<compile_context>
chip_gen: v7x
topology: tpu7x:2x2x1
jax: 0.10.0
libtpu: 0.0.40
codegen_flags: <defaults>
</compile_context>

<pallas_src>
import functools

import jax
import jax.numpy as jnp
from jax.experimental import pallas as pl
from jax.experimental.pallas import tpu as pltpu


# ----------------------------- in-kernel math helpers -----------------------------

def _layernorm(x, gamma, beta, eps=1e-5):
    # PyTorch nn.LayerNorm: biased variance, eps inside sqrt.  f32 throughout.
    mean = jnp.mean(x, axis=-1, keepdims=True)
    var = jnp.mean((x - mean) ** 2, axis=-1, keepdims=True)
    return (x - mean) * jax.lax.rsqrt(var + eps) * gamma + beta


def _gelu(x):
    # PyTorch nn.GELU() default = exact erf GELU.  erf via Abramowitz & Stegun 7.1.26;
    # the divide goes to the EUP via approx reciprocal (~1e-4 effective accuracy).
    a1, a2, a3, a4, a5 = 0.254829592, -0.284496736, 1.421413741, -1.453152027, 1.061405429
    p = 0.3275911
    xr = x * 0.7071067811865476
    s = jnp.where(xr < 0.0, -1.0, 1.0)
    ax = jnp.abs(xr)
    t = pl.reciprocal(1.0 + p * ax, approx=True)
    poly = ((((a5 * t + a4) * t + a3) * t + a2) * t + a1) * t
    erf = s * (1.0 - poly * jnp.exp(-ax * ax))
    return 0.5 * x * (1.0 + erf)


def _softmax(x):
    m = jnp.max(x, axis=-1, keepdims=True)
    e = jnp.exp(x - m)
    return e * pl.reciprocal(jnp.sum(e, axis=-1, keepdims=True), approx=True)


def _mm(x, w, b=None):
    # MXU matmul: cast the (f32) activation to the weight dtype (bf16), accumulate in f32.
    y = jnp.dot(x.astype(w.dtype), w, preferred_element_type=jnp.float32)
    return y if b is None else y + b


# ----------------------------------- fused kernel -----------------------------------

# Order of the weight arrays passed to pallas_call (after the points block).
WEIGHT_ORDER = (
    "enc_w1", "enc_b1", "enc_g", "enc_be", "enc_w2", "enc_b2",
    "a_g", "a_b", "w_attn", "bo",
    "f_g", "f_b", "f_w1", "f_b1", "f_w2", "f_b2",
    "d_g", "d_b", "d_w1", "d_b1", "d_w2", "d_b2",
)


def point_remover_kernel(
    pts_ref,
    enc_w1_ref, enc_b1_ref, enc_g_ref, enc_be_ref, enc_w2_ref, enc_b2_ref,
    a_g_ref, a_b_ref, w_attn_ref, bo_ref,
    f_g_ref, f_b_ref, f_w1_ref, f_b1_ref, f_w2_ref, f_b2_ref,
    d_g_ref, d_b_ref, d_w1_ref, d_b1_ref, d_w2_ref, d_b2_ref,
    conf_ref,
    *, depth, heads, dim_head):
    R, N, _ = pts_ref.shape
    dim = enc_w2_ref.shape[0]
    M = R * N
    H, dh = heads, dim_head
    mm_dt = enc_w2_ref.dtype                              # bf16 (matmul operand dtype)

    x = pts_ref[...]                                      # (R, N, 3) f32

    # ---- encoder: Linear(3,dim) as 3 rank-1 VPU FMAs (K=3 MXU pass wastes the array) ----
    w1 = enc_w1_ref[...]                                  # (3, dim) f32
    h = x[..., 0:1] * w1[0] + x[..., 1:2] * w1[1] + x[..., 2:3] * w1[2] + enc_b1_ref[0]
    h = h.reshape(M, dim)                                 # tokens flattened: M = R*N
    h = _gelu(_layernorm(h, enc_g_ref[0], enc_be_ref[0]))
    h = _mm(h, enc_w2_ref[...], enc_b2_ref[0])            # (M, dim) f32

    # ---- transformer: depth x [PreNorm MHA + residual, PreNorm FFN + residual] ----
    for l in range(depth):                                # static unroll, weights stay in VMEM
        # PreNorm multi-head attention + residual.
        xn = _layernorm(h, a_g_ref[l], a_b_ref[l])        # (M, dim) f32
        # ONE fused projection matmul per layer: [q*scale | k | v@wo] stacked on the lane axis.
        proj = _mm(xn, w_attn_ref[l])                     # (M, 2*H*dh + H*dim) f32
        proj3 = proj.reshape(R, N, 2 * H * dh + H * dim)  # single 2D->3D reshape per layer
        o3 = jnp.zeros((R, N, dim), jnp.float32)
        for hh in range(heads):                           # static unroll (heads is tiny)
            q = proj3[..., hh * dh:(hh + 1) * dh]                          # (R,N,dh) scale folded
            k = proj3[..., H * dh + hh * dh: H * dh + (hh + 1) * dh]       # (R,N,dh)
            vo = proj3[..., 2 * H * dh + hh * dim: 2 * H * dh + (hh + 1) * dim]  # (R,N,dim)
            dots = jnp.einsum('rne,rme->rnm', q.astype(mm_dt), k.astype(mm_dt),
                              preferred_element_type=jnp.float32)          # (R,N,N)
            attn = _softmax(dots)                                          # f32 softmax
            o3 = o3 + jnp.einsum('rnm,rmd->rnd', attn.astype(mm_dt), vo.astype(mm_dt),
                                 preferred_element_type=jnp.float32)       # wo already folded in
        h = h + bo_ref[l] + o3.reshape(M, dim)            # residual + to_out bias

        # PreNorm FFN + residual.
        xn = _layernorm(h, f_g_ref[l], f_b_ref[l])
        ff = _gelu(_mm(xn, f_w1_ref[l], f_b1_ref[l]))     # (M, 2*dim)
        h = _mm(ff, f_w2_ref[l], f_b2_ref[l]) + h

    # ---- decoder -> conf (R, N): Linear(dim,1) as mul + lane reduce ----
    xn = _layernorm(h, d_g_ref[0], d_b_ref[0])
    hdec = _gelu(_mm(xn, d_w1_ref[...], d_b1_ref[0]))     # (M, dim)
    conf = jnp.sum(hdec.reshape(R, N, dim) * d_w2_ref[0], axis=-1) + d_b2_ref[0]   # (R, N)
    conf_ref[0] = conf.astype(conf_ref.dtype)


# -------------------------------- pallas_call glue --------------------------------

def _pick_rows_per_step(BL, N, max_tokens=2048, min_steps=1):
    """Rows per grid step.  Large M=R*N amortizes per-step overhead / MXU setup; BL is padded
    to a multiple of R rather than shrinking R.  min_steps=2 only pays off on v7x (2 TCs)."""
    R = max(1, min(BL, max_tokens // N))
    if min_steps > 1:
        R = min(R, max(1, -(-BL // min_steps)))
    G = -(-BL // R)
    return R, G


def pack_params(params, *, dim_head, mm_dtype=jnp.bfloat16):
    """Pack torch-layout per-head weights into the kernel layout:
       - attention scale folded into wq,
       - W_VO[h] = wv[h] @ wo[h] precomputed (output projection eliminated),
       - [wq*scale | wk | wvo] concatenated on the lane axis -> one projection matmul per layer,
       - matmul weights cast to bf16 (biases / LN params stay f32)."""
    depth, heads, dim, dh = params["wq"].shape
    scale = dh ** -0.5
    wq_s = jnp.transpose(params["wq"] * scale, (0, 2, 1, 3)).reshape(depth, dim, heads * dh)
    wk_s = jnp.transpose(params["wk"], (0, 2, 1, 3)).reshape(depth, dim, heads * dh)
    wvo = jnp.einsum("lhde,lhef->ldhf", params["wv"], params["wo"]).reshape(depth, dim, heads * dim)
    w_attn = jnp.concatenate([wq_s, wk_s, wvo], axis=-1).astype(mm_dtype)

    packed = {k: v for k, v in params.items() if k not in ("wq", "wk", "wv", "wo")}
    packed["w_attn"] = w_attn
    for k in ("enc_w2", "f_w1", "f_w2", "d_w1"):
        packed[k] = params[k].astype(mm_dtype)
    return packed


def point_remover_conf(pts_flat, packed, *, depth, heads, dim_head,
                       max_tokens=2048, min_steps=1):
    """pts_flat: (B*L, N, 3) -> conf (B*L, N); all layers fused in one pallas_call."""
    BL, N, C = pts_flat.shape
    assert C == 3
    dim = packed["enc_w2"].shape[0]
    assert packed["w_attn"].shape[-1] == 2 * heads * dim_head + heads * dim

    R, G = _pick_rows_per_step(BL, N, max_tokens=max_tokens, min_steps=min_steps)
    BL_pad = G * R
    if BL_pad != BL:
        pts_flat = jnp.pad(pts_flat, ((0, BL_pad - BL), (0, 0), (0, 0)))

    weights = [packed[k] for k in WEIGHT_ORDER]
    in_specs = [pl.BlockSpec((R, N, 3), lambda i: (i, 0, 0))]
    for wgt in weights:
        # Full-array blocks with constant index_map: fetched once, VMEM-resident across the grid.
        in_specs.append(pl.BlockSpec(wgt.shape, lambda i, nd=wgt.ndim: (0,) * nd))

    kernel = functools.partial(point_remover_kernel,
                               depth=depth, heads=heads, dim_head=dim_head)
    conf = pl.pallas_call(
        kernel,
        out_shape=jax.ShapeDtypeStruct((G, R, N), jnp.float32),
        grid=(G,),
        in_specs=in_specs,
        out_specs=pl.BlockSpec((1, R, N), lambda i: (i, 0, 0)),
        compiler_params=pltpu.CompilerParams(
            dimension_semantics=("parallel",),        # row-groups split across TCs on v7x
            vmem_limit_bytes=32 * 1024 * 1024,        # safe on all generations (v7x: 64 MiB phys)
        ),
    )(pts_flat, *weights)
    return conf.reshape(BL_pad, N)[:BL]


# ------------------------------- parameter creation -------------------------------

def init_params(key, dim, heads, dim_head, depth=4, dtype=jnp.float32):
    """Torch-like layout: per-layer tensors stacked on a leading `depth` axis, per-head q/k/v/o
    on a leading `heads` axis.  Final Linear(dim,1) stored transposed as (1, dim) so the decoder
    can reduce along lanes."""
    mlp = dim * 2
    keys = iter(jax.random.split(key, 64))

    def w(shape, scale=0.02):
        return scale * jax.random.normal(next(keys), shape, dtype=dtype)

    ones = lambda s: jnp.ones(s, dtype)
    zeros = lambda s: jnp.zeros(s, dtype)

    return {
        # enc: Linear(3,dim) -> LayerNorm -> GELU -> Linear(dim,dim)
        "enc_w1": w((3, dim)), "enc_b1": w((1, dim)),
        "enc_g": ones((1, dim)), "enc_be": zeros((1, dim)),
        "enc_w2": w((dim, dim)), "enc_b2": w((1, dim)),
        # transformer (depth layers): PreNorm MHA (+res), PreNorm FFN (+res)
        "a_g": ones((depth, dim)), "a_b": zeros((depth, dim)),
        "wq": w((depth, heads, dim, dim_head)),
        "wk": w((depth, heads, dim, dim_head)),
        "wv": w((depth, heads, dim, dim_head)),
        "wo": w((depth, heads, dim_head, dim)),
        "bo": w((depth, dim)),
        "f_g": ones((depth, dim)), "f_b": zeros((depth, dim)),
        "f_w1": w((depth, dim, mlp)), "f_b1": w((depth, mlp)),
        "f_w2": w((depth, mlp, dim)), "f_b2": w((depth, dim)),
        # dec: LayerNorm -> Linear(dim,dim) -> GELU -> Linear(dim,1)
        "d_g": ones((1, dim)), "d_b": zeros((1, dim)),
        "d_w1": w((dim, dim)), "d_b1": w((1, dim)),
        "d_w2": w((1, dim)), "d_b2": w((1, 1)),       # d_w2 stored transposed: (1, dim)
    }


# ----------------------------------- forward -----------------------------------

def point_remover_forward(points, params, *, heads, dim_head, num_to_remove,
                          max_tokens=2048, min_steps=1):
    B, L, N, C = points.shape
    x = points.reshape(B * L, N, C)
    depth = params["a_g"].shape[0]

    packed = pack_params(params, dim_head=dim_head)
    conf = point_remover_conf(x, packed, depth=depth, heads=heads, dim_head=dim_head,
                              max_tokens=max_tokens, min_steps=min_steps)   # (B*L, N)

    # Point removal (plain JAX glue): in the torch loop `conf` is never re-sliced, so argmin is
    # the SAME index each iteration -> a contiguous window of `num_to_remove` points starting at
    # argmin(conf) is dropped from each row.
    k = num_to_remove
    Nk = N - k
    min_idx = jnp.argmin(conf, axis=1)                               # (B*L,), first-min like torch
    base = jnp.arange(Nk)
    keep = jnp.where(base[None, :] < min_idx[:, None], base[None, :], base[None, :] + k)
    # TODO(synk): if argmin falls in the last num_to_remove-1 slots the torch code yields a
    # ragged/ill-defined batch; here the gather drops a clamped contiguous window instead.
    pts_out = jax.vmap(lambda p, idx: p[idx])(x, keep)               # (B*L, N-k, 3)

    return pts_out.reshape(B, L, Nk, C), conf.reshape(B, L, N, 1)


# ------------------------------------- main -------------------------------------

if __name__ == "__main__":
    B, L, N, C = 2, 2, 16, 3
    dim, heads, dim_head, num_to_remove = 32, 2, 16, 2

    key = jax.random.PRNGKey(0)
    k_pts, k_par = jax.random.split(key)
    points = jax.random.normal(k_pts, (B, L, N, C), dtype=jnp.float32)
    params = init_params(k_par, dim, heads, dim_head, depth=4)

    pts_out, conf_out = point_remover_forward(
        points, params, heads=heads, dim_head=dim_head, num_to_remove=num_to_remove)
    jax.block_until_ready((pts_out, conf_out))

    assert pts_out.shape == (B, L, N - num_to_remove, C), pts_out.shape
    assert conf_out.shape == (B, L, N, 1), conf_out.shape
    assert bool(jnp.all(jnp.isfinite(pts_out))) and bool(jnp.all(jnp.isfinite(conf_out)))
    print("KERNEL_OK")
</pallas_src>

<mosaic_0001>
module attributes {stable_mosaic.version = 11 : i64} {
  func.func @point_remover_kernel(%arg0: i32, %arg1: memref<4x16x3xf32, #tpu.memory_space<vmem>>, %arg2: memref<3x32xf32, #tpu.memory_space<vmem>>, %arg3: memref<1x32xf32, #tpu.memory_space<vmem>>, %arg4: memref<1x32xf32, #tpu.memory_space<vmem>>, %arg5: memref<1x32xf32, #tpu.memory_space<vmem>>, %arg6: memref<32x32xbf16, #tpu.memory_space<vmem>>, %arg7: memref<1x32xf32, #tpu.memory_space<vmem>>, %arg8: memref<4x32xf32, #tpu.memory_space<vmem>>, %arg9: memref<4x32xf32, #tpu.memory_space<vmem>>, %arg10: memref<4x32x128xbf16, #tpu.memory_space<vmem>>, %arg11: memref<4x32xf32, #tpu.memory_space<vmem>>, %arg12: memref<4x32xf32, #tpu.memory_space<vmem>>, %arg13: memref<4x32xf32, #tpu.memory_space<vmem>>, %arg14: memref<4x32x64xbf16, #tpu.memory_space<vmem>>, %arg15: memref<4x64xf32, #tpu.memory_space<vmem>>, %arg16: memref<4x64x32xbf16, #tpu.memory_space<vmem>>, %arg17: memref<4x32xf32, #tpu.memory_space<vmem>>, %arg18: memref<1x32xf32, #tpu.memory_space<vmem>>, %arg19: memref<1x32xf32, #tpu.memory_space<vmem>>, %arg20: memref<32x32xbf16, #tpu.memory_space<vmem>>, %arg21: memref<1x32xf32, #tpu.memory_space<vmem>>, %arg22: memref<1x32xf32, #tpu.memory_space<vmem>>, %arg23: memref<1x1xf32, #tpu.memory_space<vmem>>, %arg24: memref<1x4x16xf32, #tpu.memory_space<vmem>>) attributes {dimension_semantics = [#tpu.dimension_semantics<parallel>], iteration_bounds = array<i64: 1>, scalar_prefetch = 0 : i64, scratch_operands = 0 : i64, tpu.core_type = #tpu.core_type<tc>, window_params = [{transform_indices = @transform_0, window_bounds = array<i64: 4, 16, 3>}, {pipeline_mode = #tpu.pipeline_mode<synchronous>, transform_indices = @transform_1, window_bounds = array<i64: 3, 32>}, {pipeline_mode = #tpu.pipeline_mode<synchronous>, transform_indices = @transform_2, window_bounds = array<i64: 1, 32>}, {pipeline_mode = #tpu.pipeline_mode<synchronous>, transform_indices = @transform_3, window_bounds = array<i64: 1, 32>}, {pipeline_mode = #tpu.pipeline_mode<synchronous>, transform_indices = @transform_4, window_bounds = array<i64: 1, 32>}, {pipeline_mode = #tpu.pipeline_mode<synchronous>, transform_indices = @transform_5, window_bounds = array<i64: 32, 32>}, {pipeline_mode = #tpu.pipeline_mode<synchronous>, transform_indices = @transform_6, window_bounds = array<i64: 1, 32>}, {pipeline_mode = #tpu.pipeline_mode<synchronous>, transform_indices = @transform_7, window_bounds = array<i64: 4, 32>}, {pipeline_mode = #tpu.pipeline_mode<synchronous>, transform_indices = @transform_8, window_bounds = array<i64: 4, 32>}, {pipeline_mode = #tpu.pipeline_mode<synchronous>, transform_indices = @transform_9, window_bounds = array<i64: 4, 32, 128>}, {pipeline_mode = #tpu.pipeline_mode<synchronous>, transform_indices = @transform_10, window_bounds = array<i64: 4, 32>}, {pipeline_mode = #tpu.pipeline_mode<synchronous>, transform_indices = @transform_11, window_bounds = array<i64: 4, 32>}, {pipeline_mode = #tpu.pipeline_mode<synchronous>, transform_indices = @transform_12, window_bounds = array<i64: 4, 32>}, {pipeline_mode = #tpu.pipeline_mode<synchronous>, transform_indices = @transform_13, window_bounds = array<i64: 4, 32, 64>}, {pipeline_mode = #tpu.pipeline_mode<synchronous>, transform_indices = @transform_14, window_bounds = array<i64: 4, 64>}, {pipeline_mode = #tpu.pipeline_mode<synchronous>, transform_indices = @transform_15, window_bounds = array<i64: 4, 64, 32>}, {pipeline_mode = #tpu.pipeline_mode<synchronous>, transform_indices = @transform_16, window_bounds = array<i64: 4, 32>}, {pipeline_mode = #tpu.pipeline_mode<synchronous>, transform_indices = @transform_17, window_bounds = array<i64: 1, 32>}, {pipeline_mode = #tpu.pipeline_mode<synchronous>, transform_indices = @transform_18, window_bounds = array<i64: 1, 32>}, {pipeline_mode = #tpu.pipeline_mode<synchronous>, transform_indices = @transform_19, window_bounds = array<i64: 32, 32>}, {pipeline_mode = #tpu.pipeline_mode<synchronous>, transform_indices = @transform_20, window_bounds = array<i64: 1, 32>}, {pipeline_mode = #tpu.pipeline_mode<synchronous>, transform_indices = @transform_21, window_bounds = array<i64: 1, 32>}, {pipeline_mode = #tpu.pipeline_mode<synchronous>, transform_indices = @transform_22, window_bounds = array<i64: 1, 1>}, {transform_indices = @transform_23, window_bounds = array<i64: 1, 4, 16>}]} {
    %c0 = arith.constant 0 : index
    %c0_0 = arith.constant 0 : index
    %c0_1 = arith.constant 0 : index
    %0 = vector.load %arg1[%c0, %c0_0, %c0_1] : memref<4x16x3xf32, #tpu.memory_space<vmem>>, vector<4x16x3xf32>
    %c0_2 = arith.constant 0 : index
    %c0_3 = arith.constant 0 : index
    %1 = vector.load %arg2[%c0_2, %c0_3] : memref<3x32xf32, #tpu.memory_space<vmem>>, vector<3x32xf32>
    %2 = vector.extract_strided_slice %0 {offsets = [0, 0, 0], sizes = [4, 16, 1], strides = [1, 1, 1]} : vector<4x16x3xf32> to vector<4x16x1xf32>
    %3 = vector.extract_strided_slice %1 {offsets = [0, 0], sizes = [1, 32], strides = [1, 1]} : vector<3x32xf32> to vector<1x32xf32>
    %4 = vector.shape_cast %3 : vector<1x32xf32> to vector<32xf32>
    %5 = vector.shape_cast %4 : vector<32xf32> to vector<1x1x32xf32>
    %6 = vector.broadcast %2 : vector<4x16x1xf32> to vector<4x16x32xf32>
    %7 = vector.broadcast %5 : vector<1x1x32xf32> to vector<4x16x32xf32>
    %8 = arith.mulf %6, %7 : vector<4x16x32xf32>
    %9 = vector.extract_strided_slice %0 {offsets = [0, 0, 1], sizes = [4, 16, 1], strides = [1, 1, 1]} : vector<4x16x3xf32> to vector<4x16x1xf32>
    %10 = vector.extract_strided_slice %1 {offsets = [1, 0], sizes = [1, 32], strides = [1, 1]} : vector<3x32xf32> to vector<1x32xf32>
    %11 = vector.shape_cast %10 : vector<1x32xf32> to vector<32xf32>
    %12 = vector.shape_cast %11 : vector<32xf32> to vector<1x1x32xf32>
    %13 = vector.broadcast %9 : vector<4x16x1xf32> to vector<4x16x32xf32>
    %14 = vector.broadcast %12 : vector<1x1x32xf32> to vector<4x16x32xf32>
    %15 = arith.mulf %13, %14 : vector<4x16x32xf32>
    %16 = arith.addf %8, %15 : vector<4x16x32xf32>
    %17 = vector.extract_strided_slice %0 {offsets = [0, 0, 2], sizes = [4, 16, 1], strides = [1, 1, 1]} : vector<4x16x3xf32> to vector<4x16x1xf32>
    %18 = vector.extract_strided_slice %1 {offsets = [2, 0], sizes = [1, 32], strides = [1, 1]} : vector<3x32xf32> to vector<1x32xf32>
    %19 = vector.shape_cast %18 : vector<1x32xf32> to vector<32xf32>
    %20 = vector.shape_cast %19 : vector<32xf32> to vector<1x1x32xf32>
    %21 = vector.broadcast %17 : vector<4x16x1xf32> to vector<4x16x32xf32>
    %22 = vector.broadcast %20 : vector<1x1x32xf32> to vector<4x16x32xf32>
    %23 = arith.mulf %21, %22 : vector<4x16x32xf32>
    %24 = arith.addf %16, %23 : vector<4x16x32xf32>
    %c0_4 = arith.constant 0 : index
    %c0_5 = arith.constant 0 : index
    %25 = vector.load %arg3[%c0_4, %c0_5] : memref<1x32xf32, #tpu.memory_space<vmem>>, vector<1x32xf32>
    %26 = vector.shape_cast %25 : vector<1x32xf32> to vector<32xf32>
    %27 = vector.shape_cast %26 : vector<32xf32> to vector<1x1x32xf32>
    %28 = vector.broadcast %27 : vector<1x1x32xf32> to vector<4x16x32xf32>
    %29 = arith.addf %24, %28 : vector<4x16x32xf32>
    %30 = vector.shape_cast %29 : vector<4x16x32xf32> to vector<64x32xf32>
    %c0_6 = arith.constant 0 : index
    %c0_7 = arith.constant 0 : index
    %31 = vector.load %arg4[%c0_6, %c0_7] : memref<1x32xf32, #tpu.memory_space<vmem>>, vector<1x32xf32>
    %32 = vector.shape_cast %31 : vector<1x32xf32> to vector<32xf32>
    %c0_8 = arith.constant 0 : index
    %c0_9 = arith.constant 0 : index
    %33 = vector.load %arg5[%c0_8, %c0_9] : memref<1x32xf32, #tpu.memory_space<vmem>>, vector<1x32xf32>
    %34 = vector.shape_cast %33 : vector<1x32xf32> to vector<32xf32>
    %cst = arith.constant dense<0.000000e+00> : vector<64xf32>
    %35 = vector.multi_reduction <add>, %30, %cst [1] : vector<64x32xf32> to vector<64xf32>
    %36 = vector.shape_cast %35 : vector<64xf32> to vector<64x1xf32>
    %cst_10 = arith.constant 3.200000e+01 : f32
    %37 = vector.broadcast %cst_10 : f32 to vector<64x1xf32>
    %38 = arith.divf %36, %37 : vector<64x1xf32>
    %39 = vector.broadcast %38 : vector<64x1xf32> to vector<64x32xf32>
    %40 = arith.subf %30, %39 : vector<64x32xf32>
    %41 = arith.mulf %40, %40 : vector<64x32xf32>
    %cst_11 = arith.constant dense<0.000000e+00> : vector<64xf32>
    %42 = vector.multi_reduction <add>, %41, %cst_11 [1] : vector<64x32xf32> to vector<64xf32>
    %43 = vector.shape_cast %42 : vector<64xf32> to vector<64x1xf32>
    %cst_12 = arith.constant 3.200000e+01 : f32
    %44 = vector.broadcast %cst_12 : f32 to vector<64x1xf32>
    %45 = arith.divf %43, %44 : vector<64x1xf32>
    %46 = vector.broadcast %38 : vector<64x1xf32> to vector<64x32xf32>
    %47 = arith.subf %30, %46 : vector<64x32xf32>
    %cst_13 = arith.constant 9.99999974E-6 : f32
    %48 = vector.broadcast %cst_13 : f32 to vector<64x1xf32>
    %49 = arith.addf %45, %48 : vector<64x1xf32>
    %50 = math.rsqrt %49 : vector<64x1xf32>
    %51 = vector.broadcast %50 : vector<64x1xf32> to vector<64x32xf32>
    %52 = arith.mulf %47, %51 : vector<64x32xf32>
    %53 = vector.shape_cast %32 : vector<32xf32> to vector<1x32xf32>
    %54 = vector.broadcast %53 : vector<1x32xf32> to vector<64x32xf32>
    %55 = arith.mulf %52, %54 : vector<64x32xf32>
    %56 = vector.shape_cast %34 : vector<32xf32> to vector<1x32xf32>
    %57 = vector.broadcast %56 : vector<1x32xf32> to vector<64x32xf32>
    %58 = arith.addf %55, %57 : vector<64x32xf32>
    %cst_14 = arith.constant 0.707106769 : f32
    %59 = vector.broadcast %cst_14 : f32 to vector<64x32xf32>
    %60 = arith.mulf %58, %59 : vector<64x32xf32>
    %cst_15 = arith.constant 0.000000e+00 : f32
    %61 = vector.broadcast %cst_15 : f32 to vector<64x32xf32>
    %62 = arith.cmpf olt, %60, %61 : vector<64x32xf32>
    %cst_16 = arith.constant -1.000000e+00 : f32
    %cst_17 = arith.constant 1.000000e+00 : f32
    %63 = vector.broadcast %cst_16 : f32 to vector<64x32xf32>
    %64 = vector.broadcast %cst_17 : f32 to vector<64x32xf32>
    %65 = arith.select %62, %63, %64 : vector<64x32xi1>, vector<64x32xf32>
    %66 = math.absf %60 : vector<64x32xf32>
    %cst_18 = arith.constant 0.327591091 : f32
    %67 = vector.broadcast %cst_18 : f32 to vector<64x32xf32>
    %68 = arith.mulf %67, %66 : vector<64x32xf32>
    %cst_19 = arith.constant 1.000000e+00 : f32
    %69 = vector.broadcast %cst_19 : f32 to vector<64x32xf32>
    %70 = arith.addf %69, %68 : vector<64x32xf32>
    %71 = tpu.reciprocal %70 {approx = true} : vector<64x32xf32> -> vector<64x32xf32>
    %cst_20 = arith.constant 1.06140542 : f32
    %72 = vector.broadcast %cst_20 : f32 to vector<64x32xf32>
    %73 = arith.mulf %72, %71 : vector<64x32xf32>
    %cst_21 = arith.constant -1.45315206 : f32
    %74 = vector.broadcast %cst_21 : f32 to vector<64x32xf32>
    %75 = arith.addf %73, %74 : vector<64x32xf32>
    %76 = arith.mulf %75, %71 : vector<64x32xf32>
    %cst_22 = arith.constant 1.42141378 : f32
    %77 = vector.broadcast %cst_22 : f32 to vector<64x32xf32>
    %78 = arith.addf %76, %77 : vector<64x32xf32>
    %79 = arith.mulf %78, %71 : vector<64x32xf32>
    %cst_23 = arith.constant -0.284496725 : f32
    %80 = vector.broadcast %cst_23 : f32 to vector<64x32xf32>
    %81 = arith.addf %79, %80 : vector<64x32xf32>
    %82 = arith.mulf %81, %71 : vector<64x32xf32>
    %cst_24 = arith.constant 0.254829586 : f32
    %83 = vector.broadcast %cst_24 : f32 to vector<64x32xf32>
    %84 = arith.addf %82, %83 : vector<64x32xf32>
    %85 = arith.mulf %84, %71 : vector<64x32xf32>
    %cst_25 = arith.constant 0.000000e+00 : f32
    %86 = vector.broadcast %cst_25 : f32 to vector<64x32xf32>
    %87 = arith.subf %86, %66 : vector<64x32xf32>
    %88 = arith.mulf %87, %66 : vector<64x32xf32>
    %89 = math.exp %88 : vector<64x32xf32>
    %90 = arith.mulf %85, %89 : vector<64x32xf32>
    %cst_26 = arith.constant 1.000000e+00 : f32
    %91 = vector.broadcast %cst_26 : f32 to vector<64x32xf32>
    %92 = arith.subf %91, %90 : vector<64x32xf32>
    %93 = arith.mulf %65, %92 : vector<64x32xf32>
    %cst_27 = arith.constant 5.000000e-01 : f32
    %94 = vector.broadcast %cst_27 : f32 to vector<64x32xf32>
    %95 = arith.mulf %94, %58 : vector<64x32xf32>
    %cst_28 = arith.constant 1.000000e+00 : f32
    %96 = vector.broadcast %cst_28 : f32 to vector<64x32xf32>
    %97 = arith.addf %96, %93 : vector<64x32xf32>
    %98 = arith.mulf %95, %97 : vector<64x32xf32>
    %c0_29 = arith.constant 0 : index
    %c0_30 = arith.constant 0 : index
    %99 = vector.load %arg6[%c0_29, %c0_30] : memref<32x32xbf16, #tpu.memory_space<vmem>>, vector<32x32xbf16>
    %c0_31 = arith.constant 0 : index
    %c0_32 = arith.constant 0 : index
    %100 = vector.load %arg7[%c0_31, %c0_32] : memref<1x32xf32, #tpu.memory_space<vmem>>, vector<1x32xf32>
    %101 = vector.shape_cast %100 : vector<1x32xf32> to vector<32xf32>
    %102 = arith.truncf %98 : vector<64x32xf32> to vector<64x32xbf16>
    %cst_33 = arith.constant dense<0.000000e+00> : vector<64x32xf32>
    %103 = tpu.matmul %102, %99, %cst_33 {dimension_numbers = #tpu.dot_dimension_numbers<[1], [0], [0], [1], [0, 0, 1, 1], [], []>} : vector<64x32xbf16>, vector<32x32xbf16>, vector<64x32xf32> -> vector<64x32xf32>
    %104 = vector.shape_cast %101 : vector<32xf32> to vector<1x32xf32>
    %105 = vector.broadcast %104 : vector<1x32xf32> to vector<64x32xf32>
    %106 = arith.addf %103, %105 : vector<64x32xf32>
    %c0_34 = arith.constant 0 : index
    %c0_35 = arith.constant 0 : index
    %107 = vector.load %arg8[%c0_34, %c0_35] : memref<4x32xf32, #tpu.memory_space<vmem>>, vector<1x32xf32>
    %108 = vector.shape_cast %107 : vector<1x32xf32> to vector<32xf32>
    %c0_36 = arith.constant 0 : index
    %c0_37 = arith.constant 0 : index
    %109 = vector.load %arg9[%c0_36, %c0_37] : memref<4x32xf32, #tpu.memory_space<vmem>>, vector<1x32xf32>
    %110 = vector.shape_cast %109 : vector<1x32xf32> to vector<32xf32>
    %cst_38 = arith.constant dense<0.000000e+00> : vector<64xf32>
    %111 = vector.multi_reduction <add>, %106, %cst_38 [1] : vector<64x32xf32> to vector<64xf32>
    %112 = vector.shape_cast %111 : vector<64xf32> to vector<64x1xf32>
    %cst_39 = arith.constant 3.200000e+01 : f32
    %113 = vector.broadcast %cst_39 : f32 to vector<64x1xf32>
    %114 = arith.divf %112, %113 : vector<64x1xf32>
    %115 = vector.broadcast %114 : vector<64x1xf32> to vector<64x32xf32>
    %116 = arith.subf %106, %115 : vector<64x32xf32>
    %117 = arith.mulf %116, %116 : vector<64x32xf32>
    %cst_40 = arith.constant dense<0.000000e+00> : vector<64xf32>
    %118 = vector.multi_reduction <add>, %117, %cst_40 [1] : vector<64x32xf32> to vector<64xf32>
    %119 = vector.shape_cast %118 : vector<64xf32> to vector<64x1xf32>
    %cst_41 = arith.constant 3.200000e+01 : f32
    %120 = vector.broadcast %cst_41 : f32 to vector<64x1xf32>
    %121 = arith.divf %119, %120 : vector<64x1xf32>
    %122 = vector.broadcast %114 : vector<64x1xf32> to vector<64x32xf32>
    %123 = arith.subf %106, %122 : vector<64x32xf32>
    %cst_42 = arith.constant 9.99999974E-6 : f32
    %124 = vector.broadcast %cst_42 : f32 to vector<64x1xf32>
    %125 = arith.addf %121, %124 : vector<64x1xf32>
    %126 = math.rsqrt %125 : vector<64x1xf32>
    %127 = vector.broadcast %126 : vector<64x1xf32> to vector<64x32xf32>
    %128 = arith.mulf %123, %127 : vector<64x32xf32>
    %129 = vector.shape_cast %108 : vector<32xf32> to vector<1x32xf32>
    %130 = vector.broadcast %129 : vector<1x32xf32> to vector<64x32xf32>
    %131 = arith.mulf %128, %130 : vector<64x32xf32>
    %132 = vector.shape_cast %110 : vector<32xf32> to vector<1x32xf32>
    %133 = vector.broadcast %132 : vector<1x32xf32> to vector<64x32xf32>
    %134 = arith.addf %131, %133 : vector<64x32xf32>
    %c0_43 = arith.constant 0 : index
    %c0_44 = arith.constant 0 : index
    %c0_45 = arith.constant 0 : index
    %135 = vector.load %arg10[%c0_43, %c0_44, %c0_45] : memref<4x32x128xbf16, #tpu.memory_space<vmem>>, vector<1x32x128xbf16>
    %136 = vector.shape_cast %135 : vector<1x32x128xbf16> to vector<32x128xbf16>
    %137 = arith.truncf %134 : vector<64x32xf32> to vector<64x32xbf16>
    %cst_46 = arith.constant dense<0.000000e+00> : vector<64x128xf32>
    %138 = tpu.matmul %137, %136, %cst_46 {dimension_numbers = #tpu.dot_dimension_numbers<[1], [0], [0], [1], [0, 0, 1, 1], [], []>} : vector<64x32xbf16>, vector<32x128xbf16>, vector<64x128xf32> -> vector<64x128xf32>
    %139 = vector.shape_cast %138 : vector<64x128xf32> to vector<4x16x128xf32>
    %cst_47 = arith.constant 0.000000e+00 : f32
    %140 = vector.broadcast %cst_47 : f32 to vector<4x16x32xf32>
    %141 = vector.extract_strided_slice %139 {offsets = [0, 0, 0], sizes = [4, 16, 16], strides = [1, 1, 1]} : vector<4x16x128xf32> to vector<4x16x16xf32>
    %142 = vector.extract_strided_slice %139 {offsets = [0, 0, 32], sizes = [4, 16, 16], strides = [1, 1, 1]} : vector<4x16x128xf32> to vector<4x16x16xf32>
    %143 = vector.extract_strided_slice %139 {offsets = [0, 0, 64], sizes = [4, 16, 32], strides = [1, 1, 1]} : vector<4x16x128xf32> to vector<4x16x32xf32>
    %144 = arith.truncf %141 : vector<4x16x16xf32> to vector<4x16x16xbf16>
    %145 = arith.truncf %142 : vector<4x16x16xf32> to vector<4x16x16xbf16>
    "tpu.trace_start"() <{level = 10 : i32, message = "rne,rme->rnm"}> : () -> ()
    %cst_48 = arith.constant dense<0.000000e+00> : vector<4x16x16xf32>
    %146 = tpu.matmul %144, %145, %cst_48 {dimension_numbers = #tpu.dot_dimension_numbers<[2], [2], [1], [1], [0, 0, 0, 1, 1, 1], [0], [0]>} : vector<4x16x16xbf16>, vector<4x16x16xbf16>, vector<4x16x16xf32> -> vector<4x16x16xf32>
    "tpu.trace_stop"() : () -> ()
    %cst_49 = arith.constant dense<0xFF800000> : vector<4x16xf32>
    %147 = vector.multi_reduction <maximumf>, %146, %cst_49 [2] : vector<4x16x16xf32> to vector<4x16xf32>
    %148 = vector.shape_cast %147 : vector<4x16xf32> to vector<4x16x1xf32>
    %149 = vector.broadcast %148 : vector<4x16x1xf32> to vector<4x16x16xf32>
    %150 = arith.subf %146, %149 : vector<4x16x16xf32>
    %151 = math.exp %150 : vector<4x16x16xf32>
    %cst_50 = arith.constant dense<0.000000e+00> : vector<4x16xf32>
    %152 = vector.multi_reduction <add>, %151, %cst_50 [2] : vector<4x16x16xf32> to vector<4x16xf32>
    %153 = vector.shape_cast %152 : vector<4x16xf32> to vector<4x16x1xf32>
    %154 = tpu.reciprocal %153 {approx = true} : vector<4x16x1xf32> -> vector<4x16x1xf32>
    %155 = vector.broadcast %154 : vector<4x16x1xf32> to vector<4x16x16xf32>
    %156 = arith.mulf %151, %155 : vector<4x16x16xf32>
    %157 = arith.truncf %156 : vector<4x16x16xf32> to vector<4x16x16xbf16>
    %158 = arith.truncf %143 : vector<4x16x32xf32> to vector<4x16x32xbf16>
    "tpu.trace_start"() <{level = 10 : i32, message = "rnm,rmd->rnd"}> : () -> ()
    %cst_51 = arith.constant dense<0.000000e+00> : vector<4x16x32xf32>
    %159 = tpu.matmul %157, %158, %cst_51 {dimension_numbers = #tpu.dot_dimension_numbers<[2], [1], [1], [2], [0, 0, 0, 1, 1, 2], [0], [0]>} : vector<4x16x16xbf16>, vector<4x16x32xbf16>, vector<4x16x32xf32> -> vector<4x16x32xf32>
    "tpu.trace_stop"() : () -> ()
    %160 = arith.addf %140, %159 : vector<4x16x32xf32>
    %161 = vector.extract_strided_slice %139 {offsets = [0, 0, 16], sizes = [4, 16, 16], strides = [1, 1, 1]} : vector<4x16x128xf32> to vector<4x16x16xf32>
    %162 = vector.extract_strided_slice %139 {offsets = [0, 0, 48], sizes = [4, 16, 16], strides = [1, 1, 1]} : vector<4x16x128xf32> to vector<4x16x16xf32>
    %163 = vector.extract_strided_slice %139 {offsets = [0, 0, 96], sizes = [4, 16, 32], strides = [1, 1, 1]} : vector<4x16x128xf32> to vector<4x16x32xf32>
    %164 = arith.truncf %161 : vector<4x16x16xf32> to vector<4x16x16xbf16>
    %165 = arith.truncf %162 : vector<4x16x16xf32> to vector<4x16x16xbf16>
    "tpu.trace_start"() <{level = 10 : i32, message = "rne,rme->rnm"}> : () -> ()
    %cst_52 = arith.constant dense<0.000000e+00> : vector<4x16x16xf32>
    %166 = tpu.matmul %164, %165, %cst_52 {dimension_numbers = #tpu.dot_dimension_numbers<[2], [2], [1], [1], [0, 0, 0, 1, 1, 1], [0], [0]>} : vector<4x16x16xbf16>, vector<4x16x16xbf16>, vector<4x16x16xf32> -> vector<4x16x16xf32>
    "tpu.trace_stop"() : () -> ()
    %cst_53 = arith.constant dense<0xFF800000> : vector<4x16xf32>
    %167 = vector.multi_reduction <maximumf>, %166, %cst_53 [2] : vector<4x16x16xf32> to vector<4x16xf32>
    %168 = vector.shape_cast %167 : vector<4x16xf32> to vector<4x16x1xf32>
    %169 = vector.broadcast %168 : vector<4x16x1xf32> to vector<4x16x16xf32>
    %170 = arith.subf %166, %169 : vector<4x16x16xf32>
    %171 = math.exp %170 : vector<4x16x16xf32>
    %cst_54 = arith.constant dense<0.000000e+00> : vector<4x16xf32>
    %172 = vector.multi_reduction <add>, %171, %cst_54 [2] : vector<4x16x16xf32> to vector<4x16xf32>
    %173 = vector.shape_cast %172 : vector<4x16xf32> to vector<4x16x1xf32>
    %174 = tpu.reciprocal %173 {approx = true} : vector<4x16x1xf32> -> vector<4x16x1xf32>
    %175 = vector.broadcast %174 : vector<4x16x1xf32> to vector<4x16x16xf32>
    %176 = arith.mulf %171, %175 : vector<4x16x16xf32>
    %177 = arith.truncf %176 : vector<4x16x16xf32> to vector<4x16x16xbf16>
    %178 = arith.truncf %163 : vector<4x16x32xf32> to vector<4x16x32xbf16>
    "tpu.trace_start"() <{level = 10 : i32, message = "rnm,rmd->rnd"}> : () -> ()
    %cst_55 = arith.constant dense<0.000000e+00> : vector<4x16x32xf32>
    %179 = tpu.matmul %177, %178, %cst_55 {dimension_numbers = #tpu.dot_dimension_numbers<[2], [1], [1], [2], [0, 0, 0, 1, 1, 2], [0], [0]>} : vector<4x16x16xbf16>, vector<4x16x32xbf16>, vector<4x16x32xf32> -> vector<4x16x32xf32>
    "tpu.trace_stop"() : () -> ()
    %180 = arith.addf %160, %179 : vector<4x16x32xf32>
    %c0_56 = arith.constant 0 : index
    %c0_57 = arith.constant 0 : index
    %181 = vector.load %arg11[%c0_56, %c0_57] : memref<4x32xf32, #tpu.memory_space<vmem>>, vector<1x32xf32>
    %182 = vector.shape_cast %181 : vector<1x32xf32> to vector<32xf32>
    %183 = vector.shape_cast %182 : vector<32xf32> to vector<1x32xf32>
    %184 = vector.broadcast %183 : vector<1x32xf32> to vector<64x32xf32>
    %185 = arith.addf %106, %184 : vector<64x32xf32>
    %186 = vector.shape_cast %180 : vector<4x16x32xf32> to vector<64x32xf32>
    %187 = arith.addf %185, %186 : vector<64x32xf32>
    %c0_58 = arith.constant 0 : index
    %c0_59 = arith.constant 0 : index
    %188 = vector.load %arg12[%c0_58, %c0_59] : memref<4x32xf32, #tpu.memory_space<vmem>>, vector<1x32xf32>
    %189 = vector.shape_cast %188 : vector<1x32xf32> to vector<32xf32>
    %c0_60 = arith.constant 0 : index
    %c0_61 = arith.constant 0 : index
    %190 = vector.load %arg13[%c0_60, %c0_61] : memref<4x32xf32, #tpu.memory_space<vmem>>, vector<1x32xf32>
    %191 = vector.shape_cast %190 : vector<1x32xf32> to vector<32xf32>
    %cst_62 = arith.constant dense<0.000000e+00> : vector<64xf32>
    %192 = vector.multi_reduction <add>, %187, %cst_62 [1] : vector<64x32xf32> to vector<64xf32>
    %193 = vector.shape_cast %192 : vector<64xf32> to vector<64x1xf32>
    %cst_63 = arith.constant 3.200000e+01 : f32
    %194 = vector.broadcast %cst_63 : f32 to vector<64x1xf32>
    %195 = arith.divf %193, %194 : vector<64x1xf32>
    %196 = vector.broadcast %195 : vector<64x1xf32> to vector<64x32xf32>
    %197 = arith.subf %187, %196 : vector<64x32xf32>
    %198 = arith.mulf %197, %197 : vector<64x32xf32>
    %cst_64 = arith.constant dense<0.000000e+00> : vector<64xf32>
    %199 = vector.multi_reduction <add>, %198, %cst_64 [1] : vector<64x32xf32> to vector<64xf32>
    %200 = vector.shape_cast %199 : vector<64xf32> to vector<64x1xf32>
    %cst_65 = arith.constant 3.200000e+01 : f32
    %201 = vector.broadcast %cst_65 : f32 to vector<64x1xf32>
    %202 = arith.divf %200, %201 : vector<64x1xf32>
    %203 = vector.broadcast %195 : vector<64x1xf32> to vector<64x32xf32>
    %204 = arith.subf %187, %203 : vector<64x32xf32>
    %cst_66 = arith.constant 9.99999974E-6 : f32
    %205 = vector.broadcast %cst_66 : f32 to vector<64x1xf32>
    %206 = arith.addf %202, %205 : vector<64x1xf32>
    %207 = math.rsqrt %206 : vector<64x1xf32>
    %208 = vector.broadcast %207 : vector<64x1xf32> to vector<64x32xf32>
    %209 = arith.mulf %204, %208 : vector<64x32xf32>
    %210 = vector.shape_cast %189 : vector<32xf32> to vector<1x32xf32>
    %211 = vector.broadcast %210 : vector<1x32xf32> to vector<64x32xf32>
    %212 = arith.mulf %209, %211 : vector<64x32xf32>
    %213 = vector.shape_cast %191 : vector<32xf32> to vector<1x32xf32>
    %214 = vector.broadcast %213 : vector<1x32xf32> to vector<64x32xf32>
    %215 = arith.addf %212, %214 : vector<64x32xf32>
    %c0_67 = arith.constant 0 : index
    %c0_68 = arith.constant 0 : index
    %c0_69 = arith.constant 0 : index
    %216 = vector.load %arg14[%c0_67, %c0_68, %c0_69] : memref<4x32x64xbf16, #tpu.memory_space<vmem>>, vector<1x32x64xbf16>
    %217 = vector.shape_cast %216 : vector<1x32x64xbf16> to vector<32x64xbf16>
    %c0_70 = arith.constant 0 : index
    %c0_71 = arith.constant 0 : index
    %218 = vector.load %arg15[%c0_70, %c0_71] : memref<4x64xf32, #tpu.memory_space<vmem>>, vector<1x64xf32>
    %219 = vector.shape_cast %218 : vector<1x64xf32> to vector<64xf32>
    %220 = arith.truncf %215 : vector<64x32xf32> to vector<64x32xbf16>
    %cst_72 = arith.constant dense<0.000000e+00> : vector<64x64xf32>
    %221 = tpu.matmul %220, %217, %cst_72 {dimension_numbers = #tpu.dot_dimension_numbers<[1], [0], [0], [1], [0, 0, 1, 1], [], []>} : vector<64x32xbf16>, vector<32x64xbf16>, vector<64x64xf32> -> vector<64x64xf32>
    %222 = vector.shape_cast %219 : vector<64xf32> to vector<1x64xf32>
    %223 = vector.broadcast %222 : vector<1x64xf32> to vector<64x64xf32>
    %224 = arith.addf %221, %223 : vector<64x64xf32>
    %cst_73 = arith.constant 0.707106769 : f32
    %225 = vector.broadcast %cst_73 : f32 to vector<64x64xf32>
    %226 = arith.mulf %224, %225 : vector<64x64xf32>
    %cst_74 = arith.constant 0.000000e+00 : f32
    %227 = vector.broadcast %cst_74 : f32 to vector<64x64xf32>
    %228 = arith.cmpf olt, %226, %227 : vector<64x64xf32>
    %cst_75 = arith.constant -1.000000e+00 : f32
    %cst_76 = arith.constant 1.000000e+00 : f32
    %229 = vector.broadcast %cst_75 : f32 to vector<64x64xf32>
    %230 = vector.broadcast %cst_76 : f32 to vector<64x64xf32>
    %231 = arith.select %228, %229, %230 : vector<64x64xi1>, vector<64x64xf32>
    %232 = math.absf %226 : vector<64x64xf32>
    %cst_77 = arith.constant 0.327591091 : f32
    %233 = vector.broadcast %cst_77 : f32 to vector<64x64xf32>
    %234 = arith.mulf %233, %232 : vector<64x64xf32>
    %cst_78 = arith.constant 1.000000e+00 : f32
    %235 = vector.broadcast %cst_78 : f32 to vector<64x64xf32>
    %236 = arith.addf %235, %234 : vector<64x64xf32>
    %237 = tpu.reciprocal %236 {approx = true} : vector<64x64xf32> -> vector<64x64xf32>
    %cst_79 = arith.constant 1.06140542 : f32
    %238 = vector.broadcast %cst_79 : f32 to vector<64x64xf32>
    %239 = arith.mulf %238, %237 : vector<64x64xf32>
    %cst_80 = arith.constant -1.45315206 : f32
    %240 = vector.broadcast %cst_80 : f32 to vector<64x64xf32>
    %241 = arith.addf %239, %240 : vector<64x64xf32>
    %242 = arith.mulf %241, %237 : vector<64x64xf32>
    %cst_81 = arith.constant 1.42141378 : f32
    %243 = vector.broadcast %cst_81 : f32 to vector<64x64xf32>
    %244 = arith.addf %242, %243 : vector<64x64xf32>
    %245 = arith.mulf %244, %237 : vector<64x64xf32>
    %cst_82 = arith.constant -0.284496725 : f32
    %246 = vector.broadcast %cst_82 : f32 to vector<64x64xf32>
    %247 = arith.addf %245, %246 : vector<64x64xf32>
    %248 = arith.mulf %247, %237 : vector<64x64xf32>
    %cst_83 = arith.constant 0.254829586 : f32
    %249 = vector.broadcast %cst_83 : f32 to vector<64x64xf32>
    %250 = arith.addf %248, %249 : vector<64x64xf32>
    %251 = arith.mulf %250, %237 : vector<64x64xf32>
    %cst_84 = arith.constant 0.000000e+00 : f32
    %252 = vector.broadcast %cst_84 : f32 to vector<64x64xf32>
    %253 = arith.subf %252, %232 : vector<64x64xf32>
    %254 = arith.mulf %253, %232 : vector<64x64xf32>
    %255 = math.exp %254 : vector<64x64xf32>
    %256 = arith.mulf %251, %255 : vector<64x64xf32>
    %cst_85 = arith.constant 1.000000e+00 : f32
    %257 = vector.broadcast %cst_85 : f32 to vector<64x64xf32>
    %258 = arith.subf %257, %256 : vector<64x64xf32>
    %259 = arith.mulf %231, %258 : vector<64x64xf32>
    %cst_86 = arith.constant 5.000000e-01 : f32
    %260 = vector.broadcast %cst_86 : f32 to vector<64x64xf32>
    %261 = arith.mulf %260, %224 : vector<64x64xf32>
    %cst_87 = arith.constant 1.000000e+00 : f32
    %262 = vector.broadcast %cst_87 : f32 to vector<64x64xf32>
    %263 = arith.addf %262, %259 : vector<64x64xf32>
    %264 = arith.mulf %261, %263 : vector<64x64xf32>
    %c0_88 = arith.constant 0 : index
    %c0_89 = arith.constant 0 : index
    %c0_90 = arith.constant 0 : index
    %265 = vector.load %arg16[%c0_88, %c0_89, %c0_90] : memref<4x64x32xbf16, #tpu.memory_space<vmem>>, vector<1x64x32xbf16>
    %266 = vector.shape_cast %265 : vector<1x64x32xbf16> to vector<64x32xbf16>
    %c0_91 = arith.constant 0 : index
    %c0_92 = arith.constant 0 : index
    %267 = vector.load %arg17[%c0_91, %c0_92] : memref<4x32xf32, #tpu.memory_space<vmem>>, vector<1x32xf32>
    %268 = vector.shape_cast %267 : vector<1x32xf32> to vector<32xf32>
    %269 = arith.truncf %264 : vector<64x64xf32> to vector<64x64xbf16>
    %cst_93 = arith.constant dense<0.000000e+00> : vector<64x32xf32>
    %270 = tpu.matmul %269, %266, %cst_93 {dimension_numbers = #tpu.dot_dimension_numbers<[1], [0], [0], [1], [0, 0, 1, 1], [], []>} : vector<64x64xbf16>, vector<64x32xbf16>, vector<64x32xf32> -> vector<64x32xf32>
    %271 = vector.shape_cast %268 : vector<32xf32> to vector<1x32xf32>
    %272 = vector.broadcast %271 : vector<1x32xf32> to vector<64x32xf32>
    %273 = arith.addf %270, %272 : vector<64x32xf32>
    %274 = arith.addf %273, %187 : vector<64x32xf32>
    %c1 = arith.constant 1 : index
    %c0_94 = arith.constant 0 : index
    %275 = vector.load %arg8[%c1, %c0_94] : memref<4x32xf32, #tpu.memory_space<vmem>>, vector<1x32xf32>
    %276 = vector.shape_cast %275 : vector<1x32xf32> to vector<32xf32>
    %c1_95 = arith.constant 1 : index
    %c0_96 = arith.constant 0 : index
    %277 = vector.load %arg9[%c1_95, %c0_96] : memref<4x32xf32, #tpu.memory_space<vmem>>, vector<1x32xf32>
    %278 = vector.shape_cast %277 : vector<1x32xf32> to vector<32xf32>
    %cst_97 = arith.constant dense<0.000000e+00> : vector<64xf32>
    %279 = vector.multi_reduction <add>, %274, %cst_97 [1] : vector<64x32xf32> to vector<64xf32>
    %280 = vector.shape_cast %279 : vector<64xf32> to vector<64x1xf32>
    %cst_98 = arith.constant 3.200000e+01 : f32
    %281 = vector.broadcast %cst_98 : f32 to vector<64x1xf32>
    %282 = arith.divf %280, %281 : vector<64x1xf32>
    %283 = vector.broadcast %282 : vector<64x1xf32> to vector<64x32xf32>
    %284 = arith.subf %274, %283 : vector<64x32xf32>
    %285 = arith.mulf %284, %284 : vector<64x32xf32>
    %cst_99 = arith.constant dense<0.000000e+00> : vector<64xf32>
    %286 = vector.multi_reduction <add>, %285, %cst_99 [1] : vector<64x32xf32> to vector<64xf32>
    %287 = vector.shape_cast %286 : vector<64xf32> to vector<64x1xf32>
    %cst_100 = arith.constant 3.200000e+01 : f32
    %288 = vector.broadcast %cst_100 : f32 to vector<64x1xf32>
    %289 = arith.divf %287, %288 : vector<64x1xf32>
    %290 = vector.broadcast %282 : vector<64x1xf32> to vector<64x32xf32>
    %291 = arith.subf %274, %290 : vector<64x32xf32>
    %cst_101 = arith.constant 9.99999974E-6 : f32
    %292 = vector.broadcast %cst_101 : f32 to vector<64x1xf32>
    %293 = arith.addf %289, %292 : vector<64x1xf32>
    %294 = math.rsqrt %293 : vector<64x1xf32>
    %295 = vector.broadcast %294 : vector<64x1xf32> to vector<64x32xf32>
    %296 = arith.mulf %291, %295 : vector<64x32xf32>
    %297 = vector.shape_cast %276 : vector<32xf32> to vector<1x32xf32>
    %298 = vector.broadcast %297 : vector<1x32xf32> to vector<64x32xf32>
    %299 = arith.mulf %296, %298 : vector<64x32xf32>
    %300 = vector.shape_cast %278 : vector<32xf32> to vector<1x32xf32>
    %301 = vector.broadcast %300 : vector<1x32xf32> to vector<64x32xf32>
    %302 = arith.addf %299, %301 : vector<64x32xf32>
    %c1_102 = arith.constant 1 : index
    %c0_103 = arith.constant 0 : index
    %c0_104 = arith.constant 0 : index
    %303 = vector.load %arg10[%c1_102, %c0_103, %c0_104] : memref<4x32x128xbf16, #tpu.memory_space<vmem>>, vector<1x32x128xbf16>
    %304 = vector.shape_cast %303 : vector<1x32x128xbf16> to vector<32x128xbf16>
    %305 = arith.truncf %302 : vector<64x32xf32> to vector<64x32xbf16>
    %cst_105 = arith.constant dense<0.000000e+00> : vector<64x128xf32>
    %306 = tpu.matmul %305, %304, %cst_105 {dimension_numbers = #tpu.dot_dimension_numbers<[1], [0], [0], [1], [0, 0, 1, 1], [], []>} : vector<64x32xbf16>, vector<32x128xbf16>, vector<64x128xf32> -> vector<64x128xf32>
    %307 = vector.shape_cast %306 : vector<64x128xf32> to vector<4x16x128xf32>
    %cst_106 = arith.constant 0.000000e+00 : f32
    %308 = vector.broadcast %cst_106 : f32 to vector<4x16x32xf32>
    %309 = vector.extract_strided_slice %307 {offsets = [0, 0, 0], sizes = [4, 16, 16], strides = [1, 1, 1]} : vector<4x16x128xf32> to vector<4x16x16xf32>
    %310 = vector.extract_strided_slice %307 {offsets = [0, 0, 32], sizes = [4, 16, 16], strides = [1, 1, 1]} : vector<4x16x128xf32> to vector<4x16x16xf32>
    %311 = vector.extract_strided_slice %307 {offsets = [0, 0, 64], sizes = [4, 16, 32], strides = [1, 1, 1]} : vector<4x16x128xf32> to vector<4x16x32xf32>
    %312 = arith.truncf %309 : vector<4x16x16xf32> to vector<4x16x16xbf16>
    %313 = arith.truncf %310 : vector<4x16x16xf32> to vector<4x16x16xbf16>
    "tpu.trace_start"() <{level = 10 : i32, message = "rne,rme->rnm"}> : () -> ()
    %cst_107 = arith.constant dense<0.000000e+00> : vector<4x16x16xf32>
    %314 = tpu.matmul %312, %313, %cst_107 {dimension_numbers = #tpu.dot_dimension_numbers<[2], [2], [1], [1], [0, 0, 0, 1, 1, 1], [0], [0]>} : vector<4x16x16xbf16>, vector<4x16x16xbf16>, vector<4x16x16xf32> -> vector<4x16x16xf32>
    "tpu.trace_stop"() : () -> ()
    %cst_108 = arith.constant dense<0xFF800000> : vector<4x16xf32>
    %315 = vector.multi_reduction <maximumf>, %314, %cst_108 [2] : vector<4x16x16xf32> to vector<4x16xf32>
    %316 = vector.shape_cast %315 : vector<4x16xf32> to vector<4x16x1xf32>
    %317 = vector.broadcast %316 : vector<4x16x1xf32> to vector<4x16x16xf32>
    %318 = arith.subf %314, %317 : vector<4x16x16xf32>
    %319 = math.exp %318 : vector<4x16x16xf32>
    %cst_109 = arith.constant dense<0.000000e+00> : vector<4x16xf32>
    %320 = vector.multi_reduction <add>, %319, %cst_109 [2] : vector<4x16x16xf32> to vector<4x16xf32>
    %321 = vector.shape_cast %320 : vector<4x16xf32> to vector<4x16x1xf32>
    %322 = tpu.reciprocal %321 {approx = true} : vector<4x16x1xf32> -> vector<4x16x1xf32>
    %323 = vector.broadcast %322 : vector<4x16x1xf32> to vector<4x16x16xf32>
    %324 = arith.mulf %319, %323 : vector<4x16x16xf32>
    %325 = arith.truncf %324 : vector<4x16x16xf32> to vector<4x16x16xbf16>
    %326 = arith.truncf %311 : vector<4x16x32xf32> to vector<4x16x32xbf16>
    "tpu.trace_start"() <{level = 10 : i32, message = "rnm,rmd->rnd"}> : () -> ()
    %cst_110 = arith.constant dense<0.000000e+00> : vector<4x16x32xf32>
    %327 = tpu.matmul %325, %326, %cst_110 {dimension_numbers = #tpu.dot_dimension_numbers<[2], [1], [1], [2], [0, 0, 0, 1, 1, 2], [0], [0]>} : vector<4x16x16xbf16>, vector<4x16x32xbf16>, vector<4x16x32xf32> -> vector<4x16x32xf32>
    "tpu.trace_stop"() : () -> ()
    %328 = arith.addf %308, %327 : vector<4x16x32xf32>
    %329 = vector.extract_strided_slice %307 {offsets = [0, 0, 16], sizes = [4, 16, 16], strides = [1, 1, 1]} : vector<4x16x128xf32> to vector<4x16x16xf32>
    %330 = vector.extract_strided_slice %307 {offsets = [0, 0, 48], sizes = [4, 16, 16], strides = [1, 1, 1]} : vector<4x16x128xf32> to vector<4x16x16xf32>
    %331 = vector.extract_strided_slice %307 {offsets = [0, 0, 96], sizes = [4, 16, 32], strides = [1, 1, 1]} : vector<4x16x128xf32> to vector<4x16x32xf32>
    %332 = arith.truncf %329 : vector<4x16x16xf32> to vector<4x16x16xbf16>
    %333 = arith.truncf %330 : vector<4x16x16xf32> to vector<4x16x16xbf16>
    "tpu.trace_start"() <{level = 10 : i32, message = "rne,rme->rnm"}> : () -> ()
    %cst_111 = arith.constant dense<0.000000e+00> : vector<4x16x16xf32>
    %334 = tpu.matmul %332, %333, %cst_111 {dimension_numbers = #tpu.dot_dimension_numbers<[2], [2], [1], [1], [0, 0, 0, 1, 1, 1], [0], [0]>} : vector<4x16x16xbf16>, vector<4x16x16xbf16>, vector<4x16x16xf32> -> vector<4x16x16xf32>
    "tpu.trace_stop"() : () -> ()
    %cst_112 = arith.constant dense<0xFF800000> : vector<4x16xf32>
    %335 = vector.multi_reduction <maximumf>, %334, %cst_112 [2] : vector<4x16x16xf32> to vector<4x16xf32>
    %336 = vector.shape_cast %335 : vector<4x16xf32> to vector<4x16x1xf32>
    %337 = vector.broadcast %336 : vector<4x16x1xf32> to vector<4x16x16xf32>
    %338 = arith.subf %334, %337 : vector<4x16x16xf32>
    %339 = math.exp %338 : vector<4x16x16xf32>
    %cst_113 = arith.constant dense<0.000000e+00> : vector<4x16xf32>
    %340 = vector.multi_reduction <add>, %339, %cst_113 [2] : vector<4x16x16xf32> to vector<4x16xf32>
    %341 = vector.shape_cast %340 : vector<4x16xf32> to vector<4x16x1xf32>
    %342 = tpu.reciprocal %341 {approx = true} : vector<4x16x1xf32> -> vector<4x16x1xf32>
    %343 = vector.broadcast %342 : vector<4x16x1xf32> to vector<4x16x16xf32>
    %344 = arith.mulf %339, %343 : vector<4x16x16xf32>
    %345 = arith.truncf %344 : vector<4x16x16xf32> to vector<4x16x16xbf16>
    %346 = arith.truncf %331 : vector<4x16x32xf32> to vector<4x16x32xbf16>
    "tpu.trace_start"() <{level = 10 : i32, message = "rnm,rmd->rnd"}> : () -> ()
    %cst_114 = arith.constant dense<0.000000e+00> : vector<4x16x32xf32>
    %347 = tpu.matmul %345, %346, %cst_114 {dimension_numbers = #tpu.dot_dimension_numbers<[2], [1], [1], [2], [0, 0, 0, 1, 1, 2], [0], [0]>} : vector<4x16x16xbf16>, vector<4x16x32xbf16>, vector<4x16x32xf32> -> vector<4x16x32xf32>
    "tpu.trace_stop"() : () -> ()
    %348 = arith.addf %328, %347 : vector<4x16x32xf32>
    %c1_115 = arith.constant 1 : index
    %c0_116 = arith.constant 0 : index
    %349 = vector.load %arg11[%c1_115, %c0_116] : memref<4x32xf32, #tpu.memory_space<vmem>>, vector<1x32xf32>
    %350 = vector.shape_cast %349 : vector<1x32xf32> to vector<32xf32>
    %351 = vector.shape_cast %350 : vector<32xf32> to vector<1x32xf32>
    %352 = vector.broadcast %351 : vector<1x32xf32> to vector<64x32xf32>
    %353 = arith.addf %274, %352 : vector<64x32xf32>
    %354 = vector.shape_cast %348 : vector<4x16x32xf32> to vector<64x32xf32>
    %355 = arith.addf %353, %354 : vector<64x32xf32>
    %c1_117 = arith.constant 1 : index
    %c0_118 = arith.constant 0 : index
    %356 = vector.load %arg12[%c1_117, %c0_118] : memref<4x32xf32, #tpu.memory_space<vmem>>, vector<1x32xf32>
    %357 = vector.shape_cast %356 : vector<1x32xf32> to vector<32xf32>
    %c1_119 = arith.constant 1 : index
    %c0_120 = arith.constant 0 : index
    %358 = vector.load %arg13[%c1_119, %c0_120] : memref<4x32xf32, #tpu.memory_space<vmem>>, vector<1x32xf32>
    %359 = vector.shape_cast %358 : vector<1x32xf32> to vector<32xf32>
    %cst_121 = arith.constant dense<0.000000e+00> : vector<64xf32>
    %360 = vector.multi_reduction <add>, %355, %cst_121 [1] : vector<64x32xf32> to vector<64xf32>
    %361 = vector.shape_cast %360 : vector<64xf32> to vector<64x1xf32>
    %cst_122 = arith.constant 3.200000e+01 : f32
    %362 = vector.broadcast %cst_122 : f32 to vector<64x1xf32>
    %363 = arith.divf %361, %362 : vector<64x1xf32>
    %364 = vector.broadcast %363 : vector<64x1xf32> to vector<64x32xf32>
    %365 = arith.subf %355, %364 : vector<64x32xf32>
    %366 = arith.mulf %365, %365 : vector<64x32xf32>
    %cst_123 = arith.constant dense<0.000000e+00> : vector<64xf32>
    %367 = vector.multi_reduction <add>, %366, %cst_123 [1] : vector<64x32xf32> to vector<64xf32>
    %368 = vector.shape_cast %367 : vector<64xf32> to vector<64x1xf32>
    %cst_124 = arith.constant 3.200000e+01 : f32
    %369 = vector.broadcast %cst_124 : f32 to vector<64x1xf32>
    %370 = arith.divf %368, %369 : vector<64x1xf32>
    %371 = vector.broadcast %363 : vector<64x1xf32> to vector<64x32xf32>
    %372 = arith.subf %355, %371 : vector<64x32xf32>
    %cst_125 = arith.constant 9.99999974E-6 : f32
    %373 = vector.broadcast %cst_125 : f32 to vector<64x1xf32>
    %374 = arith.addf %370, %373 : vector<64x1xf32>
    %375 = math.rsqrt %374 : vector<64x1xf32>
    %376 = vector.broadcast %375 : vector<64x1xf32> to vector<64x32xf32>
    %377 = arith.mulf %372, %376 : vector<64x32xf32>
    %378 = vector.shape_cast %357 : vector<32xf32> to vector<1x32xf32>
    %379 = vector.broadcast %378 : vector<1x32xf32> to vector<64x32xf32>
    %380 = arith.mulf %377, %379 : vector<64x32xf32>
    %381 = vector.shape_cast %359 : vector<32xf32> to vector<1x32xf32>
    %382 = vector.broadcast %381 : vector<1x32xf32> to vector<64x32xf32>
    %383 = arith.addf %380, %382 : vector<64x32xf32>
    %c1_126 = arith.constant 1 : index
    %c0_127 = arith.constant 0 : index
    %c0_128 = arith.constant 0 : index
    %384 = vector.load %arg14[%c1_126, %c0_127, %c0_128] : memref<4x32x64xbf16, #tpu.memory_space<vmem>>, vector<1x32x64xbf16>
    %385 = vector.shape_cast %384 : vector<1x32x64xbf16> to vector<32x64xbf16>
    %c1_129 = arith.constant 1 : index
    %c0_130 = arith.constant 0 : index
    %386 = vector.load %arg15[%c1_129, %c0_130] : memref<4x64xf32, #tpu.memory_space<vmem>>, vector<1x64xf32>
    %387 = vector.shape_cast %386 : vector<1x64xf32> to vector<64xf32>
    %388 = arith.truncf %383 : vector<64x32xf32> to vector<64x32xbf16>
    %cst_131 = arith.constant dense<0.000000e+00> : vector<64x64xf32>
    %389 = tpu.matmul %388, %385, %cst_131 {dimension_numbers = #tpu.dot_dimension_numbers<[1], [0], [0], [1], [0, 0, 1, 1], [], []>} : vector<64x32xbf16>, vector<32x64xbf16>, vector<64x64xf32> -> vector<64x64xf32>
    %390 = vector.shape_cast %387 : vector<64xf32> to vector<1x64xf32>
    %391 = vector.broadcast %390 : vector<1x64xf32> to vector<64x64xf32>
    %392 = arith.addf %389, %391 : vector<64x64xf32>
    %cst_132 = arith.constant 0.707106769 : f32
    %393 = vector.broadcast %cst_132 : f32 to vector<64x64xf32>
    %394 = arith.mulf %392, %393 : vector<64x64xf32>
    %cst_133 = arith.constant 0.000000e+00 : f32
    %395 = vector.broadcast %cst_133 : f32 to vector<64x64xf32>
    %396 = arith.cmpf olt, %394, %395 : vector<64x64xf32>
    %cst_134 = arith.constant -1.000000e+00 : f32
    %cst_135 = arith.constant 1.000000e+00 : f32
    %397 = vector.broadcast %cst_134 : f32 to vector<64x64xf32>
    %398 = vector.broadcast %cst_135 : f32 to vector<64x64xf32>
    %399 = arith.select %396, %397, %398 : vector<64x64xi1>, vector<64x64xf32>
    %400 = math.absf %394 : vector<64x64xf32>
    %cst_136 = arith.constant 0.327591091 : f32
    %401 = vector.broadcast %cst_136 : f32 to vector<64x64xf32>
    %402 = arith.mulf %401, %400 : vector<64x64xf32>
    %cst_137 = arith.constant 1.000000e+00 : f32
    %403 = vector.broadcast %cst_137 : f32 to vector<64x64xf32>
    %404 = arith.addf %403, %402 : vector<64x64xf32>
    %405 = tpu.reciprocal %404 {approx = true} : vector<64x64xf32> -> vector<64x64xf32>
    %cst_138 = arith.constant 1.06140542 : f32
    %406 = vector.broadcast %cst_138 : f32 to vector<64x64xf32>
    %407 = arith.mulf %406, %405 : vector<64x64xf32>
    %cst_139 = arith.constant -1.45315206 : f32
    %408 = vector.broadcast %cst_139 : f32 to vector<64x64xf32>
    %409 = arith.addf %407, %408 : vector<64x64xf32>
    %410 = arith.mulf %409, %405 : vector<64x64xf32>
    %cst_140 = arith.constant 1.42141378 : f32
    %411 = vector.broadcast %cst_140 : f32 to vector<64x64xf32>
    %412 = arith.addf %410, %411 : vector<64x64xf32>
    %413 = arith.mulf %412, %405 : vector<64x64xf32>
    %cst_141 = arith.constant -0.284496725 : f32
    %414 = vector.broadcast %cst_141 : f32 to vector<64x64xf32>
    %415 = arith.addf %413, %414 : vector<64x64xf32>
    %416 = arith.mulf %415, %405 : vector<64x64xf32>
    %cst_142 = arith.constant 0.254829586 : f32
    %417 = vector.broadcast %cst_142 : f32 to vector<64x64xf32>
    %418 = arith.addf %416, %417 : vector<64x64xf32>
    %419 = arith.mulf %418, %405 : vector<64x64xf32>
    %cst_143 = arith.constant 0.000000e+00 : f32
    %420 = vector.broadcast %cst_143 : f32 to vector<64x64xf32>
    %421 = arith.subf %420, %400 : vector<64x64xf32>
    %422 = arith.mulf %421, %400 : vector<64x64xf32>
    %423 = math.exp %422 : vector<64x64xf32>
    %424 = arith.mulf %419, %423 : vector<64x64xf32>
    %cst_144 = arith.constant 1.000000e+00 : f32
    %425 = vector.broadcast %cst_144 : f32 to vector<64x64xf32>
    %426 = arith.subf %425, %424 : vector<64x64xf32>
    %427 = arith.mulf %399, %426 : vector<64x64xf32>
    %cst_145 = arith.constant 5.000000e-01 : f32
    %428 = vector.broadcast %cst_145 : f32 to vector<64x64xf32>
    %429 = arith.mulf %428, %392 : vector<64x64xf32>
    %cst_146 = arith.constant 1.000000e+00 : f32
    %430 = vector.broadcast %cst_146 : f32 to vector<64x64xf32>
    %431 = arith.addf %430, %427 : vector<64x64xf32>
    %432 = arith.mulf %429, %431 : vector<64x64xf32>
    %c1_147 = arith.constant 1 : index
    %c0_148 = arith.constant 0 : index
    %c0_149 = arith.constant 0 : index
    %433 = vector.load %arg16[%c1_147, %c0_148, %c0_149] : memref<4x64x32xbf16, #tpu.memory_space<vmem>>, vector<1x64x32xbf16>
    %434 = vector.shape_cast %433 : vector<1x64x32xbf16> to vector<64x32xbf16>
    %c1_150 = arith.constant 1 : index
    %c0_151 = arith.constant 0 : index
    %435 = vector.load %arg17[%c1_150, %c0_151] : memref<4x32xf32, #tpu.memory_space<vmem>>, vector<1x32xf32>
    %436 = vector.shape_cast %435 : vector<1x32xf32> to vector<32xf32>
    %437 = arith.truncf %432 : vector<64x64xf32> to vector<64x64xbf16>
    %cst_152 = arith.constant dense<0.000000e+00> : vector<64x32xf32>
    %438 = tpu.matmul %437, %434, %cst_152 {dimension_numbers = #tpu.dot_dimension_numbers<[1], [0], [0], [1], [0, 0, 1, 1], [], []>} : vector<64x64xbf16>, vector<64x32xbf16>, vector<64x32xf32> -> vector<64x32xf32>
    %439 = vector.shape_cast %436 : vector<32xf32> to vector<1x32xf32>
    %440 = vector.broadcast %439 : vector<1x32xf32> to vector<64x32xf32>
    %441 = arith.addf %438, %440 : vector<64x32xf32>
    %442 = arith.addf %441, %355 : vector<64x32xf32>
    %c2 = arith.constant 2 : index
    %c0_153 = arith.constant 0 : index
    %443 = vector.load %arg8[%c2, %c0_153] : memref<4x32xf32, #tpu.memory_space<vmem>>, vector<1x32xf32>
    %444 = vector.shape_cast %443 : vector<1x32xf32> to vector<32xf32>
    %c2_154 = arith.constant 2 : index
    %c0_155 = arith.constant 0 : index
    %445 = vector.load %arg9[%c2_154, %c0_155] : memref<4x32xf32, #tpu.memory_space<vmem>>, vector<1x32xf32>
    %446 = vector.shape_cast %445 : vector<1x32xf32> to vector<32xf32>
    %cst_156 = arith.constant dense<0.000000e+00> : vector<64xf32>
    %447 = vector.multi_reduction <add>, %442, %cst_156 [1] : vector<64x32xf32> to vector<64xf32>
    %448 = vector.shape_cast %447 : vector<64xf32> to vector<64x1xf32>
    %cst_157 = arith.constant 3.200000e+01 : f32
    %449 = vector.broadcast %cst_157 : f32 to vector<64x1xf32>
    %450 = arith.divf %448, %449 : vector<64x1xf32>
    %451 = vector.broadcast %450 : vector<64x1xf32> to vector<64x32xf32>
    %452 = arith.subf %442, %451 : vector<64x32xf32>
    %453 = arith.mulf %452, %452 : vector<64x32xf32>
    %cst_158 = arith.constant dense<0.000000e+00> : vector<64xf32>
    %454 = vector.multi_reduction <add>, %453, %cst_158 [1] : vector<64x32xf32> to vector<64xf32>
    %455 = vector.shape_cast %454 : vector<64xf32> to vector<64x1xf32>
    %cst_159 = arith.constant 3.200000e+01 : f32
    %456 = vector.broadcast %cst_159 : f32 to vector<64x1xf32>
    %457 = arith.divf %455, %456 : vector<64x1xf32>
    %458 = vector.broadcast %450 : vector<64x1xf32> to vector<64x32xf32>
    %459 = arith.subf %442, %458 : vector<64x32xf32>
    %cst_160 = arith.constant 9.99999974E-6 : f32
    %460 = vector.broadcast %cst_160 : f32 to vector<64x1xf32>
    %461 = arith.addf %457, %460 : vector<64x1xf32>
    %462 = math.rsqrt %461 : vector<64x1xf32>
    %463 = vector.broadcast %462 : vector<64x1xf32> to vector<64x32xf32>
    %464 = arith.mulf %459, %463 : vector<64x32xf32>
    %465 = vector.shape_cast %444 : vector<32xf32> to vector<1x32xf32>
    %466 = vector.broadcast %465 : vector<1x32xf32> to vector<64x32xf32>
    %467 = arith.mulf %464, %466 : vector<64x32xf32>
    %468 = vector.shape_cast %446 : vector<32xf32> to vector<1x32xf32>
    %469 = vector.broadcast %468 : vector<1x32xf32> to vector<64x32xf32>
    %470 = arith.addf %467, %469 : vector<64x32xf32>
    %c2_161 = arith.constant 2 : index
    %c0_162 = arith.constant 0 : index
    %c0_163 = arith.constant 0 : index
    %471 = vector.load %arg10[%c2_161, %c0_162, %c0_163] : memref<4x32x128xbf16, #tpu.memory_space<vmem>>, vector<1x32x128xbf16>
    %472 = vector.shape_cast %471 : vector<1x32x128xbf16> to vector<32x128xbf16>
    %473 = arith.truncf %470 : vector<64x32xf32> to vector<64x32xbf16>
    %cst_164 = arith.constant dense<0.000000e+00> : vector<64x128xf32>
    %474 = tpu.matmul %473, %472, %cst_164 {dimension_numbers = #tpu.dot_dimension_numbers<[1], [0], [0], [1], [0, 0, 1, 1], [], []>} : vector<64x32xbf16>, vector<32x128xbf16>, vector<64x128xf32> -> vector<64x128xf32>
    %475 = vector.shape_cast %474 : vector<64x128xf32> to vector<4x16x128xf32>
    %cst_165 = arith.constant 0.000000e+00 : f32
    %476 = vector.broadcast %cst_165 : f32 to vector<4x16x32xf32>
    %477 = vector.extract_strided_slice %475 {offsets = [0, 0, 0], sizes = [4, 16, 16], strides = [1, 1, 1]} : vector<4x16x128xf32> to vector<4x16x16xf32>
    %478 = vector.extract_strided_slice %475 {offsets = [0, 0, 32], sizes = [4, 16, 16], strides = [1, 1, 1]} : vector<4x16x128xf32> to vector<4x16x16xf32>
    %479 = vector.extract_strided_slice %475 {offsets = [0, 0, 64], sizes = [4, 16, 32], strides = [1, 1, 1]} : vector<4x16x128xf32> to vector<4x16x32xf32>
    %480 = arith.truncf %477 : vector<4x16x16xf32> to vector<4x16x16xbf16>
    %481 = arith.truncf %478 : vector<4x16x16xf32> to vector<4x16x16xbf16>
    "tpu.trace_start"() <{level = 10 : i32, message = "rne,rme->rnm"}> : () -> ()
    %cst_166 = arith.constant dense<0.000000e+00> : vector<4x16x16xf32>
    %482 = tpu.matmul %480, %481, %cst_166 {dimension_numbers = #tpu.dot_dimension_numbers<[2], [2], [1], [1], [0, 0, 0, 1, 1, 1], [0], [0]>} : vector<4x16x16xbf16>, vector<4x16x16xbf16>, vector<4x16x16xf32> -> vector<4x16x16xf32>
    "tpu.trace_stop"() : () -> ()
    %cst_167 = arith.constant dense<0xFF800000> : vector<4x16xf32>
    %483 = vector.multi_reduction <maximumf>, %482, %cst_167 [2] : vector<4x16x16xf32> to vector<4x16xf32>
    %484 = vector.shape_cast %483 : vector<4x16xf32> to vector<4x16x1xf32>
    %485 = vector.broadcast %484 : vector<4x16x1xf32> to vector<4x16x16xf32>
    %486 = arith.subf %482, %485 : vector<4x16x16xf32>
    %487 = math.exp %486 : vector<4x16x16xf32>
    %cst_168 = arith.constant dense<0.000000e+00> : vector<4x16xf32>
    %488 = vector.multi_reduction <add>, %487, %cst_168 [2] : vector<4x16x16xf32> to vector<4x16xf32>
    %489 = vector.shape_cast %488 : vector<4x16xf32> to vector<4x16x1xf32>
    %490 = tpu.reciprocal %489 {approx = true} : vector<4x16x1xf32> -> vector<4x16x1xf32>
    %491 = vector.broadcast %490 : vector<4x16x1xf32> to vector<4x16x16xf32>
    %492 = arith.mulf %487, %491 : vector<4x16x16xf32>
    %493 = arith.truncf %492 : vector<4x16x16xf32> to vector<4x16x16xbf16>
    %494 = arith.truncf %479 : vector<4x16x32xf32> to vector<4x16x32xbf16>
    "tpu.trace_start"() <{level = 10 : i32, message = "rnm,rmd->rnd"}> : () -> ()
    %cst_169 = arith.constant dense<0.000000e+00> : vector<4x16x32xf32>
    %495 = tpu.matmul %493, %494, %cst_169 {dimension_numbers = #tpu.dot_dimension_numbers<[2], [1], [1], [2], [0, 0, 0, 1, 1, 2], [0], [0]>} : vector<4x16x16xbf16>, vector<4x16x32xbf16>, vector<4x16x32xf32> -> vector<4x16x32xf32>
    "tpu.trace_stop"() : () -> ()
    %496 = arith.addf %476, %495 : vector<4x16x32xf32>
    %497 = vector.extract_strided_slice %475 {offsets = [0, 0, 16], sizes = [4, 16, 16], strides = [1, 1, 1]} : vector<4x16x128xf32> to vector<4x16x16xf32>
    %498 = vector.extract_strided_slice %475 {offsets = [0, 0, 48], sizes = [4, 16, 16], strides = [1, 1, 1]} : vector<4x16x128xf32> to vector<4x16x16xf32>
    %499 = vector.extract_strided_slice %475 {offsets = [0, 0, 96], sizes = [4, 16, 32], strides = [1, 1, 1]} : vector<4x16x128xf32> to vector<4x16x32xf32>
    %500 = arith.truncf %497 : vector<4x16x16xf32> to vector<4x16x16xbf16>
    %501 = arith.truncf %498 : vector<4x16x16xf32> to vector<4x16x16xbf16>
    "tpu.trace_start"() <{level = 10 : i32, message = "rne,rme->rnm"}> : () -> ()
    %cst_170 = arith.constant dense<0.000000e+00> : vector<4x16x16xf32>
    %502 = tpu.matmul %500, %501, %cst_170 {dimension_numbers = #tpu.dot_dimension_numbers<[2], [2], [1], [1], [0, 0, 0, 1, 1, 1], [0], [0]>} : vector<4x16x16xbf16>, vector<4x16x16xbf16>, vector<4x16x16xf32> -> vector<4x16x16xf32>
    "tpu.trace_stop"() : () -> ()
    %cst_171 = arith.constant dense<0xFF800000> : vector<4x16xf32>
    %503 = vector.multi_reduction <maximumf>, %502, %cst_171 [2] : vector<4x16x16xf32> to vector<4x16xf32>
    %504 = vector.shape_cast %503 : vector<4x16xf32> to vector<4x16x1xf32>
    %505 = vector.broadcast %504 : vector<4x16x1xf32> to vector<4x16x16xf32>
    %506 = arith.subf %502, %505 : vector<4x16x16xf32>
    %507 = math.exp %506 : vector<4x16x16xf32>
    %cst_172 = arith.constant dense<0.000000e+00> : vector<4x16xf32>
    %508 = vector.multi_reduction <add>, %507, %cst_172 [2] : vector<4x16x16xf32> to vector<4x16xf32>
    %509 = vector.shape_cast %508 : vector<4x16xf32> to vector<4x16x1xf32>
    %510 = tpu.reciprocal %509 {approx = true} : vector<4x16x1xf32> -> vector<4x16x1xf32>
    %511 = vector.broadcast %510 : vector<4x16x1xf32> to vector<4x16x16xf32>
    %512 = arith.mulf %507, %511 : vector<4x16x16xf32>
    %513 = arith.truncf %512 : vector<4x16x16xf32> to vector<4x16x16xbf16>
    %514 = arith.truncf %499 : vector<4x16x32xf32> to vector<4x16x32xbf16>
    "tpu.trace_start"() <{level = 10 : i32, message = "rnm,rmd->rnd"}> : () -> ()
    %cst_173 = arith.constant dense<0.000000e+00> : vector<4x16x32xf32>
    %515 = tpu.matmul %513, %514, %cst_173 {dimension_numbers = #tpu.dot_dimension_numbers<[2], [1], [1], [2], [0, 0, 0, 1, 1, 2], [0], [0]>} : vector<4x16x16xbf16>, vector<4x16x32xbf16>, vector<4x16x32xf32> -> vector<4x16x32xf32>
    "tpu.trace_stop"() : () -> ()
    %516 = arith.addf %496, %515 : vector<4x16x32xf32>
    %c2_174 = arith.constant 2 : index
    %c0_175 = arith.constant 0 : index
    %517 = vector.load %arg11[%c2_174, %c0_175] : memref<4x32xf32, #tpu.memory_space<vmem>>, vector<1x32xf32>
    %518 = vector.shape_cast %517 : vector<1x32xf32> to vector<32xf32>
    %519 = vector.shape_cast %518 : vector<32xf32> to vector<1x32xf32>
    %520 = vector.broadcast %519 : vector<1x32xf32> to vector<64x32xf32>
    %521 = arith.addf %442, %520 : vector<64x32xf32>
    %522 = vector.shape_cast %516 : vector<4x16x32xf32> to vector<64x32xf32>
    %523 = arith.addf %521, %522 : vector<64x32xf32>
    %c2_176 = arith.constant 2 : index
    %c0_177 = arith.constant 0 : index
    %524 = vector.load %arg12[%c2_176, %c0_177] : memref<4x32xf32, #tpu.memory_space<vmem>>, vector<1x32xf32>
    %525 = vector.shape_cast %524 : vector<1x32xf32> to vector<32xf32>
    %c2_178 = arith.constant 2 : index
    %c0_179 = arith.constant 0 : index
    %526 = vector.load %arg13[%c2_178, %c0_179] : memref<4x32xf32, #tpu.memory_space<vmem>>, vector<1x32xf32>
    %527 = vector.shape_cast %526 : vector<1x32xf32> to vector<32xf32>
    %cst_180 = arith.constant dense<0.000000e+00> : vector<64xf32>
    %528 = vector.multi_reduction <add>, %523, %cst_180 [1] : vector<64x32xf32> to vector<64xf32>
    %529 = vector.shape_cast %528 : vector<64xf32> to vector<64x1xf32>
    %cst_181 = arith.constant 3.200000e+01 : f32
    %530 = vector.broadcast %cst_181 : f32 to vector<64x1xf32>
    %531 = arith.divf %529, %530 : vector<64x1xf32>
    %532 = vector.broadcast %531 : vector<64x1xf32> to vector<64x32xf32>
    %533 = arith.subf %523, %532 : vector<64x32xf32>
    %534 = arith.mulf %533, %533 : vector<64x32xf32>
    %cst_182 = arith.constant dense<0.000000e+00> : vector<64xf32>
    %535 = vector.multi_reduction <add>, %534, %cst_182 [1] : vector<64x32xf32> to vector<64xf32>
    %536 = vector.shape_cast %535 : vector<64xf32> to vector<64x1xf32>
    %cst_183 = arith.constant 3.200000e+01 : f32
    %537 = vector.broadcast %cst_183 : f32 to vector<64x1xf32>
    %538 = arith.divf %536, %537 : vector<64x1xf32>
    %539 = vector.broadcast %531 : vector<64x1xf32> to vector<64x32xf32>
    %540 = arith.subf %523, %539 : vector<64x32xf32>
    %cst_184 = arith.constant 9.99999974E-6 : f32
    %541 = vector.broadcast %cst_184 : f32 to vector<64x1xf32>
    %542 = arith.addf %538, %541 : vector<64x1xf32>
    %543 = math.rsqrt %542 : vector<64x1xf32>
    %544 = vector.broadcast %543 : vector<64x1xf32> to vector<64x32xf32>
    %545 = arith.mulf %540, %544 : vector<64x32xf32>
    %546 = vector.shape_cast %525 : vector<32xf32> to vector<1x32xf32>
    %547 = vector.broadcast %546 : vector<1x32xf32> to vector<64x32xf32>
    %548 = arith.mulf %545, %547 : vector<64x32xf32>
    %549 = vector.shape_cast %527 : vector<32xf32> to vector<1x32xf32>
    %550 = vector.broadcast %549 : vector<1x32xf32> to vector<64x32xf32>
    %551 = arith.addf %548, %550 : vector<64x32xf32>
    %c2_185 = arith.constant 2 : index
    %c0_186 = arith.constant 0 : index
    %c0_187 = arith.constant 0 : index
    %552 = vector.load %arg14[%c2_185, %c0_186, %c0_187] : memref<4x32x64xbf16, #tpu.memory_space<vmem>>, vector<1x32x64xbf16>
    %553 = vector.shape_cast %552 : vector<1x32x64xbf16> to vector<32x64xbf16>
    %c2_188 = arith.constant 2 : index
    %c0_189 = arith.constant 0 : index
    %554 = vector.load %arg15[%c2_188, %c0_189] : memref<4x64xf32, #tpu.memory_space<vmem>>, vector<1x64xf32>
    %555 = vector.shape_cast %554 : vector<1x64xf32> to vector<64xf32>
    %556 = arith.truncf %551 : vector<64x32xf32> to vector<64x32xbf16>
    %cst_190 = arith.constant dense<0.000000e+00> : vector<64x64xf32>
    %557 = tpu.matmul %556, %553, %cst_190 {dimension_numbers = #tpu.dot_dimension_numbers<[1], [0], [0], [1], [0, 0, 1, 1], [], []>} : vector<64x32xbf16>, vector<32x64xbf16>, vector<64x64xf32> -> vector<64x64xf32>
    %558 = vector.shape_cast %555 : vector<64xf32> to vector<1x64xf32>
    %559 = vector.broadcast %558 : vector<1x64xf32> to vector<64x64xf32>
    %560 = arith.addf %557, %559 : vector<64x64xf32>
    %cst_191 = arith.constant 0.707106769 : f32
    %561 = vector.broadcast %cst_191 : f32 to vector<64x64xf32>
    %562 = arith.mulf %560, %561 : vector<64x64xf32>
    %cst_192 = arith.constant 0.000000e+00 : f32
    %563 = vector.broadcast %cst_192 : f32 to vector<64x64xf32>
    %564 = arith.cmpf olt, %562, %563 : vector<64x64xf32>
    %cst_193 = arith.constant -1.000000e+00 : f32
    %cst_194 = arith.constant 1.000000e+00 : f32
    %565 = vector.broadcast %cst_193 : f32 to vector<64x64xf32>
    %566 = vector.broadcast %cst_194 : f32 to vector<64x64xf32>
    %567 = arith.select %564, %565, %566 : vector<64x64xi1>, vector<64x64xf32>
    %568 = math.absf %562 : vector<64x64xf32>
    %cst_195 = arith.constant 0.327591091 : f32
    %569 = vector.broadcast %cst_195 : f32 to vector<64x64xf32>
    %570 = arith.mulf %569, %568 : vector<64x64xf32>
    %cst_196 = arith.constant 1.000000e+00 : f32
    %571 = vector.broadcast %cst_196 : f32 to vector<64x64xf32>
    %572 = arith.addf %571, %570 : vector<64x64xf32>
    %573 = tpu.reciprocal %572 {approx = true} : vector<64x64xf32> -> vector<64x64xf32>
    %cst_197 = arith.constant 1.06140542 : f32
    %574 = vector.broadcast %cst_197 : f32 to vector<64x64xf32>
    %575 = arith.mulf %574, %573 : vector<64x64xf32>
    %cst_198 = arith.constant -1.45315206 : f32
    %576 = vector.broadcast %cst_198 : f32 to vector<64x64xf32>
    %577 = arith.addf %575, %576 : vector<64x64xf32>
    %578 = arith.mulf %577, %573 : vector<64x64xf32>
    %cst_199 = arith.constant 1.42141378 : f32
    %579 = vector.broadcast %cst_199 : f32 to vector<64x64xf32>
    %580 = arith.addf %578, %579 : vector<64x64xf32>
    %581 = arith.mulf %580, %573 : vector<64x64xf32>
    %cst_200 = arith.constant -0.284496725 : f32
    %582 = vector.broadcast %cst_200 : f32 to vector<64x64xf32>
    %583 = arith.addf %581, %582 : vector<64x64xf32>
    %584 = arith.mulf %583, %573 : vector<64x64xf32>
    %cst_201 = arith.constant 0.254829586 : f32
    %585 = vector.broadcast %cst_201 : f32 to vector<64x64xf32>
    %586 = arith.addf %584, %585 : vector<64x64xf32>
    %587 = arith.mulf %586, %573 : vector<64x64xf32>
    %cst_202 = arith.constant 0.000000e+00 : f32
    %588 = vector.broadcast %cst_202 : f32 to vector<64x64xf32>
    %589 = arith.subf %588, %568 : vector<64x64xf32>
    %590 = arith.mulf %589, %568 : vector<64x64xf32>
    %591 = math.exp %590 : vector<64x64xf32>
    %592 = arith.mulf %587, %591 : vector<64x64xf32>
    %cst_203 = arith.constant 1.000000e+00 : f32
    %593 = vector.broadcast %cst_203 : f32 to vector<64x64xf32>
    %594 = arith.subf %593, %592 : vector<64x64xf32>
    %595 = arith.mulf %567, %594 : vector<64x64xf32>
    %cst_204 = arith.constant 5.000000e-01 : f32
    %596 = vector.broadcast %cst_204 : f32 to vector<64x64xf32>
    %597 = arith.mulf %596, %560 : vector<64x64xf32>
    %cst_205 = arith.constant 1.000000e+00 : f32
    %598 = vector.broadcast %cst_205 : f32 to vector<64x64xf32>
    %599 = arith.addf %598, %595 : vector<64x64xf32>
    %600 = arith.mulf %597, %599 : vector<64x64xf32>
    %c2_206 = arith.constant 2 : index
    %c0_207 = arith.constant 0 : index
    %c0_208 = arith.constant 0 : index
    %601 = vector.load %arg16[%c2_206, %c0_207, %c0_208] : memref<4x64x32xbf16, #tpu.memory_space<vmem>>, vector<1x64x32xbf16>
    %602 = vector.shape_cast %601 : vector<1x64x32xbf16> to vector<64x32xbf16>
    %c2_209 = arith.constant 2 : index
    %c0_210 = arith.constant 0 : index
    %603 = vector.load %arg17[%c2_209, %c0_210] : memref<4x32xf32, #tpu.memory_space<vmem>>, vector<1x32xf32>
    %604 = vector.shape_cast %603 : vector<1x32xf32> to vector<32xf32>
    %605 = arith.truncf %600 : vector<64x64xf32> to vector<64x64xbf16>
    %cst_211 = arith.constant dense<0.000000e+00> : vector<64x32xf32>
    %606 = tpu.matmul %605, %602, %cst_211 {dimension_numbers = #tpu.dot_dimension_numbers<[1], [0], [0], [1], [0, 0, 1, 1], [], []>} : vector<64x64xbf16>, vector<64x32xbf16>, vector<64x32xf32> -> vector<64x32xf32>
    %607 = vector.shape_cast %604 : vector<32xf32> to vector<1x32xf32>
    %608 = vector.broadcast %607 : vector<1x32xf32> to vector<64x32xf32>
    %609 = arith.addf %606, %608 : vector<64x32xf32>
    %610 = arith.addf %609, %523 : vector<64x32xf32>
    %c3 = arith.constant 3 : index
    %c0_212 = arith.constant 0 : index
    %611 = vector.load %arg8[%c3, %c0_212] : memref<4x32xf32, #tpu.memory_space<vmem>>, vector<1x32xf32>
    %612 = vector.shape_cast %611 : vector<1x32xf32> to vector<32xf32>
    %c3_213 = arith.constant 3 : index
    %c0_214 = arith.constant 0 : index
    %613 = vector.load %arg9[%c3_213, %c0_214] : memref<4x32xf32, #tpu.memory_space<vmem>>, vector<1x32xf32>
    %614 = vector.shape_cast %613 : vector<1x32xf32> to vector<32xf32>
    %cst_215 = arith.constant dense<0.000000e+00> : vector<64xf32>
    %615 = vector.multi_reduction <add>, %610, %cst_215 [1] : vector<64x32xf32> to vector<64xf32>
    %616 = vector.shape_cast %615 : vector<64xf32> to vector<64x1xf32>
    %cst_216 = arith.constant 3.200000e+01 : f32
    %617 = vector.broadcast %cst_216 : f32 to vector<64x1xf32>
    %618 = arith.divf %616, %617 : vector<64x1xf32>
    %619 = vector.broadcast %618 : vector<64x1xf32> to vector<64x32xf32>
    %620 = arith.subf %610, %619 : vector<64x32xf32>
    %621 = arith.mulf %620, %620 : vector<64x32xf32>
    %cst_217 = arith.constant dense<0.000000e+00> : vector<64xf32>
    %622 = vector.multi_reduction <add>, %621, %cst_217 [1] : vector<64x32xf32> to vector<64xf32>
    %623 = vector.shape_cast %622 : vector<64xf32> to vector<64x1xf32>
    %cst_218 = arith.constant 3.200000e+01 : f32
    %624 = vector.broadcast %cst_218 : f32 to vector<64x1xf32>
    %625 = arith.divf %623, %624 : vector<64x1xf32>
    %626 = vector.broadcast %618 : vector<64x1xf32> to vector<64x32xf32>
    %627 = arith.subf %610, %626 : vector<64x32xf32>
    %cst_219 = arith.constant 9.99999974E-6 : f32
    %628 = vector.broadcast %cst_219 : f32 to vector<64x1xf32>
    %629 = arith.addf %625, %628 : vector<64x1xf32>
    %630 = math.rsqrt %629 : vector<64x1xf32>
    %631 = vector.broadcast %630 : vector<64x1xf32> to vector<64x32xf32>
    %632 = arith.mulf %627, %631 : vector<64x32xf32>
    %633 = vector.shape_cast %612 : vector<32xf32> to vector<1x32xf32>
    %634 = vector.broadcast %633 : vector<1x32xf32> to vector<64x32xf32>
    %635 = arith.mulf %632, %634 : vector<64x32xf32>
    %636 = vector.shape_cast %614 : vector<32xf32> to vector<1x32xf32>
    %637 = vector.broadcast %636 : vector<1x32xf32> to vector<64x32xf32>
    %638 = arith.addf %635, %637 : vector<64x32xf32>
    %c3_220 = arith.constant 3 : index
    %c0_221 = arith.constant 0 : index
    %c0_222 = arith.constant 0 : index
    %639 = vector.load %arg10[%c3_220, %c0_221, %c0_222] : memref<4x32x128xbf16, #tpu.memory_space<vmem>>, vector<1x32x128xbf16>
    %640 = vector.shape_cast %639 : vector<1x32x128xbf16> to vector<32x128xbf16>
    %641 = arith.truncf %638 : vector<64x32xf32> to vector<64x32xbf16>
    %cst_223 = arith.constant dense<0.000000e+00> : vector<64x128xf32>
    %642 = tpu.matmul %641, %640, %cst_223 {dimension_numbers = #tpu.dot_dimension_numbers<[1], [0], [0], [1], [0, 0, 1, 1], [], []>} : vector<64x32xbf16>, vector<32x128xbf16>, vector<64x128xf32> -> vector<64x128xf32>
    %643 = vector.shape_cast %642 : vector<64x128xf32> to vector<4x16x128xf32>
    %cst_224 = arith.constant 0.000000e+00 : f32
    %644 = vector.broadcast %cst_224 : f32 to vector<4x16x32xf32>
    %645 = vector.extract_strided_slice %643 {offsets = [0, 0, 0], sizes = [4, 16, 16], strides = [1, 1, 1]} : vector<4x16x128xf32> to vector<4x16x16xf32>
    %646 = vector.extract_strided_slice %643 {offsets = [0, 0, 32], sizes = [4, 16, 16], strides = [1, 1, 1]} : vector<4x16x128xf32> to vector<4x16x16xf32>
    %647 = vector.extract_strided_slice %643 {offsets = [0, 0, 64], sizes = [4, 16, 32], strides = [1, 1, 1]} : vector<4x16x128xf32> to vector<4x16x32xf32>
    %648 = arith.truncf %645 : vector<4x16x16xf32> to vector<4x16x16xbf16>
    %649 = arith.truncf %646 : vector<4x16x16xf32> to vector<4x16x16xbf16>
    "tpu.trace_start"() <{level = 10 : i32, message = "rne,rme->rnm"}> : () -> ()
    %cst_225 = arith.constant dense<0.000000e+00> : vector<4x16x16xf32>
    %650 = tpu.matmul %648, %649, %cst_225 {dimension_numbers = #tpu.dot_dimension_numbers<[2], [2], [1], [1], [0, 0, 0, 1, 1, 1], [0], [0]>} : vector<4x16x16xbf16>, vector<4x16x16xbf16>, vector<4x16x16xf32> -> vector<4x16x16xf32>
    "tpu.trace_stop"() : () -> ()
    %cst_226 = arith.constant dense<0xFF800000> : vector<4x16xf32>
    %651 = vector.multi_reduction <maximumf>, %650, %cst_226 [2] : vector<4x16x16xf32> to vector<4x16xf32>
    %652 = vector.shape_cast %651 : vector<4x16xf32> to vector<4x16x1xf32>
    %653 = vector.broadcast %652 : vector<4x16x1xf32> to vector<4x16x16xf32>
    %654 = arith.subf %650, %653 : vector<4x16x16xf32>
    %655 = math.exp %654 : vector<4x16x16xf32>
    %cst_227 = arith.constant dense<0.000000e+00> : vector<4x16xf32>
    %656 = vector.multi_reduction <add>, %655, %cst_227 [2] : vector<4x16x16xf32> to vector<4x16xf32>
    %657 = vector.shape_cast %656 : vector<4x16xf32> to vector<4x16x1xf32>
    %658 = tpu.reciprocal %657 {approx = true} : vector<4x16x1xf32> -> vector<4x16x1xf32>
    %659 = vector.broadcast %658 : vector<4x16x1xf32> to vector<4x16x16xf32>
    %660 = arith.mulf %655, %659 : vector<4x16x16xf32>
    %661 = arith.truncf %660 : vector<4x16x16xf32> to vector<4x16x16xbf16>
    %662 = arith.truncf %647 : vector<4x16x32xf32> to vector<4x16x32xbf16>
    "tpu.trace_start"() <{level = 10 : i32, message = "rnm,rmd->rnd"}> : () -> ()
    %cst_228 = arith.constant dense<0.000000e+00> : vector<4x16x32xf32>
    %663 = tpu.matmul %661, %662, %cst_228 {dimension_numbers = #tpu.dot_dimension_numbers<[2], [1], [1], [2], [0, 0, 0, 1, 1, 2], [0], [0]>} : vector<4x16x16xbf16>, vector<4x16x32xbf16>, vector<4x16x32xf32> -> vector<4x16x32xf32>
    "tpu.trace_stop"() : () -> ()
    %664 = arith.addf %644, %663 : vector<4x16x32xf32>
    %665 = vector.extract_strided_slice %643 {offsets = [0, 0, 16], sizes = [4, 16, 16], strides = [1, 1, 1]} : vector<4x16x128xf32> to vector<4x16x16xf32>
    %666 = vector.extract_strided_slice %643 {offsets = [0, 0, 48], sizes = [4, 16, 16], strides = [1, 1, 1]} : vector<4x16x128xf32> to vector<4x16x16xf32>
    %667 = vector.extract_strided_slice %643 {offsets = [0, 0, 96], sizes = [4, 16, 32], strides = [1, 1, 1]} : vector<4x16x128xf32> to vector<4x16x32xf32>
    %668 = arith.truncf %665 : vector<4x16x16xf32> to vector<4x16x16xbf16>
    %669 = arith.truncf %666 : vector<4x16x16xf32> to vector<4x16x16xbf16>
    "tpu.trace_start"() <{level = 10 : i32, message = "rne,rme->rnm"}> : () -> ()
    %cst_229 = arith.constant dense<0.000000e+00> : vector<4x16x16xf32>
    %670 = tpu.matmul %668, %669, %cst_229 {dimension_numbers = #tpu.dot_dimension_numbers<[2], [2], [1], [1], [0, 0, 0, 1, 1, 1], [0], [0]>} : vector<4x16x16xbf16>, vector<4x16x16xbf16>, vector<4x16x16xf32> -> vector<4x16x16xf32>
    "tpu.trace_stop"() : () -> ()
    %cst_230 = arith.constant dense<0xFF800000> : vector<4x16xf32>
    %671 = vector.multi_reduction <maximumf>, %670, %cst_230 [2] : vector<4x16x16xf32> to vector<4x16xf32>
    %672 = vector.shape_cast %671 : vector<4x16xf32> to vector<4x16x1xf32>
    %673 = vector.broadcast %672 : vector<4x16x1xf32> to vector<4x16x16xf32>
    %674 = arith.subf %670, %673 : vector<4x16x16xf32>
    %675 = math.exp %674 : vector<4x16x16xf32>
    %cst_231 = arith.constant dense<0.000000e+00> : vector<4x16xf32>
    %676 = vector.multi_reduction <add>, %675, %cst_231 [2] : vector<4x16x16xf32> to vector<4x16xf32>
    %677 = vector.shape_cast %676 : vector<4x16xf32> to vector<4x16x1xf32>
    %678 = tpu.reciprocal %677 {approx = true} : vector<4x16x1xf32> -> vector<4x16x1xf32>
    %679 = vector.broadcast %678 : vector<4x16x1xf32> to vector<4x16x16xf32>
    %680 = arith.mulf %675, %679 : vector<4x16x16xf32>
    %681 = arith.truncf %680 : vector<4x16x16xf32> to vector<4x16x16xbf16>
    %682 = arith.truncf %667 : vector<4x16x32xf32> to vector<4x16x32xbf16>
    "tpu.trace_start"() <{level = 10 : i32, message = "rnm,rmd->rnd"}> : () -> ()
    %cst_232 = arith.constant dense<0.000000e+00> : vector<4x16x32xf32>
    %683 = tpu.matmul %681, %682, %cst_232 {dimension_numbers = #tpu.dot_dimension_numbers<[2], [1], [1], [2], [0, 0, 0, 1, 1, 2], [0], [0]>} : vector<4x16x16xbf16>, vector<4x16x32xbf16>, vector<4x16x32xf32> -> vector<4x16x32xf32>
    "tpu.trace_stop"() : () -> ()
    %684 = arith.addf %664, %683 : vector<4x16x32xf32>
    %c3_233 = arith.constant 3 : index
    %c0_234 = arith.constant 0 : index
    %685 = vector.load %arg11[%c3_233, %c0_234] : memref<4x32xf32, #tpu.memory_space<vmem>>, vector<1x32xf32>
    %686 = vector.shape_cast %685 : vector<1x32xf32> to vector<32xf32>
    %687 = vector.shape_cast %686 : vector<32xf32> to vector<1x32xf32>
    %688 = vector.broadcast %687 : vector<1x32xf32> to vector<64x32xf32>
    %689 = arith.addf %610, %688 : vector<64x32xf32>
    %690 = vector.shape_cast %684 : vector<4x16x32xf32> to vector<64x32xf32>
    %691 = arith.addf %689, %690 : vector<64x32xf32>
    %c3_235 = arith.constant 3 : index
    %c0_236 = arith.constant 0 : index
    %692 = vector.load %arg12[%c3_235, %c0_236] : memref<4x32xf32, #tpu.memory_space<vmem>>, vector<1x32xf32>
    %693 = vector.shape_cast %692 : vector<1x32xf32> to vector<32xf32>
    %c3_237 = arith.constant 3 : index
    %c0_238 = arith.constant 0 : index
    %694 = vector.load %arg13[%c3_237, %c0_238] : memref<4x32xf32, #tpu.memory_space<vmem>>, vector<1x32xf32>
    %695 = vector.shape_cast %694 : vector<1x32xf32> to vector<32xf32>
    %cst_239 = arith.constant dense<0.000000e+00> : vector<64xf32>
    %696 = vector.multi_reduction <add>, %691, %cst_239 [1] : vector<64x32xf32> to vector<64xf32>
    %697 = vector.shape_cast %696 : vector<64xf32> to vector<64x1xf32>
    %cst_240 = arith.constant 3.200000e+01 : f32
    %698 = vector.broadcast %cst_240 : f32 to vector<64x1xf32>
    %699 = arith.divf %697, %698 : vector<64x1xf32>
    %700 = vector.broadcast %699 : vector<64x1xf32> to vector<64x32xf32>
    %701 = arith.subf %691, %700 : vector<64x32xf32>
    %702 = arith.mulf %701, %701 : vector<64x32xf32>
    %cst_241 = arith.constant dense<0.000000e+00> : vector<64xf32>
    %703 = vector.multi_reduction <add>, %702, %cst_241 [1] : vector<64x32xf32> to vector<64xf32>
    %704 = vector.shape_cast %703 : vector<64xf32> to vector<64x1xf32>
    %cst_242 = arith.constant 3.200000e+01 : f32
    %705 = vector.broadcast %cst_242 : f32 to vector<64x1xf32>
    %706 = arith.divf %704, %705 : vector<64x1xf32>
    %707 = vector.broadcast %699 : vector<64x1xf32> to vector<64x32xf32>
    %708 = arith.subf %691, %707 : vector<64x32xf32>
    %cst_243 = arith.constant 9.99999974E-6 : f32
    %709 = vector.broadcast %cst_243 : f32 to vector<64x1xf32>
    %710 = arith.addf %706, %709 : vector<64x1xf32>
    %711 = math.rsqrt %710 : vector<64x1xf32>
    %712 = vector.broadcast %711 : vector<64x1xf32> to vector<64x32xf32>
    %713 = arith.mulf %708, %712 : vector<64x32xf32>
    %714 = vector.shape_cast %693 : vector<32xf32> to vector<1x32xf32>
    %715 = vector.broadcast %714 : vector<1x32xf32> to vector<64x32xf32>
    %716 = arith.mulf %713, %715 : vector<64x32xf32>
    %717 = vector.shape_cast %695 : vector<32xf32> to vector<1x32xf32>
    %718 = vector.broadcast %717 : vector<1x32xf32> to vector<64x32xf32>
    %719 = arith.addf %716, %718 : vector<64x32xf32>
    %c3_244 = arith.constant 3 : index
    %c0_245 = arith.constant 0 : index
    %c0_246 = arith.constant 0 : index
    %720 = vector.load %arg14[%c3_244, %c0_245, %c0_246] : memref<4x32x64xbf16, #tpu.memory_space<vmem>>, vector<1x32x64xbf16>
    %721 = vector.shape_cast %720 : vector<1x32x64xbf16> to vector<32x64xbf16>
    %c3_247 = arith.constant 3 : index
    %c0_248 = arith.constant 0 : index
    %722 = vector.load %arg15[%c3_247, %c0_248] : memref<4x64xf32, #tpu.memory_space<vmem>>, vector<1x64xf32>
    %723 = vector.shape_cast %722 : vector<1x64xf32> to vector<64xf32>
    %724 = arith.truncf %719 : vector<64x32xf32> to vector<64x32xbf16>
    %cst_249 = arith.constant dense<0.000000e+00> : vector<64x64xf32>
    %725 = tpu.matmul %724, %721, %cst_249 {dimension_numbers = #tpu.dot_dimension_numbers<[1], [0], [0], [1], [0, 0, 1, 1], [], []>} : vector<64x32xbf16>, vector<32x64xbf16>, vector<64x64xf32> -> vector<64x64xf32>
    %726 = vector.shape_cast %723 : vector<64xf32> to vector<1x64xf32>
    %727 = vector.broadcast %726 : vector<1x64xf32> to vector<64x64xf32>
    %728 = arith.addf %725, %727 : vector<64x64xf32>
    %cst_250 = arith.constant 0.707106769 : f32
    %729 = vector.broadcast %cst_250 : f32 to vector<64x64xf32>
    %730 = arith.mulf %728, %729 : vector<64x64xf32>
    %cst_251 = arith.constant 0.000000e+00 : f32
    %731 = vector.broadcast %cst_251 : f32 to vector<64x64xf32>
    %732 = arith.cmpf olt, %730, %731 : vector<64x64xf32>
    %cst_252 = arith.constant -1.000000e+00 : f32
    %cst_253 = arith.constant 1.000000e+00 : f32
    %733 = vector.broadcast %cst_252 : f32 to vector<64x64xf32>
    %734 = vector.broadcast %cst_253 : f32 to vector<64x64xf32>
    %735 = arith.select %732, %733, %734 : vector<64x64xi1>, vector<64x64xf32>
    %736 = math.absf %730 : vector<64x64xf32>
    %cst_254 = arith.constant 0.327591091 : f32
    %737 = vector.broadcast %cst_254 : f32 to vector<64x64xf32>
    %738 = arith.mulf %737, %736 : vector<64x64xf32>
    %cst_255 = arith.constant 1.000000e+00 : f32
    %739 = vector.broadcast %cst_255 : f32 to vector<64x64xf32>
    %740 = arith.addf %739, %738 : vector<64x64xf32>
    %741 = tpu.reciprocal %740 {approx = true} : vector<64x64xf32> -> vector<64x64xf32>
    %cst_256 = arith.constant 1.06140542 : f32
    %742 = vector.broadcast %cst_256 : f32 to vector<64x64xf32>
    %743 = arith.mulf %742, %741 : vector<64x64xf32>
    %cst_257 = arith.constant -1.45315206 : f32
    %744 = vector.broadcast %cst_257 : f32 to vector<64x64xf32>
    %745 = arith.addf %743, %744 : vector<64x64xf32>
    %746 = arith.mulf %745, %741 : vector<64x64xf32>
    %cst_258 = arith.constant 1.42141378 : f32
    %747 = vector.broadcast %cst_258 : f32 to vector<64x64xf32>
    %748 = arith.addf %746, %747 : vector<64x64xf32>
    %749 = arith.mulf %748, %741 : vector<64x64xf32>
    %cst_259 = arith.constant -0.284496725 : f32
    %750 = vector.broadcast %cst_259 : f32 to vector<64x64xf32>
    %751 = arith.addf %749, %750 : vector<64x64xf32>
    %752 = arith.mulf %751, %741 : vector<64x64xf32>
    %cst_260 = arith.constant 0.254829586 : f32
    %753 = vector.broadcast %cst_260 : f32 to vector<64x64xf32>
    %754 = arith.addf %752, %753 : vector<64x64xf32>
    %755 = arith.mulf %754, %741 : vector<64x64xf32>
    %cst_261 = arith.constant 0.000000e+00 : f32
    %756 = vector.broadcast %cst_261 : f32 to vector<64x64xf32>
    %757 = arith.subf %756, %736 : vector<64x64xf32>
    %758 = arith.mulf %757, %736 : vector<64x64xf32>
    %759 = math.exp %758 : vector<64x64xf32>
    %760 = arith.mulf %755, %759 : vector<64x64xf32>
    %cst_262 = arith.constant 1.000000e+00 : f32
    %761 = vector.broadcast %cst_262 : f32 to vector<64x64xf32>
    %762 = arith.subf %761, %760 : vector<64x64xf32>
    %763 = arith.mulf %735, %762 : vector<64x64xf32>
    %cst_263 = arith.constant 5.000000e-01 : f32
    %764 = vector.broadcast %cst_263 : f32 to vector<64x64xf32>
    %765 = arith.mulf %764, %728 : vector<64x64xf32>
    %cst_264 = arith.constant 1.000000e+00 : f32
    %766 = vector.broadcast %cst_264 : f32 to vector<64x64xf32>
    %767 = arith.addf %766, %763 : vector<64x64xf32>
    %768 = arith.mulf %765, %767 : vector<64x64xf32>
    %c3_265 = arith.constant 3 : index
    %c0_266 = arith.constant 0 : index
    %c0_267 = arith.constant 0 : index
    %769 = vector.load %arg16[%c3_265, %c0_266, %c0_267] : memref<4x64x32xbf16, #tpu.memory_space<vmem>>, vector<1x64x32xbf16>
    %770 = vector.shape_cast %769 : vector<1x64x32xbf16> to vector<64x32xbf16>
    %c3_268 = arith.constant 3 : index
    %c0_269 = arith.constant 0 : index
    %771 = vector.load %arg17[%c3_268, %c0_269] : memref<4x32xf32, #tpu.memory_space<vmem>>, vector<1x32xf32>
    %772 = vector.shape_cast %771 : vector<1x32xf32> to vector<32xf32>
    %773 = arith.truncf %768 : vector<64x64xf32> to vector<64x64xbf16>
    %cst_270 = arith.constant dense<0.000000e+00> : vector<64x32xf32>
    %774 = tpu.matmul %773, %770, %cst_270 {dimension_numbers = #tpu.dot_dimension_numbers<[1], [0], [0], [1], [0, 0, 1, 1], [], []>} : vector<64x64xbf16>, vector<64x32xbf16>, vector<64x32xf32> -> vector<64x32xf32>
    %775 = vector.shape_cast %772 : vector<32xf32> to vector<1x32xf32>
    %776 = vector.broadcast %775 : vector<1x32xf32> to vector<64x32xf32>
    %777 = arith.addf %774, %776 : vector<64x32xf32>
    %778 = arith.addf %777, %691 : vector<64x32xf32>
    %c0_271 = arith.constant 0 : index
    %c0_272 = arith.constant 0 : index
    %779 = vector.load %arg18[%c0_271, %c0_272] : memref<1x32xf32, #tpu.memory_space<vmem>>, vector<1x32xf32>
    %780 = vector.shape_cast %779 : vector<1x32xf32> to vector<32xf32>
    %c0_273 = arith.constant 0 : index
    %c0_274 = arith.constant 0 : index
    %781 = vector.load %arg19[%c0_273, %c0_274] : memref<1x32xf32, #tpu.memory_space<vmem>>, vector<1x32xf32>
    %782 = vector.shape_cast %781 : vector<1x32xf32> to vector<32xf32>
    %cst_275 = arith.constant dense<0.000000e+00> : vector<64xf32>
    %783 = vector.multi_reduction <add>, %778, %cst_275 [1] : vector<64x32xf32> to vector<64xf32>
    %784 = vector.shape_cast %783 : vector<64xf32> to vector<64x1xf32>
    %cst_276 = arith.constant 3.200000e+01 : f32
    %785 = vector.broadcast %cst_276 : f32 to vector<64x1xf32>
    %786 = arith.divf %784, %785 : vector<64x1xf32>
    %787 = vector.broadcast %786 : vector<64x1xf32> to vector<64x32xf32>
    %788 = arith.subf %778, %787 : vector<64x32xf32>
    %789 = arith.mulf %788, %788 : vector<64x32xf32>
    %cst_277 = arith.constant dense<0.000000e+00> : vector<64xf32>
    %790 = vector.multi_reduction <add>, %789, %cst_277 [1] : vector<64x32xf32> to vector<64xf32>
    %791 = vector.shape_cast %790 : vector<64xf32> to vector<64x1xf32>
    %cst_278 = arith.constant 3.200000e+01 : f32
    %792 = vector.broadcast %cst_278 : f32 to vector<64x1xf32>
    %793 = arith.divf %791, %792 : vector<64x1xf32>
    %794 = vector.broadcast %786 : vector<64x1xf32> to vector<64x32xf32>
    %795 = arith.subf %778, %794 : vector<64x32xf32>
    %cst_279 = arith.constant 9.99999974E-6 : f32
    %796 = vector.broadcast %cst_279 : f32 to vector<64x1xf32>
    %797 = arith.addf %793, %796 : vector<64x1xf32>
    %798 = math.rsqrt %797 : vector<64x1xf32>
    %799 = vector.broadcast %798 : vector<64x1xf32> to vector<64x32xf32>
    %800 = arith.mulf %795, %799 : vector<64x32xf32>
    %801 = vector.shape_cast %780 : vector<32xf32> to vector<1x32xf32>
    %802 = vector.broadcast %801 : vector<1x32xf32> to vector<64x32xf32>
    %803 = arith.mulf %800, %802 : vector<64x32xf32>
    %804 = vector.shape_cast %782 : vector<32xf32> to vector<1x32xf32>
    %805 = vector.broadcast %804 : vector<1x32xf32> to vector<64x32xf32>
    %806 = arith.addf %803, %805 : vector<64x32xf32>
    %c0_280 = arith.constant 0 : index
    %c0_281 = arith.constant 0 : index
    %807 = vector.load %arg20[%c0_280, %c0_281] : memref<32x32xbf16, #tpu.memory_space<vmem>>, vector<32x32xbf16>
    %c0_282 = arith.constant 0 : index
    %c0_283 = arith.constant 0 : index
    %808 = vector.load %arg21[%c0_282, %c0_283] : memref<1x32xf32, #tpu.memory_space<vmem>>, vector<1x32xf32>
    %809 = vector.shape_cast %808 : vector<1x32xf32> to vector<32xf32>
    %810 = arith.truncf %806 : vector<64x32xf32> to vector<64x32xbf16>
    %cst_284 = arith.constant dense<0.000000e+00> : vector<64x32xf32>
    %811 = tpu.matmul %810, %807, %cst_284 {dimension_numbers = #tpu.dot_dimension_numbers<[1], [0], [0], [1], [0, 0, 1, 1], [], []>} : vector<64x32xbf16>, vector<32x32xbf16>, vector<64x32xf32> -> vector<64x32xf32>
    %812 = vector.shape_cast %809 : vector<32xf32> to vector<1x32xf32>
    %813 = vector.broadcast %812 : vector<1x32xf32> to vector<64x32xf32>
    %814 = arith.addf %811, %813 : vector<64x32xf32>
    %cst_285 = arith.constant 0.707106769 : f32
    %815 = vector.broadcast %cst_285 : f32 to vector<64x32xf32>
    %816 = arith.mulf %814, %815 : vector<64x32xf32>
    %cst_286 = arith.constant 0.000000e+00 : f32
    %817 = vector.broadcast %cst_286 : f32 to vector<64x32xf32>
    %818 = arith.cmpf olt, %816, %817 : vector<64x32xf32>
    %cst_287 = arith.constant -1.000000e+00 : f32
    %cst_288 = arith.constant 1.000000e+00 : f32
    %819 = vector.broadcast %cst_287 : f32 to vector<64x32xf32>
    %820 = vector.broadcast %cst_288 : f32 to vector<64x32xf32>
    %821 = arith.select %818, %819, %820 : vector<64x32xi1>, vector<64x32xf32>
    %822 = math.absf %816 : vector<64x32xf32>
    %cst_289 = arith.constant 0.327591091 : f32
    %823 = vector.broadcast %cst_289 : f32 to vector<64x32xf32>
    %824 = arith.mulf %823, %822 : vector<64x32xf32>
    %cst_290 = arith.constant 1.000000e+00 : f32
    %825 = vector.broadcast %cst_290 : f32 to vector<64x32xf32>
    %826 = arith.addf %825, %824 : vector<64x32xf32>
    %827 = tpu.reciprocal %826 {approx = true} : vector<64x32xf32> -> vector<64x32xf32>
    %cst_291 = arith.constant 1.06140542 : f32
    %828 = vector.broadcast %cst_291 : f32 to vector<64x32xf32>
    %829 = arith.mulf %828, %827 : vector<64x32xf32>
    %cst_292 = arith.constant -1.45315206 : f32
    %830 = vector.broadcast %cst_292 : f32 to vector<64x32xf32>
    %831 = arith.addf %829, %830 : vector<64x32xf32>
    %832 = arith.mulf %831, %827 : vector<64x32xf32>
    %cst_293 = arith.constant 1.42141378 : f32
    %833 = vector.broadcast %cst_293 : f32 to vector<64x32xf32>
    %834 = arith.addf %832, %833 : vector<64x32xf32>
    %835 = arith.mulf %834, %827 : vector<64x32xf32>
    %cst_294 = arith.constant -0.284496725 : f32
    %836 = vector.broadcast %cst_294 : f32 to vector<64x32xf32>
    %837 = arith.addf %835, %836 : vector<64x32xf32>
    %838 = arith.mulf %837, %827 : vector<64x32xf32>
    %cst_295 = arith.constant 0.254829586 : f32
    %839 = vector.broadcast %cst_295 : f32 to vector<64x32xf32>
    %840 = arith.addf %838, %839 : vector<64x32xf32>
    %841 = arith.mulf %840, %827 : vector<64x32xf32>
    %cst_296 = arith.constant 0.000000e+00 : f32
    %842 = vector.broadcast %cst_296 : f32 to vector<64x32xf32>
    %843 = arith.subf %842, %822 : vector<64x32xf32>
    %844 = arith.mulf %843, %822 : vector<64x32xf32>
    %845 = math.exp %844 : vector<64x32xf32>
    %846 = arith.mulf %841, %845 : vector<64x32xf32>
    %cst_297 = arith.constant 1.000000e+00 : f32
    %847 = vector.broadcast %cst_297 : f32 to vector<64x32xf32>
    %848 = arith.subf %847, %846 : vector<64x32xf32>
    %849 = arith.mulf %821, %848 : vector<64x32xf32>
    %cst_298 = arith.constant 5.000000e-01 : f32
    %850 = vector.broadcast %cst_298 : f32 to vector<64x32xf32>
    %851 = arith.mulf %850, %814 : vector<64x32xf32>
    %cst_299 = arith.constant 1.000000e+00 : f32
    %852 = vector.broadcast %cst_299 : f32 to vector<64x32xf32>
    %853 = arith.addf %852, %849 : vector<64x32xf32>
    %854 = arith.mulf %851, %853 : vector<64x32xf32>
    %855 = vector.shape_cast %854 : vector<64x32xf32> to vector<4x16x32xf32>
    %c0_300 = arith.constant 0 : index
    %c0_301 = arith.constant 0 : index
    %856 = vector.load %arg22[%c0_300, %c0_301] : memref<1x32xf32, #tpu.memory_space<vmem>>, vector<1x32xf32>
    %857 = vector.shape_cast %856 : vector<1x32xf32> to vector<32xf32>
    %858 = vector.shape_cast %857 : vector<32xf32> to vector<1x1x32xf32>
    %859 = vector.broadcast %858 : vector<1x1x32xf32> to vector<4x16x32xf32>
    %860 = arith.mulf %855, %859 : vector<4x16x32xf32>
    %cst_302 = arith.constant dense<0.000000e+00> : vector<4x16xf32>
    %861 = vector.multi_reduction <add>, %860, %cst_302 [2] : vector<4x16x32xf32> to vector<4x16xf32>
    %c0_303 = arith.constant 0 : index
    %c0_304 = arith.constant 0 : index
    %862 = vector.load %arg23[%c0_303, %c0_304] : memref<1x1xf32, #tpu.memory_space<vmem>>, vector<1x1xf32>
    %863 = vector.shape_cast %862 : vector<1x1xf32> to vector<1xf32>
    %864 = vector.shape_cast %863 : vector<1xf32> to vector<1x1xf32>
    %865 = vector.broadcast %864 : vector<1x1xf32> to vector<4x16xf32>
    %866 = arith.addf %861, %865 : vector<4x16xf32>
    %c0_305 = arith.constant 0 : index
    %c0_306 = arith.constant 0 : index
    %c0_307 = arith.constant 0 : index
    %867 = vector.load %arg24[%c0_305, %c0_306, %c0_307] : memref<1x4x16xf32, #tpu.memory_space<vmem>>, vector<1x4x16xf32>
    %868 = vector.shape_cast %867 : vector<1x4x16xf32> to vector<4x16xf32>
    %869 = vector.shape_cast %866 : vector<4x16xf32> to vector<1x4x16xf32>
    tpu.vector_store %arg24[%c0_305, %c0_306, %c0_307], %869 {strides = array<i32>} : memref<1x4x16xf32, #tpu.memory_space<vmem>>, vector<1x4x16xf32>,
    return
  }
  func.func @transform_0(%arg0: i32) -> (i32, i32, i32) {
    %c0_i32 = arith.constant 0 : i32
    %c0_i32_0 = arith.constant 0 : i32
    %c0_i32_1 = arith.constant 0 : i32
    return %arg0, %c0_i32, %c0_i32_0 : i32, i32, i32
  }
  func.func @transform_1(%arg0: i32) -> (i32, i32) {
    %c0_i32 = arith.constant 0 : i32
    %c0_i32_0 = arith.constant 0 : i32
    %c0_i32_1 = arith.constant 0 : i32
    return %c0_i32, %c0_i32_0 : i32, i32
  }
  func.func @transform_2(%arg0: i32) -> (i32, i32) {
    %c0_i32 = arith.constant 0 : i32
    %c0_i32_0 = arith.constant 0 : i32
    %c0_i32_1 = arith.constant 0 : i32
    return %c0_i32, %c0_i32_0 : i32, i32
  }
  func.func @transform_3(%arg0: i32) -> (i32, i32) {
    %c0_i32 = arith.constant 0 : i32
    %c0_i32_0 = arith.constant 0 : i32
    %c0_i32_1 = arith.constant 0 : i32
    return %c0_i32, %c0_i32_0 : i32, i32
  }
  func.func @transform_4(%arg0: i32) -> (i32, i32) {
    %c0_i32 = arith.constant 0 : i32
    %c0_i32_0 = arith.constant 0 : i32
    %c0_i32_1 = arith.constant 0 : i32
    return %c0_i32, %c0_i32_0 : i32, i32
  }
  func.func @transform_5(%arg0: i32) -> (i32, i32) {
    %c0_i32 = arith.constant 0 : i32
    %c0_i32_0 = arith.constant 0 : i32
    %c0_i32_1 = arith.constant 0 : i32
    return %c0_i32, %c0_i32_0 : i32, i32
  }
  func.func @transform_6(%arg0: i32) -> (i32, i32) {
    %c0_i32 = arith.constant 0 : i32
    %c0_i32_0 = arith.constant 0 : i32
    %c0_i32_1 = arith.constant 0 : i32
    return %c0_i32, %c0_i32_0 : i32, i32
  }
  func.func @transform_7(%arg0: i32) -> (i32, i32) {
    %c0_i32 = arith.constant 0 : i32
    %c0_i32_0 = arith.constant 0 : i32
    %c0_i32_1 = arith.constant 0 : i32
    return %c0_i32, %c0_i32_0 : i32, i32
  }
  func.func @transform_8(%arg0: i32) -> (i32, i32) {
    %c0_i32 = arith.constant 0 : i32
    %c0_i32_0 = arith.constant 0 : i32
    %c0_i32_1 = arith.constant 0 : i32
    return %c0_i32, %c0_i32_0 : i32, i32
  }
  func.func @transform_9(%arg0: i32) -> (i32, i32, i32) {
    %c0_i32 = arith.constant 0 : i32
    %c0_i32_0 = arith.constant 0 : i32
    %c0_i32_1 = arith.constant 0 : i32
    %c0_i32_2 = arith.constant 0 : i32
    return %c0_i32, %c0_i32_0, %c0_i32_1 : i32, i32, i32
  }
  func.func @transform_10(%arg0: i32) -> (i32, i32) {
    %c0_i32 = arith.constant 0 : i32
    %c0_i32_0 = arith.constant 0 : i32
    %c0_i32_1 = arith.constant 0 : i32
    return %c0_i32, %c0_i32_0 : i32, i32
  }
  func.func @transform_11(%arg0: i32) -> (i32, i32) {
    %c0_i32 = arith.constant 0 : i32
    %c0_i32_0 = arith.constant 0 : i32
    %c0_i32_1 = arith.constant 0 : i32
    return %c0_i32, %c0_i32_0 : i32, i32
  }
  func.func @transform_12(%arg0: i32) -> (i32, i32) {
    %c0_i32 = arith.constant 0 : i32
    %c0_i32_0 = arith.constant 0 : i32
    %c0_i32_1 = arith.constant 0 : i32
    return %c0_i32, %c0_i32_0 : i32, i32
  }
  func.func @transform_13(%arg0: i32) -> (i32, i32, i32) {
    %c0_i32 = arith.constant 0 : i32
    %c0_i32_0 = arith.constant 0 : i32
    %c0_i32_1 = arith.constant 0 : i32
    %c0_i32_2 = arith.constant 0 : i32
    return %c0_i32, %c0_i32_0, %c0_i32_1 : i32, i32, i32
  }
  func.func @transform_14(%arg0: i32) -> (i32, i32) {
    %c0_i32 = arith.constant 0 : i32
    %c0_i32_0 = arith.constant 0 : i32
    %c0_i32_1 = arith.constant 0 : i32
    return %c0_i32, %c0_i32_0 : i32, i32
  }
  func.func @transform_15(%arg0: i32) -> (i32, i32, i32) {
    %c0_i32 = arith.constant 0 : i32
    %c0_i32_0 = arith.constant 0 : i32
    %c0_i32_1 = arith.constant 0 : i32
    %c0_i32_2 = arith.constant 0 : i32
    return %c0_i32, %c0_i32_0, %c0_i32_1 : i32, i32, i32
  }
  func.func @transform_16(%arg0: i32) -> (i32, i32) {
    %c0_i32 = arith.constant 0 : i32
    %c0_i32_0 = arith.constant 0 : i32
    %c0_i32_1 = arith.constant 0 : i32
    return %c0_i32, %c0_i32_0 : i32, i32
  }
  func.func @transform_17(%arg0: i32) -> (i32, i32) {
    %c0_i32 = arith.constant 0 : i32
    %c0_i32_0 = arith.constant 0 : i32
    %c0_i32_1 = arith.constant 0 : i32
    return %c0_i32, %c0_i32_0 : i32, i32
  }
  func.func @transform_18(%arg0: i32) -> (i32, i32) {
    %c0_i32 = arith.constant 0 : i32
    %c0_i32_0 = arith.constant 0 : i32
    %c0_i32_1 = arith.constant 0 : i32
    return %c0_i32, %c0_i32_0 : i32, i32
  }
  func.func @transform_19(%arg0: i32) -> (i32, i32) {
    %c0_i32 = arith.constant 0 : i32
    %c0_i32_0 = arith.constant 0 : i32
    %c0_i32_1 = arith.constant 0 : i32
    return %c0_i32, %c0_i32_0 : i32, i32
  }
  func.func @transform_20(%arg0: i32) -> (i32, i32) {
    %c0_i32 = arith.constant 0 : i32
    %c0_i32_0 = arith.constant 0 : i32
    %c0_i32_1 = arith.constant 0 : i32
    return %c0_i32, %c0_i32_0 : i32, i32
  }
  func.func @transform_21(%arg0: i32) -> (i32, i32) {
    %c0_i32 = arith.constant 0 : i32
    %c0_i32_0 = arith.constant 0 : i32
    %c0_i32_1 = arith.constant 0 : i32
    return %c0_i32, %c0_i32_0 : i32, i32
  }
  func.func @transform_22(%arg0: i32) -> (i32, i32) {
    %c0_i32 = arith.constant 0 : i32
    %c0_i32_0 = arith.constant 0 : i32
    %c0_i32_1 = arith.constant 0 : i32
    return %c0_i32, %c0_i32_0 : i32, i32
  }
  func.func @transform_23(%arg0: i32) -> (i32, i32, i32) {
    %c0_i32 = arith.constant 0 : i32
    %c0_i32_0 = arith.constant 0 : i32
    %c0_i32_1 = arith.constant 0 : i32
    return %arg0, %c0_i32, %c0_i32_0 : i32, i32, i32
  }
}

</mosaic_0001>

<llo_original>
// kernel: tpu_custom_call.1
$region0: #{tpu_custom_call.1}
  #allocation0 [shape = 'u32[]', space=smem, size = 0x4, offset = 0x4, fixed_abs, tag = 'smem constant byte address 0x4 - core index']
  #allocation1 [shape = 'u32[144,128]{1,0:T(1,128)}', space=vmem, size = 0x12000, scoped, tag = 'internal scratch']
  #allocation2 [shape = 'f32[1,1]{1,0:T(1,128)S(1)}', space=vmem, size = 0x200, scoped, tag = 'scoped memory for tpu_custom_call.1']
  %s0 = inlined_call_operand.vmem [shape: f32[4,16,3], index: 0, kind: input, shape index: {}]
  %s1 = inlined_call_operand.vmem [shape: f32[3,32], index: 1, kind: input, shape index: {}]
  %s2 = inlined_call_operand.vmem [shape: f32[1,32], index: 2, kind: input, shape index: {}]
  %s3 = inlined_call_operand.vmem [shape: f32[1,32], index: 3, kind: input, shape index: {}]
  %s4 = inlined_call_operand.vmem [shape: f32[1,32], index: 4, kind: input, shape index: {}]
  %s5 = inlined_call_operand.vmem [shape: bf16[32,32], index: 5, kind: input, shape index: {}]
  %s6 = inlined_call_operand.vmem [shape: f32[1,32], index: 6, kind: input, shape index: {}]
  %s7 = inlined_call_operand.vmem [shape: f32[4,32], index: 7, kind: input, shape index: {}]
  %s8 = inlined_call_operand.vmem [shape: f32[4,32], index: 8, kind: input, shape index: {}]
  %s9 = inlined_call_operand.vmem [shape: bf16[4,32,128], index: 9, kind: input, shape index: {}]
  %s10 = inlined_call_operand.vmem [shape: f32[4,32], index: 10, kind: input, shape index: {}]
  %s11 = inlined_call_operand.vmem [shape: f32[4,32], index: 11, kind: input, shape index: {}]
  %s12 = inlined_call_operand.vmem [shape: f32[4,32], index: 12, kind: input, shape index: {}]
  %s13 = inlined_call_operand.vmem [shape: bf16[4,32,64], index: 13, kind: input, shape index: {}]
  %s14 = inlined_call_operand.vmem [shape: f32[4,64], index: 14, kind: input, shape index: {}]
  %s15 = inlined_call_operand.vmem [shape: bf16[4,64,32], index: 15, kind: input, shape index: {}]
  %s16 = inlined_call_operand.vmem [shape: f32[4,32], index: 16, kind: input, shape index: {}]
  %s17 = inlined_call_operand.vmem [shape: f32[1,32], index: 17, kind: input, shape index: {}]
  %s18 = inlined_call_operand.vmem [shape: f32[1,32], index: 18, kind: input, shape index: {}]
  %s19 = inlined_call_operand.vmem [shape: bf16[32,32], index: 19, kind: input, shape index: {}]
  %s20 = inlined_call_operand.vmem [shape: f32[1,32], index: 20, kind: input, shape index: {}]
  %s21 = inlined_call_operand.vmem [shape: f32[1,32], index: 21, kind: input, shape index: {}]
  %s22 = inlined_call_operand.<no memory space> [shape: f32[1,1], index: 22, kind: input, shape index: {}]
  %s23 = inlined_call_operand.hbm [shape: f32[1,4,16], index: 23, kind: output, shape index: {}]
  %s24 = sld [smem:[#allocation0]]
  $region102: #{tpu_custom_call.1} parent=0
    _
  %s26 = ssub.s32 1, %s24
  %s27 = scalar_select 0, %s26, %s24
  %v28 = vstv %s22
  %29 = vst [vmem:[#allocation2] sm:$0x1] %v28
  $region1: #{tpu_custom_call.1} parent=0
    #allocation3 [shape = 'u8[2048]{0}', space=vmem, size = 0x800, scoped, tag = 'output window, operand 0, single buffered']
    #allocation4 [shape = 's32[1]{0}', space=sflag, size = 0x4, scoped, tag = 'scoped memory for tpu_custom_call.1']
    %30 = vsyncpa [#allocation4], 0
    // Predicated region
    $region2: #{tpu_custom_call.1} parent=1 // pred_check
      _
    $region3: #{tpu_custom_call.1} parent=1 // pred_check_branch
      %32 = sbr.rel (0) target = $region5
    $region4: #{tpu_custom_call.1} parent=1 // pred_region
      _
    $region5: #{tpu_custom_call.1} parent=1 // pred_fallthru
      _
    // Predicated region
    $region6: #{tpu_custom_call.1} parent=1 // pred_check
      _
    $region7: #{tpu_custom_call.1} parent=1 // pred_check_branch
      %34 = sbr.rel (0) target = $region9
    $region8: #{tpu_custom_call.1} parent=1 // pred_region
      _
    $region9: #{tpu_custom_call.1} parent=1 // pred_fallthru
      _
    // Predicated region
    $region10: #{tpu_custom_call.1} parent=1 // pred_check
      _
    $region11: #{tpu_custom_call.1} parent=1 // pred_check_branch
      %36 = sbr.rel (0) target = $region13
    $region12: #{tpu_custom_call.1} parent=1 // pred_region
      _
    $region13: #{tpu_custom_call.1} parent=1 // pred_fallthru
      _
    // Predicated region
    $region14: #{tpu_custom_call.1} parent=1 // pred_check
      _
    $region15: #{tpu_custom_call.1} parent=1 // pred_check_branch
      %38 = sbr.rel (0) target = $region17
    $region16: #{tpu_custom_call.1} parent=1 // pred_region
      _
    $region17: #{tpu_custom_call.1} parent=1 // pred_fallthru
      _
    // Predicated region
    $region18: #{tpu_custom_call.1} parent=1 // pred_check
      _
    $region19: #{tpu_custom_call.1} parent=1 // pred_check_branch
      %40 = sbr.rel (0) target = $region21
    $region20: #{tpu_custom_call.1} parent=1 // pred_region
      _
    $region21: #{tpu_custom_call.1} parent=1 // pred_fallthru
      _
    // Predicated region
    $region22: #{tpu_custom_call.1} parent=1 // pred_check
      _
    $region23: #{tpu_custom_call.1} parent=1 // pred_check_branch
      %42 = sbr.rel (0) target = $region25
    $region24: #{tpu_custom_call.1} parent=1 // pred_region
      _
    $region25: #{tpu_custom_call.1} parent=1 // pred_fallthru
      _
    // Predicated region
    $region26: #{tpu_custom_call.1} parent=1 // pred_check
      _
    $region27: #{tpu_custom_call.1} parent=1 // pred_check_branch
      %44 = sbr.rel (0) target = $region29
    $region28: #{tpu_custom_call.1} parent=1 // pred_region
      _
    $region29: #{tpu_custom_call.1} parent=1 // pred_fallthru
      _
    // Predicated region
    $region30: #{tpu_custom_call.1} parent=1 // pred_check
      _
    $region31: #{tpu_custom_call.1} parent=1 // pred_check_branch
      %46 = sbr.rel (0) target = $region33
    $region32: #{tpu_custom_call.1} parent=1 // pred_region
      _
    $region33: #{tpu_custom_call.1} parent=1 // pred_fallthru
      _
    // Predicated region
    $region34: #{tpu_custom_call.1} parent=1 // pred_check
      _
    $region35: #{tpu_custom_call.1} parent=1 // pred_check_branch
      %48 = sbr.rel (0) target = $region37
    $region36: #{tpu_custom_call.1} parent=1 // pred_region
      _
    $region37: #{tpu_custom_call.1} parent=1 // pred_fallthru
      _
    // Predicated region
    $region38: #{tpu_custom_call.1} parent=1 // pred_check
      _
    $region39: #{tpu_custom_call.1} parent=1 // pred_check_branch
      %50 = sbr.rel (0) target = $region41
    $region40: #{tpu_custom_call.1} parent=1 // pred_region
      _
    $region41: #{tpu_custom_call.1} parent=1 // pred_fallthru
      _
    // Predicated region
    $region42: #{tpu_custom_call.1} parent=1 // pred_check
      _
    $region43: #{tpu_custom_call.1} parent=1 // pred_check_branch
      %52 = sbr.rel (0) target = $region45
    $region44: #{tpu_custom_call.1} parent=1 // pred_region
      _
    $region45: #{tpu_custom_call.1} parent=1 // pred_fallthru
      _
    // Predicated region
    $region46: #{tpu_custom_call.1} parent=1 // pred_check
      _
    $region47: #{tpu_custom_call.1} parent=1 // pred_check_branch
      %54 = sbr.rel (0) target = $region49
    $region48: #{tpu_custom_call.1} parent=1 // pred_region
      _
    $region49: #{tpu_custom_call.1} parent=1 // pred_fallthru
      _
    // Predicated region
    $region50: #{tpu_custom_call.1} parent=1 // pred_check
      _
    $region51: #{tpu_custom_call.1} parent=1 // pred_check_branch
      %56 = sbr.rel (0) target = $region53
    $region52: #{tpu_custom_call.1} parent=1 // pred_region
      _
    $region53: #{tpu_custom_call.1} parent=1 // pred_fallthru
      _
    // Predicated region
    $region54: #{tpu_custom_call.1} parent=1 // pred_check
      _
    $region55: #{tpu_custom_call.1} parent=1 // pred_check_branch
      %58 = sbr.rel (0) target = $region57
    $region56: #{tpu_custom_call.1} parent=1 // pred_region
      _
    $region57: #{tpu_custom_call.1} parent=1 // pred_fallthru
      _
    // Predicated region
    $region58: #{tpu_custom_call.1} parent=1 // pred_check
      _
    $region59: #{tpu_custom_call.1} parent=1 // pred_check_branch
      %60 = sbr.rel (0) target = $region61
    $region60: #{tpu_custom_call.1} parent=1 // pred_region
      _
    $region61: #{tpu_custom_call.1} parent=1 // pred_fallthru
      _
    // Predicated region
    $region62: #{tpu_custom_call.1} parent=1 // pred_check
      _
    $region63: #{tpu_custom_call.1} parent=1 // pred_check_branch
      %62 = sbr.rel (0) target = $region65
    $region64: #{tpu_custom_call.1} parent=1 // pred_region
      _
    $region65: #{tpu_custom_call.1} parent=1 // pred_fallthru
      _
    // Predicated region
    $region66: #{tpu_custom_call.1} parent=1 // pred_check
      _
    $region67: #{tpu_custom_call.1} parent=1 // pred_check_branch
      %64 = sbr.rel (0) target = $region69
    $region68: #{tpu_custom_call.1} parent=1 // pred_region
      _
    $region69: #{tpu_custom_call.1} parent=1 // pred_fallthru
      _
    // Predicated region
    $region70: #{tpu_custom_call.1} parent=1 // pred_check
      _
    $region71: #{tpu_custom_call.1} parent=1 // pred_check_branch
      %66 = sbr.rel (0) target = $region73
    $region72: #{tpu_custom_call.1} parent=1 // pred_region
      _
    $region73: #{tpu_custom_call.1} parent=1 // pred_fallthru
      _
    // Predicated region
    $region74: #{tpu_custom_call.1} parent=1 // pred_check
      _
    $region75: #{tpu_custom_call.1} parent=1 // pred_check_branch
      %68 = sbr.rel (0) target = $region77
    $region76: #{tpu_custom_call.1} parent=1 // pred_region
      _
    $region77: #{tpu_custom_call.1} parent=1 // pred_fallthru
      _
    // Predicated region
    $region78: #{tpu_custom_call.1} parent=1 // pred_check
      _
    $region79: #{tpu_custom_call.1} parent=1 // pred_check_branch
      %70 = sbr.rel (0) target = $region81
    $region80: #{tpu_custom_call.1} parent=1 // pred_region
      _
    $region81: #{tpu_custom_call.1} parent=1 // pred_fallthru
      _
    // Predicated region
    $region82: #{tpu_custom_call.1} parent=1 // pred_check
      _
    $region83: #{tpu_custom_call.1} parent=1 // pred_check_branch
      %72 = sbr.rel (0) target = $region85
    $region84: #{tpu_custom_call.1} parent=1 // pred_region
      _
    $region85: #{tpu_custom_call.1} parent=1 // pred_fallthru
      _
    // Predicated region
    $region86: #{tpu_custom_call.1} parent=1 // pred_check
      _
    $region87: #{tpu_custom_call.1} parent=1 // pred_check_branch
      %74 = sbr.rel (0) target = $region89
    $region88: #{tpu_custom_call.1} parent=1 // pred_region
      _
    $region89: #{tpu_custom_call.1} parent=1 // pred_fallthru
      _
    // Predicated region
    $region90: #{tpu_custom_call.1} parent=1 // pred_check
      _
    $region91: #{tpu_custom_call.1} parent=1 // pred_check_branch
      %76 = sbr.rel (0) target = $region93
    $region92: #{tpu_custom_call.1} parent=1 // pred_region
      _
    $region93: #{tpu_custom_call.1} parent=1 // pred_fallthru
      _
    %v78 = vld [vmem:[%s0] sm:$0xff]
    %v79 = vld [vmem:[%s0 + $0x8] sm:$0xff]
    %v80 = vld [vmem:[%s0 + $0x10] sm:$0xff]
    %v81 = vld [vmem:[%s0 + $0x18] sm:$0xff]
    %v82 = vld [vmem:[%s0 + $0x20] sm:$0xff]
    %v83 = vld [vmem:[%s0 + $0x28] sm:$0xff]
    %v84 = vld [vmem:[%s0 + $0x30] sm:$0xff]
    %v85 = vld [vmem:[%s0 + $0x38] sm:$0xff]
    %v86 = vld [vmem:[%s1] sm:$0x7]
    %88 = vset.pattern.permute.xlu0 0
    %89 = vperm.xlu0 %88, %v78
    %v90 = vpop.permute.xlu0 %89
    %93 = vset.pattern.permute.xlu0 0
    %94 = vperm.xlu0 %93, %v79
    %v95 = vpop.permute.xlu0 %94
    %98 = vset.pattern.permute.xlu0 0
    %99 = vperm.xlu0 %98, %v80
    %v100 = vpop.permute.xlu0 %99
    %103 = vset.pattern.permute.xlu0 0
    %104 = vperm.xlu0 %103, %v81
    %v105 = vpop.permute.xlu0 %104
    %108 = vset.pattern.permute.xlu0 0
    %109 = vperm.xlu0 %108, %v82
    %v110 = vpop.permute.xlu0 %109
    %113 = vset.pattern.permute.xlu0 0
    %114 = vperm.xlu0 %113, %v83
    %v115 = vpop.permute.xlu0 %114
    %118 = vset.pattern.permute.xlu0 0
    %119 = vperm.xlu0 %118, %v84
    %v120 = vpop.permute.xlu0 %119
    %123 = vset.pattern.permute.xlu0 0
    %124 = vperm.xlu0 %123, %v85
    %v125 = vpop.permute.xlu0 %124
    %v127 = vlaneseq
    %v128 = vshrl.u32 %v127, 7
    %v129 = vsub.s32 0, %v128
    %v130 = vrot.slane %v86, %v129
    %v131 = vmul.f32 %v90, %v130
    %v132 = vmul.f32 %v95, %v130
    %v133 = vmul.f32 %v100, %v130
    %v134 = vmul.f32 %v105, %v130
    %v135 = vmul.f32 %v110, %v130
    %v136 = vmul.f32 %v115, %v130
    %v137 = vmul.f32 %v120, %v130
    %v138 = vmul.f32 %v125, %v130
    %139 = vset.pattern.permute.xlu0 1
    %140 = vperm.xlu0 %139, %v78
    %v141 = vpop.permute.xlu0 %140
    %143 = vset.pattern.permute.xlu0 1
    %144 = vperm.xlu0 %143, %v79
    %v145 = vpop.permute.xlu0 %144
    %147 = vset.pattern.permute.xlu0 1
    %148 = vperm.xlu0 %147, %v80
    %v149 = vpop.permute.xlu0 %148
    %151 = vset.pattern.permute.xlu0 1
    %152 = vperm.xlu0 %151, %v81
    %v153 = vpop.permute.xlu0 %152
    %155 = vset.pattern.permute.xlu0 1
    %156 = vperm.xlu0 %155, %v82
    %v157 = vpop.permute.xlu0 %156
    %159 = vset.pattern.permute.xlu0 1
    %160 = vperm.xlu0 %159, %v83
    %v161 = vpop.permute.xlu0 %160
    %163 = vset.pattern.permute.xlu0 1
    %164 = vperm.xlu0 %163, %v84
    %v165 = vpop.permute.xlu0 %164
    %167 = vset.pattern.permute.xlu0 1
    %168 = vperm.xlu0 %167, %v85
    %v169 = vpop.permute.xlu0 %168
    %v171 = vlaneseq
    %v172 = vshrl.u32 %v171, 7
    %v173 = vsub.s32 1, %v172
    %v174 = vrot.slane %v86, %v173
    %v175 = vmul.f32 %v141, %v174
    %v176 = vmul.f32 %v145, %v174
    %v177 = vmul.f32 %v149, %v174
    %v178 = vmul.f32 %v153, %v174
    %v179 = vmul.f32 %v157, %v174
    %v180 = vmul.f32 %v161, %v174
    %v181 = vmul.f32 %v165, %v174
    %v182 = vmul.f32 %v169, %v174
    %v183 = vadd.f32 %v131, %v175
    %v184 = vadd.f32 %v132, %v176
    %v185 = vadd.f32 %v133, %v177
    %v186 = vadd.f32 %v134, %v178
    %v187 = vadd.f32 %v135, %v179
    %v188 = vadd.f32 %v136, %v180
    %v189 = vadd.f32 %v137, %v181
    %v190 = vadd.f32 %v138, %v182
    %191 = vset.pattern.permute.xlu0 2
    %192 = vperm.xlu0 %191, %v78
    %v193 = vpop.permute.xlu0 %192
    %195 = vset.pattern.permute.xlu0 2
    %196 = vperm.xlu0 %195, %v79
    %v197 = vpop.permute.xlu0 %196
    %199 = vset.pattern.permute.xlu0 2
    %200 = vperm.xlu0 %199, %v80
    %v201 = vpop.permute.xlu0 %200
    %203 = vset.pattern.permute.xlu0 2
    %204 = vperm.xlu0 %203, %v81
    %v205 = vpop.permute.xlu0 %204
    %207 = vset.pattern.permute.xlu0 2
    %208 = vperm.xlu0 %207, %v82
    %v209 = vpop.permute.xlu0 %208
    %211 = vset.pattern.permute.xlu0 2
    %212 = vperm.xlu0 %211, %v83
    %v213 = vpop.permute.xlu0 %212
    %215 = vset.pattern.permute.xlu0 2
    %216 = vperm.xlu0 %215, %v84
    %v217 = vpop.permute.xlu0 %216
    %219 = vset.pattern.permute.xlu0 2
    %220 = vperm.xlu0 %219, %v85
    %v221 = vpop.permute.xlu0 %220
    %v223 = vlaneseq
    %v224 = vshrl.u32 %v223, 7
    %v225 = vsub.s32 2, %v224
    %v226 = vrot.slane %v86, %v225
    %v227 = vmul.f32 %v193, %v226
    %v228 = vmul.f32 %v197, %v226
    %v229 = vmul.f32 %v201, %v226
    %v230 = vmul.f32 %v205, %v226
    %v231 = vmul.f32 %v209, %v226
    %v232 = vmul.f32 %v213, %v226
    %v233 = vmul.f32 %v217, %v226
    %v234 = vmul.f32 %v221, %v226
    %v235 = vadd.f32 %v183, %v227
    %v236 = vadd.f32 %v184, %v228
    %v237 = vadd.f32 %v185, %v229
    %v238 = vadd.f32 %v186, %v230
    %v239 = vadd.f32 %v187, %v231
    %v240 = vadd.f32 %v188, %v232
    %v241 = vadd.f32 %v189, %v233
    %v242 = vadd.f32 %v190, %v234
    %v243 = vld [vmem:[%s2] sm:$0x1]
    %v245 = vlaneseq
    %v246 = vshrl.u32 %v245, 7
    %v247 = vsub.s32 0, %v246
    %v248 = vrot.slane %v243, %v247
    %v250 = vadd.f32 %v235, %v248
    %v251 = vadd.f32 %v236, %v248
    %v252 = vadd.f32 %v237, %v248
    %v253 = vadd.f32 %v238, %v248
    %v254 = vadd.f32 %v239, %v248
    %v255 = vadd.f32 %v240, %v248
    %v256 = vadd.f32 %v241, %v248
    %v257 = vadd.f32 %v242, %v248
    %v258 = vld [vmem:[%s3] sm:$0x1]
    %v259 = vld [vmem:[%s4] sm:$0x1]
    %vm260 = vcmask 261120
    %v261 = vsel %vm260, %v250, 0.0
    %262 = vadd.xlane.f32.xlu0 %v261
    %v263 = vpop.xlane.xlu0 %262
    %v264 = vsel %vm260, %v251, 0.0
    %265 = vadd.xlane.f32.xlu0 %v264
    %v266 = vpop.xlane.xlu0 %265
    %v267 = vsel %vm260, %v252, 0.0
    %268 = vadd.xlane.f32.xlu0 %v267
    %v269 = vpop.xlane.xlu0 %268
    %v270 = vsel %vm260, %v253, 0.0
    %271 = vadd.xlane.f32.xlu0 %v270
    %v272 = vpop.xlane.xlu0 %271
    %v273 = vsel %vm260, %v254, 0.0
    %274 = vadd.xlane.f32.xlu0 %v273
    %v275 = vpop.xlane.xlu0 %274
    %v276 = vsel %vm260, %v255, 0.0
    %277 = vadd.xlane.f32.xlu0 %v276
    %v278 = vpop.xlane.xlu0 %277
    %v279 = vsel %vm260, %v256, 0.0
    %280 = vadd.xlane.f32.xlu0 %v279
    %v281 = vpop.xlane.xlu0 %280
    %v282 = vsel %vm260, %v257, 0.0
    %283 = vadd.xlane.f32.xlu0 %v282
    %v284 = vpop.xlane.xlu0 %283
    %v285 = vrcp.pop 32.0
    %v286 = vmul.f32 %v263, %v285
    %v287 = vmul.f32 %v266, %v285
    %v288 = vmul.f32 %v269, %v285
    %v289 = vmul.f32 %v272, %v285
    %v290 = vmul.f32 %v275, %v285
    %v291 = vmul.f32 %v278, %v285
    %v292 = vmul.f32 %v281, %v285
    %v293 = vmul.f32 %v284, %v285
    %v294 = vsub.f32 %v250, %v286
    %v295 = vsub.f32 %v251, %v287
    %v296 = vsub.f32 %v252, %v288
    %v297 = vsub.f32 %v253, %v289
    %v298 = vsub.f32 %v254, %v290
    %v299 = vsub.f32 %v255, %v291
    %v300 = vsub.f32 %v256, %v292
    %v301 = vsub.f32 %v257, %v293
    %v302 = vmul.f32 %v294, %v294
    %v303 = vmul.f32 %v295, %v295
    %v304 = vmul.f32 %v296, %v296
    %v305 = vmul.f32 %v297, %v297
    %v306 = vmul.f32 %v298, %v298
    %v307 = vmul.f32 %v299, %v299
    %v308 = vmul.f32 %v300, %v300
    %v309 = vmul.f32 %v301, %v301
    %v310 = vsel %vm260, %v302, 0.0
    %311 = vadd.xlane.f32.xlu0 %v310
    %v312 = vpop.xlane.xlu0 %311
    %v313 = vsel %vm260, %v303, 0.0
    %314 = vadd.xlane.f32.xlu0 %v313
    %v315 = vpop.xlane.xlu0 %314
    %v316 = vsel %vm260, %v304, 0.0
    %317 = vadd.xlane.f32.xlu0 %v316
    %v318 = vpop.xlane.xlu0 %317
    %v319 = vsel %vm260, %v305, 0.0
    %320 = vadd.xlane.f32.xlu0 %v319
    %v321 = vpop.xlane.xlu0 %320
    %v322 = vsel %vm260, %v306, 0.0
    %323 = vadd.xlane.f32.xlu0 %v322
    %v324 = vpop.xlane.xlu0 %323
    %v325 = vsel %vm260, %v307, 0.0
    %326 = vadd.xlane.f32.xlu0 %v325
    %v327 = vpop.xlane.xlu0 %326
    %v328 = vsel %vm260, %v308, 0.0
    %329 = vadd.xlane.f32.xlu0 %v328
    %v330 = vpop.xlane.xlu0 %329
    %v331 = vsel %vm260, %v309, 0.0
    %332 = vadd.xlane.f32.xlu0 %v331
    %v333 = vpop.xlane.xlu0 %332
    %v334 = vmul.f32 %v312, %v285
    %v335 = vmul.f32 %v315, %v285
    %v336 = vmul.f32 %v318, %v285
    %v337 = vmul.f32 %v321, %v285
    %v338 = vmul.f32 %v324, %v285
    %v339 = vmul.f32 %v327, %v285
    %v340 = vmul.f32 %v330, %v285
    %v341 = vmul.f32 %v333, %v285
    %v342 = vadd.f32 %v334, 1e-05
    %v343 = vadd.f32 %v335, 1e-05
    %v344 = vadd.f32 %v336, 1e-05
    %v345 = vadd.f32 %v337, 1e-05
    %v346 = vadd.f32 %v338, 1e-05
    %v347 = vadd.f32 %v339, 1e-05
    %v348 = vadd.f32 %v340, 1e-05
    %v349 = vadd.f32 %v341, 1e-05
    %v350 = vrsqrt.pop %v342
    %v351 = vrsqrt.pop %v343
    %v352 = vrsqrt.pop %v344
    %v353 = vrsqrt.pop %v345
    %v354 = vrsqrt.pop %v346
    %v355 = vrsqrt.pop %v347
    %v356 = vrsqrt.pop %v348
    %v357 = vrsqrt.pop %v349
    %v358 = vmul.f32 %v294, %v350
    %v359 = vmul.f32 %v295, %v351
    %v360 = vmul.f32 %v296, %v352
    %v361 = vmul.f32 %v297, %v353
    %v362 = vmul.f32 %v298, %v354
    %v363 = vmul.f32 %v299, %v355
    %v364 = vmul.f32 %v300, %v356
    %v365 = vmul.f32 %v301, %v357
    %v367 = vlaneseq
    %v368 = vshrl.u32 %v367, 7
    %v369 = vsub.s32 0, %v368
    %v370 = vrot.slane %v258, %v369
    %v372 = vmul.f32 %v358, %v370
    %v373 = vmul.f32 %v359, %v370
    %v374 = vmul.f32 %v360, %v370
    %v375 = vmul.f32 %v361, %v370
    %v376 = vmul.f32 %v362, %v370
    %v377 = vmul.f32 %v363, %v370
    %v378 = vmul.f32 %v364, %v370
    %v379 = vmul.f32 %v365, %v370
    %v381 = vlaneseq
    %v382 = vshrl.u32 %v381, 7
    %v383 = vsub.s32 0, %v382
    %v384 = vrot.slane %v259, %v383
    %v386 = vadd.f32 %v372, %v384
    %v387 = vadd.f32 %v373, %v384
    %v388 = vadd.f32 %v374, %v384
    %v389 = vadd.f32 %v375, %v384
    %v390 = vadd.f32 %v376, %v384
    %v391 = vadd.f32 %v377, %v384
    %v392 = vadd.f32 %v378, %v384
    %v393 = vadd.f32 %v379, %v384
    %v394 = vmul.f32 %v386, 0.70710677
    %v395 = vmul.f32 %v387, 0.70710677
    %v396 = vmul.f32 %v388, 0.70710677
    %v397 = vmul.f32 %v389, 0.70710677
    %v398 = vmul.f32 %v390, 0.70710677
    %v399 = vmul.f32 %v391, 0.70710677
    %v400 = vmul.f32 %v392, 0.70710677
    %v401 = vmul.f32 %v393, 0.70710677
    %vm402 = vcmp.lt.f32.partialorder %v394, 0.0
    %vm403 = vcmp.lt.f32.partialorder %v395, 0.0
    %vm404 = vcmp.lt.f32.partialorder %v396, 0.0
    %vm405 = vcmp.lt.f32.partialorder %v397, 0.0
    %vm406 = vcmp.lt.f32.partialorder %v398, 0.0
    %vm407 = vcmp.lt.f32.partialorder %v399, 0.0
    %vm408 = vcmp.lt.f32.partialorder %v400, 0.0
    %vm409 = vcmp.lt.f32.partialorder %v401, 0.0
    %v410 = vsel %vm402, -1.0, 1.0
    %v411 = vsel %vm403, -1.0, 1.0
    %v412 = vsel %vm404, -1.0, 1.0
    %v413 = vsel %vm405, -1.0, 1.0
    %v414 = vsel %vm406, -1.0, 1.0
    %v415 = vsel %vm407, -1.0, 1.0
    %v416 = vsel %vm408, -1.0, 1.0
    %v417 = vsel %vm409, -1.0, 1.0
    %v418 = vand.u32 2147483647, %v394
    %v419 = vand.u32 2147483647, %v395
    %v420 = vand.u32 2147483647, %v396
    %v421 = vand.u32 2147483647, %v397
    %v422 = vand.u32 2147483647, %v398
    %v423 = vand.u32 2147483647, %v399
    %v424 = vand.u32 2147483647, %v400
    %v425 = vand.u32 2147483647, %v401
    %v426 = vmul.f32 %v418, 0.3275911
    %v427 = vmul.f32 %v419, 0.3275911
    %v428 = vmul.f32 %v420, 0.3275911
    %v429 = vmul.f32 %v421, 0.3275911
    %v430 = vmul.f32 %v422, 0.3275911
    %v431 = vmul.f32 %v423, 0.3275911
    %v432 = vmul.f32 %v424, 0.3275911
    %v433 = vmul.f32 %v425, 0.3275911
    %v434 = vadd.f32 %v426, 1.0
    %v435 = vadd.f32 %v427, 1.0
    %v436 = vadd.f32 %v428, 1.0
    %v437 = vadd.f32 %v429, 1.0
    %v438 = vadd.f32 %v430, 1.0
    %v439 = vadd.f32 %v431, 1.0
    %v440 = vadd.f32 %v432, 1.0
    %v441 = vadd.f32 %v433, 1.0
    %v442 = vrcp.pop %v434
    %v443 = vrcp.pop %v435
    %v444 = vrcp.pop %v436
    %v445 = vrcp.pop %v437
    %v446 = vrcp.pop %v438
    %v447 = vrcp.pop %v439
    %v448 = vrcp.pop %v440
    %v449 = vrcp.pop %v441
    %v450 = vmul.f32 %v442, 1.0614054
    %v451 = vmul.f32 %v443, 1.0614054
    %v452 = vmul.f32 %v444, 1.0614054
    %v453 = vmul.f32 %v445, 1.0614054
    %v454 = vmul.f32 %v446, 1.0614054
    %v455 = vmul.f32 %v447, 1.0614054
    %v456 = vmul.f32 %v448, 1.0614054
    %v457 = vmul.f32 %v449, 1.0614054
    %v458 = vadd.f32 %v450, -1.4531521
    %v459 = vadd.f32 %v451, -1.4531521
    %v460 = vadd.f32 %v452, -1.4531521
    %v461 = vadd.f32 %v453, -1.4531521
    %v462 = vadd.f32 %v454, -1.4531521
    %v463 = vadd.f32 %v455, -1.4531521
    %v464 = vadd.f32 %v456, -1.4531521
    %v465 = vadd.f32 %v457, -1.4531521
    %v466 = vmul.f32 %v458, %v442
    %v467 = vmul.f32 %v459, %v443
    %v468 = vmul.f32 %v460, %v444
    %v469 = vmul.f32 %v461, %v445
    %v470 = vmul.f32 %v462, %v446
    %v471 = vmul.f32 %v463, %v447
    %v472 = vmul.f32 %v464, %v448
    %v473 = vmul.f32 %v465, %v449
    %v474 = vadd.f32 %v466, 1.4214138
    %v475 = vadd.f32 %v467, 1.4214138
    %v476 = vadd.f32 %v468, 1.4214138
    %v477 = vadd.f32 %v469, 1.4214138
    %v478 = vadd.f32 %v470, 1.4214138
    %v479 = vadd.f32 %v471, 1.4214138
    %v480 = vadd.f32 %v472, 1.4214138
    %v481 = vadd.f32 %v473, 1.4214138
    %v482 = vmul.f32 %v474, %v442
    %v483 = vmul.f32 %v475, %v443
    %v484 = vmul.f32 %v476, %v444
    %v485 = vmul.f32 %v477, %v445
    %v486 = vmul.f32 %v478, %v446
    %v487 = vmul.f32 %v479, %v447
    %v488 = vmul.f32 %v480, %v448
    %v489 = vmul.f32 %v481, %v449
    %v490 = vadd.f32 %v482, -0.28449672
    %v491 = vadd.f32 %v483, -0.28449672
    %v492 = vadd.f32 %v484, -0.28449672
    %v493 = vadd.f32 %v485, -0.28449672
    %v494 = vadd.f32 %v486, -0.28449672
    %v495 = vadd.f32 %v487, -0.28449672
    %v496 = vadd.f32 %v488, -0.28449672
    %v497 = vadd.f32 %v489, -0.28449672
    %v498 = vmul.f32 %v490, %v442
    %v499 = vmul.f32 %v491, %v443
    %v500 = vmul.f32 %v492, %v444
    %v501 = vmul.f32 %v493, %v445
    %v502 = vmul.f32 %v494, %v446
    %v503 = vmul.f32 %v495, %v447
    %v504 = vmul.f32 %v496, %v448
    %v505 = vmul.f32 %v497, %v449
    %v506 = vadd.f32 %v498, 0.2548296
    %v507 = vadd.f32 %v499, 0.2548296
    %v508 = vadd.f32 %v500, 0.2548296
    %v509 = vadd.f32 %v501, 0.2548296
    %v510 = vadd.f32 %v502, 0.2548296
    %v511 = vadd.f32 %v503, 0.2548296
    %v512 = vadd.f32 %v504, 0.2548296
    %v513 = vadd.f32 %v505, 0.2548296
    %v514 = vmul.f32 %v506, %v442
    %v515 = vmul.f32 %v507, %v443
    %v516 = vmul.f32 %v508, %v444
    %v517 = vmul.f32 %v509, %v445
    %v518 = vmul.f32 %v510, %v446
    %v519 = vmul.f32 %v511, %v447
    %v520 = vmul.f32 %v512, %v448
    %v521 = vmul.f32 %v513, %v449
    %v522 = vsub.f32 0.0, %v418
    %v523 = vsub.f32 0.0, %v419
    %v524 = vsub.f32 0.0, %v420
    %v525 = vsub.f32 0.0, %v421
    %v526 = vsub.f32 0.0, %v422
    %v527 = vsub.f32 0.0, %v423
    %v528 = vsub.f32 0.0, %v424
    %v529 = vsub.f32 0.0, %v425
    %v530 = vmul.f32 %v522, %v418
    %v531 = vmul.f32 %v523, %v419
    %v532 = vmul.f32 %v524, %v420
    %v533 = vmul.f32 %v525, %v421
    %v534 = vmul.f32 %v526, %v422
    %v535 = vmul.f32 %v527, %v423
    %v536 = vmul.f32 %v528, %v424
    %v537 = vmul.f32 %v529, %v425
    %v538 = vmul.f32 %v530, 1.442695
    %v539 = vpow.pop %v538
    %v540 = vmul.f32 %v531, 1.442695
    %v541 = vpow.pop %v540
    %v542 = vmul.f32 %v532, 1.442695
    %v543 = vpow.pop %v542
    %v544 = vmul.f32 %v533, 1.442695
    %v545 = vpow.pop %v544
    %v546 = vmul.f32 %v534, 1.442695
    %v547 = vpow.pop %v546
    %v548 = vmul.f32 %v535, 1.442695
    %v549 = vpow.pop %v548
    %v550 = vmul.f32 %v536, 1.442695
    %v551 = vpow.pop %v550
    %v552 = vmul.f32 %v537, 1.442695
    %v553 = vpow.pop %v552
    %v554 = vmul.f32 %v514, %v539
    %v555 = vmul.f32 %v515, %v541
    %v556 = vmul.f32 %v516, %v543
    %v557 = vmul.f32 %v517, %v545
    %v558 = vmul.f32 %v518, %v547
    %v559 = vmul.f32 %v519, %v549
    %v560 = vmul.f32 %v520, %v551
    %v561 = vmul.f32 %v521, %v553
    %v562 = vsub.f32 1.0, %v554
    %v563 = vsub.f32 1.0, %v555
    %v564 = vsub.f32 1.0, %v556
    %v565 = vsub.f32 1.0, %v557
    %v566 = vsub.f32 1.0, %v558
    %v567 = vsub.f32 1.0, %v559
    %v568 = vsub.f32 1.0, %v560
    %v569 = vsub.f32 1.0, %v561
    %v570 = vmul.f32 %v410, %v562
    %v571 = vmul.f32 %v411, %v563
    %v572 = vmul.f32 %v412, %v564
    %v573 = vmul.f32 %v413, %v565
    %v574 = vmul.f32 %v414, %v566
    %v575 = vmul.f32 %v415, %v567
    %v576 = vmul.f32 %v416, %v568
    %v577 = vmul.f32 %v417, %v569
    %v578 = vmul.f32 %v386, 0.5
    %v579 = vmul.f32 %v387, 0.5
    %v580 = vmul.f32 %v388, 0.5
    %v581 = vmul.f32 %v389, 0.5
    %v582 = vmul.f32 %v390, 0.5
    %v583 = vmul.f32 %v391, 0.5
    %v584 = vmul.f32 %v392, 0.5
    %v585 = vmul.f32 %v393, 0.5
    %v586 = vadd.f32 %v570, 1.0
    %v587 = vadd.f32 %v571, 1.0
    %v588 = vadd.f32 %v572, 1.0
    %v589 = vadd.f32 %v573, 1.0
    %v590 = vadd.f32 %v574, 1.0
    %v591 = vadd.f32 %v575, 1.0
    %v592 = vadd.f32 %v576, 1.0
    %v593 = vadd.f32 %v577, 1.0
    %v594 = vmul.f32 %v578, %v586
    %v595 = vmul.f32 %v579, %v587
    %v596 = vmul.f32 %v580, %v588
    %v597 = vmul.f32 %v581, %v589
    %v598 = vmul.f32 %v582, %v590
    %v599 = vmul.f32 %v583, %v591
    %v600 = vmul.f32 %v584, %v592
    %v601 = vmul.f32 %v585, %v593
    %v602 = vld [vmem:[%s5] sm:$0xf]
    %v603 = vld [vmem:[%s5 + $0x4] sm:$0xf]
    %v604 = vld [vmem:[%s5 + $0x8] sm:$0xf]
    %v605 = vld [vmem:[%s5 + $0xc] sm:$0xf]
    %v606 = vld [vmem:[%s6] sm:$0x1]
    %v607 = vpack.c.bf16 %v595, %v594
    %v608 = vpack.c.bf16 %v597, %v596
    %v609 = vpack.c.bf16 %v599, %v598
    %v610 = vpack.c.bf16 %v601, %v600
    %v612 = vlaneseq
    %v613 = vshrl.u32 %v612, 7
    %v614 = vsub.s32 0, %v613
    %v615 = vrot.slane %v606, %v614
    %v621 = vunpack.c.l.b16 %v602
    %v622 = vunpack.c.l.b16 %v603
    %v623 = vunpack.c.l.b16 %v604
    %v624 = vunpack.c.l.b16 %v605
    %v625 = vpack.c.b16 %v622, %v621
    %v626 = vpack.c.b16 %v624, %v623
    %v630 = vsel %vm260, %v607, 0
    %v633 = vsel %vm260, %v608, 0
    %v636 = vsel %vm260, %v609, 0
    %v639 = vsel %vm260, %v610, 0
    %641 = vmatprep.subr.bf16.mxu0 0
    %642 = vmatpush1.bf16.msra.mxu0 %v625
    %643 = vmatprep.subr.bf16.mxu0 0
    %644 = vmatpush1.bf16.msra.mxu0 %v626
    %645 = vmatprep.subr.bf16.mxu0 0
    %646 = vmatpush1.bf16.msra.mxu0 0
    %647 = vmatprep.subr.bf16.mxu0 0
    %648 = vmatpush1.bf16.msra.mxu0 0
    %649 = vmatprep.subr.bf16.mxu0 0
    %650 = vmatpush1.bf16.msra.mxu0 0
    %651 = vmatprep.subr.bf16.mxu0 0
    %652 = vmatpush1.bf16.msra.mxu0 0
    %653 = vmatprep.subr.bf16.mxu0 0
    %654 = vmatpush1.bf16.msra.mxu0 0
    %655 = vmatprep.subr.bf16.mxu0 0
    %656 = vmatpush1.bf16.msra.mxu0 0
    %657 = vmatprep.subr.bf16.mxu0 0
    %658 = vmatpush1.bf16.msra.mxu0 0
    %659 = vmatprep.subr.bf16.mxu0 0
    %660 = vmatpush1.bf16.msra.mxu0 0
    %661 = vmatprep.subr.bf16.mxu0 0
    %662 = vmatpush1.bf16.msra.mxu0 0
    %663 = vmatprep.subr.bf16.mxu0 0
    %664 = vmatpush1.bf16.msra.mxu0 0
    %665 = vmatprep.subr.bf16.mxu0 0
    %666 = vmatpush1.bf16.msra.mxu0 0
    %667 = vmatprep.subr.bf16.mxu0 0
    %668 = vmatpush1.bf16.msra.mxu0 0
    %669 = vmatprep.subr.bf16.mxu0 0
    %670 = vmatpush1.bf16.msra.mxu0 0
    %671 = vmatprep.subr.bf16.mxu0 0
    %672 = vmatpush1.bf16.msra.mxu0 0
    %673 = vmatprep.mubr.bf16.mxu0 0
    %674 = vmatmul.mubr.bf16.gmra.mrb[0].mxu0 %v630
    %v675 = vpop.f32.mrb[0].mxu0
    %v676 = vadd.f32 %v615, %v675
    %v677 = vpop.f32.mrb[0].mxu0
    %v678 = vpop.f32.mrb[0].mxu0
    %v679 = vadd.f32 %v615, %v678
    %v680 = vpop.f32.mrb[0].mxu0
    %681 = vmatprep.mubr.bf16.mxu0 0
    %682 = vmatmul.mubr.bf16.gmra.mrb[0].mxu0 %v633
    %v683 = vpop.f32.mrb[0].mxu0
    %v684 = vadd.f32 %v615, %v683
    %v685 = vpop.f32.mrb[0].mxu0
    %v686 = vpop.f32.mrb[0].mxu0
    %v687 = vadd.f32 %v615, %v686
    %v688 = vpop.f32.mrb[0].mxu0
    %689 = vmatprep.mubr.bf16.mxu0 0
    %690 = vmatmul.mubr.bf16.gmra.mrb[0].mxu0 %v636
    %v691 = vpop.f32.mrb[0].mxu0
    %v692 = vadd.f32 %v615, %v691
    %v693 = vpop.f32.mrb[0].mxu0
    %v694 = vpop.f32.mrb[0].mxu0
    %v695 = vadd.f32 %v615, %v694
    %v696 = vpop.f32.mrb[0].mxu0
    %697 = vmatprep.mubr.bf16.mxu0 0
    %698 = vmatmul.mubr.bf16.gmra.mrb[0].mxu0 %v639
    %v699 = vpop.f32.mrb[0].mxu0
    %v700 = vadd.f32 %v615, %v699
    %v701 = vpop.f32.mrb[0].mxu0
    %v702 = vpop.f32.mrb[0].mxu0
    %v703 = vadd.f32 %v615, %v702
    %v704 = vpop.f32.mrb[0].mxu0
    %705 = vdwg.mxu0
    %v706 = vld [vmem:[%s7] sm:$0x1]
    %v707 = vld [vmem:[%s8] sm:$0x1]
    %v708 = vsel %vm260, %v676, 0.0
    %709 = vadd.xlane.f32.xlu0 %v708
    %v710 = vpop.xlane.xlu0 %709
    %v711 = vsel %vm260, %v679, 0.0
    %712 = vadd.xlane.f32.xlu0 %v711
    %v713 = vpop.xlane.xlu0 %712
    %v714 = vsel %vm260, %v684, 0.0
    %715 = vadd.xlane.f32.xlu0 %v714
    %v716 = vpop.xlane.xlu0 %715
    %v717 = vsel %vm260, %v687, 0.0
    %718 = vadd.xlane.f32.xlu0 %v717
    %v719 = vpop.xlane.xlu0 %718
    %v720 = vsel %vm260, %v692, 0.0
    %721 = vadd.xlane.f32.xlu0 %v720
    %v722 = vpop.xlane.xlu0 %721
    %v723 = vsel %vm260, %v695, 0.0
    %724 = vadd.xlane.f32.xlu0 %v723
    %v725 = vpop.xlane.xlu0 %724
    %v726 = vsel %vm260, %v700, 0.0
    %727 = vadd.xlane.f32.xlu0 %v726
    %v728 = vpop.xlane.xlu0 %727
    %v729 = vsel %vm260, %v703, 0.0
    %730 = vadd.xlane.f32.xlu0 %v729
    %v731 = vpop.xlane.xlu0 %730
    %v732 = vmul.f32 %v710, %v285
    %v733 = vmul.f32 %v713, %v285
    %v734 = vmul.f32 %v716, %v285
    %v735 = vmul.f32 %v719, %v285
    %v736 = vmul.f32 %v722, %v285
    %v737 = vmul.f32 %v725, %v285
    %v738 = vmul.f32 %v728, %v285
    %v739 = vmul.f32 %v731, %v285
    %v740 = vsub.f32 %v676, %v732
    %v741 = vsub.f32 %v679, %v733
    %v742 = vsub.f32 %v684, %v734
    %v743 = vsub.f32 %v687, %v735
    %v744 = vsub.f32 %v692, %v736
    %v745 = vsub.f32 %v695, %v737
    %v746 = vsub.f32 %v700, %v738
    %v747 = vsub.f32 %v703, %v739
    %v748 = vmul.f32 %v740, %v740
    %v749 = vmul.f32 %v741, %v741
    %v750 = vmul.f32 %v742, %v742
    %v751 = vmul.f32 %v743, %v743
    %v752 = vmul.f32 %v744, %v744
    %v753 = vmul.f32 %v745, %v745
    %v754 = vmul.f32 %v746, %v746
    %v755 = vmul.f32 %v747, %v747
    %v756 = vsel %vm260, %v748, 0.0
    %757 = vadd.xlane.f32.xlu0 %v756
    %v758 = vpop.xlane.xlu0 %757
    %v759 = vsel %vm260, %v749, 0.0
    %760 = vadd.xlane.f32.xlu0 %v759
    %v761 = vpop.xlane.xlu0 %760
    %v762 = vsel %vm260, %v750, 0.0
    %763 = vadd.xlane.f32.xlu0 %v762
    %v764 = vpop.xlane.xlu0 %763
    %v765 = vsel %vm260, %v751, 0.0
    %766 = vadd.xlane.f32.xlu0 %v765
    %v767 = vpop.xlane.xlu0 %766
    %v768 = vsel %vm260, %v752, 0.0
    %769 = vadd.xlane.f32.xlu0 %v768
    %v770 = vpop.xlane.xlu0 %769
    %v771 = vsel %vm260, %v753, 0.0
    %772 = vadd.xlane.f32.xlu0 %v771
    %v773 = vpop.xlane.xlu0 %772
    %v774 = vsel %vm260, %v754, 0.0
    %775 = vadd.xlane.f32.xlu0 %v774
    %v776 = vpop.xlane.xlu0 %775
    %v777 = vsel %vm260, %v755, 0.0
    %778 = vadd.xlane.f32.xlu0 %v777
    %v779 = vpop.xlane.xlu0 %778
    %v780 = vmul.f32 %v758, %v285
    %v781 = vmul.f32 %v761, %v285
    %v782 = vmul.f32 %v764, %v285
    %v783 = vmul.f32 %v767, %v285
    %v784 = vmul.f32 %v770, %v285
    %v785 = vmul.f32 %v773, %v285
    %v786 = vmul.f32 %v776, %v285
    %v787 = vmul.f32 %v779, %v285
    %v788 = vadd.f32 %v780, 1e-05
    %v789 = vadd.f32 %v781, 1e-05
    %v790 = vadd.f32 %v782, 1e-05
    %v791 = vadd.f32 %v783, 1e-05
    %v792 = vadd.f32 %v784, 1e-05
    %v793 = vadd.f32 %v785, 1e-05
    %v794 = vadd.f32 %v786, 1e-05
    %v795 = vadd.f32 %v787, 1e-05
    %v796 = vrsqrt.pop %v788
    %v797 = vrsqrt.pop %v789
    %v798 = vrsqrt.pop %v790
    %v799 = vrsqrt.pop %v791
    %v800 = vrsqrt.pop %v792
    %v801 = vrsqrt.pop %v793
    %v802 = vrsqrt.pop %v794
    %v803 = vrsqrt.pop %v795
    %v804 = vmul.f32 %v740, %v796
    %v805 = vmul.f32 %v741, %v797
    %v806 = vmul.f32 %v742, %v798
    %v807 = vmul.f32 %v743, %v799
    %v808 = vmul.f32 %v744, %v800
    %v809 = vmul.f32 %v745, %v801
    %v810 = vmul.f32 %v746, %v802
    %v811 = vmul.f32 %v747, %v803
    %v812 = vlaneseq
    %v813 = vshrl.u32 %v812, 7
    %v814 = vsub.s32 0, %v813
    %v815 = vrot.slane %v706, %v814
    %v816 = vmul.f32 %v804, %v815
    %v817 = vmul.f32 %v805, %v815
    %v818 = vmul.f32 %v806, %v815
    %v819 = vmul.f32 %v807, %v815
    %v820 = vmul.f32 %v808, %v815
    %v821 = vmul.f32 %v809, %v815
    %v822 = vmul.f32 %v810, %v815
    %v823 = vmul.f32 %v811, %v815
    %v824 = vlaneseq
    %v825 = vshrl.u32 %v824, 7
    %v826 = vsub.s32 0, %v825
    %v827 = vrot.slane %v707, %v826
    %v828 = vadd.f32 %v816, %v827
    %v829 = vadd.f32 %v817, %v827
    %v830 = vadd.f32 %v818, %v827
    %v831 = vadd.f32 %v819, %v827
    %v832 = vadd.f32 %v820, %v827
    %v833 = vadd.f32 %v821, %v827
    %v834 = vadd.f32 %v822, %v827
    %v835 = vadd.f32 %v823, %v827
    %v836 = vld [vmem:[%s9] sm:$0xf]
    %v837 = vld [vmem:[%s9 + $0x4] sm:$0xf]
    %v838 = vld [vmem:[%s9 + $0x8] sm:$0xf]
    %v839 = vld [vmem:[%s9 + $0xc] sm:$0xf]
    %v840 = vpack.c.bf16 %v829, %v828
    %v841 = vpack.c.bf16 %v831, %v830
    %v842 = vpack.c.bf16 %v833, %v832
    %v843 = vpack.c.bf16 %v835, %v834
    %v848 = vunpack.c.l.b16 %v836
    %v849 = vunpack.c.l.b16 %v837
    %v850 = vunpack.c.l.b16 %v838
    %v851 = vunpack.c.l.b16 %v839
    %v852 = vpack.c.b16 %v849, %v848
    %v853 = vpack.c.b16 %v851, %v850
    %v857 = vsel %vm260, %v840, 0
    %v860 = vsel %vm260, %v841, 0
    %v863 = vsel %vm260, %v842, 0
    %v866 = vsel %vm260, %v843, 0
    %868 = vmatprep.subr.bf16.mxu0 0
    %869 = vmatpush1.bf16.msra.mxu0 %v852
    %870 = vmatprep.subr.bf16.mxu0 0
    %871 = vmatpush1.bf16.msra.mxu0 %v853
    %872 = vmatprep.subr.bf16.mxu0 0
    %873 = vmatpush1.bf16.msra.mxu0 0
    %874 = vmatprep.subr.bf16.mxu0 0
    %875 = vmatpush1.bf16.msra.mxu0 0
    %876 = vmatprep.subr.bf16.mxu0 0
    %877 = vmatpush1.bf16.msra.mxu0 0
    %878 = vmatprep.subr.bf16.mxu0 0
    %879 = vmatpush1.bf16.msra.mxu0 0
    %880 = vmatprep.subr.bf16.mxu0 0
    %881 = vmatpush1.bf16.msra.mxu0 0
    %882 = vmatprep.subr.bf16.mxu0 0
    %883 = vmatpush1.bf16.msra.mxu0 0
    %884 = vmatprep.subr.bf16.mxu0 0
    %885 = vmatpush1.bf16.msra.mxu0 0
    %886 = vmatprep.subr.bf16.mxu0 0
    %887 = vmatpush1.bf16.msra.mxu0 0
    %888 = vmatprep.subr.bf16.mxu0 0
    %889 = vmatpush1.bf16.msra.mxu0 0
    %890 = vmatprep.subr.bf16.mxu0 0
    %891 = vmatpush1.bf16.msra.mxu0 0
    %892 = vmatprep.subr.bf16.mxu0 0
    %893 = vmatpush1.bf16.msra.mxu0 0
    %894 = vmatprep.subr.bf16.mxu0 0
    %895 = vmatpush1.bf16.msra.mxu0 0
    %896 = vmatprep.subr.bf16.mxu0 0
    %897 = vmatpush1.bf16.msra.mxu0 0
    %898 = vmatprep.subr.bf16.mxu0 0
    %899 = vmatpush1.bf16.msra.mxu0 0
    %900 = vmatprep.mubr.bf16.mxu0 0
    %901 = vmatmul.mubr.bf16.gmra.mrb[0].mxu0 %v857
    %v902 = vpop.f32.mrb[0].mxu0
    %v903 = vadd.f32 0.0, %v902
    %v904 = vpop.f32.mrb[0].mxu0
    %v905 = vpop.f32.mrb[0].mxu0
    %v906 = vadd.f32 0.0, %v905
    %v907 = vpop.f32.mrb[0].mxu0
    %908 = vmatprep.mubr.bf16.mxu0 0
    %909 = vmatmul.mubr.bf16.gmra.mrb[0].mxu0 %v860
    %v910 = vpop.f32.mrb[0].mxu0
    %v911 = vadd.f32 0.0, %v910
    %v912 = vpop.f32.mrb[0].mxu0
    %v913 = vpop.f32.mrb[0].mxu0
    %v914 = vadd.f32 0.0, %v913
    %v915 = vpop.f32.mrb[0].mxu0
    %916 = vmatprep.mubr.bf16.mxu0 0
    %917 = vmatmul.mubr.bf16.gmra.mrb[0].mxu0 %v863
    %v918 = vpop.f32.mrb[0].mxu0
    %v919 = vadd.f32 0.0, %v918
    %v920 = vpop.f32.mrb[0].mxu0
    %v921 = vpop.f32.mrb[0].mxu0
    %v922 = vadd.f32 0.0, %v921
    %v923 = vpop.f32.mrb[0].mxu0
    %924 = vmatprep.mubr.bf16.mxu0 0
    %925 = vmatmul.mubr.bf16.gmra.mrb[0].mxu0 %v866
    %v926 = vpop.f32.mrb[0].mxu0
    %v927 = vadd.f32 0.0, %v926
    %v928 = vpop.f32.mrb[0].mxu0
    %v929 = vpop.f32.mrb[0].mxu0
    %v930 = vadd.f32 0.0, %v929
    %v931 = vpop.f32.mrb[0].mxu0
    %932 = vdwg.mxu0
    %v933 = vpack.c.bf16 %v906, %v903
    %v934 = vpack.c.bf16 %v914, %v911
    %v935 = vpack.c.bf16 %v922, %v919
    %v936 = vpack.c.bf16 %v930, %v927
    %938 = vrot.lane.b32.xlu0 %v933, 96
    %v939 = vpop.permute.xlu0 %938
    %vm940 = vcmask 130048
    %v942 = vsel %vm940, %v933, 0
    %v945 = vsel %vm940, %v939, 0
    %947 = vmatprep.subr.bf16.mxu0 0
    %948 = vmatpush1.bf16.xpose.msra.mxu0 %v945
    %949 = vmatprep.subr.bf16.mxu0 0
    %950 = vmatpush1.bf16.xpose.msra.mxu0 0
    %951 = vmatprep.subr.bf16.mxu0 0
    %952 = vmatpush1.bf16.xpose.msra.mxu0 0
    %953 = vmatprep.subr.bf16.mxu0 0
    %954 = vmatpush1.bf16.xpose.msra.mxu0 0
    %955 = vmatprep.subr.bf16.mxu0 0
    %956 = vmatpush1.bf16.xpose.msra.mxu0 0
    %957 = vmatprep.subr.bf16.mxu0 0
    %958 = vmatpush1.bf16.xpose.msra.mxu0 0
    %959 = vmatprep.subr.bf16.mxu0 0
    %960 = vmatpush1.bf16.xpose.msra.mxu0 0
    %961 = vmatprep.subr.bf16.mxu0 0
    %962 = vmatpush1.bf16.xpose.msra.mxu0 0
    %963 = vmatprep.subr.bf16.mxu0 0
    %964 = vmatpush1.bf16.xpose.msra.mxu0 0
    %965 = vmatprep.subr.bf16.mxu0 0
    %966 = vmatpush1.bf16.xpose.msra.mxu0 0
    %967 = vmatprep.subr.bf16.mxu0 0
    %968 = vmatpush1.bf16.xpose.msra.mxu0 0
    %969 = vmatprep.subr.bf16.mxu0 0
    %970 = vmatpush1.bf16.xpose.msra.mxu0 0
    %971 = vmatprep.subr.bf16.mxu0 0
    %972 = vmatpush1.bf16.xpose.msra.mxu0 0
    %973 = vmatprep.subr.bf16.mxu0 0
    %974 = vmatpush1.bf16.xpose.msra.mxu0 0
    %975 = vmatprep.subr.bf16.mxu0 0
    %976 = vmatpush1.bf16.xpose.msra.mxu0 0
    %977 = vmatprep.subr.bf16.mxu0 0
    %978 = vmatpush1.bf16.xpose.msra.mxu0 0
    %979 = vmatprep.mubr.bf16.mxu0 0
    %980 = vmatmul.mubr.bf16.gmra.mrb[0].mxu0 %v942
    %v981 = vpop.f32.mrb[0].mxu0
    %v982 = vadd.f32 0.0, %v981
    %v983 = vpop.f32.mrb[0].mxu0
    %v984 = vpop.f32.mrb[0].mxu0
    %v985 = vadd.f32 0.0, %v984
    %v986 = vpop.f32.mrb[0].mxu0
    %987 = vdwg.mxu0
    %989 = vrot.lane.b32.xlu0 %v934, 96
    %v990 = vpop.permute.xlu0 %989
    %v992 = vsel %vm940, %v934, 0
    %v995 = vsel %vm940, %v990, 0
    %997 = vmatprep.subr.bf16.mxu0 0
    %998 = vmatpush1.bf16.xpose.msra.mxu0 %v995
    %999 = vmatprep.subr.bf16.mxu0 0
    %1000 = vmatpush1.bf16.xpose.msra.mxu0 0
    %1001 = vmatprep.subr.bf16.mxu0 0
    %1002 = vmatpush1.bf16.xpose.msra.mxu0 0
    %1003 = vmatprep.subr.bf16.mxu0 0
    %1004 = vmatpush1.bf16.xpose.msra.mxu0 0
    %1005 = vmatprep.subr.bf16.mxu0 0
    %1006 = vmatpush1.bf16.xpose.msra.mxu0 0
    %1007 = vmatprep.subr.bf16.mxu0 0
    %1008 = vmatpush1.bf16.xpose.msra.mxu0 0
    %1009 = vmatprep.subr.bf16.mxu0 0
    %1010 = vmatpush1.bf16.xpose.msra.mxu0 0
    %1011 = vmatprep.subr.bf16.mxu0 0
    %1012 = vmatpush1.bf16.xpose.msra.mxu0 0
    %1013 = vmatprep.subr.bf16.mxu0 0
    %1014 = vmatpush1.bf16.xpose.msra.mxu0 0
    %1015 = vmatprep.subr.bf16.mxu0 0
    %1016 = vmatpush1.bf16.xpose.msra.mxu0 0
    %1017 = vmatprep.subr.bf16.mxu0 0
    %1018 = vmatpush1.bf16.xpose.msra.mxu0 0
    %1019 = vmatprep.subr.bf16.mxu0 0
    %1020 = vmatpush1.bf16.xpose.msra.mxu0 0
    %1021 = vmatprep.subr.bf16.mxu0 0
    %1022 = vmatpush1.bf16.xpose.msra.mxu0 0
    %1023 = vmatprep.subr.bf16.mxu0 0
    %1024 = vmatpush1.bf16.xpose.msra.mxu0 0
    %1025 = vmatprep.subr.bf16.mxu0 0
    %1026 = vmatpush1.bf16.xpose.msra.mxu0 0
    %1027 = vmatprep.subr.bf16.mxu0 0
    %1028 = vmatpush1.bf16.xpose.msra.mxu0 0
    %1029 = vmatprep.mubr.bf16.mxu0 0
    %1030 = vmatmul.mubr.bf16.gmra.mrb[0].mxu0 %v992
    %v1031 = vpop.f32.mrb[0].mxu0
    %v1032 = vadd.f32 0.0, %v1031
    %v1033 = vpop.f32.mrb[0].mxu0
    %v1034 = vpop.f32.mrb[0].mxu0
    %v1035 = vadd.f32 0.0, %v1034
    %v1036 = vpop.f32.mrb[0].mxu0
    %1037 = vdwg.mxu0
    %1039 = vrot.lane.b32.xlu0 %v935, 96
    %v1040 = vpop.permute.xlu0 %1039
    %v1042 = vsel %vm940, %v935, 0
    %v1045 = vsel %vm940, %v1040, 0
    %1047 = vmatprep.subr.bf16.mxu0 0
    %1048 = vmatpush1.bf16.xpose.msra.mxu0 %v1045
    %1049 = vmatprep.subr.bf16.mxu0 0
    %1050 = vmatpush1.bf16.xpose.msra.mxu0 0
    %1051 = vmatprep.subr.bf16.mxu0 0
    %1052 = vmatpush1.bf16.xpose.msra.mxu0 0
    %1053 = vmatprep.subr.bf16.mxu0 0
    %1054 = vmatpush1.bf16.xpose.msra.mxu0 0
    %1055 = vmatprep.subr.bf16.mxu0 0
    %1056 = vmatpush1.bf16.xpose.msra.mxu0 0
    %1057 = vmatprep.subr.bf16.mxu0 0
    %1058 = vmatpush1.bf16.xpose.msra.mxu0 0
    %1059 = vmatprep.subr.bf16.mxu0 0
    %1060 = vmatpush1.bf16.xpose.msra.mxu0 0
    %1061 = vmatprep.subr.bf16.mxu0 0
    %1062 = vmatpush1.bf16.xpose.msra.mxu0 0
    %1063 = vmatprep.subr.bf16.mxu0 0
    %1064 = vmatpush1.bf16.xpose.msra.mxu0 0
    %1065 = vmatprep.subr.bf16.mxu0 0
    %1066 = vmatpush1.bf16.xpose.msra.mxu0 0
    %1067 = vmatprep.subr.bf16.mxu0 0
    %1068 = vmatpush1.bf16.xpose.msra.mxu0 0
    %1069 = vmatprep.subr.bf16.mxu0 0
    %1070 = vmatpush1.bf16.xpose.msra.mxu0 0
    %1071 = vmatprep.subr.bf16.mxu0 0
    %1072 = vmatpush1.bf16.xpose.msra.mxu0 0
    %1073 = vmatprep.subr.bf16.mxu0 0
    %1074 = vmatpush1.bf16.xpose.msra.mxu0 0
    %1075 = vmatprep.subr.bf16.mxu0 0
    %1076 = vmatpush1.bf16.xpose.msra.mxu0 0
    %1077 = vmatprep.subr.bf16.mxu0 0
    %1078 = vmatpush1.bf16.xpose.msra.mxu0 0
    %1079 = vmatprep.mubr.bf16.mxu0 0
    %1080 = vmatmul.mubr.bf16.gmra.mrb[0].mxu0 %v1042
    %v1081 = vpop.f32.mrb[0].mxu0
    %v1082 = vadd.f32 0.0, %v1081
    %v1083 = vpop.f32.mrb[0].mxu0
    %v1084 = vpop.f32.mrb[0].mxu0
    %v1085 = vadd.f32 0.0, %v1084
    %v1086 = vpop.f32.mrb[0].mxu0
    %1087 = vdwg.mxu0
    %1089 = vrot.lane.b32.xlu0 %v936, 96
    %v1090 = vpop.permute.xlu0 %1089
    %v1092 = vsel %vm940, %v936, 0
    %v1095 = vsel %vm940, %v1090, 0
    %1097 = vmatprep.subr.bf16.mxu0 0
    %1098 = vmatpush1.bf16.xpose.msra.mxu0 %v1095
    %1099 = vmatprep.subr.bf16.mxu0 0
    %1100 = vmatpush1.bf16.xpose.msra.mxu0 0
    %1101 = vmatprep.subr.bf16.mxu0 0
    %1102 = vmatpush1.bf16.xpose.msra.mxu0 0
    %1103 = vmatprep.subr.bf16.mxu0 0
    %1104 = vmatpush1.bf16.xpose.msra.mxu0 0
    %1105 = vmatprep.subr.bf16.mxu0 0
    %1106 = vmatpush1.bf16.xpose.msra.mxu0 0
    %1107 = vmatprep.subr.bf16.mxu0 0
    %1108 = vmatpush1.bf16.xpose.msra.mxu0 0
    %1109 = vmatprep.subr.bf16.mxu0 0
    %1110 = vmatpush1.bf16.xpose.msra.mxu0 0
    %1111 = vmatprep.subr.bf16.mxu0 0
    %1112 = vmatpush1.bf16.xpose.msra.mxu0 0
    %1113 = vmatprep.subr.bf16.mxu0 0
    %1114 = vmatpush1.bf16.xpose.msra.mxu0 0
    %1115 = vmatprep.subr.bf16.mxu0 0
    %1116 = vmatpush1.bf16.xpose.msra.mxu0 0
    %1117 = vmatprep.subr.bf16.mxu0 0
    %1118 = vmatpush1.bf16.xpose.msra.mxu0 0
    %1119 = vmatprep.subr.bf16.mxu0 0
    %1120 = vmatpush1.bf16.xpose.msra.mxu0 0
    %1121 = vmatprep.subr.bf16.mxu0 0
    %1122 = vmatpush1.bf16.xpose.msra.mxu0 0
    %1123 = vmatprep.subr.bf16.mxu0 0
    %1124 = vmatpush1.bf16.xpose.msra.mxu0 0
    %1125 = vmatprep.subr.bf16.mxu0 0
    %1126 = vmatpush1.bf16.xpose.msra.mxu0 0
    %1127 = vmatprep.subr.bf16.mxu0 0
    %1128 = vmatpush1.bf16.xpose.msra.mxu0 0
    %1129 = vmatprep.mubr.bf16.mxu0 0
    %1130 = vmatmul.mubr.bf16.gmra.mrb[0].mxu0 %v1092
    %v1131 = vpop.f32.mrb[0].mxu0
    %v1132 = vadd.f32 0.0, %v1131
    %v1133 = vpop.f32.mrb[0].mxu0
    %v1134 = vpop.f32.mrb[0].mxu0
    %v1135 = vadd.f32 0.0, %v1134
    %v1136 = vpop.f32.mrb[0].mxu0
    %1137 = vdwg.mxu0
    %v1138 = vsel %vm940, %v982, -inf
    %1139 = vmax.xlane.f32.xlu0 %v1138
    %v1140 = vpop.xlane.xlu0 %1139
    %v1141 = vsel %vm940, %v985, -inf
    %1142 = vmax.xlane.f32.xlu0 %v1141
    %v1143 = vpop.xlane.xlu0 %1142
    %v1144 = vsel %vm940, %v1032, -inf
    %1145 = vmax.xlane.f32.xlu0 %v1144
    %v1146 = vpop.xlane.xlu0 %1145
    %v1147 = vsel %vm940, %v1035, -inf
    %1148 = vmax.xlane.f32.xlu0 %v1147
    %v1149 = vpop.xlane.xlu0 %1148
    %v1150 = vsel %vm940, %v1082, -inf
    %1151 = vmax.xlane.f32.xlu0 %v1150
    %v1152 = vpop.xlane.xlu0 %1151
    %v1153 = vsel %vm940, %v1085, -inf
    %1154 = vmax.xlane.f32.xlu0 %v1153
    %v1155 = vpop.xlane.xlu0 %1154
    %v1156 = vsel %vm940, %v1132, -inf
    %1157 = vmax.xlane.f32.xlu0 %v1156
    %v1158 = vpop.xlane.xlu0 %1157
    %v1159 = vsel %vm940, %v1135, -inf
    %1160 = vmax.xlane.f32.xlu0 %v1159
    %v1161 = vpop.xlane.xlu0 %1160
    %v1162 = vsub.f32 %v982, %v1140
    %v1163 = vsub.f32 %v985, %v1143
    %v1164 = vsub.f32 %v1032, %v1146
    %v1165 = vsub.f32 %v1035, %v1149
    %v1166 = vsub.f32 %v1082, %v1152
    %v1167 = vsub.f32 %v1085, %v1155
    %v1168 = vsub.f32 %v1132, %v1158
    %v1169 = vsub.f32 %v1135, %v1161
    %v1170 = vmul.f32 %v1162, 1.442695
    %v1171 = vpow.pop %v1170
    %v1172 = vmul.f32 %v1163, 1.442695
    %v1173 = vpow.pop %v1172
    %v1174 = vmul.f32 %v1164, 1.442695
    %v1175 = vpow.pop %v1174
    %v1176 = vmul.f32 %v1165, 1.442695
    %v1177 = vpow.pop %v1176
    %v1178 = vmul.f32 %v1166, 1.442695
    %v1179 = vpow.pop %v1178
    %v1180 = vmul.f32 %v1167, 1.442695
    %v1181 = vpow.pop %v1180
    %v1182 = vmul.f32 %v1168, 1.442695
    %v1183 = vpow.pop %v1182
    %v1184 = vmul.f32 %v1169, 1.442695
    %v1185 = vpow.pop %v1184
    %v1186 = vsel %vm940, %v1171, 0.0
    %1187 = vadd.xlane.f32.xlu0 %v1186
    %v1188 = vpop.xlane.xlu0 %1187
    %v1189 = vsel %vm940, %v1173, 0.0
    %1190 = vadd.xlane.f32.xlu0 %v1189
    %v1191 = vpop.xlane.xlu0 %1190
    %v1192 = vsel %vm940, %v1175, 0.0
    %1193 = vadd.xlane.f32.xlu0 %v1192
    %v1194 = vpop.xlane.xlu0 %1193
    %v1195 = vsel %vm940, %v1177, 0.0
    %1196 = vadd.xlane.f32.xlu0 %v1195
    %v1197 = vpop.xlane.xlu0 %1196
    %v1198 = vsel %vm940, %v1179, 0.0
    %1199 = vadd.xlane.f32.xlu0 %v1198
    %v1200 = vpop.xlane.xlu0 %1199
    %v1201 = vsel %vm940, %v1181, 0.0
    %1202 = vadd.xlane.f32.xlu0 %v1201
    %v1203 = vpop.xlane.xlu0 %1202
    %v1204 = vsel %vm940, %v1183, 0.0
    %1205 = vadd.xlane.f32.xlu0 %v1204
    %v1206 = vpop.xlane.xlu0 %1205
    %v1207 = vsel %vm940, %v1185, 0.0
    %1208 = vadd.xlane.f32.xlu0 %v1207
    %v1209 = vpop.xlane.xlu0 %1208
    %v1210 = vrcp.pop %v1188
    %v1211 = vrcp.pop %v1191
    %v1212 = vrcp.pop %v1194
    %v1213 = vrcp.pop %v1197
    %v1214 = vrcp.pop %v1200
    %v1215 = vrcp.pop %v1203
    %v1216 = vrcp.pop %v1206
    %v1217 = vrcp.pop %v1209
    %v1218 = vmul.f32 %v1171, %v1210
    %v1219 = vmul.f32 %v1173, %v1211
    %v1220 = vmul.f32 %v1175, %v1212
    %v1221 = vmul.f32 %v1177, %v1213
    %v1222 = vmul.f32 %v1179, %v1214
    %v1223 = vmul.f32 %v1181, %v1215
    %v1224 = vmul.f32 %v1183, %v1216
    %v1225 = vmul.f32 %v1185, %v1217
    %v1226 = vpack.c.bf16 %v1219, %v1218
    %v1227 = vpack.c.bf16 %v1221, %v1220
    %v1228 = vpack.c.bf16 %v1223, %v1222
    %v1229 = vpack.c.bf16 %v1225, %v1224
    %1230 = vrot.lane.b32.xlu0 %v933, 112
    %v1231 = vpop.permute.xlu0 %1230
    %1232 = vrot.lane.b32.xlu0 %v933, 80
    %v1233 = vpop.permute.xlu0 %1232
    %v1235 = vsel %vm940, %v1231, 0
    %v1238 = vsel %vm940, %v1233, 0
    %1240 = vmatprep.subr.bf16.mxu0 0
    %1241 = vmatpush1.bf16.xpose.msra.mxu0 %v1238
    %1242 = vmatprep.subr.bf16.mxu0 0
    %1243 = vmatpush1.bf16.xpose.msra.mxu0 0
    %1244 = vmatprep.subr.bf16.mxu0 0
    %1245 = vmatpush1.bf16.xpose.msra.mxu0 0
    %1246 = vmatprep.subr.bf16.mxu0 0
    %1247 = vmatpush1.bf16.xpose.msra.mxu0 0
    %1248 = vmatprep.subr.bf16.mxu0 0
    %1249 = vmatpush1.bf16.xpose.msra.mxu0 0
    %1250 = vmatprep.subr.bf16.mxu0 0
    %1251 = vmatpush1.bf16.xpose.msra.mxu0 0
    %1252 = vmatprep.subr.bf16.mxu0 0
    %1253 = vmatpush1.bf16.xpose.msra.mxu0 0
    %1254 = vmatprep.subr.bf16.mxu0 0
    %1255 = vmatpush1.bf16.xpose.msra.mxu0 0
    %1256 = vmatprep.subr.bf16.mxu0 0
    %1257 = vmatpush1.bf16.xpose.msra.mxu0 0
    %1258 = vmatprep.subr.bf16.mxu0 0
    %1259 = vmatpush1.bf16.xpose.msra.mxu0 0
    %1260 = vmatprep.subr.bf16.mxu0 0
    %1261 = vmatpush1.bf16.xpose.msra.mxu0 0
    %1262 = vmatprep.subr.bf16.mxu0 0
    %1263 = vmatpush1.bf16.xpose.msra.mxu0 0
    %1264 = vmatprep.subr.bf16.mxu0 0
    %1265 = vmatpush1.bf16.xpose.msra.mxu0 0
    %1266 = vmatprep.subr.bf16.mxu0 0
    %1267 = vmatpush1.bf16.xpose.msra.mxu0 0
    %1268 = vmatprep.subr.bf16.mxu0 0
    %1269 = vmatpush1.bf16.xpose.msra.mxu0 0
    %1270 = vmatprep.subr.bf16.mxu0 0
    %1271 = vmatpush1.bf16.xpose.msra.mxu0 0
    %1272 = vmatprep.mubr.bf16.mxu0 0
    %1273 = vmatmul.mubr.bf16.gmra.mrb[0].mxu0 %v1235
    %v1274 = vpop.f32.mrb[0].mxu0
    %v1275 = vadd.f32 0.0, %v1274
    %v1276 = vpop.f32.mrb[0].mxu0
    %v1277 = vpop.f32.mrb[0].mxu0
    %v1278 = vadd.f32 0.0, %v1277
    %v1279 = vpop.f32.mrb[0].mxu0
    %1280 = vdwg.mxu0
    %1281 = vrot.lane.b32.xlu0 %v934, 112
    %v1282 = vpop.permute.xlu0 %1281
    %1283 = vrot.lane.b32.xlu0 %v934, 80
    %v1284 = vpop.permute.xlu0 %1283
    %v1286 = vsel %vm940, %v1282, 0
    %v1289 = vsel %vm940, %v1284, 0
    %1291 = vmatprep.subr.bf16.mxu0 0
    %1292 = vmatpush1.bf16.xpose.msra.mxu0 %v1289
    %1293 = vmatprep.subr.bf16.mxu0 0
    %1294 = vmatpush1.bf16.xpose.msra.mxu0 0
    %1295 = vmatprep.subr.bf16.mxu0 0
    %1296 = vmatpush1.bf16.xpose.msra.mxu0 0
    %1297 = vmatprep.subr.bf16.mxu0 0
    %1298 = vmatpush1.bf16.xpose.msra.mxu0 0
    %1299 = vmatprep.subr.bf16.mxu0 0
    %1300 = vmatpush1.bf16.xpose.msra.mxu0 0
    %1301 = vmatprep.subr.bf16.mxu0 0
    %1302 = vmatpush1.bf16.xpose.msra.mxu0 0
    %1303 = vmatprep.subr.bf16.mxu0 0
    %1304 = vmatpush1.bf16.xpose.msra.mxu0 0
    %1305 = vmatprep.subr.bf16.mxu0 0
    %1306 = vmatpush1.bf16.xpose.msra.mxu0 0
    %1307 = vmatprep.subr.bf16.mxu0 0
    %1308 = vmatpush1.bf16.xpose.msra.mxu0 0
    %1309 = vmatprep.subr.bf16.mxu0 0
    %1310 = vmatpush1.bf16.xpose.msra.mxu0 0
    %1311 = vmatprep.subr.bf16.mxu0 0
    %1312 = vmatpush1.bf16.xpose.msra.mxu0 0
    %1313 = vmatprep.subr.bf16.mxu0 0
    %1314 = vmatpush1.bf16.xpose.msra.mxu0 0
    %1315 = vmatprep.subr.bf16.mxu0 0
    %1316 = vmatpush1.bf16.xpose.msra.mxu0 0
    %1317 = vmatprep.subr.bf16.mxu0 0
    %1318 = vmatpush1.bf16.xpose.msra.mxu0 0
    %1319 = vmatprep.subr.bf16.mxu0 0
    %1320 = vmatpush1.bf16.xpose.msra.mxu0 0
    %1321 = vmatprep.subr.bf16.mxu0 0
    %1322 = vmatpush1.bf16.xpose.msra.mxu0 0
    %1323 = vmatprep.mubr.bf16.mxu0 0
    %1324 = vmatmul.mubr.bf16.gmra.mrb[0].mxu0 %v1286
    %v1325 = vpop.f32.mrb[0].mxu0
    %v1326 = vadd.f32 0.0, %v1325
    %v1327 = vpop.f32.mrb[0].mxu0
    %v1328 = vpop.f32.mrb[0].mxu0
    %v1329 = vadd.f32 0.0, %v1328
    %v1330 = vpop.f32.mrb[0].mxu0
    %1331 = vdwg.mxu0
    %1332 = vrot.lane.b32.xlu0 %v935, 112
    %v1333 = vpop.permute.xlu0 %1332
    %1334 = vrot.lane.b32.xlu0 %v935, 80
    %v1335 = vpop.permute.xlu0 %1334
    %v1337 = vsel %vm940, %v1333, 0
    %v1340 = vsel %vm940, %v1335, 0
    %1342 = vmatprep.subr.bf16.mxu0 0
    %1343 = vmatpush1.bf16.xpose.msra.mxu0 %v1340
    %1344 = vmatprep.subr.bf16.mxu0 0
    %1345 = vmatpush1.bf16.xpose.msra.mxu0 0
    %1346 = vmatprep.subr.bf16.mxu0 0
    %1347 = vmatpush1.bf16.xpose.msra.mxu0 0
    %1348 = vmatprep.subr.bf16.mxu0 0
    %1349 = vmatpush1.bf16.xpose.msra.mxu0 0
    %1350 = vmatprep.subr.bf16.mxu0 0
    %1351 = vmatpush1.bf16.xpose.msra.mxu0 0
    %1352 = vmatprep.subr.bf16.mxu0 0
    %1353 = vmatpush1.bf16.xpose.msra.mxu0 0
    %1354 = vmatprep.subr.bf16.mxu0 0
    %1355 = vmatpush1.bf16.xpose.msra.mxu0 0
    %1356 = vmatprep.subr.bf16.mxu0 0
    %1357 = vmatpush1.bf16.xpose.msra.mxu0 0
    %1358 = vmatprep.subr.bf16.mxu0 0
    %1359 = vmatpush1.bf16.xpose.msra.mxu0 0
    %1360 = vmatprep.subr.bf16.mxu0 0
    %1361 = vmatpush1.bf16.xpose.msra.mxu0 0
    %1362 = vmatprep.subr.bf16.mxu0 0
    %1363 = vmatpush1.bf16.xpose.msra.mxu0 0
    %1364 = vmatprep.subr.bf16.mxu0 0
    %1365 = vmatpush1.bf16.xpose.msra.mxu0 0
    %1366 = vmatprep.subr.bf16.mxu0 0
    %1367 = vmatpush1.bf16.xpose.msra.mxu0 0
    %1368 = vmatprep.subr.bf16.mxu0 0
    %1369 = vmatpush1.bf16.xpose.msra.mxu0 0
    %1370 = vmatprep.subr.bf16.mxu0 0
    %1371 = vmatpush1.bf16.xpose.msra.mxu0 0
    %1372 = vmatprep.subr.bf16.mxu0 0
    %1373 = vmatpush1.bf16.xpose.msra.mxu0 0
    %1374 = vmatprep.mubr.bf16.mxu0 0
    %1375 = vmatmul.mubr.bf16.gmra.mrb[0].mxu0 %v1337
    %v1376 = vpop.f32.mrb[0].mxu0
    %v1377 = vadd.f32 0.0, %v1376
    %v1378 = vpop.f32.mrb[0].mxu0
    %v1379 = vpop.f32.mrb[0].mxu0
    %v1380 = vadd.f32 0.0, %v1379
    %v1381 = vpop.f32.mrb[0].mxu0
    %1382 = vdwg.mxu0
    %1383 = vrot.lane.b32.xlu0 %v936, 112
    %v1384 = vpop.permute.xlu0 %1383
    %1385 = vrot.lane.b32.xlu0 %v936, 80
    %v1386 = vpop.permute.xlu0 %1385
    %v1388 = vsel %vm940, %v1384, 0
    %v1391 = vsel %vm940, %v1386, 0
    %1393 = vmatprep.subr.bf16.mxu0 0
    %1394 = vmatpush1.bf16.xpose.msra.mxu0 %v1391
    %1395 = vmatprep.subr.bf16.mxu0 0
    %1396 = vmatpush1.bf16.xpose.msra.mxu0 0
    %1397 = vmatprep.subr.bf16.mxu0 0
    %1398 = vmatpush1.bf16.xpose.msra.mxu0 0
    %1399 = vmatprep.subr.bf16.mxu0 0
    %1400 = vmatpush1.bf16.xpose.msra.mxu0 0
    %1401 = vmatprep.subr.bf16.mxu0 0
    %1402 = vmatpush1.bf16.xpose.msra.mxu0 0
    %1403 = vmatprep.subr.bf16.mxu0 0
    %1404 = vmatpush1.bf16.xpose.msra.mxu0 0
    %1405 = vmatprep.subr.bf16.mxu0 0
    %1406 = vmatpush1.bf16.xpose.msra.mxu0 0
    %1407 = vmatprep.subr.bf16.mxu0 0
    %1408 = vmatpush1.bf16.xpose.msra.mxu0 0
    %1409 = vmatprep.subr.bf16.mxu0 0
    %1410 = vmatpush1.bf16.xpose.msra.mxu0 0
    %1411 = vmatprep.subr.bf16.mxu0 0
    %1412 = vmatpush1.bf16.xpose.msra.mxu0 0
    %1413 = vmatprep.subr.bf16.mxu0 0
    %1414 = vmatpush1.bf16.xpose.msra.mxu0 0
    %1415 = vmatprep.subr.bf16.mxu0 0
    %1416 = vmatpush1.bf16.xpose.msra.mxu0 0
    %1417 = vmatprep.subr.bf16.mxu0 0
    %1418 = vmatpush1.bf16.xpose.msra.mxu0 0
    %1419 = vmatprep.subr.bf16.mxu0 0
    %1420 = vmatpush1.bf16.xpose.msra.mxu0 0
    %1421 = vmatprep.subr.bf16.mxu0 0
    %1422 = vmatpush1.bf16.xpose.msra.mxu0 0
    %1423 = vmatprep.subr.bf16.mxu0 0
    %1424 = vmatpush1.bf16.xpose.msra.mxu0 0
    %1425 = vmatprep.mubr.bf16.mxu0 0
    %1426 = vmatmul.mubr.bf16.gmra.mrb[0].mxu0 %v1388
    %v1427 = vpop.f32.mrb[0].mxu0
    %v1428 = vadd.f32 0.0, %v1427
    %v1429 = vpop.f32.mrb[0].mxu0
    %v1430 = vpop.f32.mrb[0].mxu0
    %v1431 = vadd.f32 0.0, %v1430
    %v1432 = vpop.f32.mrb[0].mxu0
    %1433 = vdwg.mxu0
    %v1434 = vsel %vm940, %v1275, -inf
    %1435 = vmax.xlane.f32.xlu0 %v1434
    %v1436 = vpop.xlane.xlu0 %1435
    %v1437 = vsel %vm940, %v1278, -inf
    %1438 = vmax.xlane.f32.xlu0 %v1437
    %v1439 = vpop.xlane.xlu0 %1438
    %v1440 = vsel %vm940, %v1326, -inf
    %1441 = vmax.xlane.f32.xlu0 %v1440
    %v1442 = vpop.xlane.xlu0 %1441
    %v1443 = vsel %vm940, %v1329, -inf
    %1444 = vmax.xlane.f32.xlu0 %v1443
    %v1445 = vpop.xlane.xlu0 %1444
    %v1446 = vsel %vm940, %v1377, -inf
    %1447 = vmax.xlane.f32.xlu0 %v1446
    %v1448 = vpop.xlane.xlu0 %1447
    %v1449 = vsel %vm940, %v1380, -inf
    %1450 = vmax.xlane.f32.xlu0 %v1449
    %v1451 = vpop.xlane.xlu0 %1450
    %v1452 = vsel %vm940, %v1428, -inf
    %1453 = vmax.xlane.f32.xlu0 %v1452
    %v1454 = vpop.xlane.xlu0 %1453
    %v1455 = vsel %vm940, %v1431, -inf
    %1456 = vmax.xlane.f32.xlu0 %v1455
    %v1457 = vpop.xlane.xlu0 %1456
    %v1458 = vsub.f32 %v1275, %v1436
    %v1459 = vsub.f32 %v1278, %v1439
    %v1460 = vsub.f32 %v1326, %v1442
    %v1461 = vsub.f32 %v1329, %v1445
    %v1462 = vsub.f32 %v1377, %v1448
    %v1463 = vsub.f32 %v1380, %v1451
    %v1464 = vsub.f32 %v1428, %v1454
    %v1465 = vsub.f32 %v1431, %v1457
    %v1466 = vmul.f32 %v1458, 1.442695
    %v1467 = vpow.pop %v1466
    %v1468 = vmul.f32 %v1459, 1.442695
    %v1469 = vpow.pop %v1468
    %v1470 = vmul.f32 %v1460, 1.442695
    %v1471 = vpow.pop %v1470
    %v1472 = vmul.f32 %v1461, 1.442695
    %v1473 = vpow.pop %v1472
    %v1474 = vmul.f32 %v1462, 1.442695
    %v1475 = vpow.pop %v1474
    %v1476 = vmul.f32 %v1463, 1.442695
    %v1477 = vpow.pop %v1476
    %v1478 = vmul.f32 %v1464, 1.442695
    %v1479 = vpow.pop %v1478
    %v1480 = vmul.f32 %v1465, 1.442695
    %v1481 = vpow.pop %v1480
    %v1482 = vsel %vm940, %v1467, 0.0
    %1483 = vadd.xlane.f32.xlu0 %v1482
    %v1484 = vpop.xlane.xlu0 %1483
    %v1485 = vsel %vm940, %v1469, 0.0
    %1486 = vadd.xlane.f32.xlu0 %v1485
    %v1487 = vpop.xlane.xlu0 %1486
    %v1488 = vsel %vm940, %v1471, 0.0
    %1489 = vadd.xlane.f32.xlu0 %v1488
    %v1490 = vpop.xlane.xlu0 %1489
    %v1491 = vsel %vm940, %v1473, 0.0
    %1492 = vadd.xlane.f32.xlu0 %v1491
    %v1493 = vpop.xlane.xlu0 %1492
    %v1494 = vsel %vm940, %v1475, 0.0
    %1495 = vadd.xlane.f32.xlu0 %v1494
    %v1496 = vpop.xlane.xlu0 %1495
    %v1497 = vsel %vm940, %v1477, 0.0
    %1498 = vadd.xlane.f32.xlu0 %v1497
    %v1499 = vpop.xlane.xlu0 %1498
    %v1500 = vsel %vm940, %v1479, 0.0
    %1501 = vadd.xlane.f32.xlu0 %v1500
    %v1502 = vpop.xlane.xlu0 %1501
    %v1503 = vsel %vm940, %v1481, 0.0
    %1504 = vadd.xlane.f32.xlu0 %v1503
    %v1505 = vpop.xlane.xlu0 %1504
    %v1506 = vrcp.pop %v1484
    %v1507 = vrcp.pop %v1487
    %v1508 = vrcp.pop %v1490
    %v1509 = vrcp.pop %v1493
    %v1510 = vrcp.pop %v1496
    %v1511 = vrcp.pop %v1499
    %v1512 = vrcp.pop %v1502
    %v1513 = vrcp.pop %v1505
    %v1514 = vmul.f32 %v1467, %v1506
    %v1515 = vmul.f32 %v1469, %v1507
    %v1516 = vmul.f32 %v1471, %v1508
    %v1517 = vmul.f32 %v1473, %v1509
    %v1518 = vmul.f32 %v1475, %v1510
    %v1519 = vmul.f32 %v1477, %v1511
    %v1520 = vmul.f32 %v1479, %v1512
    %v1521 = vmul.f32 %v1481, %v1513
    %v1522 = vpack.c.bf16 %v1515, %v1514
    %v1523 = vpack.c.bf16 %v1517, %v1516
    %v1524 = vpack.c.bf16 %v1519, %v1518
    %v1525 = vpack.c.bf16 %v1521, %v1520
    %1526 = vrot.lane.b32.xlu0 %v933, 32
    %v1527 = vpop.permute.xlu0 %1526
    %v1530 = vsel %vm940, %v1522, 0
    %1532 = vmatprep.subr.bf16.mxu0 0
    %1533 = vmatpush1.bf16.msra.mxu0 %v1527
    %1534 = vmatprep.subr.bf16.mxu0 0
    %1535 = vmatpush1.bf16.msra.mxu0 0
    %1536 = vmatprep.subr.bf16.mxu0 0
    %1537 = vmatpush1.bf16.msra.mxu0 0
    %1538 = vmatprep.subr.bf16.mxu0 0
    %1539 = vmatpush1.bf16.msra.mxu0 0
    %1540 = vmatprep.subr.bf16.mxu0 0
    %1541 = vmatpush1.bf16.msra.mxu0 0
    %1542 = vmatprep.subr.bf16.mxu0 0
    %1543 = vmatpush1.bf16.msra.mxu0 0
    %1544 = vmatprep.subr.bf16.mxu0 0
    %1545 = vmatpush1.bf16.msra.mxu0 0
    %1546 = vmatprep.subr.bf16.mxu0 0
    %1547 = vmatpush1.bf16.msra.mxu0 0
    %1548 = vmatprep.subr.bf16.mxu0 0
    %1549 = vmatpush1.bf16.msra.mxu0 0
    %1550 = vmatprep.subr.bf16.mxu0 0
    %1551 = vmatpush1.bf16.msra.mxu0 0
    %1552 = vmatprep.subr.bf16.mxu0 0
    %1553 = vmatpush1.bf16.msra.mxu0 0
    %1554 = vmatprep.subr.bf16.mxu0 0
    %1555 = vmatpush1.bf16.msra.mxu0 0
    %1556 = vmatprep.subr.bf16.mxu0 0
    %1557 = vmatpush1.bf16.msra.mxu0 0
    %1558 = vmatprep.subr.bf16.mxu0 0
    %1559 = vmatpush1.bf16.msra.mxu0 0
    %1560 = vmatprep.subr.bf16.mxu0 0
    %1561 = vmatpush1.bf16.msra.mxu0 0
    %1562 = vmatprep.subr.bf16.mxu0 0
    %1563 = vmatpush1.bf16.msra.mxu0 0
    %1564 = vmatprep.mubr.bf16.mxu0 0
    %1565 = vmatmul.mubr.bf16.gmra.mrb[0].mxu0 %v1530
    %v1566 = vpop.f32.mrb[0].mxu0
    %v1567 = vadd.f32 0.0, %v1566
    %v1568 = vpop.f32.mrb[0].mxu0
    %v1569 = vpop.f32.mrb[0].mxu0
    %v1570 = vadd.f32 0.0, %v1569
    %v1571 = vpop.f32.mrb[0].mxu0
    %1572 = vdwg.mxu0
    %1573 = vrot.lane.b32.xlu0 %v934, 32
    %v1574 = vpop.permute.xlu0 %1573
    %v1577 = vsel %vm940, %v1523, 0
    %1579 = vmatprep.subr.bf16.mxu0 0
    %1580 = vmatpush1.bf16.msra.mxu0 %v1574
    %1581 = vmatprep.subr.bf16.mxu0 0
    %1582 = vmatpush1.bf16.msra.mxu0 0
    %1583 = vmatprep.subr.bf16.mxu0 0
    %1584 = vmatpush1.bf16.msra.mxu0 0
    %1585 = vmatprep.subr.bf16.mxu0 0
    %1586 = vmatpush1.bf16.msra.mxu0 0
    %1587 = vmatprep.subr.bf16.mxu0 0
    %1588 = vmatpush1.bf16.msra.mxu0 0
    %1589 = vmatprep.subr.bf16.mxu0 0
    %1590 = vmatpush1.bf16.msra.mxu0 0
    %1591 = vmatprep.subr.bf16.mxu0 0
    %1592 = vmatpush1.bf16.msra.mxu0 0
    %1593 = vmatprep.subr.bf16.mxu0 0
    %1594 = vmatpush1.bf16.msra.mxu0 0
    %1595 = vmatprep.subr.bf16.mxu0 0
    %1596 = vmatpush1.bf16.msra.mxu0 0
    %1597 = vmatprep.subr.bf16.mxu0 0
    %1598 = vmatpush1.bf16.msra.mxu0 0
    %1599 = vmatprep.subr.bf16.mxu0 0
    %1600 = vmatpush1.bf16.msra.mxu0 0
    %1601 = vmatprep.subr.bf16.mxu0 0
    %1602 = vmatpush1.bf16.msra.mxu0 0
    %1603 = vmatprep.subr.bf16.mxu0 0
    %1604 = vmatpush1.bf16.msra.mxu0 0
    %1605 = vmatprep.subr.bf16.mxu0 0
    %1606 = vmatpush1.bf16.msra.mxu0 0
    %1607 = vmatprep.subr.bf16.mxu0 0
    %1608 = vmatpush1.bf16.msra.mxu0 0
    %1609 = vmatprep.subr.bf16.mxu0 0
    %1610 = vmatpush1.bf16.msra.mxu0 0
    %1611 = vmatprep.mubr.bf16.mxu0 0
    %1612 = vmatmul.mubr.bf16.gmra.mrb[0].mxu0 %v1577
    %v1613 = vpop.f32.mrb[0].mxu0
    %v1614 = vadd.f32 0.0, %v1613
    %v1615 = vpop.f32.mrb[0].mxu0
    %v1616 = vpop.f32.mrb[0].mxu0
    %v1617 = vadd.f32 0.0, %v1616
    %v1618 = vpop.f32.mrb[0].mxu0
    %1619 = vdwg.mxu0
    %1620 = vrot.lane.b32.xlu0 %v935, 32
    %v1621 = vpop.permute.xlu0 %1620
    %v1624 = vsel %vm940, %v1524, 0
    %1626 = vmatprep.subr.bf16.mxu0 0
    %1627 = vmatpush1.bf16.msra.mxu0 %v1621
    %1628 = vmatprep.subr.bf16.mxu0 0
    %1629 = vmatpush1.bf16.msra.mxu0 0
    %1630 = vmatprep.subr.bf16.mxu0 0
    %1631 = vmatpush1.bf16.msra.mxu0 0
    %1632 = vmatprep.subr.bf16.mxu0 0
    %1633 = vmatpush1.bf16.msra.mxu0 0
    %1634 = vmatprep.subr.bf16.mxu0 0
    %1635 = vmatpush1.bf16.msra.mxu0 0
    %1636 = vmatprep.subr.bf16.mxu0 0
    %1637 = vmatpush1.bf16.msra.mxu0 0
    %1638 = vmatprep.subr.bf16.mxu0 0
    %1639 = vmatpush1.bf16.msra.mxu0 0
    %1640 = vmatprep.subr.bf16.mxu0 0
    %1641 = vmatpush1.bf16.msra.mxu0 0
    %1642 = vmatprep.subr.bf16.mxu0 0
    %1643 = vmatpush1.bf16.msra.mxu0 0
    %1644 = vmatprep.subr.bf16.mxu0 0
    %1645 = vmatpush1.bf16.msra.mxu0 0
    %1646 = vmatprep.subr.bf16.mxu0 0
    %1647 = vmatpush1.bf16.msra.mxu0 0
    %1648 = vmatprep.subr.bf16.mxu0 0
    %1649 = vmatpush1.bf16.msra.mxu0 0
    %1650 = vmatprep.subr.bf16.mxu0 0
    %1651 = vmatpush1.bf16.msra.mxu0 0
    %1652 = vmatprep.subr.bf16.mxu0 0
    %1653 = vmatpush1.bf16.msra.mxu0 0
    %1654 = vmatprep.subr.bf16.mxu0 0
    %1655 = vmatpush1.bf16.msra.mxu0 0
    %1656 = vmatprep.subr.bf16.mxu0 0
    %1657 = vmatpush1.bf16.msra.mxu0 0
    %1658 = vmatprep.mubr.bf16.mxu0 0
    %1659 = vmatmul.mubr.bf16.gmra.mrb[0].mxu0 %v1624
    %v1660 = vpop.f32.mrb[0].mxu0
    %v1661 = vadd.f32 0.0, %v1660
    %v1662 = vpop.f32.mrb[0].mxu0
    %v1663 = vpop.f32.mrb[0].mxu0
    %v1664 = vadd.f32 0.0, %v1663
    %v1665 = vpop.f32.mrb[0].mxu0
    %1666 = vdwg.mxu0
    %1667 = vrot.lane.b32.xlu0 %v936, 32
    %v1668 = vpop.permute.xlu0 %1667
    %v1671 = vsel %vm940, %v1525, 0
    %1673 = vmatprep.subr.bf16.mxu0 0
    %1674 = vmatpush1.bf16.msra.mxu0 %v1668
    %1675 = vmatprep.subr.bf16.mxu0 0
    %1676 = vmatpush1.bf16.msra.mxu0 0
    %1677 = vmatprep.subr.bf16.mxu0 0
    %1678 = vmatpush1.bf16.msra.mxu0 0
    %1679 = vmatprep.subr.bf16.mxu0 0
    %1680 = vmatpush1.bf16.msra.mxu0 0
    %1681 = vmatprep.subr.bf16.mxu0 0
    %1682 = vmatpush1.bf16.msra.mxu0 0
    %1683 = vmatprep.subr.bf16.mxu0 0
    %1684 = vmatpush1.bf16.msra.mxu0 0
    %1685 = vmatprep.subr.bf16.mxu0 0
    %1686 = vmatpush1.bf16.msra.mxu0 0
    %1687 = vmatprep.subr.bf16.mxu0 0
    %1688 = vmatpush1.bf16.msra.mxu0 0
    %1689 = vmatprep.subr.bf16.mxu0 0
    %1690 = vmatpush1.bf16.msra.mxu0 0
    %1691 = vmatprep.subr.bf16.mxu0 0
    %1692 = vmatpush1.bf16.msra.mxu0 0
    %1693 = vmatprep.subr.bf16.mxu0 0
    %1694 = vmatpush1.bf16.msra.mxu0 0
    %1695 = vmatprep.subr.bf16.mxu0 0
    %1696 = vmatpush1.bf16.msra.mxu0 0
    %1697 = vmatprep.subr.bf16.mxu0 0
    %1698 = vmatpush1.bf16.msra.mxu0 0
    %1699 = vmatprep.subr.bf16.mxu0 0
    %1700 = vmatpush1.bf16.msra.mxu0 0
    %1701 = vmatprep.subr.bf16.mxu0 0
    %1702 = vmatpush1.bf16.msra.mxu0 0
    %1703 = vmatprep.subr.bf16.mxu0 0
    %1704 = vmatpush1.bf16.msra.mxu0 0
    %1705 = vmatprep.mubr.bf16.mxu0 0
    %1706 = vmatmul.mubr.bf16.gmra.mrb[0].mxu0 %v1671
    %v1707 = vpop.f32.mrb[0].mxu0
    %v1708 = vadd.f32 0.0, %v1707
    %v1709 = vpop.f32.mrb[0].mxu0
    %v1710 = vpop.f32.mrb[0].mxu0
    %v1711 = vadd.f32 0.0, %v1710
    %v1712 = vpop.f32.mrb[0].mxu0
    %1713 = vdwg.mxu0
    %1714 = vrot.lane.b32.xlu0 %v933, 64
    %v1715 = vpop.permute.xlu0 %1714
    %v1718 = vsel %vm940, %v1226, 0
    %1720 = vmatprep.subr.bf16.mxu0 0
    %1721 = vmatpush1.bf16.msra.mxu0 %v1715
    %1722 = vmatprep.subr.bf16.mxu0 0
    %1723 = vmatpush1.bf16.msra.mxu0 0
    %1724 = vmatprep.subr.bf16.mxu0 0
    %1725 = vmatpush1.bf16.msra.mxu0 0
    %1726 = vmatprep.subr.bf16.mxu0 0
    %1727 = vmatpush1.bf16.msra.mxu0 0
    %1728 = vmatprep.subr.bf16.mxu0 0
    %1729 = vmatpush1.bf16.msra.mxu0 0
    %1730 = vmatprep.subr.bf16.mxu0 0
    %1731 = vmatpush1.bf16.msra.mxu0 0
    %1732 = vmatprep.subr.bf16.mxu0 0
    %1733 = vmatpush1.bf16.msra.mxu0 0
    %1734 = vmatprep.subr.bf16.mxu0 0
    %1735 = vmatpush1.bf16.msra.mxu0 0
    %1736 = vmatprep.subr.bf16.mxu0 0
    %1737 = vmatpush1.bf16.msra.mxu0 0
    %1738 = vmatprep.subr.bf16.mxu0 0
    %1739 = vmatpush1.bf16.msra.mxu0 0
    %1740 = vmatprep.subr.bf16.mxu0 0
    %1741 = vmatpush1.bf16.msra.mxu0 0
    %1742 = vmatprep.subr.bf16.mxu0 0
    %1743 = vmatpush1.bf16.msra.mxu0 0
    %1744 = vmatprep.subr.bf16.mxu0 0
    %1745 = vmatpush1.bf16.msra.mxu0 0
    %1746 = vmatprep.subr.bf16.mxu0 0
    %1747 = vmatpush1.bf16.msra.mxu0 0
    %1748 = vmatprep.subr.bf16.mxu0 0
    %1749 = vmatpush1.bf16.msra.mxu0 0
    %1750 = vmatprep.subr.bf16.mxu0 0
    %1751 = vmatpush1.bf16.msra.mxu0 0
    %1752 = vmatprep.mubr.bf16.mxu0 0
    %1753 = vmatmul.mubr.bf16.gmra.mrb[0].mxu0 %v1718
    %v1754 = vpop.f32.mrb[0].mxu0
    %v1755 = vadd.f32 %v1567, %v1754
    %v1756 = vpop.f32.mrb[0].mxu0
    %v1757 = vpop.f32.mrb[0].mxu0
    %v1758 = vadd.f32 %v1570, %v1757
    %v1759 = vpop.f32.mrb[0].mxu0
    %1760 = vdwg.mxu0
    %1761 = vrot.lane.b32.xlu0 %v934, 64
    %v1762 = vpop.permute.xlu0 %1761
    %v1765 = vsel %vm940, %v1227, 0
    %1767 = vmatprep.subr.bf16.mxu0 0
    %1768 = vmatpush1.bf16.msra.mxu0 %v1762
    %1769 = vmatprep.subr.bf16.mxu0 0
    %1770 = vmatpush1.bf16.msra.mxu0 0
    %1771 = vmatprep.subr.bf16.mxu0 0
    %1772 = vmatpush1.bf16.msra.mxu0 0
    %1773 = vmatprep.subr.bf16.mxu0 0
    %1774 = vmatpush1.bf16.msra.mxu0 0
    %1775 = vmatprep.subr.bf16.mxu0 0
    %1776 = vmatpush1.bf16.msra.mxu0 0
    %1777 = vmatprep.subr.bf16.mxu0 0
    %1778 = vmatpush1.bf16.msra.mxu0 0
    %1779 = vmatprep.subr.bf16.mxu0 0
    %1780 = vmatpush1.bf16.msra.mxu0 0
    %1781 = vmatprep.subr.bf16.mxu0 0
    %1782 = vmatpush1.bf16.msra.mxu0 0
    %1783 = vmatprep.subr.bf16.mxu0 0
    %1784 = vmatpush1.bf16.msra.mxu0 0
    %1785 = vmatprep.subr.bf16.mxu0 0
    %1786 = vmatpush1.bf16.msra.mxu0 0
    %1787 = vmatprep.subr.bf16.mxu0 0
    %1788 = vmatpush1.bf16.msra.mxu0 0
    %1789 = vmatprep.subr.bf16.mxu0 0
    %1790 = vmatpush1.bf16.msra.mxu0 0
    %1791 = vmatprep.subr.bf16.mxu0 0
    %1792 = vmatpush1.bf16.msra.mxu0 0
    %1793 = vmatprep.subr.bf16.mxu0 0
    %1794 = vmatpush1.bf16.msra.mxu0 0
    %1795 = vmatprep.subr.bf16.mxu0 0
    %1796 = vmatpush1.bf16.msra.mxu0 0
    %1797 = vmatprep.subr.bf16.mxu0 0
    %1798 = vmatpush1.bf16.msra.mxu0 0
    %1799 = vmatprep.mubr.bf16.mxu0 0
    %1800 = vmatmul.mubr.bf16.gmra.mrb[0].mxu0 %v1765
    %v1801 = vpop.f32.mrb[0].mxu0
    %v1802 = vadd.f32 %v1614, %v1801
    %v1803 = vpop.f32.mrb[0].mxu0
    %v1804 = vpop.f32.mrb[0].mxu0
    %v1805 = vadd.f32 %v1617, %v1804
    %v1806 = vpop.f32.mrb[0].mxu0
    %1807 = vdwg.mxu0
    %1808 = vrot.lane.b32.xlu0 %v935, 64
    %v1809 = vpop.permute.xlu0 %1808
    %v1812 = vsel %vm940, %v1228, 0
    %1814 = vmatprep.subr.bf16.mxu0 0
    %1815 = vmatpush1.bf16.msra.mxu0 %v1809
    %1816 = vmatprep.subr.bf16.mxu0 0
    %1817 = vmatpush1.bf16.msra.mxu0 0
    %1818 = vmatprep.subr.bf16.mxu0 0
    %1819 = vmatpush1.bf16.msra.mxu0 0
    %1820 = vmatprep.subr.bf16.mxu0 0
    %1821 = vmatpush1.bf16.msra.mxu0 0
    %1822 = vmatprep.subr.bf16.mxu0 0
    %1823 = vmatpush1.bf16.msra.mxu0 0
    %1824 = vmatprep.subr.bf16.mxu0 0
    %1825 = vmatpush1.bf16.msra.mxu0 0
    %1826 = vmatprep.subr.bf16.mxu0 0
    %1827 = vmatpush1.bf16.msra.mxu0 0
    %1828 = vmatprep.subr.bf16.mxu0 0
    %1829 = vmatpush1.bf16.msra.mxu0 0
    %1830 = vmatprep.subr.bf16.mxu0 0
    %1831 = vmatpush1.bf16.msra.mxu0 0
    %1832 = vmatprep.subr.bf16.mxu0 0
    %1833 = vmatpush1.bf16.msra.mxu0 0
    %1834 = vmatprep.subr.bf16.mxu0 0
    %1835 = vmatpush1.bf16.msra.mxu0 0
    %1836 = vmatprep.subr.bf16.mxu0 0
    %1837 = vmatpush1.bf16.msra.mxu0 0
    %1838 = vmatprep.subr.bf16.mxu0 0
    %1839 = vmatpush1.bf16.msra.mxu0 0
    %1840 = vmatprep.subr.bf16.mxu0 0
    %1841 = vmatpush1.bf16.msra.mxu0 0
    %1842 = vmatprep.subr.bf16.mxu0 0
    %1843 = vmatpush1.bf16.msra.mxu0 0
    %1844 = vmatprep.subr.bf16.mxu0 0
    %1845 = vmatpush1.bf16.msra.mxu0 0
    %1846 = vmatprep.mubr.bf16.mxu0 0
    %1847 = vmatmul.mubr.bf16.gmra.mrb[0].mxu0 %v1812
    %v1848 = vpop.f32.mrb[0].mxu0
    %v1849 = vadd.f32 %v1661, %v1848
    %v1850 = vpop.f32.mrb[0].mxu0
    %v1851 = vpop.f32.mrb[0].mxu0
    %v1852 = vadd.f32 %v1664, %v1851
    %v1853 = vpop.f32.mrb[0].mxu0
    %1854 = vdwg.mxu0
    %1855 = vrot.lane.b32.xlu0 %v936, 64
    %v1856 = vpop.permute.xlu0 %1855
    %v1859 = vsel %vm940, %v1229, 0
    %1861 = vmatprep.subr.bf16.mxu0 0
    %1862 = vmatpush1.bf16.msra.mxu0 %v1856
    %1863 = vmatprep.subr.bf16.mxu0 0
    %1864 = vmatpush1.bf16.msra.mxu0 0
    %1865 = vmatprep.subr.bf16.mxu0 0
    %1866 = vmatpush1.bf16.msra.mxu0 0
    %1867 = vmatprep.subr.bf16.mxu0 0
    %1868 = vmatpush1.bf16.msra.mxu0 0
    %1869 = vmatprep.subr.bf16.mxu0 0
    %1870 = vmatpush1.bf16.msra.mxu0 0
    %1871 = vmatprep.subr.bf16.mxu0 0
    %1872 = vmatpush1.bf16.msra.mxu0 0
    %1873 = vmatprep.subr.bf16.mxu0 0
    %1874 = vmatpush1.bf16.msra.mxu0 0
    %1875 = vmatprep.subr.bf16.mxu0 0
    %1876 = vmatpush1.bf16.msra.mxu0 0
    %1877 = vmatprep.subr.bf16.mxu0 0
    %1878 = vmatpush1.bf16.msra.mxu0 0
    %1879 = vmatprep.subr.bf16.mxu0 0
    %1880 = vmatpush1.bf16.msra.mxu0 0
    %1881 = vmatprep.subr.bf16.mxu0 0
    %1882 = vmatpush1.bf16.msra.mxu0 0
    %1883 = vmatprep.subr.bf16.mxu0 0
    %1884 = vmatpush1.bf16.msra.mxu0 0
    %1885 = vmatprep.subr.bf16.mxu0 0
    %1886 = vmatpush1.bf16.msra.mxu0 0
    %1887 = vmatprep.subr.bf16.mxu0 0
    %1888 = vmatpush1.bf16.msra.mxu0 0
    %1889 = vmatprep.subr.bf16.mxu0 0
    %1890 = vmatpush1.bf16.msra.mxu0 0
    %1891 = vmatprep.subr.bf16.mxu0 0
    %1892 = vmatpush1.bf16.msra.mxu0 0
    %1893 = vmatprep.mubr.bf16.mxu0 0
    %1894 = vmatmul.mubr.bf16.gmra.mrb[0].mxu0 %v1859
    %v1895 = vpop.f32.mrb[0].mxu0
    %v1896 = vadd.f32 %v1708, %v1895
    %v1897 = vpop.f32.mrb[0].mxu0
    %v1898 = vpop.f32.mrb[0].mxu0
    %v1899 = vadd.f32 %v1711, %v1898
    %v1900 = vpop.f32.mrb[0].mxu0
    %1901 = vdwg.mxu0
    %v1902 = vld [vmem:[%s10] sm:$0x1]
    %v1903 = vlaneseq
    %v1904 = vshrl.u32 %v1903, 7
    %v1905 = vsub.s32 0, %v1904
    %v1906 = vrot.slane %v1902, %v1905
    %v1907 = vadd.f32 %v676, %v1906
    %v1908 = vadd.f32 %v679, %v1906
    %v1909 = vadd.f32 %v684, %v1906
    %v1910 = vadd.f32 %v687, %v1906
    %v1911 = vadd.f32 %v692, %v1906
    %v1912 = vadd.f32 %v695, %v1906
    %v1913 = vadd.f32 %v700, %v1906
    %v1914 = vadd.f32 %v703, %v1906
    %v1915 = vadd.f32 %v1907, %v1755
    %v1916 = vadd.f32 %v1908, %v1758
    %v1917 = vadd.f32 %v1909, %v1802
    %v1918 = vadd.f32 %v1910, %v1805
    %v1919 = vadd.f32 %v1911, %v1849
    %v1920 = vadd.f32 %v1912, %v1852
    %v1921 = vadd.f32 %v1913, %v1896
    %v1922 = vadd.f32 %v1914, %v1899
    %v1923 = vld [vmem:[%s11] sm:$0x1]
    %v1924 = vld [vmem:[%s12] sm:$0x1]
    %v1925 = vsel %vm260, %v1915, 0.0
    %1926 = vadd.xlane.f32.xlu0 %v1925
    %v1927 = vpop.xlane.xlu0 %1926
    %v1928 = vsel %vm260, %v1916, 0.0
    %1929 = vadd.xlane.f32.xlu0 %v1928
    %v1930 = vpop.xlane.xlu0 %1929
    %v1931 = vsel %vm260, %v1917, 0.0
    %1932 = vadd.xlane.f32.xlu0 %v1931
    %v1933 = vpop.xlane.xlu0 %1932
    %v1934 = vsel %vm260, %v1918, 0.0
    %1935 = vadd.xlane.f32.xlu0 %v1934
    %v1936 = vpop.xlane.xlu0 %1935
    %v1937 = vsel %vm260, %v1919, 0.0
    %1938 = vadd.xlane.f32.xlu0 %v1937
    %v1939 = vpop.xlane.xlu0 %1938
    %v1940 = vsel %vm260, %v1920, 0.0
    %1941 = vadd.xlane.f32.xlu0 %v1940
    %v1942 = vpop.xlane.xlu0 %1941
    %v1943 = vsel %vm260, %v1921, 0.0
    %1944 = vadd.xlane.f32.xlu0 %v1943
    %v1945 = vpop.xlane.xlu0 %1944
    %v1946 = vsel %vm260, %v1922, 0.0
    %1947 = vadd.xlane.f32.xlu0 %v1946
    %v1948 = vpop.xlane.xlu0 %1947
    %v1949 = vmul.f32 %v1927, %v285
    %v1950 = vmul.f32 %v1930, %v285
    %v1951 = vmul.f32 %v1933, %v285
    %v1952 = vmul.f32 %v1936, %v285
    %v1953 = vmul.f32 %v1939, %v285
    %v1954 = vmul.f32 %v1942, %v285
    %v1955 = vmul.f32 %v1945, %v285
    %v1956 = vmul.f32 %v1948, %v285
    %v1957 = vsub.f32 %v1915, %v1949
    %v1958 = vsub.f32 %v1916, %v1950
    %v1959 = vsub.f32 %v1917, %v1951
    %v1960 = vsub.f32 %v1918, %v1952
    %v1961 = vsub.f32 %v1919, %v1953
    %v1962 = vsub.f32 %v1920, %v1954
    %v1963 = vsub.f32 %v1921, %v1955
    %v1964 = vsub.f32 %v1922, %v1956
    %v1965 = vmul.f32 %v1957, %v1957
    %v1966 = vmul.f32 %v1958, %v1958
    %v1967 = vmul.f32 %v1959, %v1959
    %v1968 = vmul.f32 %v1960, %v1960
    %v1969 = vmul.f32 %v1961, %v1961
    %v1970 = vmul.f32 %v1962, %v1962
    %v1971 = vmul.f32 %v1963, %v1963
    %v1972 = vmul.f32 %v1964, %v1964
    %v1973 = vsel %vm260, %v1965, 0.0
    %1974 = vadd.xlane.f32.xlu0 %v1973
    %v1975 = vpop.xlane.xlu0 %1974
    %v1976 = vsel %vm260, %v1966, 0.0
    %1977 = vadd.xlane.f32.xlu0 %v1976
    %v1978 = vpop.xlane.xlu0 %1977
    %v1979 = vsel %vm260, %v1967, 0.0
    %1980 = vadd.xlane.f32.xlu0 %v1979
    %v1981 = vpop.xlane.xlu0 %1980
    %v1982 = vsel %vm260, %v1968, 0.0
    %1983 = vadd.xlane.f32.xlu0 %v1982
    %v1984 = vpop.xlane.xlu0 %1983
    %v1985 = vsel %vm260, %v1969, 0.0
    %1986 = vadd.xlane.f32.xlu0 %v1985
    %v1987 = vpop.xlane.xlu0 %1986
    %v1988 = vsel %vm260, %v1970, 0.0
    %1989 = vadd.xlane.f32.xlu0 %v1988
    %v1990 = vpop.xlane.xlu0 %1989
    %v1991 = vsel %vm260, %v1971, 0.0
    %1992 = vadd.xlane.f32.xlu0 %v1991
    %v1993 = vpop.xlane.xlu0 %1992
    %v1994 = vsel %vm260, %v1972, 0.0
    %1995 = vadd.xlane.f32.xlu0 %v1994
    %v1996 = vpop.xlane.xlu0 %1995
    %v1997 = vmul.f32 %v1975, %v285
    %v1998 = vmul.f32 %v1978, %v285
    %v1999 = vmul.f32 %v1981, %v285
    %v2000 = vmul.f32 %v1984, %v285
    %v2001 = vmul.f32 %v1987, %v285
    %v2002 = vmul.f32 %v1990, %v285
    %v2003 = vmul.f32 %v1993, %v285
    %v2004 = vmul.f32 %v1996, %v285
    %v2005 = vadd.f32 %v1997, 1e-05
    %v2006 = vadd.f32 %v1998, 1e-05
    %v2007 = vadd.f32 %v1999, 1e-05
    %v2008 = vadd.f32 %v2000, 1e-05
    %v2009 = vadd.f32 %v2001, 1e-05
    %v2010 = vadd.f32 %v2002, 1e-05
    %v2011 = vadd.f32 %v2003, 1e-05
    %v2012 = vadd.f32 %v2004, 1e-05
    %v2013 = vrsqrt.pop %v2005
    %v2014 = vrsqrt.pop %v2006
    %v2015 = vrsqrt.pop %v2007
    %v2016 = vrsqrt.pop %v2008
    %v2017 = vrsqrt.pop %v2009
    %v2018 = vrsqrt.pop %v2010
    %v2019 = vrsqrt.pop %v2011
    %v2020 = vrsqrt.pop %v2012
    %v2021 = vmul.f32 %v1957, %v2013
    %v2022 = vmul.f32 %v1958, %v2014
    %v2023 = vmul.f32 %v1959, %v2015
    %v2024 = vmul.f32 %v1960, %v2016
    %v2025 = vmul.f32 %v1961, %v2017
    %v2026 = vmul.f32 %v1962, %v2018
    %v2027 = vmul.f32 %v1963, %v2019
    %v2028 = vmul.f32 %v1964, %v2020
    %v2029 = vlaneseq
    %v2030 = vshrl.u32 %v2029, 7
    %v2031 = vsub.s32 0, %v2030
    %v2032 = vrot.slane %v1923, %v2031
    %v2033 = vmul.f32 %v2021, %v2032
    %v2034 = vmul.f32 %v2022, %v2032
    %v2035 = vmul.f32 %v2023, %v2032
    %v2036 = vmul.f32 %v2024, %v2032
    %v2037 = vmul.f32 %v2025, %v2032
    %v2038 = vmul.f32 %v2026, %v2032
    %v2039 = vmul.f32 %v2027, %v2032
    %v2040 = vmul.f32 %v2028, %v2032
    %v2041 = vlaneseq
    %v2042 = vshrl.u32 %v2041, 7
    %v2043 = vsub.s32 0, %v2042
    %v2044 = vrot.slane %v1924, %v2043
    %v2045 = vadd.f32 %v2033, %v2044
    %v2046 = vadd.f32 %v2034, %v2044
    %v2047 = vadd.f32 %v2035, %v2044
    %v2048 = vadd.f32 %v2036, %v2044
    %v2049 = vadd.f32 %v2037, %v2044
    %v2050 = vadd.f32 %v2038, %v2044
    %v2051 = vadd.f32 %v2039, %v2044
    %v2052 = vadd.f32 %v2040, %v2044
    %v2053 = vld [vmem:[%s13] sm:$0xf]
    %v2054 = vld [vmem:[%s13 + $0x4] sm:$0xf]
    %v2055 = vld [vmem:[%s13 + $0x8] sm:$0xf]
    %v2056 = vld [vmem:[%s13 + $0xc] sm:$0xf]
    %v2057 = vld [vmem:[%s14] sm:$0x1]
    %v2058 = vpack.c.bf16 %v2046, %v2045
    %v2059 = vpack.c.bf16 %v2048, %v2047
    %v2060 = vpack.c.bf16 %v2050, %v2049
    %v2061 = vpack.c.bf16 %v2052, %v2051
    %v2062 = vlaneseq
    %v2063 = vshrl.u32 %v2062, 7
    %v2064 = vsub.s32 0, %v2063
    %v2065 = vrot.slane %v2057, %v2064
    %v2070 = vunpack.c.l.b16 %v2053
    %v2071 = vunpack.c.l.b16 %v2054
    %v2072 = vunpack.c.l.b16 %v2055
    %v2073 = vunpack.c.l.b16 %v2056
    %v2074 = vpack.c.b16 %v2071, %v2070
    %v2075 = vpack.c.b16 %v2073, %v2072
    %v2079 = vsel %vm260, %v2058, 0
    %v2082 = vsel %vm260, %v2059, 0
    %v2085 = vsel %vm260, %v2060, 0
    %v2088 = vsel %vm260, %v2061, 0
    %2090 = vmatprep.subr.bf16.mxu0 0
    %2091 = vmatpush1.bf16.msra.mxu0 %v2074
    %2092 = vmatprep.subr.bf16.mxu0 0
    %2093 = vmatpush1.bf16.msra.mxu0 %v2075
    %2094 = vmatprep.subr.bf16.mxu0 0
    %2095 = vmatpush1.bf16.msra.mxu0 0
    %2096 = vmatprep.subr.bf16.mxu0 0
    %2097 = vmatpush1.bf16.msra.mxu0 0
    %2098 = vmatprep.subr.bf16.mxu0 0
    %2099 = vmatpush1.bf16.msra.mxu0 0
    %2100 = vmatprep.subr.bf16.mxu0 0
    %2101 = vmatpush1.bf16.msra.mxu0 0
    %2102 = vmatprep.subr.bf16.mxu0 0
    %2103 = vmatpush1.bf16.msra.mxu0 0
    %2104 = vmatprep.subr.bf16.mxu0 0
    %2105 = vmatpush1.bf16.msra.mxu0 0
    %2106 = vmatprep.subr.bf16.mxu0 0
    %2107 = vmatpush1.bf16.msra.mxu0 0
    %2108 = vmatprep.subr.bf16.mxu0 0
    %2109 = vmatpush1.bf16.msra.mxu0 0
    %2110 = vmatprep.subr.bf16.mxu0 0
    %2111 = vmatpush1.bf16.msra.mxu0 0
    %2112 = vmatprep.subr.bf16.mxu0 0
    %2113 = vmatpush1.bf16.msra.mxu0 0
    %2114 = vmatprep.subr.bf16.mxu0 0
    %2115 = vmatpush1.bf16.msra.mxu0 0
    %2116 = vmatprep.subr.bf16.mxu0 0
    %2117 = vmatpush1.bf16.msra.mxu0 0
    %2118 = vmatprep.subr.bf16.mxu0 0
    %2119 = vmatpush1.bf16.msra.mxu0 0
    %2120 = vmatprep.subr.bf16.mxu0 0
    %2121 = vmatpush1.bf16.msra.mxu0 0
    %2122 = vmatprep.mubr.bf16.mxu0 0
    %2123 = vmatmul.mubr.bf16.gmra.mrb[0].mxu0 %v2079
    %v2124 = vpop.f32.mrb[0].mxu0
    %v2125 = vadd.f32 %v2065, %v2124
    %v2126 = vpop.f32.mrb[0].mxu0
    %v2127 = vpop.f32.mrb[0].mxu0
    %v2128 = vadd.f32 %v2065, %v2127
    %v2129 = vpop.f32.mrb[0].mxu0
    %2130 = vmatprep.mubr.bf16.mxu0 0
    %2131 = vmatmul.mubr.bf16.gmra.mrb[0].mxu0 %v2082
    %v2132 = vpop.f32.mrb[0].mxu0
    %v2133 = vadd.f32 %v2065, %v2132
    %v2134 = vpop.f32.mrb[0].mxu0
    %v2135 = vpop.f32.mrb[0].mxu0
    %v2136 = vadd.f32 %v2065, %v2135
    %v2137 = vpop.f32.mrb[0].mxu0
    %2138 = vmatprep.mubr.bf16.mxu0 0
    %2139 = vmatmul.mubr.bf16.gmra.mrb[0].mxu0 %v2085
    %v2140 = vpop.f32.mrb[0].mxu0
    %v2141 = vadd.f32 %v2065, %v2140
    %v2142 = vpop.f32.mrb[0].mxu0
    %v2143 = vpop.f32.mrb[0].mxu0
    %v2144 = vadd.f32 %v2065, %v2143
    %v2145 = vpop.f32.mrb[0].mxu0
    %2146 = vmatprep.mubr.bf16.mxu0 0
    %2147 = vmatmul.mubr.bf16.gmra.mrb[0].mxu0 %v2088
    %v2148 = vpop.f32.mrb[0].mxu0
    %v2149 = vadd.f32 %v2065, %v2148
    %v2150 = vpop.f32.mrb[0].mxu0
    %v2151 = vpop.f32.mrb[0].mxu0
    %v2152 = vadd.f32 %v2065, %v2151
    %v2153 = vpop.f32.mrb[0].mxu0
    %2154 = vdwg.mxu0
    %v2155 = vmul.f32 %v2125, 0.70710677
    %v2156 = vmul.f32 %v2128, 0.70710677
    %v2157 = vmul.f32 %v2133, 0.70710677
    %v2158 = vmul.f32 %v2136, 0.70710677
    %v2159 = vmul.f32 %v2141, 0.70710677
    %v2160 = vmul.f32 %v2144, 0.70710677
    %v2161 = vmul.f32 %v2149, 0.70710677
    %v2162 = vmul.f32 %v2152, 0.70710677
    %vm2163 = vcmp.lt.f32.partialorder %v2155, 0.0
    %vm2164 = vcmp.lt.f32.partialorder %v2156, 0.0
    %vm2165 = vcmp.lt.f32.partialorder %v2157, 0.0
    %vm2166 = vcmp.lt.f32.partialorder %v2158, 0.0
    %vm2167 = vcmp.lt.f32.partialorder %v2159, 0.0
    %vm2168 = vcmp.lt.f32.partialorder %v2160, 0.0
    %vm2169 = vcmp.lt.f32.partialorder %v2161, 0.0
    %vm2170 = vcmp.lt.f32.partialorder %v2162, 0.0
    %v2171 = vsel %vm2163, -1.0, 1.0
    %v2172 = vsel %vm2164, -1.0, 1.0
    %v2173 = vsel %vm2165, -1.0, 1.0
    %v2174 = vsel %vm2166, -1.0, 1.0
    %v2175 = vsel %vm2167, -1.0, 1.0
    %v2176 = vsel %vm2168, -1.0, 1.0
    %v2177 = vsel %vm2169, -1.0, 1.0
    %v2178 = vsel %vm2170, -1.0, 1.0
    %v2179 = vand.u32 2147483647, %v2155
    %v2180 = vand.u32 2147483647, %v2156
    %v2181 = vand.u32 2147483647, %v2157
    %v2182 = vand.u32 2147483647, %v2158
    %v2183 = vand.u32 2147483647, %v2159
    %v2184 = vand.u32 2147483647, %v2160
    %v2185 = vand.u32 2147483647, %v2161
    %v2186 = vand.u32 2147483647, %v2162
    %v2187 = vmul.f32 %v2179, 0.3275911
    %v2188 = vmul.f32 %v2180, 0.3275911
    %v2189 = vmul.f32 %v2181, 0.3275911
    %v2190 = vmul.f32 %v2182, 0.3275911
    %v2191 = vmul.f32 %v2183, 0.3275911
    %v2192 = vmul.f32 %v2184, 0.3275911
    %v2193 = vmul.f32 %v2185, 0.3275911
    %v2194 = vmul.f32 %v2186, 0.3275911
    %v2195 = vadd.f32 %v2187, 1.0
    %v2196 = vadd.f32 %v2188, 1.0
    %v2197 = vadd.f32 %v2189, 1.0
    %v2198 = vadd.f32 %v2190, 1.0
    %v2199 = vadd.f32 %v2191, 1.0
    %v2200 = vadd.f32 %v2192, 1.0
    %v2201 = vadd.f32 %v2193, 1.0
    %v2202 = vadd.f32 %v2194, 1.0
    %v2203 = vrcp.pop %v2195
    %v2204 = vrcp.pop %v2196
    %v2205 = vrcp.pop %v2197
    %v2206 = vrcp.pop %v2198
    %v2207 = vrcp.pop %v2199
    %v2208 = vrcp.pop %v2200
    %v2209 = vrcp.pop %v2201
    %v2210 = vrcp.pop %v2202
    %v2211 = vmul.f32 %v2203, 1.0614054
    %v2212 = vmul.f32 %v2204, 1.0614054
    %v2213 = vmul.f32 %v2205, 1.0614054
    %v2214 = vmul.f32 %v2206, 1.0614054
    %v2215 = vmul.f32 %v2207, 1.0614054
    %v2216 = vmul.f32 %v2208, 1.0614054
    %v2217 = vmul.f32 %v2209, 1.0614054
    %v2218 = vmul.f32 %v2210, 1.0614054
    %v2219 = vadd.f32 %v2211, -1.4531521
    %v2220 = vadd.f32 %v2212, -1.4531521
    %v2221 = vadd.f32 %v2213, -1.4531521
    %v2222 = vadd.f32 %v2214, -1.4531521
    %v2223 = vadd.f32 %v2215, -1.4531521
    %v2224 = vadd.f32 %v2216, -1.4531521
    %v2225 = vadd.f32 %v2217, -1.4531521
    %v2226 = vadd.f32 %v2218, -1.4531521
    %v2227 = vmul.f32 %v2219, %v2203
    %v2228 = vmul.f32 %v2220, %v2204
    %v2229 = vmul.f32 %v2221, %v2205
    %v2230 = vmul.f32 %v2222, %v2206
    %v2231 = vmul.f32 %v2223, %v2207
    %v2232 = vmul.f32 %v2224, %v2208
    %v2233 = vmul.f32 %v2225, %v2209
    %v2234 = vmul.f32 %v2226, %v2210
    %v2235 = vadd.f32 %v2227, 1.4214138
    %v2236 = vadd.f32 %v2228, 1.4214138
    %v2237 = vadd.f32 %v2229, 1.4214138
    %v2238 = vadd.f32 %v2230, 1.4214138
    %v2239 = vadd.f32 %v2231, 1.4214138
    %v2240 = vadd.f32 %v2232, 1.4214138
    %v2241 = vadd.f32 %v2233, 1.4214138
    %v2242 = vadd.f32 %v2234, 1.4214138
    %v2243 = vmul.f32 %v2235, %v2203
    %v2244 = vmul.f32 %v2236, %v2204
    %v2245 = vmul.f32 %v2237, %v2205
    %v2246 = vmul.f32 %v2238, %v2206
    %v2247 = vmul.f32 %v2239, %v2207
    %v2248 = vmul.f32 %v2240, %v2208
    %v2249 = vmul.f32 %v2241, %v2209
    %v2250 = vmul.f32 %v2242, %v2210
    %v2251 = vadd.f32 %v2243, -0.28449672
    %v2252 = vadd.f32 %v2244, -0.28449672
    %v2253 = vadd.f32 %v2245, -0.28449672
    %v2254 = vadd.f32 %v2246, -0.28449672
    %v2255 = vadd.f32 %v2247, -0.28449672
    %v2256 = vadd.f32 %v2248, -0.28449672
    %v2257 = vadd.f32 %v2249, -0.28449672
    %v2258 = vadd.f32 %v2250, -0.28449672
    %v2259 = vmul.f32 %v2251, %v2203
    %v2260 = vmul.f32 %v2252, %v2204
    %v2261 = vmul.f32 %v2253, %v2205
    %v2262 = vmul.f32 %v2254, %v2206
    %v2263 = vmul.f32 %v2255, %v2207
    %v2264 = vmul.f32 %v2256, %v2208
    %v2265 = vmul.f32 %v2257, %v2209
    %v2266 = vmul.f32 %v2258, %v2210
    %v2267 = vadd.f32 %v2259, 0.2548296
    %v2268 = vadd.f32 %v2260, 0.2548296
    %v2269 = vadd.f32 %v2261, 0.2548296
    %v2270 = vadd.f32 %v2262, 0.2548296
    %v2271 = vadd.f32 %v2263, 0.2548296
    %v2272 = vadd.f32 %v2264, 0.2548296
    %v2273 = vadd.f32 %v2265, 0.2548296
    %v2274 = vadd.f32 %v2266, 0.2548296
    %v2275 = vmul.f32 %v2267, %v2203
    %v2276 = vmul.f32 %v2268, %v2204
    %v2277 = vmul.f32 %v2269, %v2205
    %v2278 = vmul.f32 %v2270, %v2206
    %v2279 = vmul.f32 %v2271, %v2207
    %v2280 = vmul.f32 %v2272, %v2208
    %v2281 = vmul.f32 %v2273, %v2209
    %v2282 = vmul.f32 %v2274, %v2210
    %v2283 = vsub.f32 0.0, %v2179
    %v2284 = vsub.f32 0.0, %v2180
    %v2285 = vsub.f32 0.0, %v2181
    %v2286 = vsub.f32 0.0, %v2182
    %v2287 = vsub.f32 0.0, %v2183
    %v2288 = vsub.f32 0.0, %v2184
    %v2289 = vsub.f32 0.0, %v2185
    %v2290 = vsub.f32 0.0, %v2186
    %v2291 = vmul.f32 %v2283, %v2179
    %v2292 = vmul.f32 %v2284, %v2180
    %v2293 = vmul.f32 %v2285, %v2181
    %v2294 = vmul.f32 %v2286, %v2182
    %v2295 = vmul.f32 %v2287, %v2183
    %v2296 = vmul.f32 %v2288, %v2184
    %v2297 = vmul.f32 %v2289, %v2185
    %v2298 = vmul.f32 %v2290, %v2186
    %v2299 = vmul.f32 %v2291, 1.442695
    %v2300 = vpow.pop %v2299
    %v2301 = vmul.f32 %v2292, 1.442695
    %v2302 = vpow.pop %v2301
    %v2303 = vmul.f32 %v2293, 1.442695
    %v2304 = vpow.pop %v2303
    %v2305 = vmul.f32 %v2294, 1.442695
    %v2306 = vpow.pop %v2305
    %v2307 = vmul.f32 %v2295, 1.442695
    %v2308 = vpow.pop %v2307
    %v2309 = vmul.f32 %v2296, 1.442695
    %v2310 = vpow.pop %v2309
    %v2311 = vmul.f32 %v2297, 1.442695
    %v2312 = vpow.pop %v2311
    %v2313 = vmul.f32 %v2298, 1.442695
    %v2314 = vpow.pop %v2313
    %v2315 = vmul.f32 %v2275, %v2300
    %v2316 = vmul.f32 %v2276, %v2302
    %v2317 = vmul.f32 %v2277, %v2304
    %v2318 = vmul.f32 %v2278, %v2306
    %v2319 = vmul.f32 %v2279, %v2308
    %v2320 = vmul.f32 %v2280, %v2310
    %v2321 = vmul.f32 %v2281, %v2312
    %v2322 = vmul.f32 %v2282, %v2314
    %v2323 = vsub.f32 1.0, %v2315
    %v2324 = vsub.f32 1.0, %v2316
    %v2325 = vsub.f32 1.0, %v2317
    %v2326 = vsub.f32 1.0, %v2318
    %v2327 = vsub.f32 1.0, %v2319
    %v2328 = vsub.f32 1.0, %v2320
    %v2329 = vsub.f32 1.0, %v2321
    %v2330 = vsub.f32 1.0, %v2322
    %v2331 = vmul.f32 %v2171, %v2323
    %v2332 = vmul.f32 %v2172, %v2324
    %v2333 = vmul.f32 %v2173, %v2325
    %v2334 = vmul.f32 %v2174, %v2326
    %v2335 = vmul.f32 %v2175, %v2327
    %v2336 = vmul.f32 %v2176, %v2328
    %v2337 = vmul.f32 %v2177, %v2329
    %v2338 = vmul.f32 %v2178, %v2330
    %v2339 = vmul.f32 %v2125, 0.5
    %v2340 = vmul.f32 %v2128, 0.5
    %v2341 = vmul.f32 %v2133, 0.5
    %v2342 = vmul.f32 %v2136, 0.5
    %v2343 = vmul.f32 %v2141, 0.5
    %v2344 = vmul.f32 %v2144, 0.5
    %v2345 = vmul.f32 %v2149, 0.5
    %v2346 = vmul.f32 %v2152, 0.5
    %v2347 = vadd.f32 %v2331, 1.0
    %v2348 = vadd.f32 %v2332, 1.0
    %v2349 = vadd.f32 %v2333, 1.0
    %v2350 = vadd.f32 %v2334, 1.0
    %v2351 = vadd.f32 %v2335, 1.0
    %v2352 = vadd.f32 %v2336, 1.0
    %v2353 = vadd.f32 %v2337, 1.0
    %v2354 = vadd.f32 %v2338, 1.0
    %v2355 = vmul.f32 %v2339, %v2347
    %v2356 = vmul.f32 %v2340, %v2348
    %v2357 = vmul.f32 %v2341, %v2349
    %v2358 = vmul.f32 %v2342, %v2350
    %v2359 = vmul.f32 %v2343, %v2351
    %v2360 = vmul.f32 %v2344, %v2352
    %v2361 = vmul.f32 %v2345, %v2353
    %v2362 = vmul.f32 %v2346, %v2354
    %v2363 = vld [vmem:[%s15] sm:$0xf]
    %v2364 = vld [vmem:[%s15 + $0x4] sm:$0xf]
    %v2365 = vld [vmem:[%s15 + $0x8] sm:$0xf]
    %v2366 = vld [vmem:[%s15 + $0xc] sm:$0xf]
    %v2367 = vld [vmem:[%s15 + $0x10] sm:$0xf]
    %v2368 = vld [vmem:[%s15 + $0x14] sm:$0xf]
    %v2369 = vld [vmem:[%s15 + $0x18] sm:$0xf]
    %v2370 = vld [vmem:[%s15 + $0x1c] sm:$0xf]
    %v2371 = vld [vmem:[%s16] sm:$0x1]
    %v2372 = vpack.c.bf16 %v2356, %v2355
    %v2373 = vpack.c.bf16 %v2358, %v2357
    %v2374 = vpack.c.bf16 %v2360, %v2359
    %v2375 = vpack.c.bf16 %v2362, %v2361
    %v2376 = vlaneseq
    %v2377 = vshrl.u32 %v2376, 7
    %v2378 = vsub.s32 0, %v2377
    %v2379 = vrot.slane %v2371, %v2378
    %v2388 = vunpack.c.l.b16 %v2363
    %v2389 = vunpack.c.l.b16 %v2364
    %v2390 = vunpack.c.l.b16 %v2365
    %v2391 = vunpack.c.l.b16 %v2366
    %v2392 = vunpack.c.l.b16 %v2367
    %v2393 = vunpack.c.l.b16 %v2368
    %v2394 = vunpack.c.l.b16 %v2369
    %v2395 = vunpack.c.l.b16 %v2370
    %v2396 = vpack.c.b16 %v2389, %v2388
    %v2397 = vpack.c.b16 %v2391, %v2390
    %v2398 = vpack.c.b16 %v2393, %v2392
    %v2399 = vpack.c.b16 %v2395, %v2394
    %vm2404 = vcmask 523264
    %v2406 = vsel %vm2404, %v2372, 0
    %v2409 = vsel %vm2404, %v2373, 0
    %v2412 = vsel %vm2404, %v2374, 0
    %v2415 = vsel %vm2404, %v2375, 0
    %2417 = vmatprep.subr.bf16.mxu0 0
    %2418 = vmatpush1.bf16.msra.mxu0 %v2396
    %2419 = vmatprep.subr.bf16.mxu0 0
    %2420 = vmatpush1.bf16.msra.mxu0 %v2397
    %2421 = vmatprep.subr.bf16.mxu0 0
    %2422 = vmatpush1.bf16.msra.mxu0 %v2398
    %2423 = vmatprep.subr.bf16.mxu0 0
    %2424 = vmatpush1.bf16.msra.mxu0 %v2399
    %2425 = vmatprep.subr.bf16.mxu0 0
    %2426 = vmatpush1.bf16.msra.mxu0 0
    %2427 = vmatprep.subr.bf16.mxu0 0
    %2428 = vmatpush1.bf16.msra.mxu0 0
    %2429 = vmatprep.subr.bf16.mxu0 0
    %2430 = vmatpush1.bf16.msra.mxu0 0
    %2431 = vmatprep.subr.bf16.mxu0 0
    %2432 = vmatpush1.bf16.msra.mxu0 0
    %2433 = vmatprep.subr.bf16.mxu0 0
    %2434 = vmatpush1.bf16.msra.mxu0 0
    %2435 = vmatprep.subr.bf16.mxu0 0
    %2436 = vmatpush1.bf16.msra.mxu0 0
    %2437 = vmatprep.subr.bf16.mxu0 0
    %2438 = vmatpush1.bf16.msra.mxu0 0
    %2439 = vmatprep.subr.bf16.mxu0 0
    %2440 = vmatpush1.bf16.msra.mxu0 0
    %2441 = vmatprep.subr.bf16.mxu0 0
    %2442 = vmatpush1.bf16.msra.mxu0 0
    %2443 = vmatprep.subr.bf16.mxu0 0
    %2444 = vmatpush1.bf16.msra.mxu0 0
    %2445 = vmatprep.subr.bf16.mxu0 0
    %2446 = vmatpush1.bf16.msra.mxu0 0
    %2447 = vmatprep.subr.bf16.mxu0 0
    %2448 = vmatpush1.bf16.msra.mxu0 0
    %2449 = vmatprep.mubr.bf16.mxu0 0
    %2450 = vmatmul.mubr.bf16.gmra.mrb[0].mxu0 %v2406
    %v2451 = vpop.f32.mrb[0].mxu0
    %v2452 = vadd.f32 %v2379, %v2451
    %v2453 = vpop.f32.mrb[0].mxu0
    %v2454 = vpop.f32.mrb[0].mxu0
    %v2455 = vadd.f32 %v2379, %v2454
    %v2456 = vpop.f32.mrb[0].mxu0
    %2457 = vmatprep.mubr.bf16.mxu0 0
    %2458 = vmatmul.mubr.bf16.gmra.mrb[0].mxu0 %v2409
    %v2459 = vpop.f32.mrb[0].mxu0
    %v2460 = vadd.f32 %v2379, %v2459
    %v2461 = vpop.f32.mrb[0].mxu0
    %v2462 = vpop.f32.mrb[0].mxu0
    %v2463 = vadd.f32 %v2379, %v2462
    %v2464 = vpop.f32.mrb[0].mxu0
    %2465 = vmatprep.mubr.bf16.mxu0 0
    %2466 = vmatmul.mubr.bf16.gmra.mrb[0].mxu0 %v2412
    %v2467 = vpop.f32.mrb[0].mxu0
    %v2468 = vadd.f32 %v2379, %v2467
    %v2469 = vpop.f32.mrb[0].mxu0
    %v2470 = vpop.f32.mrb[0].mxu0
    %v2471 = vadd.f32 %v2379, %v2470
    %v2472 = vpop.f32.mrb[0].mxu0
    %2473 = vmatprep.mubr.bf16.mxu0 0
    %2474 = vmatmul.mubr.bf16.gmra.mrb[0].mxu0 %v2415
    %v2475 = vpop.f32.mrb[0].mxu0
    %v2476 = vadd.f32 %v2379, %v2475
    %v2477 = vpop.f32.mrb[0].mxu0
    %v2478 = vpop.f32.mrb[0].mxu0
    %v2479 = vadd.f32 %v2379, %v2478
    %v2480 = vpop.f32.mrb[0].mxu0
    %2481 = vdwg.mxu0
    %v2482 = vadd.f32 %v2452, %v1915
    %v2483 = vadd.f32 %v2455, %v1916
    %v2484 = vadd.f32 %v2460, %v1917
    %v2485 = vadd.f32 %v2463, %v1918
    %v2486 = vadd.f32 %v2468, %v1919
    %v2487 = vadd.f32 %v2471, %v1920
    %v2488 = vadd.f32 %v2476, %v1921
    %v2489 = vadd.f32 %v2479, %v1922
    %v2490 = vld [vmem:[%s7 + $0x1] sm:$0x1]
    %v2491 = vld [vmem:[%s8 + $0x1] sm:$0x1]
    %v2492 = vsel %vm260, %v2482, 0.0
    %2493 = vadd.xlane.f32.xlu0 %v2492
    %v2494 = vpop.xlane.xlu0 %2493
    %v2495 = vsel %vm260, %v2483, 0.0
    %2496 = vadd.xlane.f32.xlu0 %v2495
    %v2497 = vpop.xlane.xlu0 %2496
    %v2498 = vsel %vm260, %v2484, 0.0
    %2499 = vadd.xlane.f32.xlu0 %v2498
    %v2500 = vpop.xlane.xlu0 %2499
    %v2501 = vsel %vm260, %v2485, 0.0
    %2502 = vadd.xlane.f32.xlu0 %v2501
    %v2503 = vpop.xlane.xlu0 %2502
    %v2504 = vsel %vm260, %v2486, 0.0
    %2505 = vadd.xlane.f32.xlu0 %v2504
    %v2506 = vpop.xlane.xlu0 %2505
    %v2507 = vsel %vm260, %v2487, 0.0
    %2508 = vadd.xlane.f32.xlu0 %v2507
    %v2509 = vpop.xlane.xlu0 %2508
    %v2510 = vsel %vm260, %v2488, 0.0
    %2511 = vadd.xlane.f32.xlu0 %v2510
    %v2512 = vpop.xlane.xlu0 %2511
    %v2513 = vsel %vm260, %v2489, 0.0
    %2514 = vadd.xlane.f32.xlu0 %v2513
    %v2515 = vpop.xlane.xlu0 %2514
    %v2516 = vmul.f32 %v2494, %v285
    %v2517 = vmul.f32 %v2497, %v285
    %v2518 = vmul.f32 %v2500, %v285
    %v2519 = vmul.f32 %v2503, %v285
    %v2520 = vmul.f32 %v2506, %v285
    %v2521 = vmul.f32 %v2509, %v285
    %v2522 = vmul.f32 %v2512, %v285
    %v2523 = vmul.f32 %v2515, %v285
    %v2524 = vsub.f32 %v2482, %v2516
    %v2525 = vsub.f32 %v2483, %v2517
    %v2526 = vsub.f32 %v2484, %v2518
    %v2527 = vsub.f32 %v2485, %v2519
    %v2528 = vsub.f32 %v2486, %v2520
    %v2529 = vsub.f32 %v2487, %v2521
    %v2530 = vsub.f32 %v2488, %v2522
    %v2531 = vsub.f32 %v2489, %v2523
    %v2532 = vmul.f32 %v2524, %v2524
    %v2533 = vmul.f32 %v2525, %v2525
    %v2534 = vmul.f32 %v2526, %v2526
    %v2535 = vmul.f32 %v2527, %v2527
    %v2536 = vmul.f32 %v2528, %v2528
    %v2537 = vmul.f32 %v2529, %v2529
    %v2538 = vmul.f32 %v2530, %v2530
    %v2539 = vmul.f32 %v2531, %v2531
    %v2540 = vsel %vm260, %v2532, 0.0
    %2541 = vadd.xlane.f32.xlu0 %v2540
    %v2542 = vpop.xlane.xlu0 %2541
    %v2543 = vsel %vm260, %v2533, 0.0
    %2544 = vadd.xlane.f32.xlu0 %v2543
    %v2545 = vpop.xlane.xlu0 %2544
    %v2546 = vsel %vm260, %v2534, 0.0
    %2547 = vadd.xlane.f32.xlu0 %v2546
    %v2548 = vpop.xlane.xlu0 %2547
    %v2549 = vsel %vm260, %v2535, 0.0
    %2550 = vadd.xlane.f32.xlu0 %v2549
    %v2551 = vpop.xlane.xlu0 %2550
    %v2552 = vsel %vm260, %v2536, 0.0
    %2553 = vadd.xlane.f32.xlu0 %v2552
    %v2554 = vpop.xlane.xlu0 %2553
    %v2555 = vsel %vm260, %v2537, 0.0
    %2556 = vadd.xlane.f32.xlu0 %v2555
    %v2557 = vpop.xlane.xlu0 %2556
    %v2558 = vsel %vm260, %v2538, 0.0
    %2559 = vadd.xlane.f32.xlu0 %v2558
    %v2560 = vpop.xlane.xlu0 %2559
    %v2561 = vsel %vm260, %v2539, 0.0
    %2562 = vadd.xlane.f32.xlu0 %v2561
    %v2563 = vpop.xlane.xlu0 %2562
    %v2564 = vmul.f32 %v2542, %v285
    %v2565 = vmul.f32 %v2545, %v285
    %v2566 = vmul.f32 %v2548, %v285
    %v2567 = vmul.f32 %v2551, %v285
    %v2568 = vmul.f32 %v2554, %v285
    %v2569 = vmul.f32 %v2557, %v285
    %v2570 = vmul.f32 %v2560, %v285
    %v2571 = vmul.f32 %v2563, %v285
    %v2572 = vadd.f32 %v2564, 1e-05
    %v2573 = vadd.f32 %v2565, 1e-05
    %v2574 = vadd.f32 %v2566, 1e-05
    %v2575 = vadd.f32 %v2567, 1e-05
    %v2576 = vadd.f32 %v2568, 1e-05
    %v2577 = vadd.f32 %v2569, 1e-05
    %v2578 = vadd.f32 %v2570, 1e-05
    %v2579 = vadd.f32 %v2571, 1e-05
    %v2580 = vrsqrt.pop %v2572
    %v2581 = vrsqrt.pop %v2573
    %v2582 = vrsqrt.pop %v2574
    %v2583 = vrsqrt.pop %v2575
    %v2584 = vrsqrt.pop %v2576
    %v2585 = vrsqrt.pop %v2577
    %v2586 = vrsqrt.pop %v2578
    %v2587 = vrsqrt.pop %v2579
    %v2588 = vmul.f32 %v2524, %v2580
    %v2589 = vmul.f32 %v2525, %v2581
    %v2590 = vmul.f32 %v2526, %v2582
    %v2591 = vmul.f32 %v2527, %v2583
    %v2592 = vmul.f32 %v2528, %v2584
    %v2593 = vmul.f32 %v2529, %v2585
    %v2594 = vmul.f32 %v2530, %v2586
    %v2595 = vmul.f32 %v2531, %v2587
    %v2596 = vlaneseq
    %v2597 = vshrl.u32 %v2596, 7
    %v2598 = vsub.s32 0, %v2597
    %v2599 = vrot.slane %v2490, %v2598
    %v2600 = vmul.f32 %v2588, %v2599
    %v2601 = vmul.f32 %v2589, %v2599
    %v2602 = vmul.f32 %v2590, %v2599
    %v2603 = vmul.f32 %v2591, %v2599
    %v2604 = vmul.f32 %v2592, %v2599
    %v2605 = vmul.f32 %v2593, %v2599
    %v2606 = vmul.f32 %v2594, %v2599
    %v2607 = vmul.f32 %v2595, %v2599
    %v2608 = vlaneseq
    %v2609 = vshrl.u32 %v2608, 7
    %v2610 = vsub.s32 0, %v2609
    %v2611 = vrot.slane %v2491, %v2610
    %v2612 = vadd.f32 %v2600, %v2611
    %v2613 = vadd.f32 %v2601, %v2611
    %v2614 = vadd.f32 %v2602, %v2611
    %v2615 = vadd.f32 %v2603, %v2611
    %v2616 = vadd.f32 %v2604, %v2611
    %v2617 = vadd.f32 %v2605, %v2611
    %v2618 = vadd.f32 %v2606, %v2611
    %v2619 = vadd.f32 %v2607, %v2611
    %s2620 = scalar_lea.vmem %s9, 16
    %v2621 = vld [vmem:[%s2620] sm:$0xf]
    %v2622 = vld [vmem:[%s2620 + $0x4] sm:$0xf]
    %v2623 = vld [vmem:[%s2620 + $0x8] sm:$0xf]
    %v2624 = vld [vmem:[%s2620 + $0xc] sm:$0xf]
    %v2625 = vpack.c.bf16 %v2613, %v2612
    %v2626 = vpack.c.bf16 %v2615, %v2614
    %v2627 = vpack.c.bf16 %v2617, %v2616
    %v2628 = vpack.c.bf16 %v2619, %v2618
    %v2633 = vunpack.c.l.b16 %v2621
    %v2634 = vunpack.c.l.b16 %v2622
    %v2635 = vunpack.c.l.b16 %v2623
    %v2636 = vunpack.c.l.b16 %v2624
    %v2637 = vpack.c.b16 %v2634, %v2633
    %v2638 = vpack.c.b16 %v2636, %v2635
    %v2642 = vsel %vm260, %v2625, 0
    %v2645 = vsel %vm260, %v2626, 0
    %v2648 = vsel %vm260, %v2627, 0
    %v2651 = vsel %vm260, %v2628, 0
    %2653 = vmatprep.subr.bf16.mxu0 0
    %2654 = vmatpush1.bf16.msra.mxu0 %v2637
    %2655 = vmatprep.subr.bf16.mxu0 0
    %2656 = vmatpush1.bf16.msra.mxu0 %v2638
    %2657 = vmatprep.subr.bf16.mxu0 0
    %2658 = vmatpush1.bf16.msra.mxu0 0
    %2659 = vmatprep.subr.bf16.mxu0 0
    %2660 = vmatpush1.bf16.msra.mxu0 0
    %2661 = vmatprep.subr.bf16.mxu0 0
    %2662 = vmatpush1.bf16.msra.mxu0 0
    %2663 = vmatprep.subr.bf16.mxu0 0
    %2664 = vmatpush1.bf16.msra.mxu0 0
    %2665 = vmatprep.subr.bf16.mxu0 0
    %2666 = vmatpush1.bf16.msra.mxu0 0
    %2667 = vmatprep.subr.bf16.mxu0 0
    %2668 = vmatpush1.bf16.msra.mxu0 0
    %2669 = vmatprep.subr.bf16.mxu0 0
    %2670 = vmatpush1.bf16.msra.mxu0 0
    %2671 = vmatprep.subr.bf16.mxu0 0
    %2672 = vmatpush1.bf16.msra.mxu0 0
    %2673 = vmatprep.subr.bf16.mxu0 0
    %2674 = vmatpush1.bf16.msra.mxu0 0
    %2675 = vmatprep.subr.bf16.mxu0 0
    %2676 = vmatpush1.bf16.msra.mxu0 0
    %2677 = vmatprep.subr.bf16.mxu0 0
    %2678 = vmatpush1.bf16.msra.mxu0 0
    %2679 = vmatprep.subr.bf16.mxu0 0
    %2680 = vmatpush1.bf16.msra.mxu0 0
    %2681 = vmatprep.subr.bf16.mxu0 0
    %2682 = vmatpush1.bf16.msra.mxu0 0
    %2683 = vmatprep.subr.bf16.mxu0 0
    %2684 = vmatpush1.bf16.msra.mxu0 0
    %2685 = vmatprep.mubr.bf16.mxu0 0
    %2686 = vmatmul.mubr.bf16.gmra.mrb[0].mxu0 %v2642
    %v2687 = vpop.f32.mrb[0].mxu0
    %v2688 = vadd.f32 0.0, %v2687
    %v2689 = vpop.f32.mrb[0].mxu0
    %v2690 = vpop.f32.mrb[0].mxu0
    %v2691 = vadd.f32 0.0, %v2690
    %v2692 = vpop.f32.mrb[0].mxu0
    %2693 = vmatprep.mubr.bf16.mxu0 0
    %2694 = vmatmul.mubr.bf16.gmra.mrb[0].mxu0 %v2645
    %v2695 = vpop.f32.mrb[0].mxu0
    %v2696 = vadd.f32 0.0, %v2695
    %v2697 = vpop.f32.mrb[0].mxu0
    %v2698 = vpop.f32.mrb[0].mxu0
    %v2699 = vadd.f32 0.0, %v2698
    %v2700 = vpop.f32.mrb[0].mxu0
    %2701 = vmatprep.mubr.bf16.mxu0 0
    %2702 = vmatmul.mubr.bf16.gmra.mrb[0].mxu0 %v2648
    %v2703 = vpop.f32.mrb[0].mxu0
    %v2704 = vadd.f32 0.0, %v2703
    %v2705 = vpop.f32.mrb[0].mxu0
    %v2706 = vpop.f32.mrb[0].mxu0
    %v2707 = vadd.f32 0.0, %v2706
    %v2708 = vpop.f32.mrb[0].mxu0
    %2709 = vmatprep.mubr.bf16.mxu0 0
    %2710 = vmatmul.mubr.bf16.gmra.mrb[0].mxu0 %v2651
    %v2711 = vpop.f32.mrb[0].mxu0
    %v2712 = vadd.f32 0.0, %v2711
    %v2713 = vpop.f32.mrb[0].mxu0
    %v2714 = vpop.f32.mrb[0].mxu0
    %v2715 = vadd.f32 0.0, %v2714
    %v2716 = vpop.f32.mrb[0].mxu0
    %2717 = vdwg.mxu0
    %v2718 = vpack.c.bf16 %v2691, %v2688
    %v2719 = vpack.c.bf16 %v2699, %v2696
    %v2720 = vpack.c.bf16 %v2707, %v2704
    %v2721 = vpack.c.bf16 %v2715, %v2712
    %2723 = vrot.lane.b32.xlu0 %v2718, 96
    %v2724 = vpop.permute.xlu0 %2723
    %v2726 = vsel %vm940, %v2718, 0
    %v2729 = vsel %vm940, %v2724, 0
    %2731 = vmatprep.subr.bf16.mxu0 0
    %2732 = vmatpush1.bf16.xpose.msra.mxu0 %v2729
    %2733 = vmatprep.subr.bf16.mxu0 0
    %2734 = vmatpush1.bf16.xpose.msra.mxu0 0
    %2735 = vmatprep.subr.bf16.mxu0 0
    %2736 = vmatpush1.bf16.xpose.msra.mxu0 0
    %2737 = vmatprep.subr.bf16.mxu0 0
    %2738 = vmatpush1.bf16.xpose.msra.mxu0 0
    %2739 = vmatprep.subr.bf16.mxu0 0
    %2740 = vmatpush1.bf16.xpose.msra.mxu0 0
    %2741 = vmatprep.subr.bf16.mxu0 0
    %2742 = vmatpush1.bf16.xpose.msra.mxu0 0
    %2743 = vmatprep.subr.bf16.mxu0 0
    %2744 = vmatpush1.bf16.xpose.msra.mxu0 0
    %2745 = vmatprep.subr.bf16.mxu0 0
    %2746 = vmatpush1.bf16.xpose.msra.mxu0 0
    %2747 = vmatprep.subr.bf16.mxu0 0
    %2748 = vmatpush1.bf16.xpose.msra.mxu0 0
    %2749 = vmatprep.subr.bf16.mxu0 0
    %2750 = vmatpush1.bf16.xpose.msra.mxu0 0
    %2751 = vmatprep.subr.bf16.mxu0 0
    %2752 = vmatpush1.bf16.xpose.msra.mxu0 0
    %2753 = vmatprep.subr.bf16.mxu0 0
    %2754 = vmatpush1.bf16.xpose.msra.mxu0 0
    %2755 = vmatprep.subr.bf16.mxu0 0
    %2756 = vmatpush1.bf16.xpose.msra.mxu0 0
    %2757 = vmatprep.subr.bf16.mxu0 0
    %2758 = vmatpush1.bf16.xpose.msra.mxu0 0
    %2759 = vmatprep.subr.bf16.mxu0 0
    %2760 = vmatpush1.bf16.xpose.msra.mxu0 0
    %2761 = vmatprep.subr.bf16.mxu0 0
    %2762 = vmatpush1.bf16.xpose.msra.mxu0 0
    %2763 = vmatprep.mubr.bf16.mxu0 0
    %2764 = vmatmul.mubr.bf16.gmra.mrb[0].mxu0 %v2726
    %v2765 = vpop.f32.mrb[0].mxu0
    %v2766 = vadd.f32 0.0, %v2765
    %v2767 = vpop.f32.mrb[0].mxu0
    %v2768 = vpop.f32.mrb[0].mxu0
    %v2769 = vadd.f32 0.0, %v2768
    %v2770 = vpop.f32.mrb[0].mxu0
    %2771 = vdwg.mxu0
    %2773 = vrot.lane.b32.xlu0 %v2719, 96
    %v2774 = vpop.permute.xlu0 %2773
    %v2776 = vsel %vm940, %v2719, 0
    %v2779 = vsel %vm940, %v2774, 0
    %2781 = vmatprep.subr.bf16.mxu0 0
    %2782 = vmatpush1.bf16.xpose.msra.mxu0 %v2779
    %2783 = vmatprep.subr.bf16.mxu0 0
    %2784 = vmatpush1.bf16.xpose.msra.mxu0 0
    %2785 = vmatprep.subr.bf16.mxu0 0
    %2786 = vmatpush1.bf16.xpose.msra.mxu0 0
    %2787 = vmatprep.subr.bf16.mxu0 0
    %2788 = vmatpush1.bf16.xpose.msra.mxu0 0
    %2789 = vmatprep.subr.bf16.mxu0 0
    %2790 = vmatpush1.bf16.xpose.msra.mxu0 0
    %2791 = vmatprep.subr.bf16.mxu0 0
    %2792 = vmatpush1.bf16.xpose.msra.mxu0 0
    %2793 = vmatprep.subr.bf16.mxu0 0
    %2794 = vmatpush1.bf16.xpose.msra.mxu0 0
    %2795 = vmatprep.subr.bf16.mxu0 0
    %2796 = vmatpush1.bf16.xpose.msra.mxu0 0
    %2797 = vmatprep.subr.bf16.mxu0 0
    %2798 = vmatpush1.bf16.xpose.msra.mxu0 0
    %2799 = vmatprep.subr.bf16.mxu0 0
    %2800 = vmatpush1.bf16.xpose.msra.mxu0 0
    %2801 = vmatprep.subr.bf16.mxu0 0
    %2802 = vmatpush1.bf16.xpose.msra.mxu0 0
    %2803 = vmatprep.subr.bf16.mxu0 0
    %2804 = vmatpush1.bf16.xpose.msra.mxu0 0
    %2805 = vmatprep.subr.bf16.mxu0 0
    %2806 = vmatpush1.bf16.xpose.msra.mxu0 0
    %2807 = vmatprep.subr.bf16.mxu0 0
    %2808 = vmatpush1.bf16.xpose.msra.mxu0 0
    %2809 = vmatprep.subr.bf16.mxu0 0
    %2810 = vmatpush1.bf16.xpose.msra.mxu0 0
    %2811 = vmatprep.subr.bf16.mxu0 0
    %2812 = vmatpush1.bf16.xpose.msra.mxu0 0
    %2813 = vmatprep.mubr.bf16.mxu0 0
    %2814 = vmatmul.mubr.bf16.gmra.mrb[0].mxu0 %v2776
    %v2815 = vpop.f32.mrb[0].mxu0
    %v2816 = vadd.f32 0.0, %v2815
    %v2817 = vpop.f32.mrb[0].mxu0
    %v2818 = vpop.f32.mrb[0].mxu0
    %v2819 = vadd.f32 0.0, %v2818
    %v2820 = vpop.f32.mrb[0].mxu0
    %2821 = vdwg.mxu0
    %2823 = vrot.lane.b32.xlu0 %v2720, 96
    %v2824 = vpop.permute.xlu0 %2823
    %v2826 = vsel %vm940, %v2720, 0
    %v2829 = vsel %vm940, %v2824, 0
    %2831 = vmatprep.subr.bf16.mxu0 0
    %2832 = vmatpush1.bf16.xpose.msra.mxu0 %v2829
    %2833 = vmatprep.subr.bf16.mxu0 0
    %2834 = vmatpush1.bf16.xpose.msra.mxu0 0
    %2835 = vmatprep.subr.bf16.mxu0 0
    %2836 = vmatpush1.bf16.xpose.msra.mxu0 0
    %2837 = vmatprep.subr.bf16.mxu0 0
    %2838 = vmatpush1.bf16.xpose.msra.mxu0 0
    %2839 = vmatprep.subr.bf16.mxu0 0
    %2840 = vmatpush1.bf16.xpose.msra.mxu0 0
    %2841 = vmatprep.subr.bf16.mxu0 0
    %2842 = vmatpush1.bf16.xpose.msra.mxu0 0
    %2843 = vmatprep.subr.bf16.mxu0 0
    %2844 = vmatpush1.bf16.xpose.msra.mxu0 0
    %2845 = vmatprep.subr.bf16.mxu0 0
    %2846 = vmatpush1.bf16.xpose.msra.mxu0 0
    %2847 = vmatprep.subr.bf16.mxu0 0
    %2848 = vmatpush1.bf16.xpose.msra.mxu0 0
    %2849 = vmatprep.subr.bf16.mxu0 0
    %2850 = vmatpush1.bf16.xpose.msra.mxu0 0
    %2851 = vmatprep.subr.bf16.mxu0 0
    %2852 = vmatpush1.bf16.xpose.msra.mxu0 0
    %2853 = vmatprep.subr.bf16.mxu0 0
    %2854 = vmatpush1.bf16.xpose.msra.mxu0 0
    %2855 = vmatprep.subr.bf16.mxu0 0
    %2856 = vmatpush1.bf16.xpose.msra.mxu0 0
    %2857 = vmatprep.subr.bf16.mxu0 0
    %2858 = vmatpush1.bf16.xpose.msra.mxu0 0
    %2859 = vmatprep.subr.bf16.mxu0 0
    %2860 = vmatpush1.bf16.xpose.msra.mxu0 0
    %2861 = vmatprep.subr.bf16.mxu0 0
    %2862 = vmatpush1.bf16.xpose.msra.mxu0 0
    %2863 = vmatprep.mubr.bf16.mxu0 0
    %2864 = vmatmul.mubr.bf16.gmra.mrb[0].mxu0 %v2826
    %v2865 = vpop.f32.mrb[0].mxu0
    %v2866 = vadd.f32 0.0, %v2865
    %v2867 = vpop.f32.mrb[0].mxu0
    %v2868 = vpop.f32.mrb[0].mxu0
    %v2869 = vadd.f32 0.0, %v2868
    %v2870 = vpop.f32.mrb[0].mxu0
    %2871 = vdwg.mxu0
    %2873 = vrot.lane.b32.xlu0 %v2721, 96
    %v2874 = vpop.permute.xlu0 %2873
    %v2876 = vsel %vm940, %v2721, 0
    %v2879 = vsel %vm940, %v2874, 0
    %2881 = vmatprep.subr.bf16.mxu0 0
    %2882 = vmatpush1.bf16.xpose.msra.mxu0 %v2879
    %2883 = vmatprep.subr.bf16.mxu0 0
    %2884 = vmatpush1.bf16.xpose.msra.mxu0 0
    %2885 = vmatprep.subr.bf16.mxu0 0
    %2886 = vmatpush1.bf16.xpose.msra.mxu0 0
    %2887 = vmatprep.subr.bf16.mxu0 0
    %2888 = vmatpush1.bf16.xpose.msra.mxu0 0
    %2889 = vmatprep.subr.bf16.mxu0 0
    %2890 = vmatpush1.bf16.xpose.msra.mxu0 0
    %2891 = vmatprep.subr.bf16.mxu0 0
    %2892 = vmatpush1.bf16.xpose.msra.mxu0 0
    %2893 = vmatprep.subr.bf16.mxu0 0
    %2894 = vmatpush1.bf16.xpose.msra.mxu0 0
    %2895 = vmatprep.subr.bf16.mxu0 0
    %2896 = vmatpush1.bf16.xpose.msra.mxu0 0
    %2897 = vmatprep.subr.bf16.mxu0 0
    %2898 = vmatpush1.bf16.xpose.msra.mxu0 0
    %2899 = vmatprep.subr.bf16.mxu0 0
    %2900 = vmatpush1.bf16.xpose.msra.mxu0 0
    %2901 = vmatprep.subr.bf16.mxu0 0
    %2902 = vmatpush1.bf16.xpose.msra.mxu0 0
    %2903 = vmatprep.subr.bf16.mxu0 0
    %2904 = vmatpush1.bf16.xpose.msra.mxu0 0
    %2905 = vmatprep.subr.bf16.mxu0 0
    %2906 = vmatpush1.bf16.xpose.msra.mxu0 0
    %2907 = vmatprep.subr.bf16.mxu0 0
    %2908 = vmatpush1.bf16.xpose.msra.mxu0 0
    %2909 = vmatprep.subr.bf16.mxu0 0
    %2910 = vmatpush1.bf16.xpose.msra.mxu0 0
    %2911 = vmatprep.subr.bf16.mxu0 0
    %2912 = vmatpush1.bf16.xpose.msra.mxu0 0
    %2913 = vmatprep.mubr.bf16.mxu0 0
    %2914 = vmatmul.mubr.bf16.gmra.mrb[0].mxu0 %v2876
    %v2915 = vpop.f32.mrb[0].mxu0
    %v2916 = vadd.f32 0.0, %v2915
    %v2917 = vpop.f32.mrb[0].mxu0
    %v2918 = vpop.f32.mrb[0].mxu0
    %v2919 = vadd.f32 0.0, %v2918
    %v2920 = vpop.f32.mrb[0].mxu0
    %2921 = vdwg.mxu0
    %v2922 = vsel %vm940, %v2766, -inf
    %2923 = vmax.xlane.f32.xlu0 %v2922
    %v2924 = vpop.xlane.xlu0 %2923
    %v2925 = vsel %vm940, %v2769, -inf
    %2926 = vmax.xlane.f32.xlu0 %v2925
    %v2927 = vpop.xlane.xlu0 %2926
    %v2928 = vsel %vm940, %v2816, -inf
    %2929 = vmax.xlane.f32.xlu0 %v2928
    %v2930 = vpop.xlane.xlu0 %2929
    %v2931 = vsel %vm940, %v2819, -inf
    %2932 = vmax.xlane.f32.xlu0 %v2931
    %v2933 = vpop.xlane.xlu0 %2932
    %v2934 = vsel %vm940, %v2866, -inf
    %2935 = vmax.xlane.f32.xlu0 %v2934
    %v2936 = vpop.xlane.xlu0 %2935
    %v2937 = vsel %vm940, %v2869, -inf
    %2938 = vmax.xlane.f32.xlu0 %v2937
    %v2939 = vpop.xlane.xlu0 %2938
    %v2940 = vsel %vm940, %v2916, -inf
    %2941 = vmax.xlane.f32.xlu0 %v2940
    %v2942 = vpop.xlane.xlu0 %2941
    %v2943 = vsel %vm940, %v2919, -inf
    %2944 = vmax.xlane.f32.xlu0 %v2943
    %v2945 = vpop.xlane.xlu0 %2944
    %v2946 = vsub.f32 %v2766, %v2924
    %v2947 = vsub.f32 %v2769, %v2927
    %v2948 = vsub.f32 %v2816, %v2930
    %v2949 = vsub.f32 %v2819, %v2933
    %v2950 = vsub.f32 %v2866, %v2936
    %v2951 = vsub.f32 %v2869, %v2939
    %v2952 = vsub.f32 %v2916, %v2942
    %v2953 = vsub.f32 %v2919, %v2945
    %v2954 = vmul.f32 %v2946, 1.442695
    %v2955 = vpow.pop %v2954
    %v2956 = vmul.f32 %v2947, 1.442695
    %v2957 = vpow.pop %v2956
    %v2958 = vmul.f32 %v2948, 1.442695
    %v2959 = vpow.pop %v2958
    %v2960 = vmul.f32 %v2949, 1.442695
    %v2961 = vpow.pop %v2960
    %v2962 = vmul.f32 %v2950, 1.442695
    %v2963 = vpow.pop %v2962
    %v2964 = vmul.f32 %v2951, 1.442695
    %v2965 = vpow.pop %v2964
    %v2966 = vmul.f32 %v2952, 1.442695
    %v2967 = vpow.pop %v2966
    %v2968 = vmul.f32 %v2953, 1.442695
    %v2969 = vpow.pop %v2968
    %v2970 = vsel %vm940, %v2955, 0.0
    %2971 = vadd.xlane.f32.xlu0 %v2970
    %v2972 = vpop.xlane.xlu0 %2971
    %v2973 = vsel %vm940, %v2957, 0.0
    %2974 = vadd.xlane.f32.xlu0 %v2973
    %v2975 = vpop.xlane.xlu0 %2974
    %v2976 = vsel %vm940, %v2959, 0.0
    %2977 = vadd.xlane.f32.xlu0 %v2976
    %v2978 = vpop.xlane.xlu0 %2977
    %v2979 = vsel %vm940, %v2961, 0.0
    %2980 = vadd.xlane.f32.xlu0 %v2979
    %v2981 = vpop.xlane.xlu0 %2980
    %v2982 = vsel %vm940, %v2963, 0.0
    %2983 = vadd.xlane.f32.xlu0 %v2982
    %v2984 = vpop.xlane.xlu0 %2983
    %v2985 = vsel %vm940, %v2965, 0.0
    %2986 = vadd.xlane.f32.xlu0 %v2985
    %v2987 = vpop.xlane.xlu0 %2986
    %v2988 = vsel %vm940, %v2967, 0.0
    %2989 = vadd.xlane.f32.xlu0 %v2988
    %v2990 = vpop.xlane.xlu0 %2989
    %v2991 = vsel %vm940, %v2969, 0.0
    %2992 = vadd.xlane.f32.xlu0 %v2991
    %v2993 = vpop.xlane.xlu0 %2992
    %v2994 = vrcp.pop %v2972
    %v2995 = vrcp.pop %v2975
    %v2996 = vrcp.pop %v2978
    %v2997 = vrcp.pop %v2981
    %v2998 = vrcp.pop %v2984
    %v2999 = vrcp.pop %v2987
    %v3000 = vrcp.pop %v2990
    %v3001 = vrcp.pop %v2993
    %v3002 = vmul.f32 %v2955, %v2994
    %v3003 = vmul.f32 %v2957, %v2995
    %v3004 = vmul.f32 %v2959, %v2996
    %v3005 = vmul.f32 %v2961, %v2997
    %v3006 = vmul.f32 %v2963, %v2998
    %v3007 = vmul.f32 %v2965, %v2999
    %v3008 = vmul.f32 %v2967, %v3000
    %v3009 = vmul.f32 %v2969, %v3001
    %v3010 = vpack.c.bf16 %v3003, %v3002
    %v3011 = vpack.c.bf16 %v3005, %v3004
    %v3012 = vpack.c.bf16 %v3007, %v3006
    %v3013 = vpack.c.bf16 %v3009, %v3008
    %3014 = vrot.lane.b32.xlu0 %v2718, 112
    %v3015 = vpop.permute.xlu0 %3014
    %3016 = vrot.lane.b32.xlu0 %v2718, 80
    %v3017 = vpop.permute.xlu0 %3016
    %v3019 = vsel %vm940, %v3015, 0
    %v3022 = vsel %vm940, %v3017, 0
    %3024 = vmatprep.subr.bf16.mxu0 0
    %3025 = vmatpush1.bf16.xpose.msra.mxu0 %v3022
    %3026 = vmatprep.subr.bf16.mxu0 0
    %3027 = vmatpush1.bf16.xpose.msra.mxu0 0
    %3028 = vmatprep.subr.bf16.mxu0 0
    %3029 = vmatpush1.bf16.xpose.msra.mxu0 0
    %3030 = vmatprep.subr.bf16.mxu0 0
    %3031 = vmatpush1.bf16.xpose.msra.mxu0 0
    %3032 = vmatprep.subr.bf16.mxu0 0
    %3033 = vmatpush1.bf16.xpose.msra.mxu0 0
    %3034 = vmatprep.subr.bf16.mxu0 0
    %3035 = vmatpush1.bf16.xpose.msra.mxu0 0
    %3036 = vmatprep.subr.bf16.mxu0 0
    %3037 = vmatpush1.bf16.xpose.msra.mxu0 0
    %3038 = vmatprep.subr.bf16.mxu0 0
    %3039 = vmatpush1.bf16.xpose.msra.mxu0 0
    %3040 = vmatprep.subr.bf16.mxu0 0
    %3041 = vmatpush1.bf16.xpose.msra.mxu0 0
    %3042 = vmatprep.subr.bf16.mxu0 0
    %3043 = vmatpush1.bf16.xpose.msra.mxu0 0
    %3044 = vmatprep.subr.bf16.mxu0 0
    %3045 = vmatpush1.bf16.xpose.msra.mxu0 0
    %3046 = vmatprep.subr.bf16.mxu0 0
    %3047 = vmatpush1.bf16.xpose.msra.mxu0 0
    %3048 = vmatprep.subr.bf16.mxu0 0
    %3049 = vmatpush1.bf16.xpose.msra.mxu0 0
    %3050 = vmatprep.subr.bf16.mxu0 0
    %3051 = vmatpush1.bf16.xpose.msra.mxu0 0
    %3052 = vmatprep.subr.bf16.mxu0 0
    %3053 = vmatpush1.bf16.xpose.msra.mxu0 0
    %3054 = vmatprep.subr.bf16.mxu0 0
    %3055 = vmatpush1.bf16.xpose.msra.mxu0 0
    %3056 = vmatprep.mubr.bf16.mxu0 0
    %3057 = vmatmul.mubr.bf16.gmra.mrb[0].mxu0 %v3019
    %v3058 = vpop.f32.mrb[0].mxu0
    %v3059 = vadd.f32 0.0, %v3058
    %v3060 = vpop.f32.mrb[0].mxu0
    %v3061 = vpop.f32.mrb[0].mxu0
    %v3062 = vadd.f32 0.0, %v3061
    %v3063 = vpop.f32.mrb[0].mxu0
    %3064 = vdwg.mxu0
    %3065 = vrot.lane.b32.xlu0 %v2719, 112
    %v3066 = vpop.permute.xlu0 %3065
    %3067 = vrot.lane.b32.xlu0 %v2719, 80
    %v3068 = vpop.permute.xlu0 %3067
    %v3070 = vsel %vm940, %v3066, 0
    %v3073 = vsel %vm940, %v3068, 0
    %3075 = vmatprep.subr.bf16.mxu0 0
    %3076 = vmatpush1.bf16.xpose.msra.mxu0 %v3073
    %3077 = vmatprep.subr.bf16.mxu0 0
    %3078 = vmatpush1.bf16.xpose.msra.mxu0 0
    %3079 = vmatprep.subr.bf16.mxu0 0
    %3080 = vmatpush1.bf16.xpose.msra.mxu0 0
    %3081 = vmatprep.subr.bf16.mxu0 0
    %3082 = vmatpush1.bf16.xpose.msra.mxu0 0
    %3083 = vmatprep.subr.bf16.mxu0 0
    %3084 = vmatpush1.bf16.xpose.msra.mxu0 0
    %3085 = vmatprep.subr.bf16.mxu0 0
    %3086 = vmatpush1.bf16.xpose.msra.mxu0 0
    %3087 = vmatprep.subr.bf16.mxu0 0
    %3088 = vmatpush1.bf16.xpose.msra.mxu0 0
    %3089 = vmatprep.subr.bf16.mxu0 0
    %3090 = vmatpush1.bf16.xpose.msra.mxu0 0
    %3091 = vmatprep.subr.bf16.mxu0 0
    %3092 = vmatpush1.bf16.xpose.msra.mxu0 0
    %3093 = vmatprep.subr.bf16.mxu0 0
    %3094 = vmatpush1.bf16.xpose.msra.mxu0 0
    %3095 = vmatprep.subr.bf16.mxu0 0
    %3096 = vmatpush1.bf16.xpose.msra.mxu0 0
    %3097 = vmatprep.subr.bf16.mxu0 0
    %3098 = vmatpush1.bf16.xpose.msra.mxu0 0
    %3099 = vmatprep.subr.bf16.mxu0 0
    %3100 = vmatpush1.bf16.xpose.msra.mxu0 0
    %3101 = vmatprep.subr.bf16.mxu0 0
    %3102 = vmatpush1.bf16.xpose.msra.mxu0 0
    %3103 = vmatprep.subr.bf16.mxu0 0
    %3104 = vmatpush1.bf16.xpose.msra.mxu0 0
    %3105 = vmatprep.subr.bf16.mxu0 0
    %3106 = vmatpush1.bf16.xpose.msra.mxu0 0
    %3107 = vmatprep.mubr.bf16.mxu0 0
    %3108 = vmatmul.mubr.bf16.gmra.mrb[0].mxu0 %v3070
    %v3109 = vpop.f32.mrb[0].mxu0
    %v3110 = vadd.f32 0.0, %v3109
    %v3111 = vpop.f32.mrb[0].mxu0
    %v3112 = vpop.f32.mrb[0].mxu0
    %v3113 = vadd.f32 0.0, %v3112
    %v3114 = vpop.f32.mrb[0].mxu0
    %3115 = vdwg.mxu0
    %3116 = vrot.lane.b32.xlu0 %v2720, 112
    %v3117 = vpop.permute.xlu0 %3116
    %3118 = vrot.lane.b32.xlu0 %v2720, 80
    %v3119 = vpop.permute.xlu0 %3118
    %v3121 = vsel %vm940, %v3117, 0
    %v3124 = vsel %vm940, %v3119, 0
    %3126 = vmatprep.subr.bf16.mxu0 0
    %3127 = vmatpush1.bf16.xpose.msra.mxu0 %v3124
    %3128 = vmatprep.subr.bf16.mxu0 0
    %3129 = vmatpush1.bf16.xpose.msra.mxu0 0
    %3130 = vmatprep.subr.bf16.mxu0 0
    %3131 = vmatpush1.bf16.xpose.msra.mxu0 0
    %3132 = vmatprep.subr.bf16.mxu0 0
    %3133 = vmatpush1.bf16.xpose.msra.mxu0 0
    %3134 = vmatprep.subr.bf16.mxu0 0
    %3135 = vmatpush1.bf16.xpose.msra.mxu0 0
    %3136 = vmatprep.subr.bf16.mxu0 0
    %3137 = vmatpush1.bf16.xpose.msra.mxu0 0
    %3138 = vmatprep.subr.bf16.mxu0 0
    %3139 = vmatpush1.bf16.xpose.msra.mxu0 0
    %3140 = vmatprep.subr.bf16.mxu0 0
    %3141 = vmatpush1.bf16.xpose.msra.mxu0 0
    %3142 = vmatprep.subr.bf16.mxu0 0
    %3143 = vmatpush1.bf16.xpose.msra.mxu0 0
    %3144 = vmatprep.subr.bf16.mxu0 0
    %3145 = vmatpush1.bf16.xpose.msra.mxu0 0
    %3146 = vmatprep.subr.bf16.mxu0 0
    %3147 = vmatpush1.bf16.xpose.msra.mxu0 0
    %3148 = vmatprep.subr.bf16.mxu0 0
    %3149 = vmatpush1.bf16.xpose.msra.mxu0 0
    %3150 = vmatprep.subr.bf16.mxu0 0
    %3151 = vmatpush1.bf16.xpose.msra.mxu0 0
    %3152 = vmatprep.subr.bf16.mxu0 0
    %3153 = vmatpush1.bf16.xpose.msra.mxu0 0
    %3154 = vmatprep.subr.bf16.mxu0 0
    %3155 = vmatpush1.bf16.xpose.msra.mxu0 0
    %3156 = vmatprep.subr.bf16.mxu0 0
    %3157 = vmatpush1.bf16.xpose.msra.mxu0 0
    %3158 = vmatprep.mubr.bf16.mxu0 0
    %3159 = vmatmul.mubr.bf16.gmra.mrb[0].mxu0 %v3121
    %v3160 = vpop.f32.mrb[0].mxu0
    %v3161 = vadd.f32 0.0, %v3160
    %v3162 = vpop.f32.mrb[0].mxu0
    %v3163 = vpop.f32.mrb[0].mxu0
    %v3164 = vadd.f32 0.0, %v3163
    %v3165 = vpop.f32.mrb[0].mxu0
    %3166 = vdwg.mxu0
    %3167 = vrot.lane.b32.xlu0 %v2721, 112
    %v3168 = vpop.permute.xlu0 %3167
    %3169 = vrot.lane.b32.xlu0 %v2721, 80
    %v3170 = vpop.permute.xlu0 %3169
    %v3172 = vsel %vm940, %v3168, 0
    %v3175 = vsel %vm940, %v3170, 0
    %3177 = vmatprep.subr.bf16.mxu0 0
    %3178 = vmatpush1.bf16.xpose.msra.mxu0 %v3175
    %3179 = vmatprep.subr.bf16.mxu0 0
    %3180 = vmatpush1.bf16.xpose.msra.mxu0 0
    %3181 = vmatprep.subr.bf16.mxu0 0
    %3182 = vmatpush1.bf16.xpose.msra.mxu0 0
    %3183 = vmatprep.subr.bf16.mxu0 0
    %3184 = vmatpush1.bf16.xpose.msra.mxu0 0
    %3185 = vmatprep.subr.bf16.mxu0 0
    %3186 = vmatpush1.bf16.xpose.msra.mxu0 0
    %3187 = vmatprep.subr.bf16.mxu0 0
    %3188 = vmatpush1.bf16.xpose.msra.mxu0 0
    %3189 = vmatprep.subr.bf16.mxu0 0
    %3190 = vmatpush1.bf16.xpose.msra.mxu0 0
    %3191 = vmatprep.subr.bf16.mxu0 0
    %3192 = vmatpush1.bf16.xpose.msra.mxu0 0
    %3193 = vmatprep.subr.bf16.mxu0 0
    %3194 = vmatpush1.bf16.xpose.msra.mxu0 0
    %3195 = vmatprep.subr.bf16.mxu0 0
    %3196 = vmatpush1.bf16.xpose.msra.mxu0 0
    %3197 = vmatprep.subr.bf16.mxu0 0
    %3198 = vmatpush1.bf16.xpose.msra.mxu0 0
    %3199 = vmatprep.subr.bf16.mxu0 0
    %3200 = vmatpush1.bf16.xpose.msra.mxu0 0
    %3201 = vmatprep.subr.bf16.mxu0 0
    %3202 = vmatpush1.bf16.xpose.msra.mxu0 0
    %3203 = vmatprep.subr.bf16.mxu0 0
    %3204 = vmatpush1.bf16.xpose.msra.mxu0 0
    %3205 = vmatprep.subr.bf16.mxu0 0
    %3206 = vmatpush1.bf16.xpose.msra.mxu0 0
    %3207 = vmatprep.subr.bf16.mxu0 0
    %3208 = vmatpush1.bf16.xpose.msra.mxu0 0
    %3209 = vmatprep.mubr.bf16.mxu0 0
    %3210 = vmatmul.mubr.bf16.gmra.mrb[0].mxu0 %v3172
    %v3211 = vpop.f32.mrb[0].mxu0
    %v3212 = vadd.f32 0.0, %v3211
    %v3213 = vpop.f32.mrb[0].mxu0
    %v3214 = vpop.f32.mrb[0].mxu0
    %v3215 = vadd.f32 0.0, %v3214
    %v3216 = vpop.f32.mrb[0].mxu0
    %3217 = vdwg.mxu0
    %v3218 = vsel %vm940, %v3059, -inf
    %3219 = vmax.xlane.f32.xlu0 %v3218
    %v3220 = vpop.xlane.xlu0 %3219
    %v3221 = vsel %vm940, %v3062, -inf
    %3222 = vmax.xlane.f32.xlu0 %v3221
    %v3223 = vpop.xlane.xlu0 %3222
    %v3224 = vsel %vm940, %v3110, -inf
    %3225 = vmax.xlane.f32.xlu0 %v3224
    %v3226 = vpop.xlane.xlu0 %3225
    %v3227 = vsel %vm940, %v3113, -inf
    %3228 = vmax.xlane.f32.xlu0 %v3227
    %v3229 = vpop.xlane.xlu0 %3228
    %v3230 = vsel %vm940, %v3161, -inf
    %3231 = vmax.xlane.f32.xlu0 %v3230
    %v3232 = vpop.xlane.xlu0 %3231
    %v3233 = vsel %vm940, %v3164, -inf
    %3234 = vmax.xlane.f32.xlu0 %v3233
    %v3235 = vpop.xlane.xlu0 %3234
    %v3236 = vsel %vm940, %v3212, -inf
    %3237 = vmax.xlane.f32.xlu0 %v3236
    %v3238 = vpop.xlane.xlu0 %3237
    %v3239 = vsel %vm940, %v3215, -inf
    %3240 = vmax.xlane.f32.xlu0 %v3239
    %v3241 = vpop.xlane.xlu0 %3240
    %v3242 = vsub.f32 %v3059, %v3220
    %v3243 = vsub.f32 %v3062, %v3223
    %v3244 = vsub.f32 %v3110, %v3226
    %v3245 = vsub.f32 %v3113, %v3229
    %v3246 = vsub.f32 %v3161, %v3232
    %v3247 = vsub.f32 %v3164, %v3235
    %v3248 = vsub.f32 %v3212, %v3238
    %v3249 = vsub.f32 %v3215, %v3241
    %v3250 = vmul.f32 %v3242, 1.442695
    %v3251 = vpow.pop %v3250
    %v3252 = vmul.f32 %v3243, 1.442695
    %v3253 = vpow.pop %v3252
    %v3254 = vmul.f32 %v3244, 1.442695
    %v3255 = vpow.pop %v3254
    %v3256 = vmul.f32 %v3245, 1.442695
    %v3257 = vpow.pop %v3256
    %v3258 = vmul.f32 %v3246, 1.442695
    %v3259 = vpow.pop %v3258
    %v3260 = vmul.f32 %v3247, 1.442695
    %v3261 = vpow.pop %v3260
    %v3262 = vmul.f32 %v3248, 1.442695
    %v3263 = vpow.pop %v3262
    %v3264 = vmul.f32 %v3249, 1.442695
    %v3265 = vpow.pop %v3264
    %v3266 = vsel %vm940, %v3251, 0.0
    %3267 = vadd.xlane.f32.xlu0 %v3266
    %v3268 = vpop.xlane.xlu0 %3267
    %v3269 = vsel %vm940, %v3253, 0.0
    %3270 = vadd.xlane.f32.xlu0 %v3269
    %v3271 = vpop.xlane.xlu0 %3270
    %v3272 = vsel %vm940, %v3255, 0.0
    %3273 = vadd.xlane.f32.xlu0 %v3272
    %v3274 = vpop.xlane.xlu0 %3273
    %v3275 = vsel %vm940, %v3257, 0.0
    %3276 = vadd.xlane.f32.xlu0 %v3275
    %v3277 = vpop.xlane.xlu0 %3276
    %v3278 = vsel %vm940, %v3259, 0.0
    %3279 = vadd.xlane.f32.xlu0 %v3278
    %v3280 = vpop.xlane.xlu0 %3279
    %v3281 = vsel %vm940, %v3261, 0.0
    %3282 = vadd.xlane.f32.xlu0 %v3281
    %v3283 = vpop.xlane.xlu0 %3282
    %v3284 = vsel %vm940, %v3263, 0.0
    %3285 = vadd.xlane.f32.xlu0 %v3284
    %v3286 = vpop.xlane.xlu0 %3285
    %v3287 = vsel %vm940, %v3265, 0.0
    %3288 = vadd.xlane.f32.xlu0 %v3287
    %v3289 = vpop.xlane.xlu0 %3288
    %v3290 = vrcp.pop %v3268
    %v3291 = vrcp.pop %v3271
    %v3292 = vrcp.pop %v3274
    %v3293 = vrcp.pop %v3277
    %v3294 = vrcp.pop %v3280
    %v3295 = vrcp.pop %v3283
    %v3296 = vrcp.pop %v3286
    %v3297 = vrcp.pop %v3289
    %v3298 = vmul.f32 %v3251, %v3290
    %v3299 = vmul.f32 %v3253, %v3291
    %v3300 = vmul.f32 %v3255, %v3292
    %v3301 = vmul.f32 %v3257, %v3293
    %v3302 = vmul.f32 %v3259, %v3294
    %v3303 = vmul.f32 %v3261, %v3295
    %v3304 = vmul.f32 %v3263, %v3296
    %v3305 = vmul.f32 %v3265, %v3297
    %v3306 = vpack.c.bf16 %v3299, %v3298
    %v3307 = vpack.c.bf16 %v3301, %v3300
    %v3308 = vpack.c.bf16 %v3303, %v3302
    %v3309 = vpack.c.bf16 %v3305, %v3304
    %3310 = vrot.lane.b32.xlu0 %v2718, 32
    %v3311 = vpop.permute.xlu0 %3310
    %v3314 = vsel %vm940, %v3306, 0
    %3316 = vmatprep.subr.bf16.mxu0 0
    %3317 = vmatpush1.bf16.msra.mxu0 %v3311
    %3318 = vmatprep.subr.bf16.mxu0 0
    %3319 = vmatpush1.bf16.msra.mxu0 0
    %3320 = vmatprep.subr.bf16.mxu0 0
    %3321 = vmatpush1.bf16.msra.mxu0 0
    %3322 = vmatprep.subr.bf16.mxu0 0
    %3323 = vmatpush1.bf16.msra.mxu0 0
    %3324 = vmatprep.subr.bf16.mxu0 0
    %3325 = vmatpush1.bf16.msra.mxu0 0
    %3326 = vmatprep.subr.bf16.mxu0 0
    %3327 = vmatpush1.bf16.msra.mxu0 0
    %3328 = vmatprep.subr.bf16.mxu0 0
    %3329 = vmatpush1.bf16.msra.mxu0 0
    %3330 = vmatprep.subr.bf16.mxu0 0
    %3331 = vmatpush1.bf16.msra.mxu0 0
    %3332 = vmatprep.subr.bf16.mxu0 0
    %3333 = vmatpush1.bf16.msra.mxu0 0
    %3334 = vmatprep.subr.bf16.mxu0 0
    %3335 = vmatpush1.bf16.msra.mxu0 0
    %3336 = vmatprep.subr.bf16.mxu0 0
    %3337 = vmatpush1.bf16.msra.mxu0 0
    %3338 = vmatprep.subr.bf16.mxu0 0
    %3339 = vmatpush1.bf16.msra.mxu0 0
    %3340 = vmatprep.subr.bf16.mxu0 0
    %3341 = vmatpush1.bf16.msra.mxu0 0
    %3342 = vmatprep.subr.bf16.mxu0 0
    %3343 = vmatpush1.bf16.msra.mxu0 0
    %3344 = vmatprep.subr.bf16.mxu0 0
    %3345 = vmatpush1.bf16.msra.mxu0 0
    %3346 = vmatprep.subr.bf16.mxu0 0
    %3347 = vmatpush1.bf16.msra.mxu0 0
    %3348 = vmatprep.mubr.bf16.mxu0 0
    %3349 = vmatmul.mubr.bf16.gmra.mrb[0].mxu0 %v3314
    %v3350 = vpop.f32.mrb[0].mxu0
    %v3351 = vadd.f32 0.0, %v3350
    %v3352 = vpop.f32.mrb[0].mxu0
    %v3353 = vpop.f32.mrb[0].mxu0
    %v3354 = vadd.f32 0.0, %v3353
    %v3355 = vpop.f32.mrb[0].mxu0
    %3356 = vdwg.mxu0
    %3357 = vrot.lane.b32.xlu0 %v2719, 32
    %v3358 = vpop.permute.xlu0 %3357
    %v3361 = vsel %vm940, %v3307, 0
    %3363 = vmatprep.subr.bf16.mxu0 0
    %3364 = vmatpush1.bf16.msra.mxu0 %v3358
    %3365 = vmatprep.subr.bf16.mxu0 0
    %3366 = vmatpush1.bf16.msra.mxu0 0
    %3367 = vmatprep.subr.bf16.mxu0 0
    %3368 = vmatpush1.bf16.msra.mxu0 0
    %3369 = vmatprep.subr.bf16.mxu0 0
    %3370 = vmatpush1.bf16.msra.mxu0 0
    %3371 = vmatprep.subr.bf16.mxu0 0
    %3372 = vmatpush1.bf16.msra.mxu0 0
    %3373 = vmatprep.subr.bf16.mxu0 0
    %3374 = vmatpush1.bf16.msra.mxu0 0
    %3375 = vmatprep.subr.bf16.mxu0 0
    %3376 = vmatpush1.bf16.msra.mxu0 0
    %3377 = vmatprep.subr.bf16.mxu0 0
    %3378 = vmatpush1.bf16.msra.mxu0 0
    %3379 = vmatprep.subr.bf16.mxu0 0
    %3380 = vmatpush1.bf16.msra.mxu0 0
    %3381 = vmatprep.subr.bf16.mxu0 0
    %3382 = vmatpush1.bf16.msra.mxu0 0
    %3383 = vmatprep.subr.bf16.mxu0 0
    %3384 = vmatpush1.bf16.msra.mxu0 0
    %3385 = vmatprep.subr.bf16.mxu0 0
    %3386 = vmatpush1.bf16.msra.mxu0 0
    %3387 = vmatprep.subr.bf16.mxu0 0
    %3388 = vmatpush1.bf16.msra.mxu0 0
    %3389 = vmatprep.subr.bf16.mxu0 0
    %3390 = vmatpush1.bf16.msra.mxu0 0
    %3391 = vmatprep.subr.bf16.mxu0 0
    %3392 = vmatpush1.bf16.msra.mxu0 0
    %3393 = vmatprep.subr.bf16.mxu0 0
    %3394 = vmatpush1.bf16.msra.mxu0 0
    %3395 = vmatprep.mubr.bf16.mxu0 0
    %3396 = vmatmul.mubr.bf16.gmra.mrb[0].mxu0 %v3361
    %v3397 = vpop.f32.mrb[0].mxu0
    %v3398 = vadd.f32 0.0, %v3397
    %v3399 = vpop.f32.mrb[0].mxu0
    %v3400 = vpop.f32.mrb[0].mxu0
    %v3401 = vadd.f32 0.0, %v3400
    %v3402 = vpop.f32.mrb[0].mxu0
    %3403 = vdwg.mxu0
    %3404 = vrot.lane.b32.xlu0 %v2720, 32
    %v3405 = vpop.permute.xlu0 %3404
    %v3408 = vsel %vm940, %v3308, 0
    %3410 = vmatprep.subr.bf16.mxu0 0
    %3411 = vmatpush1.bf16.msra.mxu0 %v3405
    %3412 = vmatprep.subr.bf16.mxu0 0
    %3413 = vmatpush1.bf16.msra.mxu0 0
    %3414 = vmatprep.subr.bf16.mxu0 0
    %3415 = vmatpush1.bf16.msra.mxu0 0
    %3416 = vmatprep.subr.bf16.mxu0 0
    %3417 = vmatpush1.bf16.msra.mxu0 0
    %3418 = vmatprep.subr.bf16.mxu0 0
    %3419 = vmatpush1.bf16.msra.mxu0 0
    %3420 = vmatprep.subr.bf16.mxu0 0
    %3421 = vmatpush1.bf16.msra.mxu0 0
    %3422 = vmatprep.subr.bf16.mxu0 0
    %3423 = vmatpush1.bf16.msra.mxu0 0
    %3424 = vmatprep.subr.bf16.mxu0 0
    %3425 = vmatpush1.bf16.msra.mxu0 0
    %3426 = vmatprep.subr.bf16.mxu0 0
    %3427 = vmatpush1.bf16.msra.mxu0 0
    %3428 = vmatprep.subr.bf16.mxu0 0
    %3429 = vmatpush1.bf16.msra.mxu0 0
    %3430 = vmatprep.subr.bf16.mxu0 0
    %3431 = vmatpush1.bf16.msra.mxu0 0
    %3432 = vmatprep.subr.bf16.mxu0 0
    %3433 = vmatpush1.bf16.msra.mxu0 0
    %3434 = vmatprep.subr.bf16.mxu0 0
    %3435 = vmatpush1.bf16.msra.mxu0 0
    %3436 = vmatprep.subr.bf16.mxu0 0
    %3437 = vmatpush1.bf16.msra.mxu0 0
    %3438 = vmatprep.subr.bf16.mxu0 0
    %3439 = vmatpush1.bf16.msra.mxu0 0
    %3440 = vmatprep.subr.bf16.mxu0 0
    %3441 = vmatpush1.bf16.msra.mxu0 0
    %3442 = vmatprep.mubr.bf16.mxu0 0
    %3443 = vmatmul.mubr.bf16.gmra.mrb[0].mxu0 %v3408
    %v3444 = vpop.f32.mrb[0].mxu0
    %v3445 = vadd.f32 0.0, %v3444
    %v3446 = vpop.f32.mrb[0].mxu0
    %v3447 = vpop.f32.mrb[0].mxu0
    %v3448 = vadd.f32 0.0, %v3447
    %v3449 = vpop.f32.mrb[0].mxu0
    %3450 = vdwg.mxu0
    %3451 = vrot.lane.b32.xlu0 %v2721, 32
    %v3452 = vpop.permute.xlu0 %3451
    %v3455 = vsel %vm940, %v3309, 0
    %3457 = vmatprep.subr.bf16.mxu0 0
    %3458 = vmatpush1.bf16.msra.mxu0 %v3452
    %3459 = vmatprep.subr.bf16.mxu0 0
    %3460 = vmatpush1.bf16.msra.mxu0 0
    %3461 = vmatprep.subr.bf16.mxu0 0
    %3462 = vmatpush1.bf16.msra.mxu0 0
    %3463 = vmatprep.subr.bf16.mxu0 0
    %3464 = vmatpush1.bf16.msra.mxu0 0
    %3465 = vmatprep.subr.bf16.mxu0 0
    %3466 = vmatpush1.bf16.msra.mxu0 0
    %3467 = vmatprep.subr.bf16.mxu0 0
    %3468 = vmatpush1.bf16.msra.mxu0 0
    %3469 = vmatprep.subr.bf16.mxu0 0
    %3470 = vmatpush1.bf16.msra.mxu0 0
    %3471 = vmatprep.subr.bf16.mxu0 0
    %3472 = vmatpush1.bf16.msra.mxu0 0
    %3473 = vmatprep.subr.bf16.mxu0 0
    %3474 = vmatpush1.bf16.msra.mxu0 0
    %3475 = vmatprep.subr.bf16.mxu0 0
    %3476 = vmatpush1.bf16.msra.mxu0 0
    %3477 = vmatprep.subr.bf16.mxu0 0
    %3478 = vmatpush1.bf16.msra.mxu0 0
    %3479 = vmatprep.subr.bf16.mxu0 0
    %3480 = vmatpush1.bf16.msra.mxu0 0
    %3481 = vmatprep.subr.bf16.mxu0 0
    %3482 = vmatpush1.bf16.msra.mxu0 0
    %3483 = vmatprep.subr.bf16.mxu0 0
    %3484 = vmatpush1.bf16.msra.mxu0 0
    %3485 = vmatprep.subr.bf16.mxu0 0
    %3486 = vmatpush1.bf16.msra.mxu0 0
    %3487 = vmatprep.subr.bf16.mxu0 0
    %3488 = vmatpush1.bf16.msra.mxu0 0
    %3489 = vmatprep.mubr.bf16.mxu0 0
    %3490 = vmatmul.mubr.bf16.gmra.mrb[0].mxu0 %v3455
    %v3491 = vpop.f32.mrb[0].mxu0
    %v3492 = vadd.f32 0.0, %v3491
    %v3493 = vpop.f32.mrb[0].mxu0
    %v3494 = vpop.f32.mrb[0].mxu0
    %v3495 = vadd.f32 0.0, %v3494
    %v3496 = vpop.f32.mrb[0].mxu0
    %3497 = vdwg.mxu0
    %3498 = vrot.lane.b32.xlu0 %v2718, 64
    %v3499 = vpop.permute.xlu0 %3498
    %v3502 = vsel %vm940, %v3010, 0
    %3504 = vmatprep.subr.bf16.mxu0 0
    %3505 = vmatpush1.bf16.msra.mxu0 %v3499
    %3506 = vmatprep.subr.bf16.mxu0 0
    %3507 = vmatpush1.bf16.msra.mxu0 0
    %3508 = vmatprep.subr.bf16.mxu0 0
    %3509 = vmatpush1.bf16.msra.mxu0 0
    %3510 = vmatprep.subr.bf16.mxu0 0
    %3511 = vmatpush1.bf16.msra.mxu0 0
    %3512 = vmatprep.subr.bf16.mxu0 0
    %3513 = vmatpush1.bf16.msra.mxu0 0
    %3514 = vmatprep.subr.bf16.mxu0 0
    %3515 = vmatpush1.bf16.msra.mxu0 0
    %3516 = vmatprep.subr.bf16.mxu0 0
    %3517 = vmatpush1.bf16.msra.mxu0 0
    %3518 = vmatprep.subr.bf16.mxu0 0
    %3519 = vmatpush1.bf16.msra.mxu0 0
    %3520 = vmatprep.subr.bf16.mxu0 0
    %3521 = vmatpush1.bf16.msra.mxu0 0
    %3522 = vmatprep.subr.bf16.mxu0 0
    %3523 = vmatpush1.bf16.msra.mxu0 0
    %3524 = vmatprep.subr.bf16.mxu0 0
    %3525 = vmatpush1.bf16.msra.mxu0 0
    %3526 = vmatprep.subr.bf16.mxu0 0
    %3527 = vmatpush1.bf16.msra.mxu0 0
    %3528 = vmatprep.subr.bf16.mxu0 0
    %3529 = vmatpush1.bf16.msra.mxu0 0
    %3530 = vmatprep.subr.bf16.mxu0 0
    %3531 = vmatpush1.bf16.msra.mxu0 0
    %3532 = vmatprep.subr.bf16.mxu0 0
    %3533 = vmatpush1.bf16.msra.mxu0 0
    %3534 = vmatprep.subr.bf16.mxu0 0
    %3535 = vmatpush1.bf16.msra.mxu0 0
    %3536 = vmatprep.mubr.bf16.mxu0 0
    %3537 = vmatmul.mubr.bf16.gmra.mrb[0].mxu0 %v3502
    %v3538 = vpop.f32.mrb[0].mxu0
    %v3539 = vadd.f32 %v3351, %v3538
    %v3540 = vpop.f32.mrb[0].mxu0
    %v3541 = vpop.f32.mrb[0].mxu0
    %v3542 = vadd.f32 %v3354, %v3541
    %v3543 = vpop.f32.mrb[0].mxu0
    %3544 = vdwg.mxu0
    %3545 = vrot.lane.b32.xlu0 %v2719, 64
    %v3546 = vpop.permute.xlu0 %3545
    %v3549 = vsel %vm940, %v3011, 0
    %3551 = vmatprep.subr.bf16.mxu0 0
    %3552 = vmatpush1.bf16.msra.mxu0 %v3546
    %3553 = vmatprep.subr.bf16.mxu0 0
    %3554 = vmatpush1.bf16.msra.mxu0 0
    %3555 = vmatprep.subr.bf16.mxu0 0
    %3556 = vmatpush1.bf16.msra.mxu0 0
    %3557 = vmatprep.subr.bf16.mxu0 0
    %3558 = vmatpush1.bf16.msra.mxu0 0
    %3559 = vmatprep.subr.bf16.mxu0 0
    %3560 = vmatpush1.bf16.msra.mxu0 0
    %3561 = vmatprep.subr.bf16.mxu0 0
    %3562 = vmatpush1.bf16.msra.mxu0 0
    %3563 = vmatprep.subr.bf16.mxu0 0
    %3564 = vmatpush1.bf16.msra.mxu0 0
    %3565 = vmatprep.subr.bf16.mxu0 0
    %3566 = vmatpush1.bf16.msra.mxu0 0
    %3567 = vmatprep.subr.bf16.mxu0 0
    %3568 = vmatpush1.bf16.msra.mxu0 0
    %3569 = vmatprep.subr.bf16.mxu0 0
    %3570 = vmatpush1.bf16.msra.mxu0 0
    %3571 = vmatprep.subr.bf16.mxu0 0
    %3572 = vmatpush1.bf16.msra.mxu0 0
    %3573 = vmatprep.subr.bf16.mxu0 0
    %3574 = vmatpush1.bf16.msra.mxu0 0
    %3575 = vmatprep.subr.bf16.mxu0 0
    %3576 = vmatpush1.bf16.msra.mxu0 0
    %3577 = vmatprep.subr.bf16.mxu0 0
    %3578 = vmatpush1.bf16.msra.mxu0 0
    %3579 = vmatprep.subr.bf16.mxu0 0
    %3580 = vmatpush1.bf16.msra.mxu0 0
    %3581 = vmatprep.subr.bf16.mxu0 0
    %3582 = vmatpush1.bf16.msra.mxu0 0
    %3583 = vmatprep.mubr.bf16.mxu0 0
    %3584 = vmatmul.mubr.bf16.gmra.mrb[0].mxu0 %v3549
    %v3585 = vpop.f32.mrb[0].mxu0
    %v3586 = vadd.f32 %v3398, %v3585
    %v3587 = vpop.f32.mrb[0].mxu0
    %v3588 = vpop.f32.mrb[0].mxu0
    %v3589 = vadd.f32 %v3401, %v3588
    %v3590 = vpop.f32.mrb[0].mxu0
    %3591 = vdwg.mxu0
    %3592 = vrot.lane.b32.xlu0 %v2720, 64
    %v3593 = vpop.permute.xlu0 %3592
    %v3596 = vsel %vm940, %v3012, 0
    %3598 = vmatprep.subr.bf16.mxu0 0
    %3599 = vmatpush1.bf16.msra.mxu0 %v3593
    %3600 = vmatprep.subr.bf16.mxu0 0
    %3601 = vmatpush1.bf16.msra.mxu0 0
    %3602 = vmatprep.subr.bf16.mxu0 0
    %3603 = vmatpush1.bf16.msra.mxu0 0
    %3604 = vmatprep.subr.bf16.mxu0 0
    %3605 = vmatpush1.bf16.msra.mxu0 0
    %3606 = vmatprep.subr.bf16.mxu0 0
    %3607 = vmatpush1.bf16.msra.mxu0 0
    %3608 = vmatprep.subr.bf16.mxu0 0
    %3609 = vmatpush1.bf16.msra.mxu0 0
    %3610 = vmatprep.subr.bf16.mxu0 0
    %3611 = vmatpush1.bf16.msra.mxu0 0
    %3612 = vmatprep.subr.bf16.mxu0 0
    %3613 = vmatpush1.bf16.msra.mxu0 0
    %3614 = vmatprep.subr.bf16.mxu0 0
    %3615 = vmatpush1.bf16.msra.mxu0 0
    %3616 = vmatprep.subr.bf16.mxu0 0
    %3617 = vmatpush1.bf16.msra.mxu0 0
    %3618 = vmatprep.subr.bf16.mxu0 0
    %3619 = vmatpush1.bf16.msra.mxu0 0
    %3620 = vmatprep.subr.bf16.mxu0 0
    %3621 = vmatpush1.bf16.msra.mxu0 0
    %3622 = vmatprep.subr.bf16.mxu0 0
    %3623 = vmatpush1.bf16.msra.mxu0 0
    %3624 = vmatprep.subr.bf16.mxu0 0
    %3625 = vmatpush1.bf16.msra.mxu0 0
    %3626 = vmatprep.subr.bf16.mxu0 0
    %3627 = vmatpush1.bf16.msra.mxu0 0
    %3628 = vmatprep.subr.bf16.mxu0 0
    %3629 = vmatpush1.bf16.msra.mxu0 0
    %3630 = vmatprep.mubr.bf16.mxu0 0
    %3631 = vmatmul.mubr.bf16.gmra.mrb[0].mxu0 %v3596
    %v3632 = vpop.f32.mrb[0].mxu0
    %v3633 = vadd.f32 %v3445, %v3632
    %v3634 = vpop.f32.mrb[0].mxu0
    %v3635 = vpop.f32.mrb[0].mxu0
    %v3636 = vadd.f32 %v3448, %v3635
    %v3637 = vpop.f32.mrb[0].mxu0
    %3638 = vdwg.mxu0
    %3639 = vrot.lane.b32.xlu0 %v2721, 64
    %v3640 = vpop.permute.xlu0 %3639
    %v3643 = vsel %vm940, %v3013, 0
    %3645 = vmatprep.subr.bf16.mxu0 0
    %3646 = vmatpush1.bf16.msra.mxu0 %v3640
    %3647 = vmatprep.subr.bf16.mxu0 0
    %3648 = vmatpush1.bf16.msra.mxu0 0
    %3649 = vmatprep.subr.bf16.mxu0 0
    %3650 = vmatpush1.bf16.msra.mxu0 0
    %3651 = vmatprep.subr.bf16.mxu0 0
    %3652 = vmatpush1.bf16.msra.mxu0 0
    %3653 = vmatprep.subr.bf16.mxu0 0
    %3654 = vmatpush1.bf16.msra.mxu0 0
    %3655 = vmatprep.subr.bf16.mxu0 0
    %3656 = vmatpush1.bf16.msra.mxu0 0
    %3657 = vmatprep.subr.bf16.mxu0 0
    %3658 = vmatpush1.bf16.msra.mxu0 0
    %3659 = vmatprep.subr.bf16.mxu0 0
    %3660 = vmatpush1.bf16.msra.mxu0 0
    %3661 = vmatprep.subr.bf16.mxu0 0
    %3662 = vmatpush1.bf16.msra.mxu0 0
    %3663 = vmatprep.subr.bf16.mxu0 0
    %3664 = vmatpush1.bf16.msra.mxu0 0
    %3665 = vmatprep.subr.bf16.mxu0 0
    %3666 = vmatpush1.bf16.msra.mxu0 0
    %3667 = vmatprep.subr.bf16.mxu0 0
    %3668 = vmatpush1.bf16.msra.mxu0 0
    %3669 = vmatprep.subr.bf16.mxu0 0
    %3670 = vmatpush1.bf16.msra.mxu0 0
    %3671 = vmatprep.subr.bf16.mxu0 0
    %3672 = vmatpush1.bf16.msra.mxu0 0
    %3673 = vmatprep.subr.bf16.mxu0 0
    %3674 = vmatpush1.bf16.msra.mxu0 0
    %3675 = vmatprep.subr.bf16.mxu0 0
    %3676 = vmatpush1.bf16.msra.mxu0 0
    %3677 = vmatprep.mubr.bf16.mxu0 0
    %3678 = vmatmul.mubr.bf16.gmra.mrb[0].mxu0 %v3643
    %v3679 = vpop.f32.mrb[0].mxu0
    %v3680 = vadd.f32 %v3492, %v3679
    %v3681 = vpop.f32.mrb[0].mxu0
    %v3682 = vpop.f32.mrb[0].mxu0
    %v3683 = vadd.f32 %v3495, %v3682
    %v3684 = vpop.f32.mrb[0].mxu0
    %3685 = vdwg.mxu0
    %v3686 = vld [vmem:[%s10 + $0x1] sm:$0x1]
    %v3687 = vlaneseq
    %v3688 = vshrl.u32 %v3687, 7
    %v3689 = vsub.s32 0, %v3688
    %v3690 = vrot.slane %v3686, %v3689
    %v3691 = vadd.f32 %v2482, %v3690
    %v3692 = vadd.f32 %v2483, %v3690
    %v3693 = vadd.f32 %v2484, %v3690
    %v3694 = vadd.f32 %v2485, %v3690
    %v3695 = vadd.f32 %v2486, %v3690
    %v3696 = vadd.f32 %v2487, %v3690
    %v3697 = vadd.f32 %v2488, %v3690
    %v3698 = vadd.f32 %v2489, %v3690
    %v3699 = vadd.f32 %v3691, %v3539
    %v3700 = vadd.f32 %v3692, %v3542
    %v3701 = vadd.f32 %v3693, %v3586
    %v3702 = vadd.f32 %v3694, %v3589
    %v3703 = vadd.f32 %v3695, %v3633
    %v3704 = vadd.f32 %v3696, %v3636
    %v3705 = vadd.f32 %v3697, %v3680
    %v3706 = vadd.f32 %v3698, %v3683
    %v3707 = vld [vmem:[%s11 + $0x1] sm:$0x1]
    %v3708 = vld [vmem:[%s12 + $0x1] sm:$0x1]
    %v3709 = vsel %vm260, %v3699, 0.0
    %3710 = vadd.xlane.f32.xlu0 %v3709
    %v3711 = vpop.xlane.xlu0 %3710
    %v3712 = vsel %vm260, %v3700, 0.0
    %3713 = vadd.xlane.f32.xlu0 %v3712
    %v3714 = vpop.xlane.xlu0 %3713
    %v3715 = vsel %vm260, %v3701, 0.0
    %3716 = vadd.xlane.f32.xlu0 %v3715
    %v3717 = vpop.xlane.xlu0 %3716
    %v3718 = vsel %vm260, %v3702, 0.0
    %3719 = vadd.xlane.f32.xlu0 %v3718
    %v3720 = vpop.xlane.xlu0 %3719
    %v3721 = vsel %vm260, %v3703, 0.0
    %3722 = vadd.xlane.f32.xlu0 %v3721
    %v3723 = vpop.xlane.xlu0 %3722
    %v3724 = vsel %vm260, %v3704, 0.0
    %3725 = vadd.xlane.f32.xlu0 %v3724
    %v3726 = vpop.xlane.xlu0 %3725
    %v3727 = vsel %vm260, %v3705, 0.0
    %3728 = vadd.xlane.f32.xlu0 %v3727
    %v3729 = vpop.xlane.xlu0 %3728
    %v3730 = vsel %vm260, %v3706, 0.0
    %3731 = vadd.xlane.f32.xlu0 %v3730
    %v3732 = vpop.xlane.xlu0 %3731
    %v3733 = vmul.f32 %v3711, %v285
    %v3734 = vmul.f32 %v3714, %v285
    %v3735 = vmul.f32 %v3717, %v285
    %v3736 = vmul.f32 %v3720, %v285
    %v3737 = vmul.f32 %v3723, %v285
    %v3738 = vmul.f32 %v3726, %v285
    %v3739 = vmul.f32 %v3729, %v285
    %v3740 = vmul.f32 %v3732, %v285
    %v3741 = vsub.f32 %v3699, %v3733
    %v3742 = vsub.f32 %v3700, %v3734
    %v3743 = vsub.f32 %v3701, %v3735
    %v3744 = vsub.f32 %v3702, %v3736
    %v3745 = vsub.f32 %v3703, %v3737
    %v3746 = vsub.f32 %v3704, %v3738
    %v3747 = vsub.f32 %v3705, %v3739
    %v3748 = vsub.f32 %v3706, %v3740
    %v3749 = vmul.f32 %v3741, %v3741
    %v3750 = vmul.f32 %v3742, %v3742
    %v3751 = vmul.f32 %v3743, %v3743
    %v3752 = vmul.f32 %v3744, %v3744
    %v3753 = vmul.f32 %v3745, %v3745
    %v3754 = vmul.f32 %v3746, %v3746
    %v3755 = vmul.f32 %v3747, %v3747
    %v3756 = vmul.f32 %v3748, %v3748
    %v3757 = vsel %vm260, %v3749, 0.0
    %3758 = vadd.xlane.f32.xlu0 %v3757
    %v3759 = vpop.xlane.xlu0 %3758
    %v3760 = vsel %vm260, %v3750, 0.0
    %3761 = vadd.xlane.f32.xlu0 %v3760
    %v3762 = vpop.xlane.xlu0 %3761
    %v3763 = vsel %vm260, %v3751, 0.0
    %3764 = vadd.xlane.f32.xlu0 %v3763
    %v3765 = vpop.xlane.xlu0 %3764
    %v3766 = vsel %vm260, %v3752, 0.0
    %3767 = vadd.xlane.f32.xlu0 %v3766
    %v3768 = vpop.xlane.xlu0 %3767
    %v3769 = vsel %vm260, %v3753, 0.0
    %3770 = vadd.xlane.f32.xlu0 %v3769
    %v3771 = vpop.xlane.xlu0 %3770
    %v3772 = vsel %vm260, %v3754, 0.0
    %3773 = vadd.xlane.f32.xlu0 %v3772
    %v3774 = vpop.xlane.xlu0 %3773
    %v3775 = vsel %vm260, %v3755, 0.0
    %3776 = vadd.xlane.f32.xlu0 %v3775
    %v3777 = vpop.xlane.xlu0 %3776
    %v3778 = vsel %vm260, %v3756, 0.0
    %3779 = vadd.xlane.f32.xlu0 %v3778
    %v3780 = vpop.xlane.xlu0 %3779
    %v3781 = vmul.f32 %v3759, %v285
    %v3782 = vmul.f32 %v3762, %v285
    %v3783 = vmul.f32 %v3765, %v285
    %v3784 = vmul.f32 %v3768, %v285
    %v3785 = vmul.f32 %v3771, %v285
    %v3786 = vmul.f32 %v3774, %v285
    %v3787 = vmul.f32 %v3777, %v285
    %v3788 = vmul.f32 %v3780, %v285
    %v3789 = vadd.f32 %v3781, 1e-05
    %v3790 = vadd.f32 %v3782, 1e-05
    %v3791 = vadd.f32 %v3783, 1e-05
    %v3792 = vadd.f32 %v3784, 1e-05
    %v3793 = vadd.f32 %v3785, 1e-05
    %v3794 = vadd.f32 %v3786, 1e-05
    %v3795 = vadd.f32 %v3787, 1e-05
    %v3796 = vadd.f32 %v3788, 1e-05
    %v3797 = vrsqrt.pop %v3789
    %v3798 = vrsqrt.pop %v3790
    %v3799 = vrsqrt.pop %v3791
    %v3800 = vrsqrt.pop %v3792
    %v3801 = vrsqrt.pop %v3793
    %v3802 = vrsqrt.pop %v3794
    %v3803 = vrsqrt.pop %v3795
    %v3804 = vrsqrt.pop %v3796
    %v3805 = vmul.f32 %v3741, %v3797
    %v3806 = vmul.f32 %v3742, %v3798
    %v3807 = vmul.f32 %v3743, %v3799
    %v3808 = vmul.f32 %v3744, %v3800
    %v3809 = vmul.f32 %v3745, %v3801
    %v3810 = vmul.f32 %v3746, %v3802
    %v3811 = vmul.f32 %v3747, %v3803
    %v3812 = vmul.f32 %v3748, %v3804
    %v3813 = vlaneseq
    %v3814 = vshrl.u32 %v3813, 7
    %v3815 = vsub.s32 0, %v3814
    %v3816 = vrot.slane %v3707, %v3815
    %v3817 = vmul.f32 %v3805, %v3816
    %v3818 = vmul.f32 %v3806, %v3816
    %v3819 = vmul.f32 %v3807, %v3816
    %v3820 = vmul.f32 %v3808, %v3816
    %v3821 = vmul.f32 %v3809, %v3816
    %v3822 = vmul.f32 %v3810, %v3816
    %v3823 = vmul.f32 %v3811, %v3816
    %v3824 = vmul.f32 %v3812, %v3816
    %v3825 = vlaneseq
    %v3826 = vshrl.u32 %v3825, 7
    %v3827 = vsub.s32 0, %v3826
    %v3828 = vrot.slane %v3708, %v3827
    %v3829 = vadd.f32 %v3817, %v3828
    %v3830 = vadd.f32 %v3818, %v3828
    %v3831 = vadd.f32 %v3819, %v3828
    %v3832 = vadd.f32 %v3820, %v3828
    %v3833 = vadd.f32 %v3821, %v3828
    %v3834 = vadd.f32 %v3822, %v3828
    %v3835 = vadd.f32 %v3823, %v3828
    %v3836 = vadd.f32 %v3824, %v3828
    %s3837 = scalar_lea.vmem %s13, 16
    %v3838 = vld [vmem:[%s3837] sm:$0xf]
    %v3839 = vld [vmem:[%s3837 + $0x4] sm:$0xf]
    %v3840 = vld [vmem:[%s3837 + $0x8] sm:$0xf]
    %v3841 = vld [vmem:[%s3837 + $0xc] sm:$0xf]
    %v3842 = vld [vmem:[%s14 + $0x1] sm:$0x1]
    %v3843 = vpack.c.bf16 %v3830, %v3829
    %v3844 = vpack.c.bf16 %v3832, %v3831
    %v3845 = vpack.c.bf16 %v3834, %v3833
    %v3846 = vpack.c.bf16 %v3836, %v3835
    %v3847 = vlaneseq
    %v3848 = vshrl.u32 %v3847, 7
    %v3849 = vsub.s32 0, %v3848
    %v3850 = vrot.slane %v3842, %v3849
    %v3855 = vunpack.c.l.b16 %v3838
    %v3856 = vunpack.c.l.b16 %v3839
    %v3857 = vunpack.c.l.b16 %v3840
    %v3858 = vunpack.c.l.b16 %v3841
    %v3859 = vpack.c.b16 %v3856, %v3855
    %v3860 = vpack.c.b16 %v3858, %v3857
    %v3864 = vsel %vm260, %v3843, 0
    %v3867 = vsel %vm260, %v3844, 0
    %v3870 = vsel %vm260, %v3845, 0
    %v3873 = vsel %vm260, %v3846, 0
    %3875 = vmatprep.subr.bf16.mxu0 0
    %3876 = vmatpush1.bf16.msra.mxu0 %v3859
    %3877 = vmatprep.subr.bf16.mxu0 0
    %3878 = vmatpush1.bf16.msra.mxu0 %v3860
    %3879 = vmatprep.subr.bf16.mxu0 0
    %3880 = vmatpush1.bf16.msra.mxu0 0
    %3881 = vmatprep.subr.bf16.mxu0 0
    %3882 = vmatpush1.bf16.msra.mxu0 0
    %3883 = vmatprep.subr.bf16.mxu0 0
    %3884 = vmatpush1.bf16.msra.mxu0 0
    %3885 = vmatprep.subr.bf16.mxu0 0
    %3886 = vmatpush1.bf16.msra.mxu0 0
    %3887 = vmatprep.subr.bf16.mxu0 0
    %3888 = vmatpush1.bf16.msra.mxu0 0
    %3889 = vmatprep.subr.bf16.mxu0 0
    %3890 = vmatpush1.bf16.msra.mxu0 0
    %3891 = vmatprep.subr.bf16.mxu0 0
    %3892 = vmatpush1.bf16.msra.mxu0 0
    %3893 = vmatprep.subr.bf16.mxu0 0
    %3894 = vmatpush1.bf16.msra.mxu0 0
    %3895 = vmatprep.subr.bf16.mxu0 0
    %3896 = vmatpush1.bf16.msra.mxu0 0
    %3897 = vmatprep.subr.bf16.mxu0 0
    %3898 = vmatpush1.bf16.msra.mxu0 0
    %3899 = vmatprep.subr.bf16.mxu0 0
    %3900 = vmatpush1.bf16.msra.mxu0 0
    %3901 = vmatprep.subr.bf16.mxu0 0
    %3902 = vmatpush1.bf16.msra.mxu0 0
    %3903 = vmatprep.subr.bf16.mxu0 0
    %3904 = vmatpush1.bf16.msra.mxu0 0
    %3905 = vmatprep.subr.bf16.mxu0 0
    %3906 = vmatpush1.bf16.msra.mxu0 0
    %3907 = vmatprep.mubr.bf16.mxu0 0
    %3908 = vmatmul.mubr.bf16.gmra.mrb[0].mxu0 %v3864
    %v3909 = vpop.f32.mrb[0].mxu0
    %v3910 = vadd.f32 %v3850, %v3909
    %v3911 = vpop.f32.mrb[0].mxu0
    %v3912 = vpop.f32.mrb[0].mxu0
    %v3913 = vadd.f32 %v3850, %v3912
    %v3914 = vpop.f32.mrb[0].mxu0
    %3915 = vmatprep.mubr.bf16.mxu0 0
    %3916 = vmatmul.mubr.bf16.gmra.mrb[0].mxu0 %v3867
    %v3917 = vpop.f32.mrb[0].mxu0
    %v3918 = vadd.f32 %v3850, %v3917
    %v3919 = vpop.f32.mrb[0].mxu0
    %v3920 = vpop.f32.mrb[0].mxu0
    %v3921 = vadd.f32 %v3850, %v3920
    %v3922 = vpop.f32.mrb[0].mxu0
    %3923 = vmatprep.mubr.bf16.mxu0 0
    %3924 = vmatmul.mubr.bf16.gmra.mrb[0].mxu0 %v3870
    %v3925 = vpop.f32.mrb[0].mxu0
    %v3926 = vadd.f32 %v3850, %v3925
    %v3927 = vpop.f32.mrb[0].mxu0
    %v3928 = vpop.f32.mrb[0].mxu0
    %v3929 = vadd.f32 %v3850, %v3928
    %v3930 = vpop.f32.mrb[0].mxu0
    %3931 = vmatprep.mubr.bf16.mxu0 0
    %3932 = vmatmul.mubr.bf16.gmra.mrb[0].mxu0 %v3873
    %v3933 = vpop.f32.mrb[0].mxu0
    %v3934 = vadd.f32 %v3850, %v3933
    %v3935 = vpop.f32.mrb[0].mxu0
    %v3936 = vpop.f32.mrb[0].mxu0
    %v3937 = vadd.f32 %v3850, %v3936
    %v3938 = vpop.f32.mrb[0].mxu0
    %3939 = vdwg.mxu0
    %v3940 = vmul.f32 %v3910, 0.70710677
    %v3941 = vmul.f32 %v3913, 0.70710677
    %v3942 = vmul.f32 %v3918, 0.70710677
    %v3943 = vmul.f32 %v3921, 0.70710677
    %v3944 = vmul.f32 %v3926, 0.70710677
    %v3945 = vmul.f32 %v3929, 0.70710677
    %v3946 = vmul.f32 %v3934, 0.70710677
    %v3947 = vmul.f32 %v3937, 0.70710677
    %vm3948 = vcmp.lt.f32.partialorder %v3940, 0.0
    %vm3949 = vcmp.lt.f32.partialorder %v3941, 0.0
    %vm3950 = vcmp.lt.f32.partialorder %v3942, 0.0
    %vm3951 = vcmp.lt.f32.partialorder %v3943, 0.0
    %vm3952 = vcmp.lt.f32.partialorder %v3944, 0.0
    %vm3953 = vcmp.lt.f32.partialorder %v3945, 0.0
    %vm3954 = vcmp.lt.f32.partialorder %v3946, 0.0
    %vm3955 = vcmp.lt.f32.partialorder %v3947, 0.0
    %v3956 = vsel %vm3948, -1.0, 1.0
    %v3957 = vsel %vm3949, -1.0, 1.0
    %v3958 = vsel %vm3950, -1.0, 1.0
    %v3959 = vsel %vm3951, -1.0, 1.0
    %v3960 = vsel %vm3952, -1.0, 1.0
    %v3961 = vsel %vm3953, -1.0, 1.0
    %v3962 = vsel %vm3954, -1.0, 1.0
    %v3963 = vsel %vm3955, -1.0, 1.0
    %v3964 = vand.u32 2147483647, %v3940
    %v3965 = vand.u32 2147483647, %v3941
    %v3966 = vand.u32 2147483647, %v3942
    %v3967 = vand.u32 2147483647, %v3943
    %v3968 = vand.u32 2147483647, %v3944
    %v3969 = vand.u32 2147483647, %v3945
    %v3970 = vand.u32 2147483647, %v3946
    %v3971 = vand.u32 2147483647, %v3947
    %v3972 = vmul.f32 %v3964, 0.3275911
    %v3973 = vmul.f32 %v3965, 0.3275911
    %v3974 = vmul.f32 %v3966, 0.3275911
    %v3975 = vmul.f32 %v3967, 0.3275911
    %v3976 = vmul.f32 %v3968, 0.3275911
    %v3977 = vmul.f32 %v3969, 0.3275911
    %v3978 = vmul.f32 %v3970, 0.3275911
    %v3979 = vmul.f32 %v3971, 0.3275911
    %v3980 = vadd.f32 %v3972, 1.0
    %v3981 = vadd.f32 %v3973, 1.0
    %v3982 = vadd.f32 %v3974, 1.0
    %v3983 = vadd.f32 %v3975, 1.0
    %v3984 = vadd.f32 %v3976, 1.0
    %v3985 = vadd.f32 %v3977, 1.0
    %v3986 = vadd.f32 %v3978, 1.0
    %v3987 = vadd.f32 %v3979, 1.0
    %v3988 = vrcp.pop %v3980
    %v3989 = vrcp.pop %v3981
    %v3990 = vrcp.pop %v3982
    %v3991 = vrcp.pop %v3983
    %v3992 = vrcp.pop %v3984
    %v3993 = vrcp.pop %v3985
    %v3994 = vrcp.pop %v3986
    %v3995 = vrcp.pop %v3987
    %v3996 = vmul.f32 %v3988, 1.0614054
    %v3997 = vmul.f32 %v3989, 1.0614054
    %v3998 = vmul.f32 %v3990, 1.0614054
    %v3999 = vmul.f32 %v3991, 1.0614054
    %v4000 = vmul.f32 %v3992, 1.0614054
    %v4001 = vmul.f32 %v3993, 1.0614054
    %v4002 = vmul.f32 %v3994, 1.0614054
    %v4003 = vmul.f32 %v3995, 1.0614054
    %v4004 = vadd.f32 %v3996, -1.4531521
    %v4005 = vadd.f32 %v3997, -1.4531521
    %v4006 = vadd.f32 %v3998, -1.4531521
    %v4007 = vadd.f32 %v3999, -1.4531521
    %v4008 = vadd.f32 %v4000, -1.4531521
    %v4009 = vadd.f32 %v4001, -1.4531521
    %v4010 = vadd.f32 %v4002, -1.4531521
    %v4011 = vadd.f32 %v4003, -1.4531521
    %v4012 = vmul.f32 %v4004, %v3988
    %v4013 = vmul.f32 %v4005, %v3989
    %v4014 = vmul.f32 %v4006, %v3990
    %v4015 = vmul.f32 %v4007, %v3991
    %v4016 = vmul.f32 %v4008, %v3992
    %v4017 = vmul.f32 %v4009, %v3993
    %v4018 = vmul.f32 %v4010, %v3994
    %v4019 = vmul.f32 %v4011, %v3995
    %v4020 = vadd.f32 %v4012, 1.4214138
    %v4021 = vadd.f32 %v4013, 1.4214138
    %v4022 = vadd.f32 %v4014, 1.4214138
    %v4023 = vadd.f32 %v4015, 1.4214138
    %v4024 = vadd.f32 %v4016, 1.4214138
    %v4025 = vadd.f32 %v4017, 1.4214138
    %v4026 = vadd.f32 %v4018, 1.4214138
    %v4027 = vadd.f32 %v4019, 1.4214138
    %v4028 = vmul.f32 %v4020, %v3988
    %v4029 = vmul.f32 %v4021, %v3989
    %v4030 = vmul.f32 %v4022, %v3990
    %v4031 = vmul.f32 %v4023, %v3991
    %v4032 = vmul.f32 %v4024, %v3992
    %v4033 = vmul.f32 %v4025, %v3993
    %v4034 = vmul.f32 %v4026, %v3994
    %v4035 = vmul.f32 %v4027, %v3995
    %v4036 = vadd.f32 %v4028, -0.28449672
    %v4037 = vadd.f32 %v4029, -0.28449672
    %v4038 = vadd.f32 %v4030, -0.28449672
    %v4039 = vadd.f32 %v4031, -0.28449672
    %v4040 = vadd.f32 %v4032, -0.28449672
    %v4041 = vadd.f32 %v4033, -0.28449672
    %v4042 = vadd.f32 %v4034, -0.28449672
    %v4043 = vadd.f32 %v4035, -0.28449672
    %v4044 = vmul.f32 %v4036, %v3988
    %v4045 = vmul.f32 %v4037, %v3989
    %v4046 = vmul.f32 %v4038, %v3990
    %v4047 = vmul.f32 %v4039, %v3991
    %v4048 = vmul.f32 %v4040, %v3992
    %v4049 = vmul.f32 %v4041, %v3993
    %v4050 = vmul.f32 %v4042, %v3994
    %v4051 = vmul.f32 %v4043, %v3995
    %v4052 = vadd.f32 %v4044, 0.2548296
    %v4053 = vadd.f32 %v4045, 0.2548296
    %v4054 = vadd.f32 %v4046, 0.2548296
    %v4055 = vadd.f32 %v4047, 0.2548296
    %v4056 = vadd.f32 %v4048, 0.2548296
    %v4057 = vadd.f32 %v4049, 0.2548296
    %v4058 = vadd.f32 %v4050, 0.2548296
    %v4059 = vadd.f32 %v4051, 0.2548296
    %v4060 = vmul.f32 %v4052, %v3988
    %v4061 = vmul.f32 %v4053, %v3989
    %v4062 = vmul.f32 %v4054, %v3990
    %v4063 = vmul.f32 %v4055, %v3991
    %v4064 = vmul.f32 %v4056, %v3992
    %v4065 = vmul.f32 %v4057, %v3993
    %v4066 = vmul.f32 %v4058, %v3994
    %v4067 = vmul.f32 %v4059, %v3995
    %v4068 = vsub.f32 0.0, %v3964
    %v4069 = vsub.f32 0.0, %v3965
    %v4070 = vsub.f32 0.0, %v3966
    %v4071 = vsub.f32 0.0, %v3967
    %v4072 = vsub.f32 0.0, %v3968
    %v4073 = vsub.f32 0.0, %v3969
    %v4074 = vsub.f32 0.0, %v3970
    %v4075 = vsub.f32 0.0, %v3971
    %v4076 = vmul.f32 %v4068, %v3964
    %v4077 = vmul.f32 %v4069, %v3965
    %v4078 = vmul.f32 %v4070, %v3966
    %v4079 = vmul.f32 %v4071, %v3967
    %v4080 = vmul.f32 %v4072, %v3968
    %v4081 = vmul.f32 %v4073, %v3969
    %v4082 = vmul.f32 %v4074, %v3970
    %v4083 = vmul.f32 %v4075, %v3971
    %v4084 = vmul.f32 %v4076, 1.442695
    %v4085 = vpow.pop %v4084
    %v4086 = vmul.f32 %v4077, 1.442695
    %v4087 = vpow.pop %v4086
    %v4088 = vmul.f32 %v4078, 1.442695
    %v4089 = vpow.pop %v4088
    %v4090 = vmul.f32 %v4079, 1.442695
    %v4091 = vpow.pop %v4090
    %v4092 = vmul.f32 %v4080, 1.442695
    %v4093 = vpow.pop %v4092
    %v4094 = vmul.f32 %v4081, 1.442695
    %v4095 = vpow.pop %v4094
    %v4096 = vmul.f32 %v4082, 1.442695
    %v4097 = vpow.pop %v4096
    %v4098 = vmul.f32 %v4083, 1.442695
    %v4099 = vpow.pop %v4098
    %v4100 = vmul.f32 %v4060, %v4085
    %v4101 = vmul.f32 %v4061, %v4087
    %v4102 = vmul.f32 %v4062, %v4089
    %v4103 = vmul.f32 %v4063, %v4091
    %v4104 = vmul.f32 %v4064, %v4093
    %v4105 = vmul.f32 %v4065, %v4095
    %v4106 = vmul.f32 %v4066, %v4097
    %v4107 = vmul.f32 %v4067, %v4099
    %v4108 = vsub.f32 1.0, %v4100
    %v4109 = vsub.f32 1.0, %v4101
    %v4110 = vsub.f32 1.0, %v4102
    %v4111 = vsub.f32 1.0, %v4103
    %v4112 = vsub.f32 1.0, %v4104
    %v4113 = vsub.f32 1.0, %v4105
    %v4114 = vsub.f32 1.0, %v4106
    %v4115 = vsub.f32 1.0, %v4107
    %v4116 = vmul.f32 %v3956, %v4108
    %v4117 = vmul.f32 %v3957, %v4109
    %v4118 = vmul.f32 %v3958, %v4110
    %v4119 = vmul.f32 %v3959, %v4111
    %v4120 = vmul.f32 %v3960, %v4112
    %v4121 = vmul.f32 %v3961, %v4113
    %v4122 = vmul.f32 %v3962, %v4114
    %v4123 = vmul.f32 %v3963, %v4115
    %v4124 = vmul.f32 %v3910, 0.5
    %v4125 = vmul.f32 %v3913, 0.5
    %v4126 = vmul.f32 %v3918, 0.5
    %v4127 = vmul.f32 %v3921, 0.5
    %v4128 = vmul.f32 %v3926, 0.5
    %v4129 = vmul.f32 %v3929, 0.5
    %v4130 = vmul.f32 %v3934, 0.5
    %v4131 = vmul.f32 %v3937, 0.5
    %v4132 = vadd.f32 %v4116, 1.0
    %v4133 = vadd.f32 %v4117, 1.0
    %v4134 = vadd.f32 %v4118, 1.0
    %v4135 = vadd.f32 %v4119, 1.0
    %v4136 = vadd.f32 %v4120, 1.0
    %v4137 = vadd.f32 %v4121, 1.0
    %v4138 = vadd.f32 %v4122, 1.0
    %v4139 = vadd.f32 %v4123, 1.0
    %v4140 = vmul.f32 %v4124, %v4132
    %v4141 = vmul.f32 %v4125, %v4133
    %v4142 = vmul.f32 %v4126, %v4134
    %v4143 = vmul.f32 %v4127, %v4135
    %v4144 = vmul.f32 %v4128, %v4136
    %v4145 = vmul.f32 %v4129, %v4137
    %v4146 = vmul.f32 %v4130, %v4138
    %v4147 = vmul.f32 %v4131, %v4139
    %s4148 = scalar_lea.vmem %s15, 32
    %v4149 = vld [vmem:[%s4148] sm:$0xf]
    %v4150 = vld [vmem:[%s4148 + $0x4] sm:$0xf]
    %v4151 = vld [vmem:[%s4148 + $0x8] sm:$0xf]
    %v4152 = vld [vmem:[%s4148 + $0xc] sm:$0xf]
    %v4153 = vld [vmem:[%s4148 + $0x10] sm:$0xf]
    %v4154 = vld [vmem:[%s4148 + $0x14] sm:$0xf]
    %v4155 = vld [vmem:[%s4148 + $0x18] sm:$0xf]
    %v4156 = vld [vmem:[%s4148 + $0x1c] sm:$0xf]
    %v4157 = vld [vmem:[%s16 + $0x1] sm:$0x1]
    %v4158 = vpack.c.bf16 %v4141, %v4140
    %v4159 = vpack.c.bf16 %v4143, %v4142
    %v4160 = vpack.c.bf16 %v4145, %v4144
    %v4161 = vpack.c.bf16 %v4147, %v4146
    %v4162 = vlaneseq
    %v4163 = vshrl.u32 %v4162, 7
    %v4164 = vsub.s32 0, %v4163
    %v4165 = vrot.slane %v4157, %v4164
    %v4174 = vunpack.c.l.b16 %v4149
    %v4175 = vunpack.c.l.b16 %v4150
    %v4176 = vunpack.c.l.b16 %v4151
    %v4177 = vunpack.c.l.b16 %v4152
    %v4178 = vunpack.c.l.b16 %v4153
    %v4179 = vunpack.c.l.b16 %v4154
    %v4180 = vunpack.c.l.b16 %v4155
    %v4181 = vunpack.c.l.b16 %v4156
    %v4182 = vpack.c.b16 %v4175, %v4174
    %v4183 = vpack.c.b16 %v4177, %v4176
    %v4184 = vpack.c.b16 %v4179, %v4178
    %v4185 = vpack.c.b16 %v4181, %v4180
    %v4191 = vsel %vm2404, %v4158, 0
    %v4194 = vsel %vm2404, %v4159, 0
    %v4197 = vsel %vm2404, %v4160, 0
    %v4200 = vsel %vm2404, %v4161, 0
    %4202 = vmatprep.subr.bf16.mxu0 0
    %4203 = vmatpush1.bf16.msra.mxu0 %v4182
    %4204 = vmatprep.subr.bf16.mxu0 0
    %4205 = vmatpush1.bf16.msra.mxu0 %v4183
    %4206 = vmatprep.subr.bf16.mxu0 0
    %4207 = vmatpush1.bf16.msra.mxu0 %v4184
    %4208 = vmatprep.subr.bf16.mxu0 0
    %4209 = vmatpush1.bf16.msra.mxu0 %v4185
    %4210 = vmatprep.subr.bf16.mxu0 0
    %4211 = vmatpush1.bf16.msra.mxu0 0
    %4212 = vmatprep.subr.bf16.mxu0 0
    %4213 = vmatpush1.bf16.msra.mxu0 0
    %4214 = vmatprep.subr.bf16.mxu0 0
    %4215 = vmatpush1.bf16.msra.mxu0 0
    %4216 = vmatprep.subr.bf16.mxu0 0
    %4217 = vmatpush1.bf16.msra.mxu0 0
    %4218 = vmatprep.subr.bf16.mxu0 0
    %4219 = vmatpush1.bf16.msra.mxu0 0
    %4220 = vmatprep.subr.bf16.mxu0 0
    %4221 = vmatpush1.bf16.msra.mxu0 0
    %4222 = vmatprep.subr.bf16.mxu0 0
    %4223 = vmatpush1.bf16.msra.mxu0 0
    %4224 = vmatprep.subr.bf16.mxu0 0
    %4225 = vmatpush1.bf16.msra.mxu0 0
    %4226 = vmatprep.subr.bf16.mxu0 0
    %4227 = vmatpush1.bf16.msra.mxu0 0
    %4228 = vmatprep.subr.bf16.mxu0 0
    %4229 = vmatpush1.bf16.msra.mxu0 0
    %4230 = vmatprep.subr.bf16.mxu0 0
    %4231 = vmatpush1.bf16.msra.mxu0 0
    %4232 = vmatprep.subr.bf16.mxu0 0
    %4233 = vmatpush1.bf16.msra.mxu0 0
    %4234 = vmatprep.mubr.bf16.mxu0 0
    %4235 = vmatmul.mubr.bf16.gmra.mrb[0].mxu0 %v4191
    %v4236 = vpop.f32.mrb[0].mxu0
    %v4237 = vadd.f32 %v4165, %v4236
    %v4238 = vpop.f32.mrb[0].mxu0
    %v4239 = vpop.f32.mrb[0].mxu0
    %v4240 = vadd.f32 %v4165, %v4239
    %v4241 = vpop.f32.mrb[0].mxu0
    %4242 = vmatprep.mubr.bf16.mxu0 0
    %4243 = vmatmul.mubr.bf16.gmra.mrb[0].mxu0 %v4194
    %v4244 = vpop.f32.mrb[0].mxu0
    %v4245 = vadd.f32 %v4165, %v4244
    %v4246 = vpop.f32.mrb[0].mxu0
    %v4247 = vpop.f32.mrb[0].mxu0
    %v4248 = vadd.f32 %v4165, %v4247
    %v4249 = vpop.f32.mrb[0].mxu0
    %4250 = vmatprep.mubr.bf16.mxu0 0
    %4251 = vmatmul.mubr.bf16.gmra.mrb[0].mxu0 %v4197
    %v4252 = vpop.f32.mrb[0].mxu0
    %v4253 = vadd.f32 %v4165, %v4252
    %v4254 = vpop.f32.mrb[0].mxu0
    %v4255 = vpop.f32.mrb[0].mxu0
    %v4256 = vadd.f32 %v4165, %v4255
    %v4257 = vpop.f32.mrb[0].mxu0
    %4258 = vmatprep.mubr.bf16.mxu0 0
    %4259 = vmatmul.mubr.bf16.gmra.mrb[0].mxu0 %v4200
    %v4260 = vpop.f32.mrb[0].mxu0
    %v4261 = vadd.f32 %v4165, %v4260
    %v4262 = vpop.f32.mrb[0].mxu0
    %v4263 = vpop.f32.mrb[0].mxu0
    %v4264 = vadd.f32 %v4165, %v4263
    %v4265 = vpop.f32.mrb[0].mxu0
    %4266 = vdwg.mxu0
    %v4267 = vadd.f32 %v4237, %v3699
    %v4268 = vadd.f32 %v4240, %v3700
    %v4269 = vadd.f32 %v4245, %v3701
    %v4270 = vadd.f32 %v4248, %v3702
    %v4271 = vadd.f32 %v4253, %v3703
    %v4272 = vadd.f32 %v4256, %v3704
    %v4273 = vadd.f32 %v4261, %v3705
    %v4274 = vadd.f32 %v4264, %v3706
    %v4275 = vld [vmem:[%s7 + $0x2] sm:$0x1]
    %v4276 = vld [vmem:[%s8 + $0x2] sm:$0x1]
    %v4277 = vsel %vm260, %v4267, 0.0
    %4278 = vadd.xlane.f32.xlu0 %v4277
    %v4279 = vpop.xlane.xlu0 %4278
    %v4280 = vsel %vm260, %v4268, 0.0
    %4281 = vadd.xlane.f32.xlu0 %v4280
    %v4282 = vpop.xlane.xlu0 %4281
    %v4283 = vsel %vm260, %v4269, 0.0
    %4284 = vadd.xlane.f32.xlu0 %v4283
    %v4285 = vpop.xlane.xlu0 %4284
    %v4286 = vsel %vm260, %v4270, 0.0
    %4287 = vadd.xlane.f32.xlu0 %v4286
    %v4288 = vpop.xlane.xlu0 %4287
    %v4289 = vsel %vm260, %v4271, 0.0
    %4290 = vadd.xlane.f32.xlu0 %v4289
    %v4291 = vpop.xlane.xlu0 %4290
    %v4292 = vsel %vm260, %v4272, 0.0
    %4293 = vadd.xlane.f32.xlu0 %v4292
    %v4294 = vpop.xlane.xlu0 %4293
    %v4295 = vsel %vm260, %v4273, 0.0
    %4296 = vadd.xlane.f32.xlu0 %v4295
    %v4297 = vpop.xlane.xlu0 %4296
    %v4298 = vsel %vm260, %v4274, 0.0
    %4299 = vadd.xlane.f32.xlu0 %v4298
    %v4300 = vpop.xlane.xlu0 %4299
    %v4301 = vmul.f32 %v4279, %v285
    %v4302 = vmul.f32 %v4282, %v285
    %v4303 = vmul.f32 %v4285, %v285
    %v4304 = vmul.f32 %v4288, %v285
    %v4305 = vmul.f32 %v4291, %v285
    %v4306 = vmul.f32 %v4294, %v285
    %v4307 = vmul.f32 %v4297, %v285
    %v4308 = vmul.f32 %v4300, %v285
    %v4309 = vsub.f32 %v4267, %v4301
    %v4310 = vsub.f32 %v4268, %v4302
    %v4311 = vsub.f32 %v4269, %v4303
    %v4312 = vsub.f32 %v4270, %v4304
    %v4313 = vsub.f32 %v4271, %v4305
    %v4314 = vsub.f32 %v4272, %v4306
    %v4315 = vsub.f32 %v4273, %v4307
    %v4316 = vsub.f32 %v4274, %v4308
    %v4317 = vmul.f32 %v4309, %v4309
    %v4318 = vmul.f32 %v4310, %v4310
    %v4319 = vmul.f32 %v4311, %v4311
    %v4320 = vmul.f32 %v4312, %v4312
    %v4321 = vmul.f32 %v4313, %v4313
    %v4322 = vmul.f32 %v4314, %v4314
    %v4323 = vmul.f32 %v4315, %v4315
    %v4324 = vmul.f32 %v4316, %v4316
    %v4325 = vsel %vm260, %v4317, 0.0
    %4326 = vadd.xlane.f32.xlu0 %v4325
    %v4327 = vpop.xlane.xlu0 %4326
    %v4328 = vsel %vm260, %v4318, 0.0
    %4329 = vadd.xlane.f32.xlu0 %v4328
    %v4330 = vpop.xlane.xlu0 %4329
    %v4331 = vsel %vm260, %v4319, 0.0
    %4332 = vadd.xlane.f32.xlu0 %v4331
    %v4333 = vpop.xlane.xlu0 %4332
    %v4334 = vsel %vm260, %v4320, 0.0
    %4335 = vadd.xlane.f32.xlu0 %v4334
    %v4336 = vpop.xlane.xlu0 %4335
    %v4337 = vsel %vm260, %v4321, 0.0
    %4338 = vadd.xlane.f32.xlu0 %v4337
    %v4339 = vpop.xlane.xlu0 %4338
    %v4340 = vsel %vm260, %v4322, 0.0
    %4341 = vadd.xlane.f32.xlu0 %v4340
    %v4342 = vpop.xlane.xlu0 %4341
    %v4343 = vsel %vm260, %v4323, 0.0
    %4344 = vadd.xlane.f32.xlu0 %v4343
    %v4345 = vpop.xlane.xlu0 %4344
    %v4346 = vsel %vm260, %v4324, 0.0
    %4347 = vadd.xlane.f32.xlu0 %v4346
    %v4348 = vpop.xlane.xlu0 %4347
    %v4349 = vmul.f32 %v4327, %v285
    %v4350 = vmul.f32 %v4330, %v285
    %v4351 = vmul.f32 %v4333, %v285
    %v4352 = vmul.f32 %v4336, %v285
    %v4353 = vmul.f32 %v4339, %v285
    %v4354 = vmul.f32 %v4342, %v285
    %v4355 = vmul.f32 %v4345, %v285
    %v4356 = vmul.f32 %v4348, %v285
    %v4357 = vadd.f32 %v4349, 1e-05
    %v4358 = vadd.f32 %v4350, 1e-05
    %v4359 = vadd.f32 %v4351, 1e-05
    %v4360 = vadd.f32 %v4352, 1e-05
    %v4361 = vadd.f32 %v4353, 1e-05
    %v4362 = vadd.f32 %v4354, 1e-05
    %v4363 = vadd.f32 %v4355, 1e-05
    %v4364 = vadd.f32 %v4356, 1e-05
    %v4365 = vrsqrt.pop %v4357
    %v4366 = vrsqrt.pop %v4358
    %v4367 = vrsqrt.pop %v4359
    %v4368 = vrsqrt.pop %v4360
    %v4369 = vrsqrt.pop %v4361
    %v4370 = vrsqrt.pop %v4362
    %v4371 = vrsqrt.pop %v4363
    %v4372 = vrsqrt.pop %v4364
    %v4373 = vmul.f32 %v4309, %v4365
    %v4374 = vmul.f32 %v4310, %v4366
    %v4375 = vmul.f32 %v4311, %v4367
    %v4376 = vmul.f32 %v4312, %v4368
    %v4377 = vmul.f32 %v4313, %v4369
    %v4378 = vmul.f32 %v4314, %v4370
    %v4379 = vmul.f32 %v4315, %v4371
    %v4380 = vmul.f32 %v4316, %v4372
    %v4381 = vlaneseq
    %v4382 = vshrl.u32 %v4381, 7
    %v4383 = vsub.s32 0, %v4382
    %v4384 = vrot.slane %v4275, %v4383
    %v4385 = vmul.f32 %v4373, %v4384
    %v4386 = vmul.f32 %v4374, %v4384
    %v4387 = vmul.f32 %v4375, %v4384
    %v4388 = vmul.f32 %v4376, %v4384
    %v4389 = vmul.f32 %v4377, %v4384
    %v4390 = vmul.f32 %v4378, %v4384
    %v4391 = vmul.f32 %v4379, %v4384
    %v4392 = vmul.f32 %v4380, %v4384
    %v4393 = vlaneseq
    %v4394 = vshrl.u32 %v4393, 7
    %v4395 = vsub.s32 0, %v4394
    %v4396 = vrot.slane %v4276, %v4395
    %v4397 = vadd.f32 %v4385, %v4396
    %v4398 = vadd.f32 %v4386, %v4396
    %v4399 = vadd.f32 %v4387, %v4396
    %v4400 = vadd.f32 %v4388, %v4396
    %v4401 = vadd.f32 %v4389, %v4396
    %v4402 = vadd.f32 %v4390, %v4396
    %v4403 = vadd.f32 %v4391, %v4396
    %v4404 = vadd.f32 %v4392, %v4396
    %s4405 = scalar_lea.vmem %s9, 32
    %v4406 = vld [vmem:[%s4405] sm:$0xf]
    %v4407 = vld [vmem:[%s4405 + $0x4] sm:$0xf]
    %v4408 = vld [vmem:[%s4405 + $0x8] sm:$0xf]
    %v4409 = vld [vmem:[%s4405 + $0xc] sm:$0xf]
    %v4410 = vpack.c.bf16 %v4398, %v4397
    %v4411 = vpack.c.bf16 %v4400, %v4399
    %v4412 = vpack.c.bf16 %v4402, %v4401
    %v4413 = vpack.c.bf16 %v4404, %v4403
    %v4418 = vunpack.c.l.b16 %v4406
    %v4419 = vunpack.c.l.b16 %v4407
    %v4420 = vunpack.c.l.b16 %v4408
    %v4421 = vunpack.c.l.b16 %v4409
    %v4422 = vpack.c.b16 %v4419, %v4418
    %v4423 = vpack.c.b16 %v4421, %v4420
    %v4427 = vsel %vm260, %v4410, 0
    %v4430 = vsel %vm260, %v4411, 0
    %v4433 = vsel %vm260, %v4412, 0
    %v4436 = vsel %vm260, %v4413, 0
    %4438 = vmatprep.subr.bf16.mxu0 0
    %4439 = vmatpush1.bf16.msra.mxu0 %v4422
    %4440 = vmatprep.subr.bf16.mxu0 0
    %4441 = vmatpush1.bf16.msra.mxu0 %v4423
    %4442 = vmatprep.subr.bf16.mxu0 0
    %4443 = vmatpush1.bf16.msra.mxu0 0
    %4444 = vmatprep.subr.bf16.mxu0 0
    %4445 = vmatpush1.bf16.msra.mxu0 0
    %4446 = vmatprep.subr.bf16.mxu0 0
    %4447 = vmatpush1.bf16.msra.mxu0 0
    %4448 = vmatprep.subr.bf16.mxu0 0
    %4449 = vmatpush1.bf16.msra.mxu0 0
    %4450 = vmatprep.subr.bf16.mxu0 0
    %4451 = vmatpush1.bf16.msra.mxu0 0
    %4452 = vmatprep.subr.bf16.mxu0 0
    %4453 = vmatpush1.bf16.msra.mxu0 0
    %4454 = vmatprep.subr.bf16.mxu0 0
    %4455 = vmatpush1.bf16.msra.mxu0 0
    %4456 = vmatprep.subr.bf16.mxu0 0
    %4457 = vmatpush1.bf16.msra.mxu0 0
    %4458 = vmatprep.subr.bf16.mxu0 0
    %4459 = vmatpush1.bf16.msra.mxu0 0
    %4460 = vmatprep.subr.bf16.mxu0 0
    %4461 = vmatpush1.bf16.msra.mxu0 0
    %4462 = vmatprep.subr.bf16.mxu0 0
    %4463 = vmatpush1.bf16.msra.mxu0 0
    %4464 = vmatprep.subr.bf16.mxu0 0
    %4465 = vmatpush1.bf16.msra.mxu0 0
    %4466 = vmatprep.subr.bf16.mxu0 0
    %4467 = vmatpush1.bf16.msra.mxu0 0
    %4468 = vmatprep.subr.bf16.mxu0 0
    %4469 = vmatpush1.bf16.msra.mxu0 0
    %4470 = vmatprep.mubr.bf16.mxu0 0
    %4471 = vmatmul.mubr.bf16.gmra.mrb[0].mxu0 %v4427
    %v4472 = vpop.f32.mrb[0].mxu0
    %v4473 = vadd.f32 0.0, %v4472
    %v4474 = vpop.f32.mrb[0].mxu0
    %v4475 = vpop.f32.mrb[0].mxu0
    %v4476 = vadd.f32 0.0, %v4475
    %v4477 = vpop.f32.mrb[0].mxu0
    %4478 = vmatprep.mubr.bf16.mxu0 0
    %4479 = vmatmul.mubr.bf16.gmra.mrb[0].mxu0 %v4430
    %v4480 = vpop.f32.mrb[0].mxu0
    %v4481 = vadd.f32 0.0, %v4480
    %v4482 = vpop.f32.mrb[0].mxu0
    %v4483 = vpop.f32.mrb[0].mxu0
    %v4484 = vadd.f32 0.0, %v4483
    %v4485 = vpop.f32.mrb[0].mxu0
    %4486 = vmatprep.mubr.bf16.mxu0 0
    %4487 = vmatmul.mubr.bf16.gmra.mrb[0].mxu0 %v4433
    %v4488 = vpop.f32.mrb[0].mxu0
    %v4489 = vadd.f32 0.0, %v4488
    %v4490 = vpop.f32.mrb[0].mxu0
    %v4491 = vpop.f32.mrb[0].mxu0
    %v4492 = vadd.f32 0.0, %v4491
    %v4493 = vpop.f32.mrb[0].mxu0
    %4494 = vmatprep.mubr.bf16.mxu0 0
    %4495 = vmatmul.mubr.bf16.gmra.mrb[0].mxu0 %v4436
    %v4496 = vpop.f32.mrb[0].mxu0
    %v4497 = vadd.f32 0.0, %v4496
    %v4498 = vpop.f32.mrb[0].mxu0
    %v4499 = vpop.f32.mrb[0].mxu0
    %v4500 = vadd.f32 0.0, %v4499
    %v4501 = vpop.f32.mrb[0].mxu0
    %4502 = vdwg.mxu0
    %v4503 = vpack.c.bf16 %v4476, %v4473
    %v4504 = vpack.c.bf16 %v4484, %v4481
    %v4505 = vpack.c.bf16 %v4492, %v4489
    %v4506 = vpack.c.bf16 %v4500, %v4497
    %4508 = vrot.lane.b32.xlu0 %v4503, 96
    %v4509 = vpop.permute.xlu0 %4508
    %v4511 = vsel %vm940, %v4503, 0
    %v4514 = vsel %vm940, %v4509, 0
    %4516 = vmatprep.subr.bf16.mxu0 0
    %4517 = vmatpush1.bf16.xpose.msra.mxu0 %v4514
    %4518 = vmatprep.subr.bf16.mxu0 0
    %4519 = vmatpush1.bf16.xpose.msra.mxu0 0
    %4520 = vmatprep.subr.bf16.mxu0 0
    %4521 = vmatpush1.bf16.xpose.msra.mxu0 0
    %4522 = vmatprep.subr.bf16.mxu0 0
    %4523 = vmatpush1.bf16.xpose.msra.mxu0 0
    %4524 = vmatprep.subr.bf16.mxu0 0
    %4525 = vmatpush1.bf16.xpose.msra.mxu0 0
    %4526 = vmatprep.subr.bf16.mxu0 0
    %4527 = vmatpush1.bf16.xpose.msra.mxu0 0
    %4528 = vmatprep.subr.bf16.mxu0 0
    %4529 = vmatpush1.bf16.xpose.msra.mxu0 0
    %4530 = vmatprep.subr.bf16.mxu0 0
    %4531 = vmatpush1.bf16.xpose.msra.mxu0 0
    %4532 = vmatprep.subr.bf16.mxu0 0
    %4533 = vmatpush1.bf16.xpose.msra.mxu0 0
    %4534 = vmatprep.subr.bf16.mxu0 0
    %4535 = vmatpush1.bf16.xpose.msra.mxu0 0
    %4536 = vmatprep.subr.bf16.mxu0 0
    %4537 = vmatpush1.bf16.xpose.msra.mxu0 0
    %4538 = vmatprep.subr.bf16.mxu0 0
    %4539 = vmatpush1.bf16.xpose.msra.mxu0 0
    %4540 = vmatprep.subr.bf16.mxu0 0
    %4541 = vmatpush1.bf16.xpose.msra.mxu0 0
    %4542 = vmatprep.subr.bf16.mxu0 0
    %4543 = vmatpush1.bf16.xpose.msra.mxu0 0
    %4544 = vmatprep.subr.bf16.mxu0 0
    %4545 = vmatpush1.bf16.xpose.msra.mxu0 0
    %4546 = vmatprep.subr.bf16.mxu0 0
    %4547 = vmatpush1.bf16.xpose.msra.mxu0 0
    %4548 = vmatprep.mubr.bf16.mxu0 0
    %4549 = vmatmul.mubr.bf16.gmra.mrb[0].mxu0 %v4511
    %v4550 = vpop.f32.mrb[0].mxu0
    %v4551 = vadd.f32 0.0, %v4550
    %v4552 = vpop.f32.mrb[0].mxu0
    %v4553 = vpop.f32.mrb[0].mxu0
    %v4554 = vadd.f32 0.0, %v4553
    %v4555 = vpop.f32.mrb[0].mxu0
    %4556 = vdwg.mxu0
    %4558 = vrot.lane.b32.xlu0 %v4504, 96
    %v4559 = vpop.permute.xlu0 %4558
    %v4561 = vsel %vm940, %v4504, 0
    %v4564 = vsel %vm940, %v4559, 0
    %4566 = vmatprep.subr.bf16.mxu0 0
    %4567 = vmatpush1.bf16.xpose.msra.mxu0 %v4564
    %4568 = vmatprep.subr.bf16.mxu0 0
    %4569 = vmatpush1.bf16.xpose.msra.mxu0 0
    %4570 = vmatprep.subr.bf16.mxu0 0
    %4571 = vmatpush1.bf16.xpose.msra.mxu0 0
    %4572 = vmatprep.subr.bf16.mxu0 0
    %4573 = vmatpush1.bf16.xpose.msra.mxu0 0
    %4574 = vmatprep.subr.bf16.mxu0 0
    %4575 = vmatpush1.bf16.xpose.msra.mxu0 0
    %4576 = vmatprep.subr.bf16.mxu0 0
    %4577 = vmatpush1.bf16.xpose.msra.mxu0 0
    %4578 = vmatprep.subr.bf16.mxu0 0
    %4579 = vmatpush1.bf16.xpose.msra.mxu0 0
    %4580 = vmatprep.subr.bf16.mxu0 0
    %4581 = vmatpush1.bf16.xpose.msra.mxu0 0
    %4582 = vmatprep.subr.bf16.mxu0 0
    %4583 = vmatpush1.bf16.xpose.msra.mxu0 0
    %4584 = vmatprep.subr.bf16.mxu0 0
    %4585 = vmatpush1.bf16.xpose.msra.mxu0 0
    %4586 = vmatprep.subr.bf16.mxu0 0
    %4587 = vmatpush1.bf16.xpose.msra.mxu0 0
    %4588 = vmatprep.subr.bf16.mxu0 0
    %4589 = vmatpush1.bf16.xpose.msra.mxu0 0
    %4590 = vmatprep.subr.bf16.mxu0 0
    %4591 = vmatpush1.bf16.xpose.msra.mxu0 0
    %4592 = vmatprep.subr.bf16.mxu0 0
    %4593 = vmatpush1.bf16.xpose.msra.mxu0 0
    %4594 = vmatprep.subr.bf16.mxu0 0
    %4595 = vmatpush1.bf16.xpose.msra.mxu0 0
    %4596 = vmatprep.subr.bf16.mxu0 0
    %4597 = vmatpush1.bf16.xpose.msra.mxu0 0
    %4598 = vmatprep.mubr.bf16.mxu0 0
    %4599 = vmatmul.mubr.bf16.gmra.mrb[0].mxu0 %v4561
    %v4600 = vpop.f32.mrb[0].mxu0
    %v4601 = vadd.f32 0.0, %v4600
    %v4602 = vpop.f32.mrb[0].mxu0
    %v4603 = vpop.f32.mrb[0].mxu0
    %v4604 = vadd.f32 0.0, %v4603
    %v4605 = vpop.f32.mrb[0].mxu0
    %4606 = vdwg.mxu0
    %4608 = vrot.lane.b32.xlu0 %v4505, 96
    %v4609 = vpop.permute.xlu0 %4608
    %v4611 = vsel %vm940, %v4505, 0
    %v4614 = vsel %vm940, %v4609, 0
    %4616 = vmatprep.subr.bf16.mxu0 0
    %4617 = vmatpush1.bf16.xpose.msra.mxu0 %v4614
    %4618 = vmatprep.subr.bf16.mxu0 0
    %4619 = vmatpush1.bf16.xpose.msra.mxu0 0
    %4620 = vmatprep.subr.bf16.mxu0 0
    %4621 = vmatpush1.bf16.xpose.msra.mxu0 0
    %4622 = vmatprep.subr.bf16.mxu0 0
    %4623 = vmatpush1.bf16.xpose.msra.mxu0 0
    %4624 = vmatprep.subr.bf16.mxu0 0
    %4625 = vmatpush1.bf16.xpose.msra.mxu0 0
    %4626 = vmatprep.subr.bf16.mxu0 0
    %4627 = vmatpush1.bf16.xpose.msra.mxu0 0
    %4628 = vmatprep.subr.bf16.mxu0 0
    %4629 = vmatpush1.bf16.xpose.msra.mxu0 0
    %4630 = vmatprep.subr.bf16.mxu0 0
    %4631 = vmatpush1.bf16.xpose.msra.mxu0 0
    %4632 = vmatprep.subr.bf16.mxu0 0
    %4633 = vmatpush1.bf16.xpose.msra.mxu0 0
    %4634 = vmatprep.subr.bf16.mxu0 0
    %4635 = vmatpush1.bf16.xpose.msra.mxu0 0
    %4636 = vmatprep.subr.bf16.mxu0 0
    %4637 = vmatpush1.bf16.xpose.msra.mxu0 0
    %4638 = vmatprep.subr.bf16.mxu0 0
    %4639 = vmatpush1.bf16.xpose.msra.mxu0 0
    %4640 = vmatprep.subr.bf16.mxu0 0
    %4641 = vmatpush1.bf16.xpose.msra.mxu0 0
    %4642 = vmatprep.subr.bf16.mxu0 0
    %4643 = vmatpush1.bf16.xpose.msra.mxu0 0
    %4644 = vmatprep.subr.bf16.mxu0 0
    %4645 = vmatpush1.bf16.xpose.msra.mxu0 0
    %4646 = vmatprep.subr.bf16.mxu0 0
    %4647 = vmatpush1.bf16.xpose.msra.mxu0 0
    %4648 = vmatprep.mubr.bf16.mxu0 0
    %4649 = vmatmul.mubr.bf16.gmra.mrb[0].mxu0 %v4611
    %v4650 = vpop.f32.mrb[0].mxu0
    %v4651 = vadd.f32 0.0, %v4650
    %v4652 = vpop.f32.mrb[0].mxu0
    %v4653 = vpop.f32.mrb[0].mxu0
    %v4654 = vadd.f32 0.0, %v4653
    %v4655 = vpop.f32.mrb[0].mxu0
    %4656 = vdwg.mxu0
    %4658 = vrot.lane.b32.xlu0 %v4506, 96
    %v4659 = vpop.permute.xlu0 %4658
    %v4661 = vsel %vm940, %v4506, 0
    %v4664 = vsel %vm940, %v4659, 0
    %4666 = vmatprep.subr.bf16.mxu0 0
    %4667 = vmatpush1.bf16.xpose.msra.mxu0 %v4664
    %4668 = vmatprep.subr.bf16.mxu0 0
    %4669 = vmatpush1.bf16.xpose.msra.mxu0 0
    %4670 = vmatprep.subr.bf16.mxu0 0
    %4671 = vmatpush1.bf16.xpose.msra.mxu0 0
    %4672 = vmatprep.subr.bf16.mxu0 0
    %4673 = vmatpush1.bf16.xpose.msra.mxu0 0
    %4674 = vmatprep.subr.bf16.mxu0 0
    %4675 = vmatpush1.bf16.xpose.msra.mxu0 0
    %4676 = vmatprep.subr.bf16.mxu0 0
    %4677 = vmatpush1.bf16.xpose.msra.mxu0 0
    %4678 = vmatprep.subr.bf16.mxu0 0
    %4679 = vmatpush1.bf16.xpose.msra.mxu0 0
    %4680 = vmatprep.subr.bf16.mxu0 0
    %4681 = vmatpush1.bf16.xpose.msra.mxu0 0
    %4682 = vmatprep.subr.bf16.mxu0 0
    %4683 = vmatpush1.bf16.xpose.msra.mxu0 0
    %4684 = vmatprep.subr.bf16.mxu0 0
    %4685 = vmatpush1.bf16.xpose.msra.mxu0 0
    %4686 = vmatprep.subr.bf16.mxu0 0
    %4687 = vmatpush1.bf16.xpose.msra.mxu0 0
    %4688 = vmatprep.subr.bf16.mxu0 0
    %4689 = vmatpush1.bf16.xpose.msra.mxu0 0
    %4690 = vmatprep.subr.bf16.mxu0 0
    %4691 = vmatpush1.bf16.xpose.msra.mxu0 0
    %4692 = vmatprep.subr.bf16.mxu0 0
    %4693 = vmatpush1.bf16.xpose.msra.mxu0 0
    %4694 = vmatprep.subr.bf16.mxu0 0
    %4695 = vmatpush1.bf16.xpose.msra.mxu0 0
    %4696 = vmatprep.subr.bf16.mxu0 0
    %4697 = vmatpush1.bf16.xpose.msra.mxu0 0
    %4698 = vmatprep.mubr.bf16.mxu0 0
    %4699 = vmatmul.mubr.bf16.gmra.mrb[0].mxu0 %v4661
    %v4700 = vpop.f32.mrb[0].mxu0
    %v4701 = vadd.f32 0.0, %v4700
    %v4702 = vpop.f32.mrb[0].mxu0
    %v4703 = vpop.f32.mrb[0].mxu0
    %v4704 = vadd.f32 0.0, %v4703
    %v4705 = vpop.f32.mrb[0].mxu0
    %4706 = vdwg.mxu0
    %v4707 = vsel %vm940, %v4551, -inf
    %4708 = vmax.xlane.f32.xlu0 %v4707
    %v4709 = vpop.xlane.xlu0 %4708
    %v4710 = vsel %vm940, %v4554, -inf
    %4711 = vmax.xlane.f32.xlu0 %v4710
    %v4712 = vpop.xlane.xlu0 %4711
    %v4713 = vsel %vm940, %v4601, -inf
    %4714 = vmax.xlane.f32.xlu0 %v4713
    %v4715 = vpop.xlane.xlu0 %4714
    %v4716 = vsel %vm940, %v4604, -inf
    %4717 = vmax.xlane.f32.xlu0 %v4716
    %v4718 = vpop.xlane.xlu0 %4717
    %v4719 = vsel %vm940, %v4651, -inf
    %4720 = vmax.xlane.f32.xlu0 %v4719
    %v4721 = vpop.xlane.xlu0 %4720
    %v4722 = vsel %vm940, %v4654, -inf
    %4723 = vmax.xlane.f32.xlu0 %v4722
    %v4724 = vpop.xlane.xlu0 %4723
    %v4725 = vsel %vm940, %v4701, -inf
    %4726 = vmax.xlane.f32.xlu0 %v4725
    %v4727 = vpop.xlane.xlu0 %4726
    %v4728 = vsel %vm940, %v4704, -inf
    %4729 = vmax.xlane.f32.xlu0 %v4728
    %v4730 = vpop.xlane.xlu0 %4729
    %v4731 = vsub.f32 %v4551, %v4709
    %v4732 = vsub.f32 %v4554, %v4712
    %v4733 = vsub.f32 %v4601, %v4715
    %v4734 = vsub.f32 %v4604, %v4718
    %v4735 = vsub.f32 %v4651, %v4721
    %v4736 = vsub.f32 %v4654, %v4724
    %v4737 = vsub.f32 %v4701, %v4727
    %v4738 = vsub.f32 %v4704, %v4730
    %v4739 = vmul.f32 %v4731, 1.442695
    %v4740 = vpow.pop %v4739
    %v4741 = vmul.f32 %v4732, 1.442695
    %v4742 = vpow.pop %v4741
    %v4743 = vmul.f32 %v4733, 1.442695
    %v4744 = vpow.pop %v4743
    %v4745 = vmul.f32 %v4734, 1.442695
    %v4746 = vpow.pop %v4745
    %v4747 = vmul.f32 %v4735, 1.442695
    %v4748 = vpow.pop %v4747
    %v4749 = vmul.f32 %v4736, 1.442695
    %v4750 = vpow.pop %v4749
    %v4751 = vmul.f32 %v4737, 1.442695
    %v4752 = vpow.pop %v4751
    %v4753 = vmul.f32 %v4738, 1.442695
    %v4754 = vpow.pop %v4753
    %v4755 = vsel %vm940, %v4740, 0.0
    %4756 = vadd.xlane.f32.xlu0 %v4755
    %v4757 = vpop.xlane.xlu0 %4756
    %v4758 = vsel %vm940, %v4742, 0.0
    %4759 = vadd.xlane.f32.xlu0 %v4758
    %v4760 = vpop.xlane.xlu0 %4759
    %v4761 = vsel %vm940, %v4744, 0.0
    %4762 = vadd.xlane.f32.xlu0 %v4761
    %v4763 = vpop.xlane.xlu0 %4762
    %v4764 = vsel %vm940, %v4746, 0.0
    %4765 = vadd.xlane.f32.xlu0 %v4764
    %v4766 = vpop.xlane.xlu0 %4765
    %v4767 = vsel %vm940, %v4748, 0.0
    %4768 = vadd.xlane.f32.xlu0 %v4767
    %v4769 = vpop.xlane.xlu0 %4768
    %v4770 = vsel %vm940, %v4750, 0.0
    %4771 = vadd.xlane.f32.xlu0 %v4770
    %v4772 = vpop.xlane.xlu0 %4771
    %v4773 = vsel %vm940, %v4752, 0.0
    %4774 = vadd.xlane.f32.xlu0 %v4773
    %v4775 = vpop.xlane.xlu0 %4774
    %v4776 = vsel %vm940, %v4754, 0.0
    %4777 = vadd.xlane.f32.xlu0 %v4776
    %v4778 = vpop.xlane.xlu0 %4777
    %v4779 = vrcp.pop %v4757
    %v4780 = vrcp.pop %v4760
    %v4781 = vrcp.pop %v4763
    %v4782 = vrcp.pop %v4766
    %v4783 = vrcp.pop %v4769
    %v4784 = vrcp.pop %v4772
    %v4785 = vrcp.pop %v4775
    %v4786 = vrcp.pop %v4778
    %v4787 = vmul.f32 %v4740, %v4779
    %v4788 = vmul.f32 %v4742, %v4780
    %v4789 = vmul.f32 %v4744, %v4781
    %v4790 = vmul.f32 %v4746, %v4782
    %v4791 = vmul.f32 %v4748, %v4783
    %v4792 = vmul.f32 %v4750, %v4784
    %v4793 = vmul.f32 %v4752, %v4785
    %v4794 = vmul.f32 %v4754, %v4786
    %v4795 = vpack.c.bf16 %v4788, %v4787
    %v4796 = vpack.c.bf16 %v4790, %v4789
    %v4797 = vpack.c.bf16 %v4792, %v4791
    %v4798 = vpack.c.bf16 %v4794, %v4793
    %4799 = vrot.lane.b32.xlu0 %v4503, 112
    %v4800 = vpop.permute.xlu0 %4799
    %4801 = vrot.lane.b32.xlu0 %v4503, 80
    %v4802 = vpop.permute.xlu0 %4801
    %v4804 = vsel %vm940, %v4800, 0
    %v4807 = vsel %vm940, %v4802, 0
    %4809 = vmatprep.subr.bf16.mxu0 0
    %4810 = vmatpush1.bf16.xpose.msra.mxu0 %v4807
    %4811 = vmatprep.subr.bf16.mxu0 0
    %4812 = vmatpush1.bf16.xpose.msra.mxu0 0
    %4813 = vmatprep.subr.bf16.mxu0 0
    %4814 = vmatpush1.bf16.xpose.msra.mxu0 0
    %4815 = vmatprep.subr.bf16.mxu0 0
    %4816 = vmatpush1.bf16.xpose.msra.mxu0 0
    %4817 = vmatprep.subr.bf16.mxu0 0
    %4818 = vmatpush1.bf16.xpose.msra.mxu0 0
    %4819 = vmatprep.subr.bf16.mxu0 0
    %4820 = vmatpush1.bf16.xpose.msra.mxu0 0
    %4821 = vmatprep.subr.bf16.mxu0 0
    %4822 = vmatpush1.bf16.xpose.msra.mxu0 0
    %4823 = vmatprep.subr.bf16.mxu0 0
    %4824 = vmatpush1.bf16.xpose.msra.mxu0 0
    %4825 = vmatprep.subr.bf16.mxu0 0
    %4826 = vmatpush1.bf16.xpose.msra.mxu0 0
    %4827 = vmatprep.subr.bf16.mxu0 0
    %4828 = vmatpush1.bf16.xpose.msra.mxu0 0
    %4829 = vmatprep.subr.bf16.mxu0 0
    %4830 = vmatpush1.bf16.xpose.msra.mxu0 0
    %4831 = vmatprep.subr.bf16.mxu0 0
    %4832 = vmatpush1.bf16.xpose.msra.mxu0 0
    %4833 = vmatprep.subr.bf16.mxu0 0
    %4834 = vmatpush1.bf16.xpose.msra.mxu0 0
    %4835 = vmatprep.subr.bf16.mxu0 0
    %4836 = vmatpush1.bf16.xpose.msra.mxu0 0
    %4837 = vmatprep.subr.bf16.mxu0 0
    %4838 = vmatpush1.bf16.xpose.msra.mxu0 0
    %4839 = vmatprep.subr.bf16.mxu0 0
    %4840 = vmatpush1.bf16.xpose.msra.mxu0 0
    %4841 = vmatprep.mubr.bf16.mxu0 0
    %4842 = vmatmul.mubr.bf16.gmra.mrb[0].mxu0 %v4804
    %v4843 = vpop.f32.mrb[0].mxu0
    %v4844 = vadd.f32 0.0, %v4843
    %v4845 = vpop.f32.mrb[0].mxu0
    %v4846 = vpop.f32.mrb[0].mxu0
    %v4847 = vadd.f32 0.0, %v4846
    %v4848 = vpop.f32.mrb[0].mxu0
    %4849 = vdwg.mxu0
    %4850 = vrot.lane.b32.xlu0 %v4504, 112
    %v4851 = vpop.permute.xlu0 %4850
    %4852 = vrot.lane.b32.xlu0 %v4504, 80
    %v4853 = vpop.permute.xlu0 %4852
    %v4855 = vsel %vm940, %v4851, 0
    %v4858 = vsel %vm940, %v4853, 0
    %4860 = vmatprep.subr.bf16.mxu0 0
    %4861 = vmatpush1.bf16.xpose.msra.mxu0 %v4858
    %4862 = vmatprep.subr.bf16.mxu0 0
    %4863 = vmatpush1.bf16.xpose.msra.mxu0 0
    %4864 = vmatprep.subr.bf16.mxu0 0
    %4865 = vmatpush1.bf16.xpose.msra.mxu0 0
    %4866 = vmatprep.subr.bf16.mxu0 0
    %4867 = vmatpush1.bf16.xpose.msra.mxu0 0
    %4868 = vmatprep.subr.bf16.mxu0 0
    %4869 = vmatpush1.bf16.xpose.msra.mxu0 0
    %4870 = vmatprep.subr.bf16.mxu0 0
    %4871 = vmatpush1.bf16.xpose.msra.mxu0 0
    %4872 = vmatprep.subr.bf16.mxu0 0
    %4873 = vmatpush1.bf16.xpose.msra.mxu0 0
    %4874 = vmatprep.subr.bf16.mxu0 0
    %4875 = vmatpush1.bf16.xpose.msra.mxu0 0
    %4876 = vmatprep.subr.bf16.mxu0 0
    %4877 = vmatpush1.bf16.xpose.msra.mxu0 0
    %4878 = vmatprep.subr.bf16.mxu0 0
    %4879 = vmatpush1.bf16.xpose.msra.mxu0 0
    %4880 = vmatprep.subr.bf16.mxu0 0
    %4881 = vmatpush1.bf16.xpose.msra.mxu0 0
    %4882 = vmatprep.subr.bf16.mxu0 0
    %4883 = vmatpush1.bf16.xpose.msra.mxu0 0
    %4884 = vmatprep.subr.bf16.mxu0 0
    %4885 = vmatpush1.bf16.xpose.msra.mxu0 0
    %4886 = vmatprep.subr.bf16.mxu0 0
    %4887 = vmatpush1.bf16.xpose.msra.mxu0 0
    %4888 = vmatprep.subr.bf16.mxu0 0
    %4889 = vmatpush1.bf16.xpose.msra.mxu0 0
    %4890 = vmatprep.subr.bf16.mxu0 0
    %4891 = vmatpush1.bf16.xpose.msra.mxu0 0
    %4892 = vmatprep.mubr.bf16.mxu0 0
    %4893 = vmatmul.mubr.bf16.gmra.mrb[0].mxu0 %v4855
    %v4894 = vpop.f32.mrb[0].mxu0
    %v4895 = vadd.f32 0.0, %v4894
    %v4896 = vpop.f32.mrb[0].mxu0
    %v4897 = vpop.f32.mrb[0].mxu0
    %v4898 = vadd.f32 0.0, %v4897
    %v4899 = vpop.f32.mrb[0].mxu0
    %4900 = vdwg.mxu0
    %4901 = vrot.lane.b32.xlu0 %v4505, 112
    %v4902 = vpop.permute.xlu0 %4901
    %4903 = vrot.lane.b32.xlu0 %v4505, 80
    %v4904 = vpop.permute.xlu0 %4903
    %v4906 = vsel %vm940, %v4902, 0
    %v4909 = vsel %vm940, %v4904, 0
    %4911 = vmatprep.subr.bf16.mxu0 0
    %4912 = vmatpush1.bf16.xpose.msra.mxu0 %v4909
    %4913 = vmatprep.subr.bf16.mxu0 0
    %4914 = vmatpush1.bf16.xpose.msra.mxu0 0
    %4915 = vmatprep.subr.bf16.mxu0 0
    %4916 = vmatpush1.bf16.xpose.msra.mxu0 0
    %4917 = vmatprep.subr.bf16.mxu0 0
    %4918 = vmatpush1.bf16.xpose.msra.mxu0 0
    %4919 = vmatprep.subr.bf16.mxu0 0
    %4920 = vmatpush1.bf16.xpose.msra.mxu0 0
    %4921 = vmatprep.subr.bf16.mxu0 0
    %4922 = vmatpush1.bf16.xpose.msra.mxu0 0
    %4923 = vmatprep.subr.bf16.mxu0 0
    %4924 = vmatpush1.bf16.xpose.msra.mxu0 0
    %4925 = vmatprep.subr.bf16.mxu0 0
    %4926 = vmatpush1.bf16.xpose.msra.mxu0 0
    %4927 = vmatprep.subr.bf16.mxu0 0
    %4928 = vmatpush1.bf16.xpose.msra.mxu0 0
    %4929 = vmatprep.subr.bf16.mxu0 0
    %4930 = vmatpush1.bf16.xpose.msra.mxu0 0
    %4931 = vmatprep.subr.bf16.mxu0 0
    %4932 = vmatpush1.bf16.xpose.msra.mxu0 0
    %4933 = vmatprep.subr.bf16.mxu0 0
    %4934 = vmatpush1.bf16.xpose.msra.mxu0 0
    %4935 = vmatprep.subr.bf16.mxu0 0
    %4936 = vmatpush1.bf16.xpose.msra.mxu0 0
    %4937 = vmatprep.subr.bf16.mxu0 0
    %4938 = vmatpush1.bf16.xpose.msra.mxu0 0
    %4939 = vmatprep.subr.bf16.mxu0 0
    %4940 = vmatpush1.bf16.xpose.msra.mxu0 0
    %4941 = vmatprep.subr.bf16.mxu0 0
    %4942 = vmatpush1.bf16.xpose.msra.mxu0 0
    %4943 = vmatprep.mubr.bf16.mxu0 0
    %4944 = vmatmul.mubr.bf16.gmra.mrb[0].mxu0 %v4906
    %v4945 = vpop.f32.mrb[0].mxu0
    %v4946 = vadd.f32 0.0, %v4945
    %v4947 = vpop.f32.mrb[0].mxu0
    %v4948 = vpop.f32.mrb[0].mxu0
    %v4949 = vadd.f32 0.0, %v4948
    %v4950 = vpop.f32.mrb[0].mxu0
    %4951 = vdwg.mxu0
    %4952 = vrot.lane.b32.xlu0 %v4506, 112
    %v4953 = vpop.permute.xlu0 %4952
    %4954 = vrot.lane.b32.xlu0 %v4506, 80
    %v4955 = vpop.permute.xlu0 %4954
    %v4957 = vsel %vm940, %v4953, 0
    %v4960 = vsel %vm940, %v4955, 0
    %4962 = vmatprep.subr.bf16.mxu0 0
    %4963 = vmatpush1.bf16.xpose.msra.mxu0 %v4960
    %4964 = vmatprep.subr.bf16.mxu0 0
    %4965 = vmatpush1.bf16.xpose.msra.mxu0 0
    %4966 = vmatprep.subr.bf16.mxu0 0
    %4967 = vmatpush1.bf16.xpose.msra.mxu0 0
    %4968 = vmatprep.subr.bf16.mxu0 0
    %4969 = vmatpush1.bf16.xpose.msra.mxu0 0
    %4970 = vmatprep.subr.bf16.mxu0 0
    %4971 = vmatpush1.bf16.xpose.msra.mxu0 0
    %4972 = vmatprep.subr.bf16.mxu0 0
    %4973 = vmatpush1.bf16.xpose.msra.mxu0 0
    %4974 = vmatprep.subr.bf16.mxu0 0
    %4975 = vmatpush1.bf16.xpose.msra.mxu0 0
    %4976 = vmatprep.subr.bf16.mxu0 0
    %4977 = vmatpush1.bf16.xpose.msra.mxu0 0
    %4978 = vmatprep.subr.bf16.mxu0 0
    %4979 = vmatpush1.bf16.xpose.msra.mxu0 0
    %4980 = vmatprep.subr.bf16.mxu0 0
    %4981 = vmatpush1.bf16.xpose.msra.mxu0 0
    %4982 = vmatprep.subr.bf16.mxu0 0
    %4983 = vmatpush1.bf16.xpose.msra.mxu0 0
    %4984 = vmatprep.subr.bf16.mxu0 0
    %4985 = vmatpush1.bf16.xpose.msra.mxu0 0
    %4986 = vmatprep.subr.bf16.mxu0 0
    %4987 = vmatpush1.bf16.xpose.msra.mxu0 0
    %4988 = vmatprep.subr.bf16.mxu0 0
    %4989 = vmatpush1.bf16.xpose.msra.mxu0 0
    %4990 = vmatprep.subr.bf16.mxu0 0
    %4991 = vmatpush1.bf16.xpose.msra.mxu0 0
    %4992 = vmatprep.subr.bf16.mxu0 0
    %4993 = vmatpush1.bf16.xpose.msra.mxu0 0
    %4994 = vmatprep.mubr.bf16.mxu0 0
    %4995 = vmatmul.mubr.bf16.gmra.mrb[0].mxu0 %v4957
    %v4996 = vpop.f32.mrb[0].mxu0
    %v4997 = vadd.f32 0.0, %v4996
    %v4998 = vpop.f32.mrb[0].mxu0
    %v4999 = vpop.f32.mrb[0].mxu0
    %v5000 = vadd.f32 0.0, %v4999
    %v5001 = vpop.f32.mrb[0].mxu0
    %5002 = vdwg.mxu0
    %v5003 = vsel %vm940, %v4844, -inf
    %5004 = vmax.xlane.f32.xlu0 %v5003
    %v5005 = vpop.xlane.xlu0 %5004
    %v5006 = vsel %vm940, %v4847, -inf
    %5007 = vmax.xlane.f32.xlu0 %v5006
    %v5008 = vpop.xlane.xlu0 %5007
    %v5009 = vsel %vm940, %v4895, -inf
    %5010 = vmax.xlane.f32.xlu0 %v5009
    %v5011 = vpop.xlane.xlu0 %5010
    %v5012 = vsel %vm940, %v4898, -inf
    %5013 = vmax.xlane.f32.xlu0 %v5012
    %v5014 = vpop.xlane.xlu0 %5013
    %v5015 = vsel %vm940, %v4946, -inf
    %5016 = vmax.xlane.f32.xlu0 %v5015
    %v5017 = vpop.xlane.xlu0 %5016
    %v5018 = vsel %vm940, %v4949, -inf
    %5019 = vmax.xlane.f32.xlu0 %v5018
    %v5020 = vpop.xlane.xlu0 %5019
    %v5021 = vsel %vm940, %v4997, -inf
    %5022 = vmax.xlane.f32.xlu0 %v5021
    %v5023 = vpop.xlane.xlu0 %5022
    %v5024 = vsel %vm940, %v5000, -inf
    %5025 = vmax.xlane.f32.xlu0 %v5024
    %v5026 = vpop.xlane.xlu0 %5025
    %v5027 = vsub.f32 %v4844, %v5005
    %v5028 = vsub.f32 %v4847, %v5008
    %v5029 = vsub.f32 %v4895, %v5011
    %v5030 = vsub.f32 %v4898, %v5014
    %v5031 = vsub.f32 %v4946, %v5017
    %v5032 = vsub.f32 %v4949, %v5020
    %v5033 = vsub.f32 %v4997, %v5023
    %v5034 = vsub.f32 %v5000, %v5026
    %v5035 = vmul.f32 %v5027, 1.442695
    %v5036 = vpow.pop %v5035
    %v5037 = vmul.f32 %v5028, 1.442695
    %v5038 = vpow.pop %v5037
    %v5039 = vmul.f32 %v5029, 1.442695
    %v5040 = vpow.pop %v5039
    %v5041 = vmul.f32 %v5030, 1.442695
    %v5042 = vpow.pop %v5041
    %v5043 = vmul.f32 %v5031, 1.442695
    %v5044 = vpow.pop %v5043
    %v5045 = vmul.f32 %v5032, 1.442695
    %v5046 = vpow.pop %v5045
    %v5047 = vmul.f32 %v5033, 1.442695
    %v5048 = vpow.pop %v5047
    %v5049 = vmul.f32 %v5034, 1.442695
    %v5050 = vpow.pop %v5049
    %v5051 = vsel %vm940, %v5036, 0.0
    %5052 = vadd.xlane.f32.xlu0 %v5051
    %v5053 = vpop.xlane.xlu0 %5052
    %v5054 = vsel %vm940, %v5038, 0.0
    %5055 = vadd.xlane.f32.xlu0 %v5054
    %v5056 = vpop.xlane.xlu0 %5055
    %v5057 = vsel %vm940, %v5040, 0.0
    %5058 = vadd.xlane.f32.xlu0 %v5057
    %v5059 = vpop.xlane.xlu0 %5058
    %v5060 = vsel %vm940, %v5042, 0.0
    %5061 = vadd.xlane.f32.xlu0 %v5060
    %v5062 = vpop.xlane.xlu0 %5061
    %v5063 = vsel %vm940, %v5044, 0.0
    %5064 = vadd.xlane.f32.xlu0 %v5063
    %v5065 = vpop.xlane.xlu0 %5064
    %v5066 = vsel %vm940, %v5046, 0.0
    %5067 = vadd.xlane.f32.xlu0 %v5066
    %v5068 = vpop.xlane.xlu0 %5067
    %v5069 = vsel %vm940, %v5048, 0.0
    %5070 = vadd.xlane.f32.xlu0 %v5069
    %v5071 = vpop.xlane.xlu0 %5070
    %v5072 = vsel %vm940, %v5050, 0.0
    %5073 = vadd.xlane.f32.xlu0 %v5072
    %v5074 = vpop.xlane.xlu0 %5073
    %v5075 = vrcp.pop %v5053
    %v5076 = vrcp.pop %v5056
    %v5077 = vrcp.pop %v5059
    %v5078 = vrcp.pop %v5062
    %v5079 = vrcp.pop %v5065
    %v5080 = vrcp.pop %v5068
    %v5081 = vrcp.pop %v5071
    %v5082 = vrcp.pop %v5074
    %v5083 = vmul.f32 %v5036, %v5075
    %v5084 = vmul.f32 %v5038, %v5076
    %v5085 = vmul.f32 %v5040, %v5077
    %v5086 = vmul.f32 %v5042, %v5078
    %v5087 = vmul.f32 %v5044, %v5079
    %v5088 = vmul.f32 %v5046, %v5080
    %v5089 = vmul.f32 %v5048, %v5081
    %v5090 = vmul.f32 %v5050, %v5082
    %v5091 = vpack.c.bf16 %v5084, %v5083
    %v5092 = vpack.c.bf16 %v5086, %v5085
    %v5093 = vpack.c.bf16 %v5088, %v5087
    %v5094 = vpack.c.bf16 %v5090, %v5089
    %5095 = vrot.lane.b32.xlu0 %v4503, 32
    %v5096 = vpop.permute.xlu0 %5095
    %v5099 = vsel %vm940, %v5091, 0
    %5101 = vmatprep.subr.bf16.mxu0 0
    %5102 = vmatpush1.bf16.msra.mxu0 %v5096
    %5103 = vmatprep.subr.bf16.mxu0 0
    %5104 = vmatpush1.bf16.msra.mxu0 0
    %5105 = vmatprep.subr.bf16.mxu0 0
    %5106 = vmatpush1.bf16.msra.mxu0 0
    %5107 = vmatprep.subr.bf16.mxu0 0
    %5108 = vmatpush1.bf16.msra.mxu0 0
    %5109 = vmatprep.subr.bf16.mxu0 0
    %5110 = vmatpush1.bf16.msra.mxu0 0
    %5111 = vmatprep.subr.bf16.mxu0 0
    %5112 = vmatpush1.bf16.msra.mxu0 0
    %5113 = vmatprep.subr.bf16.mxu0 0
    %5114 = vmatpush1.bf16.msra.mxu0 0
    %5115 = vmatprep.subr.bf16.mxu0 0
    %5116 = vmatpush1.bf16.msra.mxu0 0
    %5117 = vmatprep.subr.bf16.mxu0 0
    %5118 = vmatpush1.bf16.msra.mxu0 0
    %5119 = vmatprep.subr.bf16.mxu0 0
    %5120 = vmatpush1.bf16.msra.mxu0 0
    %5121 = vmatprep.subr.bf16.mxu0 0
    %5122 = vmatpush1.bf16.msra.mxu0 0
    %5123 = vmatprep.subr.bf16.mxu0 0
    %5124 = vmatpush1.bf16.msra.mxu0 0
    %5125 = vmatprep.subr.bf16.mxu0 0
    %5126 = vmatpush1.bf16.msra.mxu0 0
    %5127 = vmatprep.subr.bf16.mxu0 0
    %5128 = vmatpush1.bf16.msra.mxu0 0
    %5129 = vmatprep.subr.bf16.mxu0 0
    %5130 = vmatpush1.bf16.msra.mxu0 0
    %5131 = vmatprep.subr.bf16.mxu0 0
    %5132 = vmatpush1.bf16.msra.mxu0 0
    %5133 = vmatprep.mubr.bf16.mxu0 0
    %5134 = vmatmul.mubr.bf16.gmra.mrb[0].mxu0 %v5099
    %v5135 = vpop.f32.mrb[0].mxu0
    %v5136 = vadd.f32 0.0, %v5135
    %v5137 = vpop.f32.mrb[0].mxu0
    %v5138 = vpop.f32.mrb[0].mxu0
    %v5139 = vadd.f32 0.0, %v5138
    %v5140 = vpop.f32.mrb[0].mxu0
    %5141 = vdwg.mxu0
    %5142 = vrot.lane.b32.xlu0 %v4504, 32
    %v5143 = vpop.permute.xlu0 %5142
    %v5146 = vsel %vm940, %v5092, 0
    %5148 = vmatprep.subr.bf16.mxu0 0
    %5149 = vmatpush1.bf16.msra.mxu0 %v5143
    %5150 = vmatprep.subr.bf16.mxu0 0
    %5151 = vmatpush1.bf16.msra.mxu0 0
    %5152 = vmatprep.subr.bf16.mxu0 0
    %5153 = vmatpush1.bf16.msra.mxu0 0
    %5154 = vmatprep.subr.bf16.mxu0 0
    %5155 = vmatpush1.bf16.msra.mxu0 0
    %5156 = vmatprep.subr.bf16.mxu0 0
    %5157 = vmatpush1.bf16.msra.mxu0 0
    %5158 = vmatprep.subr.bf16.mxu0 0
    %5159 = vmatpush1.bf16.msra.mxu0 0
    %5160 = vmatprep.subr.bf16.mxu0 0
    %5161 = vmatpush1.bf16.msra.mxu0 0
    %5162 = vmatprep.subr.bf16.mxu0 0
    %5163 = vmatpush1.bf16.msra.mxu0 0
    %5164 = vmatprep.subr.bf16.mxu0 0
    %5165 = vmatpush1.bf16.msra.mxu0 0
    %5166 = vmatprep.subr.bf16.mxu0 0
    %5167 = vmatpush1.bf16.msra.mxu0 0
    %5168 = vmatprep.subr.bf16.mxu0 0
    %5169 = vmatpush1.bf16.msra.mxu0 0
    %5170 = vmatprep.subr.bf16.mxu0 0
    %5171 = vmatpush1.bf16.msra.mxu0 0
    %5172 = vmatprep.subr.bf16.mxu0 0
    %5173 = vmatpush1.bf16.msra.mxu0 0
    %5174 = vmatprep.subr.bf16.mxu0 0
    %5175 = vmatpush1.bf16.msra.mxu0 0
    %5176 = vmatprep.subr.bf16.mxu0 0
    %5177 = vmatpush1.bf16.msra.mxu0 0
    %5178 = vmatprep.subr.bf16.mxu0 0
    %5179 = vmatpush1.bf16.msra.mxu0 0
    %5180 = vmatprep.mubr.bf16.mxu0 0
    %5181 = vmatmul.mubr.bf16.gmra.mrb[0].mxu0 %v5146
    %v5182 = vpop.f32.mrb[0].mxu0
    %v5183 = vadd.f32 0.0, %v5182
    %v5184 = vpop.f32.mrb[0].mxu0
    %v5185 = vpop.f32.mrb[0].mxu0
    %v5186 = vadd.f32 0.0, %v5185
    %v5187 = vpop.f32.mrb[0].mxu0
    %5188 = vdwg.mxu0
    %5189 = vrot.lane.b32.xlu0 %v4505, 32
    %v5190 = vpop.permute.xlu0 %5189
    %v5193 = vsel %vm940, %v5093, 0
    %5195 = vmatprep.subr.bf16.mxu0 0
    %5196 = vmatpush1.bf16.msra.mxu0 %v5190
    %5197 = vmatprep.subr.bf16.mxu0 0
    %5198 = vmatpush1.bf16.msra.mxu0 0
    %5199 = vmatprep.subr.bf16.mxu0 0
    %5200 = vmatpush1.bf16.msra.mxu0 0
    %5201 = vmatprep.subr.bf16.mxu0 0
    %5202 = vmatpush1.bf16.msra.mxu0 0
    %5203 = vmatprep.subr.bf16.mxu0 0
    %5204 = vmatpush1.bf16.msra.mxu0 0
    %5205 = vmatprep.subr.bf16.mxu0 0
    %5206 = vmatpush1.bf16.msra.mxu0 0
    %5207 = vmatprep.subr.bf16.mxu0 0
    %5208 = vmatpush1.bf16.msra.mxu0 0
    %5209 = vmatprep.subr.bf16.mxu0 0
    %5210 = vmatpush1.bf16.msra.mxu0 0
    %5211 = vmatprep.subr.bf16.mxu0 0
    %5212 = vmatpush1.bf16.msra.mxu0 0
    %5213 = vmatprep.subr.bf16.mxu0 0
    %5214 = vmatpush1.bf16.msra.mxu0 0
    %5215 = vmatprep.subr.bf16.mxu0 0
    %5216 = vmatpush1.bf16.msra.mxu0 0
    %5217 = vmatprep.subr.bf16.mxu0 0
    %5218 = vmatpush1.bf16.msra.mxu0 0
    %5219 = vmatprep.subr.bf16.mxu0 0
    %5220 = vmatpush1.bf16.msra.mxu0 0
    %5221 = vmatprep.subr.bf16.mxu0 0
    %5222 = vmatpush1.bf16.msra.mxu0 0
    %5223 = vmatprep.subr.bf16.mxu0 0
    %5224 = vmatpush1.bf16.msra.mxu0 0
    %5225 = vmatprep.subr.bf16.mxu0 0
    %5226 = vmatpush1.bf16.msra.mxu0 0
    %5227 = vmatprep.mubr.bf16.mxu0 0
    %5228 = vmatmul.mubr.bf16.gmra.mrb[0].mxu0 %v5193
    %v5229 = vpop.f32.mrb[0].mxu0
    %v5230 = vadd.f32 0.0, %v5229
    %v5231 = vpop.f32.mrb[0].mxu0
    %v5232 = vpop.f32.mrb[0].mxu0
    %v5233 = vadd.f32 0.0, %v5232
    %v5234 = vpop.f32.mrb[0].mxu0
    %5235 = vdwg.mxu0
    %5236 = vrot.lane.b32.xlu0 %v4506, 32
    %v5237 = vpop.permute.xlu0 %5236
    %v5240 = vsel %vm940, %v5094, 0
    %5242 = vmatprep.subr.bf16.mxu0 0
    %5243 = vmatpush1.bf16.msra.mxu0 %v5237
    %5244 = vmatprep.subr.bf16.mxu0 0
    %5245 = vmatpush1.bf16.msra.mxu0 0
    %5246 = vmatprep.subr.bf16.mxu0 0
    %5247 = vmatpush1.bf16.msra.mxu0 0
    %5248 = vmatprep.subr.bf16.mxu0 0
    %5249 = vmatpush1.bf16.msra.mxu0 0
    %5250 = vmatprep.subr.bf16.mxu0 0
    %5251 = vmatpush1.bf16.msra.mxu0 0
    %5252 = vmatprep.subr.bf16.mxu0 0
    %5253 = vmatpush1.bf16.msra.mxu0 0
    %5254 = vmatprep.subr.bf16.mxu0 0
    %5255 = vmatpush1.bf16.msra.mxu0 0
    %5256 = vmatprep.subr.bf16.mxu0 0
    %5257 = vmatpush1.bf16.msra.mxu0 0
    %5258 = vmatprep.subr.bf16.mxu0 0
    %5259 = vmatpush1.bf16.msra.mxu0 0
    %5260 = vmatprep.subr.bf16.mxu0 0
    %5261 = vmatpush1.bf16.msra.mxu0 0
    %5262 = vmatprep.subr.bf16.mxu0 0
    %5263 = vmatpush1.bf16.msra.mxu0 0
    %5264 = vmatprep.subr.bf16.mxu0 0
    %5265 = vmatpush1.bf16.msra.mxu0 0
    %5266 = vmatprep.subr.bf16.mxu0 0
    %5267 = vmatpush1.bf16.msra.mxu0 0
    %5268 = vmatprep.subr.bf16.mxu0 0
    %5269 = vmatpush1.bf16.msra.mxu0 0
    %5270 = vmatprep.subr.bf16.mxu0 0
    %5271 = vmatpush1.bf16.msra.mxu0 0
    %5272 = vmatprep.subr.bf16.mxu0 0
    %5273 = vmatpush1.bf16.msra.mxu0 0
    %5274 = vmatprep.mubr.bf16.mxu0 0
    %5275 = vmatmul.mubr.bf16.gmra.mrb[0].mxu0 %v5240
    %v5276 = vpop.f32.mrb[0].mxu0
    %v5277 = vadd.f32 0.0, %v5276
    %v5278 = vpop.f32.mrb[0].mxu0
    %v5279 = vpop.f32.mrb[0].mxu0
    %v5280 = vadd.f32 0.0, %v5279
    %v5281 = vpop.f32.mrb[0].mxu0
    %5282 = vdwg.mxu0
    %5283 = vrot.lane.b32.xlu0 %v4503, 64
    %v5284 = vpop.permute.xlu0 %5283
    %v5287 = vsel %vm940, %v4795, 0
    %5289 = vmatprep.subr.bf16.mxu0 0
    %5290 = vmatpush1.bf16.msra.mxu0 %v5284
    %5291 = vmatprep.subr.bf16.mxu0 0
    %5292 = vmatpush1.bf16.msra.mxu0 0
    %5293 = vmatprep.subr.bf16.mxu0 0
    %5294 = vmatpush1.bf16.msra.mxu0 0
    %5295 = vmatprep.subr.bf16.mxu0 0
    %5296 = vmatpush1.bf16.msra.mxu0 0
    %5297 = vmatprep.subr.bf16.mxu0 0
    %5298 = vmatpush1.bf16.msra.mxu0 0
    %5299 = vmatprep.subr.bf16.mxu0 0
    %5300 = vmatpush1.bf16.msra.mxu0 0
    %5301 = vmatprep.subr.bf16.mxu0 0
    %5302 = vmatpush1.bf16.msra.mxu0 0
    %5303 = vmatprep.subr.bf16.mxu0 0
    %5304 = vmatpush1.bf16.msra.mxu0 0
    %5305 = vmatprep.subr.bf16.mxu0 0
    %5306 = vmatpush1.bf16.msra.mxu0 0
    %5307 = vmatprep.subr.bf16.mxu0 0
    %5308 = vmatpush1.bf16.msra.mxu0 0
    %5309 = vmatprep.subr.bf16.mxu0 0
    %5310 = vmatpush1.bf16.msra.mxu0 0
    %5311 = vmatprep.subr.bf16.mxu0 0
    %5312 = vmatpush1.bf16.msra.mxu0 0
    %5313 = vmatprep.subr.bf16.mxu0 0
    %5314 = vmatpush1.bf16.msra.mxu0 0
    %5315 = vmatprep.subr.bf16.mxu0 0
    %5316 = vmatpush1.bf16.msra.mxu0 0
    %5317 = vmatprep.subr.bf16.mxu0 0
    %5318 = vmatpush1.bf16.msra.mxu0 0
    %5319 = vmatprep.subr.bf16.mxu0 0
    %5320 = vmatpush1.bf16.msra.mxu0 0
    %5321 = vmatprep.mubr.bf16.mxu0 0
    %5322 = vmatmul.mubr.bf16.gmra.mrb[0].mxu0 %v5287
    %v5323 = vpop.f32.mrb[0].mxu0
    %v5324 = vadd.f32 %v5136, %v5323
    %v5325 = vpop.f32.mrb[0].mxu0
    %v5326 = vpop.f32.mrb[0].mxu0
    %v5327 = vadd.f32 %v5139, %v5326
    %v5328 = vpop.f32.mrb[0].mxu0
    %5329 = vdwg.mxu0
    %5330 = vrot.lane.b32.xlu0 %v4504, 64
    %v5331 = vpop.permute.xlu0 %5330
    %v5334 = vsel %vm940, %v4796, 0
    %5336 = vmatprep.subr.bf16.mxu0 0
    %5337 = vmatpush1.bf16.msra.mxu0 %v5331
    %5338 = vmatprep.subr.bf16.mxu0 0
    %5339 = vmatpush1.bf16.msra.mxu0 0
    %5340 = vmatprep.subr.bf16.mxu0 0
    %5341 = vmatpush1.bf16.msra.mxu0 0
    %5342 = vmatprep.subr.bf16.mxu0 0
    %5343 = vmatpush1.bf16.msra.mxu0 0
    %5344 = vmatprep.subr.bf16.mxu0 0
    %5345 = vmatpush1.bf16.msra.mxu0 0
    %5346 = vmatprep.subr.bf16.mxu0 0
    %5347 = vmatpush1.bf16.msra.mxu0 0
    %5348 = vmatprep.subr.bf16.mxu0 0
    %5349 = vmatpush1.bf16.msra.mxu0 0
    %5350 = vmatprep.subr.bf16.mxu0 0
    %5351 = vmatpush1.bf16.msra.mxu0 0
    %5352 = vmatprep.subr.bf16.mxu0 0
    %5353 = vmatpush1.bf16.msra.mxu0 0
    %5354 = vmatprep.subr.bf16.mxu0 0
    %5355 = vmatpush1.bf16.msra.mxu0 0
    %5356 = vmatprep.subr.bf16.mxu0 0
    %5357 = vmatpush1.bf16.msra.mxu0 0
    %5358 = vmatprep.subr.bf16.mxu0 0
    %5359 = vmatpush1.bf16.msra.mxu0 0
    %5360 = vmatprep.subr.bf16.mxu0 0
    %5361 = vmatpush1.bf16.msra.mxu0 0
    %5362 = vmatprep.subr.bf16.mxu0 0
    %5363 = vmatpush1.bf16.msra.mxu0 0
    %5364 = vmatprep.subr.bf16.mxu0 0
    %5365 = vmatpush1.bf16.msra.mxu0 0
    %5366 = vmatprep.subr.bf16.mxu0 0
    %5367 = vmatpush1.bf16.msra.mxu0 0
    %5368 = vmatprep.mubr.bf16.mxu0 0
    %5369 = vmatmul.mubr.bf16.gmra.mrb[0].mxu0 %v5334
    %v5370 = vpop.f32.mrb[0].mxu0
    %v5371 = vadd.f32 %v5183, %v5370
    %v5372 = vpop.f32.mrb[0].mxu0
    %v5373 = vpop.f32.mrb[0].mxu0
    %v5374 = vadd.f32 %v5186, %v5373
    %v5375 = vpop.f32.mrb[0].mxu0
    %5376 = vdwg.mxu0
    %5377 = vrot.lane.b32.xlu0 %v4505, 64
    %v5378 = vpop.permute.xlu0 %5377
    %v5381 = vsel %vm940, %v4797, 0
    %5383 = vmatprep.subr.bf16.mxu0 0
    %5384 = vmatpush1.bf16.msra.mxu0 %v5378
    %5385 = vmatprep.subr.bf16.mxu0 0
    %5386 = vmatpush1.bf16.msra.mxu0 0
    %5387 = vmatprep.subr.bf16.mxu0 0
    %5388 = vmatpush1.bf16.msra.mxu0 0
    %5389 = vmatprep.subr.bf16.mxu0 0
    %5390 = vmatpush1.bf16.msra.mxu0 0
    %5391 = vmatprep.subr.bf16.mxu0 0
    %5392 = vmatpush1.bf16.msra.mxu0 0
    %5393 = vmatprep.subr.bf16.mxu0 0
    %5394 = vmatpush1.bf16.msra.mxu0 0
    %5395 = vmatprep.subr.bf16.mxu0 0
    %5396 = vmatpush1.bf16.msra.mxu0 0
    %5397 = vmatprep.subr.bf16.mxu0 0
    %5398 = vmatpush1.bf16.msra.mxu0 0
    %5399 = vmatprep.subr.bf16.mxu0 0
    %5400 = vmatpush1.bf16.msra.mxu0 0
    %5401 = vmatprep.subr.bf16.mxu0 0
    %5402 = vmatpush1.bf16.msra.mxu0 0
    %5403 = vmatprep.subr.bf16.mxu0 0
    %5404 = vmatpush1.bf16.msra.mxu0 0
    %5405 = vmatprep.subr.bf16.mxu0 0
    %5406 = vmatpush1.bf16.msra.mxu0 0
    %5407 = vmatprep.subr.bf16.mxu0 0
    %5408 = vmatpush1.bf16.msra.mxu0 0
    %5409 = vmatprep.subr.bf16.mxu0 0
    %5410 = vmatpush1.bf16.msra.mxu0 0
    %5411 = vmatprep.subr.bf16.mxu0 0
    %5412 = vmatpush1.bf16.msra.mxu0 0
    %5413 = vmatprep.subr.bf16.mxu0 0
    %5414 = vmatpush1.bf16.msra.mxu0 0
    %5415 = vmatprep.mubr.bf16.mxu0 0
    %5416 = vmatmul.mubr.bf16.gmra.mrb[0].mxu0 %v5381
    %v5417 = vpop.f32.mrb[0].mxu0
    %v5418 = vadd.f32 %v5230, %v5417
    %v5419 = vpop.f32.mrb[0].mxu0
    %v5420 = vpop.f32.mrb[0].mxu0
    %v5421 = vadd.f32 %v5233, %v5420
    %v5422 = vpop.f32.mrb[0].mxu0
    %5423 = vdwg.mxu0
    %5424 = vrot.lane.b32.xlu0 %v4506, 64
    %v5425 = vpop.permute.xlu0 %5424
    %v5428 = vsel %vm940, %v4798, 0
    %5430 = vmatprep.subr.bf16.mxu0 0
    %5431 = vmatpush1.bf16.msra.mxu0 %v5425
    %5432 = vmatprep.subr.bf16.mxu0 0
    %5433 = vmatpush1.bf16.msra.mxu0 0
    %5434 = vmatprep.subr.bf16.mxu0 0
    %5435 = vmatpush1.bf16.msra.mxu0 0
    %5436 = vmatprep.subr.bf16.mxu0 0
    %5437 = vmatpush1.bf16.msra.mxu0 0
    %5438 = vmatprep.subr.bf16.mxu0 0
    %5439 = vmatpush1.bf16.msra.mxu0 0
    %5440 = vmatprep.subr.bf16.mxu0 0
    %5441 = vmatpush1.bf16.msra.mxu0 0
    %5442 = vmatprep.subr.bf16.mxu0 0
    %5443 = vmatpush1.bf16.msra.mxu0 0
    %5444 = vmatprep.subr.bf16.mxu0 0
    %5445 = vmatpush1.bf16.msra.mxu0 0
    %5446 = vmatprep.subr.bf16.mxu0 0
    %5447 = vmatpush1.bf16.msra.mxu0 0
    %5448 = vmatprep.subr.bf16.mxu0 0
    %5449 = vmatpush1.bf16.msra.mxu0 0
    %5450 = vmatprep.subr.bf16.mxu0 0
    %5451 = vmatpush1.bf16.msra.mxu0 0
    %5452 = vmatprep.subr.bf16.mxu0 0
    %5453 = vmatpush1.bf16.msra.mxu0 0
    %5454 = vmatprep.subr.bf16.mxu0 0
    %5455 = vmatpush1.bf16.msra.mxu0 0
    %5456 = vmatprep.subr.bf16.mxu0 0
    %5457 = vmatpush1.bf16.msra.mxu0 0
    %5458 = vmatprep.subr.bf16.mxu0 0
    %5459 = vmatpush1.bf16.msra.mxu0 0
    %5460 = vmatprep.subr.bf16.mxu0 0
    %5461 = vmatpush1.bf16.msra.mxu0 0
    %5462 = vmatprep.mubr.bf16.mxu0 0
    %5463 = vmatmul.mubr.bf16.gmra.mrb[0].mxu0 %v5428
    %v5464 = vpop.f32.mrb[0].mxu0
    %v5465 = vadd.f32 %v5277, %v5464
    %v5466 = vpop.f32.mrb[0].mxu0
    %v5467 = vpop.f32.mrb[0].mxu0
    %v5468 = vadd.f32 %v5280, %v5467
    %v5469 = vpop.f32.mrb[0].mxu0
    %5470 = vdwg.mxu0
    %v5471 = vld [vmem:[%s10 + $0x2] sm:$0x1]
    %v5472 = vlaneseq
    %v5473 = vshrl.u32 %v5472, 7
    %v5474 = vsub.s32 0, %v5473
    %v5475 = vrot.slane %v5471, %v5474
    %v5476 = vadd.f32 %v4267, %v5475
    %v5477 = vadd.f32 %v4268, %v5475
    %v5478 = vadd.f32 %v4269, %v5475
    %v5479 = vadd.f32 %v4270, %v5475
    %v5480 = vadd.f32 %v4271, %v5475
    %v5481 = vadd.f32 %v4272, %v5475
    %v5482 = vadd.f32 %v4273, %v5475
    %v5483 = vadd.f32 %v4274, %v5475
    %v5484 = vadd.f32 %v5476, %v5324
    %v5485 = vadd.f32 %v5477, %v5327
    %v5486 = vadd.f32 %v5478, %v5371
    %v5487 = vadd.f32 %v5479, %v5374
    %v5488 = vadd.f32 %v5480, %v5418
    %v5489 = vadd.f32 %v5481, %v5421
    %v5490 = vadd.f32 %v5482, %v5465
    %v5491 = vadd.f32 %v5483, %v5468
    %v5492 = vld [vmem:[%s11 + $0x2] sm:$0x1]
    %v5493 = vld [vmem:[%s12 + $0x2] sm:$0x1]
    %v5494 = vsel %vm260, %v5484, 0.0
    %5495 = vadd.xlane.f32.xlu0 %v5494
    %v5496 = vpop.xlane.xlu0 %5495
    %v5497 = vsel %vm260, %v5485, 0.0
    %5498 = vadd.xlane.f32.xlu0 %v5497
    %v5499 = vpop.xlane.xlu0 %5498
    %v5500 = vsel %vm260, %v5486, 0.0
    %5501 = vadd.xlane.f32.xlu0 %v5500
    %v5502 = vpop.xlane.xlu0 %5501
    %v5503 = vsel %vm260, %v5487, 0.0
    %5504 = vadd.xlane.f32.xlu0 %v5503
    %v5505 = vpop.xlane.xlu0 %5504
    %v5506 = vsel %vm260, %v5488, 0.0
    %5507 = vadd.xlane.f32.xlu0 %v5506
    %v5508 = vpop.xlane.xlu0 %5507
    %v5509 = vsel %vm260, %v5489, 0.0
    %5510 = vadd.xlane.f32.xlu0 %v5509
    %v5511 = vpop.xlane.xlu0 %5510
    %v5512 = vsel %vm260, %v5490, 0.0
    %5513 = vadd.xlane.f32.xlu0 %v5512
    %v5514 = vpop.xlane.xlu0 %5513
    %v5515 = vsel %vm260, %v5491, 0.0
    %5516 = vadd.xlane.f32.xlu0 %v5515
    %v5517 = vpop.xlane.xlu0 %5516
    %v5518 = vmul.f32 %v5496, %v285
    %v5519 = vmul.f32 %v5499, %v285
    %v5520 = vmul.f32 %v5502, %v285
    %v5521 = vmul.f32 %v5505, %v285
    %v5522 = vmul.f32 %v5508, %v285
    %v5523 = vmul.f32 %v5511, %v285
    %v5524 = vmul.f32 %v5514, %v285
    %v5525 = vmul.f32 %v5517, %v285
    %v5526 = vsub.f32 %v5484, %v5518
    %v5527 = vsub.f32 %v5485, %v5519
    %v5528 = vsub.f32 %v5486, %v5520
    %v5529 = vsub.f32 %v5487, %v5521
    %v5530 = vsub.f32 %v5488, %v5522
    %v5531 = vsub.f32 %v5489, %v5523
    %v5532 = vsub.f32 %v5490, %v5524
    %v5533 = vsub.f32 %v5491, %v5525
    %v5534 = vmul.f32 %v5526, %v5526
    %v5535 = vmul.f32 %v5527, %v5527
    %v5536 = vmul.f32 %v5528, %v5528
    %v5537 = vmul.f32 %v5529, %v5529
    %v5538 = vmul.f32 %v5530, %v5530
    %v5539 = vmul.f32 %v5531, %v5531
    %v5540 = vmul.f32 %v5532, %v5532
    %v5541 = vmul.f32 %v5533, %v5533
    %v5542 = vsel %vm260, %v5534, 0.0
    %5543 = vadd.xlane.f32.xlu0 %v5542
    %v5544 = vpop.xlane.xlu0 %5543
    %v5545 = vsel %vm260, %v5535, 0.0
    %5546 = vadd.xlane.f32.xlu0 %v5545
    %v5547 = vpop.xlane.xlu0 %5546
    %v5548 = vsel %vm260, %v5536, 0.0
    %5549 = vadd.xlane.f32.xlu0 %v5548
    %v5550 = vpop.xlane.xlu0 %5549
    %v5551 = vsel %vm260, %v5537, 0.0
    %5552 = vadd.xlane.f32.xlu0 %v5551
    %v5553 = vpop.xlane.xlu0 %5552
    %v5554 = vsel %vm260, %v5538, 0.0
    %5555 = vadd.xlane.f32.xlu0 %v5554
    %v5556 = vpop.xlane.xlu0 %5555
    %v5557 = vsel %vm260, %v5539, 0.0
    %5558 = vadd.xlane.f32.xlu0 %v5557
    %v5559 = vpop.xlane.xlu0 %5558
    %v5560 = vsel %vm260, %v5540, 0.0
    %5561 = vadd.xlane.f32.xlu0 %v5560
    %v5562 = vpop.xlane.xlu0 %5561
    %v5563 = vsel %vm260, %v5541, 0.0
    %5564 = vadd.xlane.f32.xlu0 %v5563
    %v5565 = vpop.xlane.xlu0 %5564
    %v5566 = vmul.f32 %v5544, %v285
    %v5567 = vmul.f32 %v5547, %v285
    %v5568 = vmul.f32 %v5550, %v285
    %v5569 = vmul.f32 %v5553, %v285
    %v5570 = vmul.f32 %v5556, %v285
    %v5571 = vmul.f32 %v5559, %v285
    %v5572 = vmul.f32 %v5562, %v285
    %v5573 = vmul.f32 %v5565, %v285
    %v5574 = vadd.f32 %v5566, 1e-05
    %v5575 = vadd.f32 %v5567, 1e-05
    %v5576 = vadd.f32 %v5568, 1e-05
    %v5577 = vadd.f32 %v5569, 1e-05
    %v5578 = vadd.f32 %v5570, 1e-05
    %v5579 = vadd.f32 %v5571, 1e-05
    %v5580 = vadd.f32 %v5572, 1e-05
    %v5581 = vadd.f32 %v5573, 1e-05
    %v5582 = vrsqrt.pop %v5574
    %v5583 = vrsqrt.pop %v5575
    %v5584 = vrsqrt.pop %v5576
    %v5585 = vrsqrt.pop %v5577
    %v5586 = vrsqrt.pop %v5578
    %v5587 = vrsqrt.pop %v5579
    %v5588 = vrsqrt.pop %v5580
    %v5589 = vrsqrt.pop %v5581
    %v5590 = vmul.f32 %v5526, %v5582
    %v5591 = vmul.f32 %v5527, %v5583
    %v5592 = vmul.f32 %v5528, %v5584
    %v5593 = vmul.f32 %v5529, %v5585
    %v5594 = vmul.f32 %v5530, %v5586
    %v5595 = vmul.f32 %v5531, %v5587
    %v5596 = vmul.f32 %v5532, %v5588
    %v5597 = vmul.f32 %v5533, %v5589
    %v5598 = vlaneseq
    %v5599 = vshrl.u32 %v5598, 7
    %v5600 = vsub.s32 0, %v5599
    %v5601 = vrot.slane %v5492, %v5600
    %v5602 = vmul.f32 %v5590, %v5601
    %v5603 = vmul.f32 %v5591, %v5601
    %v5604 = vmul.f32 %v5592, %v5601
    %v5605 = vmul.f32 %v5593, %v5601
    %v5606 = vmul.f32 %v5594, %v5601
    %v5607 = vmul.f32 %v5595, %v5601
    %v5608 = vmul.f32 %v5596, %v5601
    %v5609 = vmul.f32 %v5597, %v5601
    %v5610 = vlaneseq
    %v5611 = vshrl.u32 %v5610, 7
    %v5612 = vsub.s32 0, %v5611
    %v5613 = vrot.slane %v5493, %v5612
    %v5614 = vadd.f32 %v5602, %v5613
    %v5615 = vadd.f32 %v5603, %v5613
    %v5616 = vadd.f32 %v5604, %v5613
    %v5617 = vadd.f32 %v5605, %v5613
    %v5618 = vadd.f32 %v5606, %v5613
    %v5619 = vadd.f32 %v5607, %v5613
    %v5620 = vadd.f32 %v5608, %v5613
    %v5621 = vadd.f32 %v5609, %v5613
    %s5622 = scalar_lea.vmem %s13, 32
    %v5623 = vld [vmem:[%s5622] sm:$0xf]
    %v5624 = vld [vmem:[%s5622 + $0x4] sm:$0xf]
    %v5625 = vld [vmem:[%s5622 + $0x8] sm:$0xf]
    %v5626 = vld [vmem:[%s5622 + $0xc] sm:$0xf]
    %v5627 = vld [vmem:[%s14 + $0x2] sm:$0x1]
    %v5628 = vpack.c.bf16 %v5615, %v5614
    %v5629 = vpack.c.bf16 %v5617, %v5616
    %v5630 = vpack.c.bf16 %v5619, %v5618
    %v5631 = vpack.c.bf16 %v5621, %v5620
    %v5632 = vlaneseq
    %v5633 = vshrl.u32 %v5632, 7
    %v5634 = vsub.s32 0, %v5633
    %v5635 = vrot.slane %v5627, %v5634
    %v5640 = vunpack.c.l.b16 %v5623
    %v5641 = vunpack.c.l.b16 %v5624
    %v5642 = vunpack.c.l.b16 %v5625
    %v5643 = vunpack.c.l.b16 %v5626
    %v5644 = vpack.c.b16 %v5641, %v5640
    %v5645 = vpack.c.b16 %v5643, %v5642
    %v5649 = vsel %vm260, %v5628, 0
    %v5652 = vsel %vm260, %v5629, 0
    %v5655 = vsel %vm260, %v5630, 0
    %v5658 = vsel %vm260, %v5631, 0
    %5660 = vmatprep.subr.bf16.mxu0 0
    %5661 = vmatpush1.bf16.msra.mxu0 %v5644
    %5662 = vmatprep.subr.bf16.mxu0 0
    %5663 = vmatpush1.bf16.msra.mxu0 %v5645
    %5664 = vmatprep.subr.bf16.mxu0 0
    %5665 = vmatpush1.bf16.msra.mxu0 0
    %5666 = vmatprep.subr.bf16.mxu0 0
    %5667 = vmatpush1.bf16.msra.mxu0 0
    %5668 = vmatprep.subr.bf16.mxu0 0
    %5669 = vmatpush1.bf16.msra.mxu0 0
    %5670 = vmatprep.subr.bf16.mxu0 0
    %5671 = vmatpush1.bf16.msra.mxu0 0
    %5672 = vmatprep.subr.bf16.mxu0 0
    %5673 = vmatpush1.bf16.msra.mxu0 0
    %5674 = vmatprep.subr.bf16.mxu0 0
    %5675 = vmatpush1.bf16.msra.mxu0 0
    %5676 = vmatprep.subr.bf16.mxu0 0
    %5677 = vmatpush1.bf16.msra.mxu0 0
    %5678 = vmatprep.subr.bf16.mxu0 0
    %5679 = vmatpush1.bf16.msra.mxu0 0
    %5680 = vmatprep.subr.bf16.mxu0 0
    %5681 = vmatpush1.bf16.msra.mxu0 0
    %5682 = vmatprep.subr.bf16.mxu0 0
    %5683 = vmatpush1.bf16.msra.mxu0 0
    %5684 = vmatprep.subr.bf16.mxu0 0
    %5685 = vmatpush1.bf16.msra.mxu0 0
    %5686 = vmatprep.subr.bf16.mxu0 0
    %5687 = vmatpush1.bf16.msra.mxu0 0
    %5688 = vmatprep.subr.bf16.mxu0 0
    %5689 = vmatpush1.bf16.msra.mxu0 0
    %5690 = vmatprep.subr.bf16.mxu0 0
    %5691 = vmatpush1.bf16.msra.mxu0 0
    %5692 = vmatprep.mubr.bf16.mxu0 0
    %5693 = vmatmul.mubr.bf16.gmra.mrb[0].mxu0 %v5649
    %v5694 = vpop.f32.mrb[0].mxu0
    %v5695 = vadd.f32 %v5635, %v5694
    %v5696 = vpop.f32.mrb[0].mxu0
    %v5697 = vpop.f32.mrb[0].mxu0
    %v5698 = vadd.f32 %v5635, %v5697
    %v5699 = vpop.f32.mrb[0].mxu0
    %5700 = vmatprep.mubr.bf16.mxu0 0
    %5701 = vmatmul.mubr.bf16.gmra.mrb[0].mxu0 %v5652
    %v5702 = vpop.f32.mrb[0].mxu0
    %v5703 = vadd.f32 %v5635, %v5702
    %v5704 = vpop.f32.mrb[0].mxu0
    %v5705 = vpop.f32.mrb[0].mxu0
    %v5706 = vadd.f32 %v5635, %v5705
    %v5707 = vpop.f32.mrb[0].mxu0
    %5708 = vmatprep.mubr.bf16.mxu0 0
    %5709 = vmatmul.mubr.bf16.gmra.mrb[0].mxu0 %v5655
    %v5710 = vpop.f32.mrb[0].mxu0
    %v5711 = vadd.f32 %v5635, %v5710
    %v5712 = vpop.f32.mrb[0].mxu0
    %v5713 = vpop.f32.mrb[0].mxu0
    %v5714 = vadd.f32 %v5635, %v5713
    %v5715 = vpop.f32.mrb[0].mxu0
    %5716 = vmatprep.mubr.bf16.mxu0 0
    %5717 = vmatmul.mubr.bf16.gmra.mrb[0].mxu0 %v5658
    %v5718 = vpop.f32.mrb[0].mxu0
    %v5719 = vadd.f32 %v5635, %v5718
    %v5720 = vpop.f32.mrb[0].mxu0
    %v5721 = vpop.f32.mrb[0].mxu0
    %v5722 = vadd.f32 %v5635, %v5721
    %v5723 = vpop.f32.mrb[0].mxu0
    %5724 = vdwg.mxu0
    %v5725 = vmul.f32 %v5695, 0.70710677
    %v5726 = vmul.f32 %v5698, 0.70710677
    %v5727 = vmul.f32 %v5703, 0.70710677
    %v5728 = vmul.f32 %v5706, 0.70710677
    %v5729 = vmul.f32 %v5711, 0.70710677
    %v5730 = vmul.f32 %v5714, 0.70710677
    %v5731 = vmul.f32 %v5719, 0.70710677
    %v5732 = vmul.f32 %v5722, 0.70710677
    %vm5733 = vcmp.lt.f32.partialorder %v5725, 0.0
    %vm5734 = vcmp.lt.f32.partialorder %v5726, 0.0
    %vm5735 = vcmp.lt.f32.partialorder %v5727, 0.0
    %vm5736 = vcmp.lt.f32.partialorder %v5728, 0.0
    %vm5737 = vcmp.lt.f32.partialorder %v5729, 0.0
    %vm5738 = vcmp.lt.f32.partialorder %v5730, 0.0
    %vm5739 = vcmp.lt.f32.partialorder %v5731, 0.0
    %vm5740 = vcmp.lt.f32.partialorder %v5732, 0.0
    %v5741 = vsel %vm5733, -1.0, 1.0
    %v5742 = vsel %vm5734, -1.0, 1.0
    %v5743 = vsel %vm5735, -1.0, 1.0
    %v5744 = vsel %vm5736, -1.0, 1.0
    %v5745 = vsel %vm5737, -1.0, 1.0
    %v5746 = vsel %vm5738, -1.0, 1.0
    %v5747 = vsel %vm5739, -1.0, 1.0
    %v5748 = vsel %vm5740, -1.0, 1.0
    %v5749 = vand.u32 2147483647, %v5725
    %v5750 = vand.u32 2147483647, %v5726
    %v5751 = vand.u32 2147483647, %v5727
    %v5752 = vand.u32 2147483647, %v5728
    %v5753 = vand.u32 2147483647, %v5729
    %v5754 = vand.u32 2147483647, %v5730
    %v5755 = vand.u32 2147483647, %v5731
    %v5756 = vand.u32 2147483647, %v5732
    %v5757 = vmul.f32 %v5749, 0.3275911
    %v5758 = vmul.f32 %v5750, 0.3275911
    %v5759 = vmul.f32 %v5751, 0.3275911
    %v5760 = vmul.f32 %v5752, 0.3275911
    %v5761 = vmul.f32 %v5753, 0.3275911
    %v5762 = vmul.f32 %v5754, 0.3275911
    %v5763 = vmul.f32 %v5755, 0.3275911
    %v5764 = vmul.f32 %v5756, 0.3275911
    %v5765 = vadd.f32 %v5757, 1.0
    %v5766 = vadd.f32 %v5758, 1.0
    %v5767 = vadd.f32 %v5759, 1.0
    %v5768 = vadd.f32 %v5760, 1.0
    %v5769 = vadd.f32 %v5761, 1.0
    %v5770 = vadd.f32 %v5762, 1.0
    %v5771 = vadd.f32 %v5763, 1.0
    %v5772 = vadd.f32 %v5764, 1.0
    %v5773 = vrcp.pop %v5765
    %v5774 = vrcp.pop %v5766
    %v5775 = vrcp.pop %v5767
    %v5776 = vrcp.pop %v5768
    %v5777 = vrcp.pop %v5769
    %v5778 = vrcp.pop %v5770
    %v5779 = vrcp.pop %v5771
    %v5780 = vrcp.pop %v5772
    %v5781 = vmul.f32 %v5773, 1.0614054
    %v5782 = vmul.f32 %v5774, 1.0614054
    %v5783 = vmul.f32 %v5775, 1.0614054
    %v5784 = vmul.f32 %v5776, 1.0614054
    %v5785 = vmul.f32 %v5777, 1.0614054
    %v5786 = vmul.f32 %v5778, 1.0614054
    %v5787 = vmul.f32 %v5779, 1.0614054
    %v5788 = vmul.f32 %v5780, 1.0614054
    %v5789 = vadd.f32 %v5781, -1.4531521
    %v5790 = vadd.f32 %v5782, -1.4531521
    %v5791 = vadd.f32 %v5783, -1.4531521
    %v5792 = vadd.f32 %v5784, -1.4531521
    %v5793 = vadd.f32 %v5785, -1.4531521
    %v5794 = vadd.f32 %v5786, -1.4531521
    %v5795 = vadd.f32 %v5787, -1.4531521
    %v5796 = vadd.f32 %v5788, -1.4531521
    %v5797 = vmul.f32 %v5789, %v5773
    %v5798 = vmul.f32 %v5790, %v5774
    %v5799 = vmul.f32 %v5791, %v5775
    %v5800 = vmul.f32 %v5792, %v5776
    %v5801 = vmul.f32 %v5793, %v5777
    %v5802 = vmul.f32 %v5794, %v5778
    %v5803 = vmul.f32 %v5795, %v5779
    %v5804 = vmul.f32 %v5796, %v5780
    %v5805 = vadd.f32 %v5797, 1.4214138
    %v5806 = vadd.f32 %v5798, 1.4214138
    %v5807 = vadd.f32 %v5799, 1.4214138
    %v5808 = vadd.f32 %v5800, 1.4214138
    %v5809 = vadd.f32 %v5801, 1.4214138
    %v5810 = vadd.f32 %v5802, 1.4214138
    %v5811 = vadd.f32 %v5803, 1.4214138
    %v5812 = vadd.f32 %v5804, 1.4214138
    %v5813 = vmul.f32 %v5805, %v5773
    %v5814 = vmul.f32 %v5806, %v5774
    %v5815 = vmul.f32 %v5807, %v5775
    %v5816 = vmul.f32 %v5808, %v5776
    %v5817 = vmul.f32 %v5809, %v5777
    %v5818 = vmul.f32 %v5810, %v5778
    %v5819 = vmul.f32 %v5811, %v5779
    %v5820 = vmul.f32 %v5812, %v5780
    %v5821 = vadd.f32 %v5813, -0.28449672
    %v5822 = vadd.f32 %v5814, -0.28449672
    %v5823 = vadd.f32 %v5815, -0.28449672
    %v5824 = vadd.f32 %v5816, -0.28449672
    %v5825 = vadd.f32 %v5817, -0.28449672
    %v5826 = vadd.f32 %v5818, -0.28449672
    %v5827 = vadd.f32 %v5819, -0.28449672
    %v5828 = vadd.f32 %v5820, -0.28449672
    %v5829 = vmul.f32 %v5821, %v5773
    %v5830 = vmul.f32 %v5822, %v5774
    %v5831 = vmul.f32 %v5823, %v5775
    %v5832 = vmul.f32 %v5824, %v5776
    %v5833 = vmul.f32 %v5825, %v5777
    %v5834 = vmul.f32 %v5826, %v5778
    %v5835 = vmul.f32 %v5827, %v5779
    %v5836 = vmul.f32 %v5828, %v5780
    %v5837 = vadd.f32 %v5829, 0.2548296
    %v5838 = vadd.f32 %v5830, 0.2548296
    %v5839 = vadd.f32 %v5831, 0.2548296
    %v5840 = vadd.f32 %v5832, 0.2548296
    %v5841 = vadd.f32 %v5833, 0.2548296
    %v5842 = vadd.f32 %v5834, 0.2548296
    %v5843 = vadd.f32 %v5835, 0.2548296
    %v5844 = vadd.f32 %v5836, 0.2548296
    %v5845 = vmul.f32 %v5837, %v5773
    %v5846 = vmul.f32 %v5838, %v5774
    %v5847 = vmul.f32 %v5839, %v5775
    %v5848 = vmul.f32 %v5840, %v5776
    %v5849 = vmul.f32 %v5841, %v5777
    %v5850 = vmul.f32 %v5842, %v5778
    %v5851 = vmul.f32 %v5843, %v5779
    %v5852 = vmul.f32 %v5844, %v5780
    %v5853 = vsub.f32 0.0, %v5749
    %v5854 = vsub.f32 0.0, %v5750
    %v5855 = vsub.f32 0.0, %v5751
    %v5856 = vsub.f32 0.0, %v5752
    %v5857 = vsub.f32 0.0, %v5753
    %v5858 = vsub.f32 0.0, %v5754
    %v5859 = vsub.f32 0.0, %v5755
    %v5860 = vsub.f32 0.0, %v5756
    %v5861 = vmul.f32 %v5853, %v5749
    %v5862 = vmul.f32 %v5854, %v5750
    %v5863 = vmul.f32 %v5855, %v5751
    %v5864 = vmul.f32 %v5856, %v5752
    %v5865 = vmul.f32 %v5857, %v5753
    %v5866 = vmul.f32 %v5858, %v5754
    %v5867 = vmul.f32 %v5859, %v5755
    %v5868 = vmul.f32 %v5860, %v5756
    %v5869 = vmul.f32 %v5861, 1.442695
    %v5870 = vpow.pop %v5869
    %v5871 = vmul.f32 %v5862, 1.442695
    %v5872 = vpow.pop %v5871
    %v5873 = vmul.f32 %v5863, 1.442695
    %v5874 = vpow.pop %v5873
    %v5875 = vmul.f32 %v5864, 1.442695
    %v5876 = vpow.pop %v5875
    %v5877 = vmul.f32 %v5865, 1.442695
    %v5878 = vpow.pop %v5877
    %v5879 = vmul.f32 %v5866, 1.442695
    %v5880 = vpow.pop %v5879
    %v5881 = vmul.f32 %v5867, 1.442695
    %v5882 = vpow.pop %v5881
    %v5883 = vmul.f32 %v5868, 1.442695
    %v5884 = vpow.pop %v5883
    %v5885 = vmul.f32 %v5845, %v5870
    %v5886 = vmul.f32 %v5846, %v5872
    %v5887 = vmul.f32 %v5847, %v5874
    %v5888 = vmul.f32 %v5848, %v5876
    %v5889 = vmul.f32 %v5849, %v5878
    %v5890 = vmul.f32 %v5850, %v5880
    %v5891 = vmul.f32 %v5851, %v5882
    %v5892 = vmul.f32 %v5852, %v5884
    %v5893 = vsub.f32 1.0, %v5885
    %v5894 = vsub.f32 1.0, %v5886
    %v5895 = vsub.f32 1.0, %v5887
    %v5896 = vsub.f32 1.0, %v5888
    %v5897 = vsub.f32 1.0, %v5889
    %v5898 = vsub.f32 1.0, %v5890
    %v5899 = vsub.f32 1.0, %v5891
    %v5900 = vsub.f32 1.0, %v5892
    %v5901 = vmul.f32 %v5741, %v5893
    %v5902 = vmul.f32 %v5742, %v5894
    %v5903 = vmul.f32 %v5743, %v5895
    %v5904 = vmul.f32 %v5744, %v5896
    %v5905 = vmul.f32 %v5745, %v5897
    %v5906 = vmul.f32 %v5746, %v5898
    %v5907 = vmul.f32 %v5747, %v5899
    %v5908 = vmul.f32 %v5748, %v5900
    %v5909 = vmul.f32 %v5695, 0.5
    %v5910 = vmul.f32 %v5698, 0.5
    %v5911 = vmul.f32 %v5703, 0.5
    %v5912 = vmul.f32 %v5706, 0.5
    %v5913 = vmul.f32 %v5711, 0.5
    %v5914 = vmul.f32 %v5714, 0.5
    %v5915 = vmul.f32 %v5719, 0.5
    %v5916 = vmul.f32 %v5722, 0.5
    %v5917 = vadd.f32 %v5901, 1.0
    %v5918 = vadd.f32 %v5902, 1.0
    %v5919 = vadd.f32 %v5903, 1.0
    %v5920 = vadd.f32 %v5904, 1.0
    %v5921 = vadd.f32 %v5905, 1.0
    %v5922 = vadd.f32 %v5906, 1.0
    %v5923 = vadd.f32 %v5907, 1.0
    %v5924 = vadd.f32 %v5908, 1.0
    %v5925 = vmul.f32 %v5909, %v5917
    %v5926 = vmul.f32 %v5910, %v5918
    %v5927 = vmul.f32 %v5911, %v5919
    %v5928 = vmul.f32 %v5912, %v5920
    %v5929 = vmul.f32 %v5913, %v5921
    %v5930 = vmul.f32 %v5914, %v5922
    %v5931 = vmul.f32 %v5915, %v5923
    %v5932 = vmul.f32 %v5916, %v5924
    %s5933 = scalar_lea.vmem %s15, 64
    %v5934 = vld [vmem:[%s5933] sm:$0xf]
    %v5935 = vld [vmem:[%s5933 + $0x4] sm:$0xf]
    %v5936 = vld [vmem:[%s5933 + $0x8] sm:$0xf]
    %v5937 = vld [vmem:[%s5933 + $0xc] sm:$0xf]
    %v5938 = vld [vmem:[%s5933 + $0x10] sm:$0xf]
    %v5939 = vld [vmem:[%s5933 + $0x14] sm:$0xf]
    %v5940 = vld [vmem:[%s5933 + $0x18] sm:$0xf]
    %v5941 = vld [vmem:[%s5933 + $0x1c] sm:$0xf]
    %v5942 = vld [vmem:[%s16 + $0x2] sm:$0x1]
    %v5943 = vpack.c.bf16 %v5926, %v5925
    %v5944 = vpack.c.bf16 %v5928, %v5927
    %v5945 = vpack.c.bf16 %v5930, %v5929
    %v5946 = vpack.c.bf16 %v5932, %v5931
    %v5947 = vlaneseq
    %v5948 = vshrl.u32 %v5947, 7
    %v5949 = vsub.s32 0, %v5948
    %v5950 = vrot.slane %v5942, %v5949
    %v5959 = vunpack.c.l.b16 %v5934
    %v5960 = vunpack.c.l.b16 %v5935
    %v5961 = vunpack.c.l.b16 %v5936
    %v5962 = vunpack.c.l.b16 %v5937
    %v5963 = vunpack.c.l.b16 %v5938
    %v5964 = vunpack.c.l.b16 %v5939
    %v5965 = vunpack.c.l.b16 %v5940
    %v5966 = vunpack.c.l.b16 %v5941
    %v5967 = vpack.c.b16 %v5960, %v5959
    %v5968 = vpack.c.b16 %v5962, %v5961
    %v5969 = vpack.c.b16 %v5964, %v5963
    %v5970 = vpack.c.b16 %v5966, %v5965
    %v5976 = vsel %vm2404, %v5943, 0
    %v5979 = vsel %vm2404, %v5944, 0
    %v5982 = vsel %vm2404, %v5945, 0
    %v5985 = vsel %vm2404, %v5946, 0
    %5987 = vmatprep.subr.bf16.mxu0 0
    %5988 = vmatpush1.bf16.msra.mxu0 %v5967
    %5989 = vmatprep.subr.bf16.mxu0 0
    %5990 = vmatpush1.bf16.msra.mxu0 %v5968
    %5991 = vmatprep.subr.bf16.mxu0 0
    %5992 = vmatpush1.bf16.msra.mxu0 %v5969
    %5993 = vmatprep.subr.bf16.mxu0 0
    %5994 = vmatpush1.bf16.msra.mxu0 %v5970
    %5995 = vmatprep.subr.bf16.mxu0 0
    %5996 = vmatpush1.bf16.msra.mxu0 0
    %5997 = vmatprep.subr.bf16.mxu0 0
    %5998 = vmatpush1.bf16.msra.mxu0 0
    %5999 = vmatprep.subr.bf16.mxu0 0
    %6000 = vmatpush1.bf16.msra.mxu0 0
    %6001 = vmatprep.subr.bf16.mxu0 0
    %6002 = vmatpush1.bf16.msra.mxu0 0
    %6003 = vmatprep.subr.bf16.mxu0 0
    %6004 = vmatpush1.bf16.msra.mxu0 0
    %6005 = vmatprep.subr.bf16.mxu0 0
    %6006 = vmatpush1.bf16.msra.mxu0 0
    %6007 = vmatprep.subr.bf16.mxu0 0
    %6008 = vmatpush1.bf16.msra.mxu0 0
    %6009 = vmatprep.subr.bf16.mxu0 0
    %6010 = vmatpush1.bf16.msra.mxu0 0
    %6011 = vmatprep.subr.bf16.mxu0 0
    %6012 = vmatpush1.bf16.msra.mxu0 0
    %6013 = vmatprep.subr.bf16.mxu0 0
    %6014 = vmatpush1.bf16.msra.mxu0 0
    %6015 = vmatprep.subr.bf16.mxu0 0
    %6016 = vmatpush1.bf16.msra.mxu0 0
    %6017 = vmatprep.subr.bf16.mxu0 0
    %6018 = vmatpush1.bf16.msra.mxu0 0
    %6019 = vmatprep.mubr.bf16.mxu0 0
    %6020 = vmatmul.mubr.bf16.gmra.mrb[0].mxu0 %v5976
    %v6021 = vpop.f32.mrb[0].mxu0
    %v6022 = vadd.f32 %v5950, %v6021
    %v6023 = vpop.f32.mrb[0].mxu0
    %v6024 = vpop.f32.mrb[0].mxu0
    %v6025 = vadd.f32 %v5950, %v6024
    %v6026 = vpop.f32.mrb[0].mxu0
    %6027 = vmatprep.mubr.bf16.mxu0 0
    %6028 = vmatmul.mubr.bf16.gmra.mrb[0].mxu0 %v5979
    %v6029 = vpop.f32.mrb[0].mxu0
    %v6030 = vadd.f32 %v5950, %v6029
    %v6031 = vpop.f32.mrb[0].mxu0
    %v6032 = vpop.f32.mrb[0].mxu0
    %v6033 = vadd.f32 %v5950, %v6032
    %v6034 = vpop.f32.mrb[0].mxu0
    %6035 = vmatprep.mubr.bf16.mxu0 0
    %6036 = vmatmul.mubr.bf16.gmra.mrb[0].mxu0 %v5982
    %v6037 = vpop.f32.mrb[0].mxu0
    %v6038 = vadd.f32 %v5950, %v6037
    %v6039 = vpop.f32.mrb[0].mxu0
    %v6040 = vpop.f32.mrb[0].mxu0
    %v6041 = vadd.f32 %v5950, %v6040
    %v6042 = vpop.f32.mrb[0].mxu0
    %6043 = vmatprep.mubr.bf16.mxu0 0
    %6044 = vmatmul.mubr.bf16.gmra.mrb[0].mxu0 %v5985
    %v6045 = vpop.f32.mrb[0].mxu0
    %v6046 = vadd.f32 %v5950, %v6045
    %v6047 = vpop.f32.mrb[0].mxu0
    %v6048 = vpop.f32.mrb[0].mxu0
    %v6049 = vadd.f32 %v5950, %v6048
    %v6050 = vpop.f32.mrb[0].mxu0
    %6051 = vdwg.mxu0
    %v6052 = vadd.f32 %v6022, %v5484
    %v6053 = vadd.f32 %v6025, %v5485
    %v6054 = vadd.f32 %v6030, %v5486
    %v6055 = vadd.f32 %v6033, %v5487
    %v6056 = vadd.f32 %v6038, %v5488
    %v6057 = vadd.f32 %v6041, %v5489
    %v6058 = vadd.f32 %v6046, %v5490
    %v6059 = vadd.f32 %v6049, %v5491
    %v6060 = vld [vmem:[%s7 + $0x3] sm:$0x1]
    %v6061 = vld [vmem:[%s8 + $0x3] sm:$0x1]
    %v6062 = vsel %vm260, %v6052, 0.0
    %6063 = vadd.xlane.f32.xlu0 %v6062
    %v6064 = vpop.xlane.xlu0 %6063
    %v6065 = vsel %vm260, %v6053, 0.0
    %6066 = vadd.xlane.f32.xlu0 %v6065
    %v6067 = vpop.xlane.xlu0 %6066
    %v6068 = vsel %vm260, %v6054, 0.0
    %6069 = vadd.xlane.f32.xlu0 %v6068
    %v6070 = vpop.xlane.xlu0 %6069
    %v6071 = vsel %vm260, %v6055, 0.0
    %6072 = vadd.xlane.f32.xlu0 %v6071
    %v6073 = vpop.xlane.xlu0 %6072
    %v6074 = vsel %vm260, %v6056, 0.0
    %6075 = vadd.xlane.f32.xlu0 %v6074
    %v6076 = vpop.xlane.xlu0 %6075
    %v6077 = vsel %vm260, %v6057, 0.0
    %6078 = vadd.xlane.f32.xlu0 %v6077
    %v6079 = vpop.xlane.xlu0 %6078
    %v6080 = vsel %vm260, %v6058, 0.0
    %6081 = vadd.xlane.f32.xlu0 %v6080
    %v6082 = vpop.xlane.xlu0 %6081
    %v6083 = vsel %vm260, %v6059, 0.0
    %6084 = vadd.xlane.f32.xlu0 %v6083
    %v6085 = vpop.xlane.xlu0 %6084
    %v6086 = vmul.f32 %v6064, %v285
    %v6087 = vmul.f32 %v6067, %v285
    %v6088 = vmul.f32 %v6070, %v285
    %v6089 = vmul.f32 %v6073, %v285
    %v6090 = vmul.f32 %v6076, %v285
    %v6091 = vmul.f32 %v6079, %v285
    %v6092 = vmul.f32 %v6082, %v285
    %v6093 = vmul.f32 %v6085, %v285
    %v6094 = vsub.f32 %v6052, %v6086
    %v6095 = vsub.f32 %v6053, %v6087
    %v6096 = vsub.f32 %v6054, %v6088
    %v6097 = vsub.f32 %v6055, %v6089
    %v6098 = vsub.f32 %v6056, %v6090
    %v6099 = vsub.f32 %v6057, %v6091
    %v6100 = vsub.f32 %v6058, %v6092
    %v6101 = vsub.f32 %v6059, %v6093
    %v6102 = vmul.f32 %v6094, %v6094
    %v6103 = vmul.f32 %v6095, %v6095
    %v6104 = vmul.f32 %v6096, %v6096
    %v6105 = vmul.f32 %v6097, %v6097
    %v6106 = vmul.f32 %v6098, %v6098
    %v6107 = vmul.f32 %v6099, %v6099
    %v6108 = vmul.f32 %v6100, %v6100
    %v6109 = vmul.f32 %v6101, %v6101
    %v6110 = vsel %vm260, %v6102, 0.0
    %6111 = vadd.xlane.f32.xlu0 %v6110
    %v6112 = vpop.xlane.xlu0 %6111
    %v6113 = vsel %vm260, %v6103, 0.0
    %6114 = vadd.xlane.f32.xlu0 %v6113
    %v6115 = vpop.xlane.xlu0 %6114
    %v6116 = vsel %vm260, %v6104, 0.0
    %6117 = vadd.xlane.f32.xlu0 %v6116
    %v6118 = vpop.xlane.xlu0 %6117
    %v6119 = vsel %vm260, %v6105, 0.0
    %6120 = vadd.xlane.f32.xlu0 %v6119
    %v6121 = vpop.xlane.xlu0 %6120
    %v6122 = vsel %vm260, %v6106, 0.0
    %6123 = vadd.xlane.f32.xlu0 %v6122
    %v6124 = vpop.xlane.xlu0 %6123
    %v6125 = vsel %vm260, %v6107, 0.0
    %6126 = vadd.xlane.f32.xlu0 %v6125
    %v6127 = vpop.xlane.xlu0 %6126
    %v6128 = vsel %vm260, %v6108, 0.0
    %6129 = vadd.xlane.f32.xlu0 %v6128
    %v6130 = vpop.xlane.xlu0 %6129
    %v6131 = vsel %vm260, %v6109, 0.0
    %6132 = vadd.xlane.f32.xlu0 %v6131
    %v6133 = vpop.xlane.xlu0 %6132
    %v6134 = vmul.f32 %v6112, %v285
    %v6135 = vmul.f32 %v6115, %v285
    %v6136 = vmul.f32 %v6118, %v285
    %v6137 = vmul.f32 %v6121, %v285
    %v6138 = vmul.f32 %v6124, %v285
    %v6139 = vmul.f32 %v6127, %v285
    %v6140 = vmul.f32 %v6130, %v285
    %v6141 = vmul.f32 %v6133, %v285
    %v6142 = vadd.f32 %v6134, 1e-05
    %v6143 = vadd.f32 %v6135, 1e-05
    %v6144 = vadd.f32 %v6136, 1e-05
    %v6145 = vadd.f32 %v6137, 1e-05
    %v6146 = vadd.f32 %v6138, 1e-05
    %v6147 = vadd.f32 %v6139, 1e-05
    %v6148 = vadd.f32 %v6140, 1e-05
    %v6149 = vadd.f32 %v6141, 1e-05
    %v6150 = vrsqrt.pop %v6142
    %v6151 = vrsqrt.pop %v6143
    %v6152 = vrsqrt.pop %v6144
    %v6153 = vrsqrt.pop %v6145
    %v6154 = vrsqrt.pop %v6146
    %v6155 = vrsqrt.pop %v6147
    %v6156 = vrsqrt.pop %v6148
    %v6157 = vrsqrt.pop %v6149
    %v6158 = vmul.f32 %v6094, %v6150
    %v6159 = vmul.f32 %v6095, %v6151
    %v6160 = vmul.f32 %v6096, %v6152
    %v6161 = vmul.f32 %v6097, %v6153
    %v6162 = vmul.f32 %v6098, %v6154
    %v6163 = vmul.f32 %v6099, %v6155
    %v6164 = vmul.f32 %v6100, %v6156
    %v6165 = vmul.f32 %v6101, %v6157
    %v6166 = vlaneseq
    %v6167 = vshrl.u32 %v6166, 7
    %v6168 = vsub.s32 0, %v6167
    %v6169 = vrot.slane %v6060, %v6168
    %v6170 = vmul.f32 %v6158, %v6169
    %v6171 = vmul.f32 %v6159, %v6169
    %v6172 = vmul.f32 %v6160, %v6169
    %v6173 = vmul.f32 %v6161, %v6169
    %v6174 = vmul.f32 %v6162, %v6169
    %v6175 = vmul.f32 %v6163, %v6169
    %v6176 = vmul.f32 %v6164, %v6169
    %v6177 = vmul.f32 %v6165, %v6169
    %v6178 = vlaneseq
    %v6179 = vshrl.u32 %v6178, 7
    %v6180 = vsub.s32 0, %v6179
    %v6181 = vrot.slane %v6061, %v6180
    %v6182 = vadd.f32 %v6170, %v6181
    %v6183 = vadd.f32 %v6171, %v6181
    %v6184 = vadd.f32 %v6172, %v6181
    %v6185 = vadd.f32 %v6173, %v6181
    %v6186 = vadd.f32 %v6174, %v6181
    %v6187 = vadd.f32 %v6175, %v6181
    %v6188 = vadd.f32 %v6176, %v6181
    %v6189 = vadd.f32 %v6177, %v6181
    %s6190 = scalar_lea.vmem %s9, 48
    %v6191 = vld [vmem:[%s6190] sm:$0xf]
    %v6192 = vld [vmem:[%s6190 + $0x4] sm:$0xf]
    %v6193 = vld [vmem:[%s6190 + $0x8] sm:$0xf]
    %v6194 = vld [vmem:[%s6190 + $0xc] sm:$0xf]
    %v6195 = vpack.c.bf16 %v6183, %v6182
    %v6196 = vpack.c.bf16 %v6185, %v6184
    %v6197 = vpack.c.bf16 %v6187, %v6186
    %v6198 = vpack.c.bf16 %v6189, %v6188
    %v6203 = vunpack.c.l.b16 %v6191
    %v6204 = vunpack.c.l.b16 %v6192
    %v6205 = vunpack.c.l.b16 %v6193
    %v6206 = vunpack.c.l.b16 %v6194
    %v6207 = vpack.c.b16 %v6204, %v6203
    %v6208 = vpack.c.b16 %v6206, %v6205
    %v6212 = vsel %vm260, %v6195, 0
    %v6215 = vsel %vm260, %v6196, 0
    %v6218 = vsel %vm260, %v6197, 0
    %v6221 = vsel %vm260, %v6198, 0
    %6223 = vmatprep.subr.bf16.mxu0 0
    %6224 = vmatpush1.bf16.msra.mxu0 %v6207
    %6225 = vmatprep.subr.bf16.mxu0 0
    %6226 = vmatpush1.bf16.msra.mxu0 %v6208
    %6227 = vmatprep.subr.bf16.mxu0 0
    %6228 = vmatpush1.bf16.msra.mxu0 0
    %6229 = vmatprep.subr.bf16.mxu0 0
    %6230 = vmatpush1.bf16.msra.mxu0 0
    %6231 = vmatprep.subr.bf16.mxu0 0
    %6232 = vmatpush1.bf16.msra.mxu0 0
    %6233 = vmatprep.subr.bf16.mxu0 0
    %6234 = vmatpush1.bf16.msra.mxu0 0
    %6235 = vmatprep.subr.bf16.mxu0 0
    %6236 = vmatpush1.bf16.msra.mxu0 0
    %6237 = vmatprep.subr.bf16.mxu0 0
    %6238 = vmatpush1.bf16.msra.mxu0 0
    %6239 = vmatprep.subr.bf16.mxu0 0
    %6240 = vmatpush1.bf16.msra.mxu0 0
    %6241 = vmatprep.subr.bf16.mxu0 0
    %6242 = vmatpush1.bf16.msra.mxu0 0
    %6243 = vmatprep.subr.bf16.mxu0 0
    %6244 = vmatpush1.bf16.msra.mxu0 0
    %6245 = vmatprep.subr.bf16.mxu0 0
    %6246 = vmatpush1.bf16.msra.mxu0 0
    %6247 = vmatprep.subr.bf16.mxu0 0
    %6248 = vmatpush1.bf16.msra.mxu0 0
    %6249 = vmatprep.subr.bf16.mxu0 0
    %6250 = vmatpush1.bf16.msra.mxu0 0
    %6251 = vmatprep.subr.bf16.mxu0 0
    %6252 = vmatpush1.bf16.msra.mxu0 0
    %6253 = vmatprep.subr.bf16.mxu0 0
    %6254 = vmatpush1.bf16.msra.mxu0 0
    %6255 = vmatprep.mubr.bf16.mxu0 0
    %6256 = vmatmul.mubr.bf16.gmra.mrb[0].mxu0 %v6212
    %v6257 = vpop.f32.mrb[0].mxu0
    %v6258 = vadd.f32 0.0, %v6257
    %v6259 = vpop.f32.mrb[0].mxu0
    %v6260 = vpop.f32.mrb[0].mxu0
    %v6261 = vadd.f32 0.0, %v6260
    %v6262 = vpop.f32.mrb[0].mxu0
    %6263 = vmatprep.mubr.bf16.mxu0 0
    %6264 = vmatmul.mubr.bf16.gmra.mrb[0].mxu0 %v6215
    %v6265 = vpop.f32.mrb[0].mxu0
    %v6266 = vadd.f32 0.0, %v6265
    %v6267 = vpop.f32.mrb[0].mxu0
    %v6268 = vpop.f32.mrb[0].mxu0
    %v6269 = vadd.f32 0.0, %v6268
    %v6270 = vpop.f32.mrb[0].mxu0
    %6271 = vmatprep.mubr.bf16.mxu0 0
    %6272 = vmatmul.mubr.bf16.gmra.mrb[0].mxu0 %v6218
    %v6273 = vpop.f32.mrb[0].mxu0
    %v6274 = vadd.f32 0.0, %v6273
    %v6275 = vpop.f32.mrb[0].mxu0
    %v6276 = vpop.f32.mrb[0].mxu0
    %v6277 = vadd.f32 0.0, %v6276
    %v6278 = vpop.f32.mrb[0].mxu0
    %6279 = vmatprep.mubr.bf16.mxu0 0
    %6280 = vmatmul.mubr.bf16.gmra.mrb[0].mxu0 %v6221
    %v6281 = vpop.f32.mrb[0].mxu0
    %v6282 = vadd.f32 0.0, %v6281
    %v6283 = vpop.f32.mrb[0].mxu0
    %v6284 = vpop.f32.mrb[0].mxu0
    %v6285 = vadd.f32 0.0, %v6284
    %v6286 = vpop.f32.mrb[0].mxu0
    %6287 = vdwg.mxu0
    %v6288 = vpack.c.bf16 %v6261, %v6258
    %v6289 = vpack.c.bf16 %v6269, %v6266
    %v6290 = vpack.c.bf16 %v6277, %v6274
    %v6291 = vpack.c.bf16 %v6285, %v6282
    %6293 = vrot.lane.b32.xlu0 %v6288, 96
    %v6294 = vpop.permute.xlu0 %6293
    %v6296 = vsel %vm940, %v6288, 0
    %v6299 = vsel %vm940, %v6294, 0
    %6301 = vmatprep.subr.bf16.mxu0 0
    %6302 = vmatpush1.bf16.xpose.msra.mxu0 %v6299
    %6303 = vmatprep.subr.bf16.mxu0 0
    %6304 = vmatpush1.bf16.xpose.msra.mxu0 0
    %6305 = vmatprep.subr.bf16.mxu0 0
    %6306 = vmatpush1.bf16.xpose.msra.mxu0 0
    %6307 = vmatprep.subr.bf16.mxu0 0
    %6308 = vmatpush1.bf16.xpose.msra.mxu0 0
    %6309 = vmatprep.subr.bf16.mxu0 0
    %6310 = vmatpush1.bf16.xpose.msra.mxu0 0
    %6311 = vmatprep.subr.bf16.mxu0 0
    %6312 = vmatpush1.bf16.xpose.msra.mxu0 0
    %6313 = vmatprep.subr.bf16.mxu0 0
    %6314 = vmatpush1.bf16.xpose.msra.mxu0 0
    %6315 = vmatprep.subr.bf16.mxu0 0
    %6316 = vmatpush1.bf16.xpose.msra.mxu0 0
    %6317 = vmatprep.subr.bf16.mxu0 0
    %6318 = vmatpush1.bf16.xpose.msra.mxu0 0
    %6319 = vmatprep.subr.bf16.mxu0 0
    %6320 = vmatpush1.bf16.xpose.msra.mxu0 0
    %6321 = vmatprep.subr.bf16.mxu0 0
    %6322 = vmatpush1.bf16.xpose.msra.mxu0 0
    %6323 = vmatprep.subr.bf16.mxu0 0
    %6324 = vmatpush1.bf16.xpose.msra.mxu0 0
    %6325 = vmatprep.subr.bf16.mxu0 0
    %6326 = vmatpush1.bf16.xpose.msra.mxu0 0
    %6327 = vmatprep.subr.bf16.mxu0 0
    %6328 = vmatpush1.bf16.xpose.msra.mxu0 0
    %6329 = vmatprep.subr.bf16.mxu0 0
    %6330 = vmatpush1.bf16.xpose.msra.mxu0 0
    %6331 = vmatprep.subr.bf16.mxu0 0
    %6332 = vmatpush1.bf16.xpose.msra.mxu0 0
    %6333 = vmatprep.mubr.bf16.mxu0 0
    %6334 = vmatmul.mubr.bf16.gmra.mrb[0].mxu0 %v6296
    %v6335 = vpop.f32.mrb[0].mxu0
    %v6336 = vadd.f32 0.0, %v6335
    %v6337 = vpop.f32.mrb[0].mxu0
    %v6338 = vpop.f32.mrb[0].mxu0
    %v6339 = vadd.f32 0.0, %v6338
    %v6340 = vpop.f32.mrb[0].mxu0
    %6341 = vdwg.mxu0
    %6343 = vrot.lane.b32.xlu0 %v6289, 96
    %v6344 = vpop.permute.xlu0 %6343
    %v6346 = vsel %vm940, %v6289, 0
    %v6349 = vsel %vm940, %v6344, 0
    %6351 = vmatprep.subr.bf16.mxu0 0
    %6352 = vmatpush1.bf16.xpose.msra.mxu0 %v6349
    %6353 = vmatprep.subr.bf16.mxu0 0
    %6354 = vmatpush1.bf16.xpose.msra.mxu0 0
    %6355 = vmatprep.subr.bf16.mxu0 0
    %6356 = vmatpush1.bf16.xpose.msra.mxu0 0
    %6357 = vmatprep.subr.bf16.mxu0 0
    %6358 = vmatpush1.bf16.xpose.msra.mxu0 0
    %6359 = vmatprep.subr.bf16.mxu0 0
    %6360 = vmatpush1.bf16.xpose.msra.mxu0 0
    %6361 = vmatprep.subr.bf16.mxu0 0
    %6362 = vmatpush1.bf16.xpose.msra.mxu0 0
    %6363 = vmatprep.subr.bf16.mxu0 0
    %6364 = vmatpush1.bf16.xpose.msra.mxu0 0
    %6365 = vmatprep.subr.bf16.mxu0 0
    %6366 = vmatpush1.bf16.xpose.msra.mxu0 0
    %6367 = vmatprep.subr.bf16.mxu0 0
    %6368 = vmatpush1.bf16.xpose.msra.mxu0 0
    %6369 = vmatprep.subr.bf16.mxu0 0
    %6370 = vmatpush1.bf16.xpose.msra.mxu0 0
    %6371 = vmatprep.subr.bf16.mxu0 0
    %6372 = vmatpush1.bf16.xpose.msra.mxu0 0
    %6373 = vmatprep.subr.bf16.mxu0 0
    %6374 = vmatpush1.bf16.xpose.msra.mxu0 0
    %6375 = vmatprep.subr.bf16.mxu0 0
    %6376 = vmatpush1.bf16.xpose.msra.mxu0 0
    %6377 = vmatprep.subr.bf16.mxu0 0
    %6378 = vmatpush1.bf16.xpose.msra.mxu0 0
    %6379 = vmatprep.subr.bf16.mxu0 0
    %6380 = vmatpush1.bf16.xpose.msra.mxu0 0
    %6381 = vmatprep.subr.bf16.mxu0 0
    %6382 = vmatpush1.bf16.xpose.msra.mxu0 0
    %6383 = vmatprep.mubr.bf16.mxu0 0
    %6384 = vmatmul.mubr.bf16.gmra.mrb[0].mxu0 %v6346
    %v6385 = vpop.f32.mrb[0].mxu0
    %v6386 = vadd.f32 0.0, %v6385
    %v6387 = vpop.f32.mrb[0].mxu0
    %v6388 = vpop.f32.mrb[0].mxu0
    %v6389 = vadd.f32 0.0, %v6388
    %v6390 = vpop.f32.mrb[0].mxu0
    %6391 = vdwg.mxu0
    %6393 = vrot.lane.b32.xlu0 %v6290, 96
    %v6394 = vpop.permute.xlu0 %6393
    %v6396 = vsel %vm940, %v6290, 0
    %v6399 = vsel %vm940, %v6394, 0
    %6401 = vmatprep.subr.bf16.mxu0 0
    %6402 = vmatpush1.bf16.xpose.msra.mxu0 %v6399
    %6403 = vmatprep.subr.bf16.mxu0 0
    %6404 = vmatpush1.bf16.xpose.msra.mxu0 0
    %6405 = vmatprep.subr.bf16.mxu0 0
    %6406 = vmatpush1.bf16.xpose.msra.mxu0 0
    %6407 = vmatprep.subr.bf16.mxu0 0
    %6408 = vmatpush1.bf16.xpose.msra.mxu0 0
    %6409 = vmatprep.subr.bf16.mxu0 0
    %6410 = vmatpush1.bf16.xpose.msra.mxu0 0
    %6411 = vmatprep.subr.bf16.mxu0 0
    %6412 = vmatpush1.bf16.xpose.msra.mxu0 0
    %6413 = vmatprep.subr.bf16.mxu0 0
    %6414 = vmatpush1.bf16.xpose.msra.mxu0 0
    %6415 = vmatprep.subr.bf16.mxu0 0
    %6416 = vmatpush1.bf16.xpose.msra.mxu0 0
    %6417 = vmatprep.subr.bf16.mxu0 0
    %6418 = vmatpush1.bf16.xpose.msra.mxu0 0
    %6419 = vmatprep.subr.bf16.mxu0 0
    %6420 = vmatpush1.bf16.xpose.msra.mxu0 0
    %6421 = vmatprep.subr.bf16.mxu0 0
    %6422 = vmatpush1.bf16.xpose.msra.mxu0 0
    %6423 = vmatprep.subr.bf16.mxu0 0
    %6424 = vmatpush1.bf16.xpose.msra.mxu0 0
    %6425 = vmatprep.subr.bf16.mxu0 0
    %6426 = vmatpush1.bf16.xpose.msra.mxu0 0
    %6427 = vmatprep.subr.bf16.mxu0 0
    %6428 = vmatpush1.bf16.xpose.msra.mxu0 0
    %6429 = vmatprep.subr.bf16.mxu0 0
    %6430 = vmatpush1.bf16.xpose.msra.mxu0 0
    %6431 = vmatprep.subr.bf16.mxu0 0
    %6432 = vmatpush1.bf16.xpose.msra.mxu0 0
    %6433 = vmatprep.mubr.bf16.mxu0 0
    %6434 = vmatmul.mubr.bf16.gmra.mrb[0].mxu0 %v6396
    %v6435 = vpop.f32.mrb[0].mxu0
    %v6436 = vadd.f32 0.0, %v6435
    %v6437 = vpop.f32.mrb[0].mxu0
    %v6438 = vpop.f32.mrb[0].mxu0
    %v6439 = vadd.f32 0.0, %v6438
    %v6440 = vpop.f32.mrb[0].mxu0
    %6441 = vdwg.mxu0
    %6443 = vrot.lane.b32.xlu0 %v6291, 96
    %v6444 = vpop.permute.xlu0 %6443
    %v6446 = vsel %vm940, %v6291, 0
    %v6449 = vsel %vm940, %v6444, 0
    %6451 = vmatprep.subr.bf16.mxu0 0
    %6452 = vmatpush1.bf16.xpose.msra.mxu0 %v6449
    %6453 = vmatprep.subr.bf16.mxu0 0
    %6454 = vmatpush1.bf16.xpose.msra.mxu0 0
    %6455 = vmatprep.subr.bf16.mxu0 0
    %6456 = vmatpush1.bf16.xpose.msra.mxu0 0
    %6457 = vmatprep.subr.bf16.mxu0 0
    %6458 = vmatpush1.bf16.xpose.msra.mxu0 0
    %6459 = vmatprep.subr.bf16.mxu0 0
    %6460 = vmatpush1.bf16.xpose.msra.mxu0 0
    %6461 = vmatprep.subr.bf16.mxu0 0
    %6462 = vmatpush1.bf16.xpose.msra.mxu0 0
    %6463 = vmatprep.subr.bf16.mxu0 0
    %6464 = vmatpush1.bf16.xpose.msra.mxu0 0
    %6465 = vmatprep.subr.bf16.mxu0 0
    %6466 = vmatpush1.bf16.xpose.msra.mxu0 0
    %6467 = vmatprep.subr.bf16.mxu0 0
    %6468 = vmatpush1.bf16.xpose.msra.mxu0 0
    %6469 = vmatprep.subr.bf16.mxu0 0
    %6470 = vmatpush1.bf16.xpose.msra.mxu0 0
    %6471 = vmatprep.subr.bf16.mxu0 0
    %6472 = vmatpush1.bf16.xpose.msra.mxu0 0
    %6473 = vmatprep.subr.bf16.mxu0 0
    %6474 = vmatpush1.bf16.xpose.msra.mxu0 0
    %6475 = vmatprep.subr.bf16.mxu0 0
    %6476 = vmatpush1.bf16.xpose.msra.mxu0 0
    %6477 = vmatprep.subr.bf16.mxu0 0
    %6478 = vmatpush1.bf16.xpose.msra.mxu0 0
    %6479 = vmatprep.subr.bf16.mxu0 0
    %6480 = vmatpush1.bf16.xpose.msra.mxu0 0
    %6481 = vmatprep.subr.bf16.mxu0 0
    %6482 = vmatpush1.bf16.xpose.msra.mxu0 0
    %6483 = vmatprep.mubr.bf16.mxu0 0
    %6484 = vmatmul.mubr.bf16.gmra.mrb[0].mxu0 %v6446
    %v6485 = vpop.f32.mrb[0].mxu0
    %v6486 = vadd.f32 0.0, %v6485
    %v6487 = vpop.f32.mrb[0].mxu0
    %v6488 = vpop.f32.mrb[0].mxu0
    %v6489 = vadd.f32 0.0, %v6488
    %v6490 = vpop.f32.mrb[0].mxu0
    %6491 = vdwg.mxu0
    %v6492 = vsel %vm940, %v6336, -inf
    %6493 = vmax.xlane.f32.xlu0 %v6492
    %v6494 = vpop.xlane.xlu0 %6493
    %v6495 = vsel %vm940, %v6339, -inf
    %6496 = vmax.xlane.f32.xlu0 %v6495
    %v6497 = vpop.xlane.xlu0 %6496
    %v6498 = vsel %vm940, %v6386, -inf
    %6499 = vmax.xlane.f32.xlu0 %v6498
    %v6500 = vpop.xlane.xlu0 %6499
    %v6501 = vsel %vm940, %v6389, -inf
    %6502 = vmax.xlane.f32.xlu0 %v6501
    %v6503 = vpop.xlane.xlu0 %6502
    %v6504 = vsel %vm940, %v6436, -inf
    %6505 = vmax.xlane.f32.xlu0 %v6504
    %v6506 = vpop.xlane.xlu0 %6505
    %v6507 = vsel %vm940, %v6439, -inf
    %6508 = vmax.xlane.f32.xlu0 %v6507
    %v6509 = vpop.xlane.xlu0 %6508
    %v6510 = vsel %vm940, %v6486, -inf
    %6511 = vmax.xlane.f32.xlu0 %v6510
    %v6512 = vpop.xlane.xlu0 %6511
    %v6513 = vsel %vm940, %v6489, -inf
    %6514 = vmax.xlane.f32.xlu0 %v6513
    %v6515 = vpop.xlane.xlu0 %6514
    %v6516 = vsub.f32 %v6336, %v6494
    %v6517 = vsub.f32 %v6339, %v6497
    %v6518 = vsub.f32 %v6386, %v6500
    %v6519 = vsub.f32 %v6389, %v6503
    %v6520 = vsub.f32 %v6436, %v6506
    %v6521 = vsub.f32 %v6439, %v6509
    %v6522 = vsub.f32 %v6486, %v6512
    %v6523 = vsub.f32 %v6489, %v6515
    %v6524 = vmul.f32 %v6516, 1.442695
    %v6525 = vpow.pop %v6524
    %v6526 = vmul.f32 %v6517, 1.442695
    %v6527 = vpow.pop %v6526
    %v6528 = vmul.f32 %v6518, 1.442695
    %v6529 = vpow.pop %v6528
    %v6530 = vmul.f32 %v6519, 1.442695
    %v6531 = vpow.pop %v6530
    %v6532 = vmul.f32 %v6520, 1.442695
    %v6533 = vpow.pop %v6532
    %v6534 = vmul.f32 %v6521, 1.442695
    %v6535 = vpow.pop %v6534
    %v6536 = vmul.f32 %v6522, 1.442695
    %v6537 = vpow.pop %v6536
    %v6538 = vmul.f32 %v6523, 1.442695
    %v6539 = vpow.pop %v6538
    %v6540 = vsel %vm940, %v6525, 0.0
    %6541 = vadd.xlane.f32.xlu0 %v6540
    %v6542 = vpop.xlane.xlu0 %6541
    %v6543 = vsel %vm940, %v6527, 0.0
    %6544 = vadd.xlane.f32.xlu0 %v6543
    %v6545 = vpop.xlane.xlu0 %6544
    %v6546 = vsel %vm940, %v6529, 0.0
    %6547 = vadd.xlane.f32.xlu0 %v6546
    %v6548 = vpop.xlane.xlu0 %6547
    %v6549 = vsel %vm940, %v6531, 0.0
    %6550 = vadd.xlane.f32.xlu0 %v6549
    %v6551 = vpop.xlane.xlu0 %6550
    %v6552 = vsel %vm940, %v6533, 0.0
    %6553 = vadd.xlane.f32.xlu0 %v6552
    %v6554 = vpop.xlane.xlu0 %6553
    %v6555 = vsel %vm940, %v6535, 0.0
    %6556 = vadd.xlane.f32.xlu0 %v6555
    %v6557 = vpop.xlane.xlu0 %6556
    %v6558 = vsel %vm940, %v6537, 0.0
    %6559 = vadd.xlane.f32.xlu0 %v6558
    %v6560 = vpop.xlane.xlu0 %6559
    %v6561 = vsel %vm940, %v6539, 0.0
    %6562 = vadd.xlane.f32.xlu0 %v6561
    %v6563 = vpop.xlane.xlu0 %6562
    %v6564 = vrcp.pop %v6542
    %v6565 = vrcp.pop %v6545
    %v6566 = vrcp.pop %v6548
    %v6567 = vrcp.pop %v6551
    %v6568 = vrcp.pop %v6554
    %v6569 = vrcp.pop %v6557
    %v6570 = vrcp.pop %v6560
    %v6571 = vrcp.pop %v6563
    %v6572 = vmul.f32 %v6525, %v6564
    %v6573 = vmul.f32 %v6527, %v6565
    %v6574 = vmul.f32 %v6529, %v6566
    %v6575 = vmul.f32 %v6531, %v6567
    %v6576 = vmul.f32 %v6533, %v6568
    %v6577 = vmul.f32 %v6535, %v6569
    %v6578 = vmul.f32 %v6537, %v6570
    %v6579 = vmul.f32 %v6539, %v6571
    %v6580 = vpack.c.bf16 %v6573, %v6572
    %v6581 = vpack.c.bf16 %v6575, %v6574
    %v6582 = vpack.c.bf16 %v6577, %v6576
    %v6583 = vpack.c.bf16 %v6579, %v6578
    %6584 = vrot.lane.b32.xlu0 %v6288, 112
    %v6585 = vpop.permute.xlu0 %6584
    %6586 = vrot.lane.b32.xlu0 %v6288, 80
    %v6587 = vpop.permute.xlu0 %6586
    %v6589 = vsel %vm940, %v6585, 0
    %v6592 = vsel %vm940, %v6587, 0
    %6594 = vmatprep.subr.bf16.mxu0 0
    %6595 = vmatpush1.bf16.xpose.msra.mxu0 %v6592
    %6596 = vmatprep.subr.bf16.mxu0 0
    %6597 = vmatpush1.bf16.xpose.msra.mxu0 0
    %6598 = vmatprep.subr.bf16.mxu0 0
    %6599 = vmatpush1.bf16.xpose.msra.mxu0 0
    %6600 = vmatprep.subr.bf16.mxu0 0
    %6601 = vmatpush1.bf16.xpose.msra.mxu0 0
    %6602 = vmatprep.subr.bf16.mxu0 0
    %6603 = vmatpush1.bf16.xpose.msra.mxu0 0
    %6604 = vmatprep.subr.bf16.mxu0 0
    %6605 = vmatpush1.bf16.xpose.msra.mxu0 0
    %6606 = vmatprep.subr.bf16.mxu0 0
    %6607 = vmatpush1.bf16.xpose.msra.mxu0 0
    %6608 = vmatprep.subr.bf16.mxu0 0
    %6609 = vmatpush1.bf16.xpose.msra.mxu0 0
    %6610 = vmatprep.subr.bf16.mxu0 0
    %6611 = vmatpush1.bf16.xpose.msra.mxu0 0
    %6612 = vmatprep.subr.bf16.mxu0 0
    %6613 = vmatpush1.bf16.xpose.msra.mxu0 0
    %6614 = vmatprep.subr.bf16.mxu0 0
    %6615 = vmatpush1.bf16.xpose.msra.mxu0 0
    %6616 = vmatprep.subr.bf16.mxu0 0
    %6617 = vmatpush1.bf16.xpose.msra.mxu0 0
    %6618 = vmatprep.subr.bf16.mxu0 0
    %6619 = vmatpush1.bf16.xpose.msra.mxu0 0
    %6620 = vmatprep.subr.bf16.mxu0 0
    %6621 = vmatpush1.bf16.xpose.msra.mxu0 0
    %6622 = vmatprep.subr.bf16.mxu0 0
    %6623 = vmatpush1.bf16.xpose.msra.mxu0 0
    %6624 = vmatprep.subr.bf16.mxu0 0
    %6625 = vmatpush1.bf16.xpose.msra.mxu0 0
    %6626 = vmatprep.mubr.bf16.mxu0 0
    %6627 = vmatmul.mubr.bf16.gmra.mrb[0].mxu0 %v6589
    %v6628 = vpop.f32.mrb[0].mxu0
    %v6629 = vadd.f32 0.0, %v6628
    %v6630 = vpop.f32.mrb[0].mxu0
    %v6631 = vpop.f32.mrb[0].mxu0
    %v6632 = vadd.f32 0.0, %v6631
    %v6633 = vpop.f32.mrb[0].mxu0
    %6634 = vdwg.mxu0
    %6635 = vrot.lane.b32.xlu0 %v6289, 112
    %v6636 = vpop.permute.xlu0 %6635
    %6637 = vrot.lane.b32.xlu0 %v6289, 80
    %v6638 = vpop.permute.xlu0 %6637
    %v6640 = vsel %vm940, %v6636, 0
    %v6643 = vsel %vm940, %v6638, 0
    %6645 = vmatprep.subr.bf16.mxu0 0
    %6646 = vmatpush1.bf16.xpose.msra.mxu0 %v6643
    %6647 = vmatprep.subr.bf16.mxu0 0
    %6648 = vmatpush1.bf16.xpose.msra.mxu0 0
    %6649 = vmatprep.subr.bf16.mxu0 0
    %6650 = vmatpush1.bf16.xpose.msra.mxu0 0
    %6651 = vmatprep.subr.bf16.mxu0 0
    %6652 = vmatpush1.bf16.xpose.msra.mxu0 0
    %6653 = vmatprep.subr.bf16.mxu0 0
    %6654 = vmatpush1.bf16.xpose.msra.mxu0 0
    %6655 = vmatprep.subr.bf16.mxu0 0
    %6656 = vmatpush1.bf16.xpose.msra.mxu0 0
    %6657 = vmatprep.subr.bf16.mxu0 0
    %6658 = vmatpush1.bf16.xpose.msra.mxu0 0
    %6659 = vmatprep.subr.bf16.mxu0 0
    %6660 = vmatpush1.bf16.xpose.msra.mxu0 0
    %6661 = vmatprep.subr.bf16.mxu0 0
    %6662 = vmatpush1.bf16.xpose.msra.mxu0 0
    %6663 = vmatprep.subr.bf16.mxu0 0
    %6664 = vmatpush1.bf16.xpose.msra.mxu0 0
    %6665 = vmatprep.subr.bf16.mxu0 0
    %6666 = vmatpush1.bf16.xpose.msra.mxu0 0
    %6667 = vmatprep.subr.bf16.mxu0 0
    %6668 = vmatpush1.bf16.xpose.msra.mxu0 0
    %6669 = vmatprep.subr.bf16.mxu0 0
    %6670 = vmatpush1.bf16.xpose.msra.mxu0 0
    %6671 = vmatprep.subr.bf16.mxu0 0
    %6672 = vmatpush1.bf16.xpose.msra.mxu0 0
    %6673 = vmatprep.subr.bf16.mxu0 0
    %6674 = vmatpush1.bf16.xpose.msra.mxu0 0
    %6675 = vmatprep.subr.bf16.mxu0 0
    %6676 = vmatpush1.bf16.xpose.msra.mxu0 0
    %6677 = vmatprep.mubr.bf16.mxu0 0
    %6678 = vmatmul.mubr.bf16.gmra.mrb[0].mxu0 %v6640
    %v6679 = vpop.f32.mrb[0].mxu0
    %v6680 = vadd.f32 0.0, %v6679
    %v6681 = vpop.f32.mrb[0].mxu0
    %v6682 = vpop.f32.mrb[0].mxu0
    %v6683 = vadd.f32 0.0, %v6682
    %v6684 = vpop.f32.mrb[0].mxu0
    %6685 = vdwg.mxu0
    %6686 = vrot.lane.b32.xlu0 %v6290, 112
    %v6687 = vpop.permute.xlu0 %6686
    %6688 = vrot.lane.b32.xlu0 %v6290, 80
    %v6689 = vpop.permute.xlu0 %6688
    %v6691 = vsel %vm940, %v6687, 0
    %v6694 = vsel %vm940, %v6689, 0
    %6696 = vmatprep.subr.bf16.mxu0 0
    %6697 = vmatpush1.bf16.xpose.msra.mxu0 %v6694
    %6698 = vmatprep.subr.bf16.mxu0 0
    %6699 = vmatpush1.bf16.xpose.msra.mxu0 0
    %6700 = vmatprep.subr.bf16.mxu0 0
    %6701 = vmatpush1.bf16.xpose.msra.mxu0 0
    %6702 = vmatprep.subr.bf16.mxu0 0
    %6703 = vmatpush1.bf16.xpose.msra.mxu0 0
    %6704 = vmatprep.subr.bf16.mxu0 0
    %6705 = vmatpush1.bf16.xpose.msra.mxu0 0
    %6706 = vmatprep.subr.bf16.mxu0 0
    %6707 = vmatpush1.bf16.xpose.msra.mxu0 0
    %6708 = vmatprep.subr.bf16.mxu0 0
    %6709 = vmatpush1.bf16.xpose.msra.mxu0 0
    %6710 = vmatprep.subr.bf16.mxu0 0
    %6711 = vmatpush1.bf16.xpose.msra.mxu0 0
    %6712 = vmatprep.subr.bf16.mxu0 0
    %6713 = vmatpush1.bf16.xpose.msra.mxu0 0
    %6714 = vmatprep.subr.bf16.mxu0 0
    %6715 = vmatpush1.bf16.xpose.msra.mxu0 0
    %6716 = vmatprep.subr.bf16.mxu0 0
    %6717 = vmatpush1.bf16.xpose.msra.mxu0 0
    %6718 = vmatprep.subr.bf16.mxu0 0
    %6719 = vmatpush1.bf16.xpose.msra.mxu0 0
    %6720 = vmatprep.subr.bf16.mxu0 0
    %6721 = vmatpush1.bf16.xpose.msra.mxu0 0
    %6722 = vmatprep.subr.bf16.mxu0 0
    %6723 = vmatpush1.bf16.xpose.msra.mxu0 0
    %6724 = vmatprep.subr.bf16.mxu0 0
    %6725 = vmatpush1.bf16.xpose.msra.mxu0 0
    %6726 = vmatprep.subr.bf16.mxu0 0
    %6727 = vmatpush1.bf16.xpose.msra.mxu0 0
    %6728 = vmatprep.mubr.bf16.mxu0 0
    %6729 = vmatmul.mubr.bf16.gmra.mrb[0].mxu0 %v6691
    %v6730 = vpop.f32.mrb[0].mxu0
    %v6731 = vadd.f32 0.0, %v6730
    %v6732 = vpop.f32.mrb[0].mxu0
    %v6733 = vpop.f32.mrb[0].mxu0
    %v6734 = vadd.f32 0.0, %v6733
    %v6735 = vpop.f32.mrb[0].mxu0
    %6736 = vdwg.mxu0
    %6737 = vrot.lane.b32.xlu0 %v6291, 112
    %v6738 = vpop.permute.xlu0 %6737
    %6739 = vrot.lane.b32.xlu0 %v6291, 80
    %v6740 = vpop.permute.xlu0 %6739
    %v6742 = vsel %vm940, %v6738, 0
    %v6745 = vsel %vm940, %v6740, 0
    %6747 = vmatprep.subr.bf16.mxu0 0
    %6748 = vmatpush1.bf16.xpose.msra.mxu0 %v6745
    %6749 = vmatprep.subr.bf16.mxu0 0
    %6750 = vmatpush1.bf16.xpose.msra.mxu0 0
    %6751 = vmatprep.subr.bf16.mxu0 0
    %6752 = vmatpush1.bf16.xpose.msra.mxu0 0
    %6753 = vmatprep.subr.bf16.mxu0 0
    %6754 = vmatpush1.bf16.xpose.msra.mxu0 0
    %6755 = vmatprep.subr.bf16.mxu0 0
    %6756 = vmatpush1.bf16.xpose.msra.mxu0 0
    %6757 = vmatprep.subr.bf16.mxu0 0
    %6758 = vmatpush1.bf16.xpose.msra.mxu0 0
    %6759 = vmatprep.subr.bf16.mxu0 0
    %6760 = vmatpush1.bf16.xpose.msra.mxu0 0
    %6761 = vmatprep.subr.bf16.mxu0 0
    %6762 = vmatpush1.bf16.xpose.msra.mxu0 0
    %6763 = vmatprep.subr.bf16.mxu0 0
    %6764 = vmatpush1.bf16.xpose.msra.mxu0 0
    %6765 = vmatprep.subr.bf16.mxu0 0
    %6766 = vmatpush1.bf16.xpose.msra.mxu0 0
    %6767 = vmatprep.subr.bf16.mxu0 0
    %6768 = vmatpush1.bf16.xpose.msra.mxu0 0
    %6769 = vmatprep.subr.bf16.mxu0 0
    %6770 = vmatpush1.bf16.xpose.msra.mxu0 0
    %6771 = vmatprep.subr.bf16.mxu0 0
    %6772 = vmatpush1.bf16.xpose.msra.mxu0 0
    %6773 = vmatprep.subr.bf16.mxu0 0
    %6774 = vmatpush1.bf16.xpose.msra.mxu0 0
    %6775 = vmatprep.subr.bf16.mxu0 0
    %6776 = vmatpush1.bf16.xpose.msra.mxu0 0
    %6777 = vmatprep.subr.bf16.mxu0 0
    %6778 = vmatpush1.bf16.xpose.msra.mxu0 0
    %6779 = vmatprep.mubr.bf16.mxu0 0
    %6780 = vmatmul.mubr.bf16.gmra.mrb[0].mxu0 %v6742
    %v6781 = vpop.f32.mrb[0].mxu0
    %v6782 = vadd.f32 0.0, %v6781
    %v6783 = vpop.f32.mrb[0].mxu0
    %v6784 = vpop.f32.mrb[0].mxu0
    %v6785 = vadd.f32 0.0, %v6784
    %v6786 = vpop.f32.mrb[0].mxu0
    %6787 = vdwg.mxu0
    %v6788 = vsel %vm940, %v6629, -inf
    %6789 = vmax.xlane.f32.xlu0 %v6788
    %v6790 = vpop.xlane.xlu0 %6789
    %v6791 = vsel %vm940, %v6632, -inf
    %6792 = vmax.xlane.f32.xlu0 %v6791
    %v6793 = vpop.xlane.xlu0 %6792
    %v6794 = vsel %vm940, %v6680, -inf
    %6795 = vmax.xlane.f32.xlu0 %v6794
    %v6796 = vpop.xlane.xlu0 %6795
    %v6797 = vsel %vm940, %v6683, -inf
    %6798 = vmax.xlane.f32.xlu0 %v6797
    %v6799 = vpop.xlane.xlu0 %6798
    %v6800 = vsel %vm940, %v6731, -inf
    %6801 = vmax.xlane.f32.xlu0 %v6800
    %v6802 = vpop.xlane.xlu0 %6801
    %v6803 = vsel %vm940, %v6734, -inf
    %6804 = vmax.xlane.f32.xlu0 %v6803
    %v6805 = vpop.xlane.xlu0 %6804
    %v6806 = vsel %vm940, %v6782, -inf
    %6807 = vmax.xlane.f32.xlu0 %v6806
    %v6808 = vpop.xlane.xlu0 %6807
    %v6809 = vsel %vm940, %v6785, -inf
    %6810 = vmax.xlane.f32.xlu0 %v6809
    %v6811 = vpop.xlane.xlu0 %6810
    %v6812 = vsub.f32 %v6629, %v6790
    %v6813 = vsub.f32 %v6632, %v6793
    %v6814 = vsub.f32 %v6680, %v6796
    %v6815 = vsub.f32 %v6683, %v6799
    %v6816 = vsub.f32 %v6731, %v6802
    %v6817 = vsub.f32 %v6734, %v6805
    %v6818 = vsub.f32 %v6782, %v6808
    %v6819 = vsub.f32 %v6785, %v6811
    %v6820 = vmul.f32 %v6812, 1.442695
    %v6821 = vpow.pop %v6820
    %v6822 = vmul.f32 %v6813, 1.442695
    %v6823 = vpow.pop %v6822
    %v6824 = vmul.f32 %v6814, 1.442695
    %v6825 = vpow.pop %v6824
    %v6826 = vmul.f32 %v6815, 1.442695
    %v6827 = vpow.pop %v6826
    %v6828 = vmul.f32 %v6816, 1.442695
    %v6829 = vpow.pop %v6828
    %v6830 = vmul.f32 %v6817, 1.442695
    %v6831 = vpow.pop %v6830
    %v6832 = vmul.f32 %v6818, 1.442695
    %v6833 = vpow.pop %v6832
    %v6834 = vmul.f32 %v6819, 1.442695
    %v6835 = vpow.pop %v6834
    %v6836 = vsel %vm940, %v6821, 0.0
    %6837 = vadd.xlane.f32.xlu0 %v6836
    %v6838 = vpop.xlane.xlu0 %6837
    %v6839 = vsel %vm940, %v6823, 0.0
    %6840 = vadd.xlane.f32.xlu0 %v6839
    %v6841 = vpop.xlane.xlu0 %6840
    %v6842 = vsel %vm940, %v6825, 0.0
    %6843 = vadd.xlane.f32.xlu0 %v6842
    %v6844 = vpop.xlane.xlu0 %6843
    %v6845 = vsel %vm940, %v6827, 0.0
    %6846 = vadd.xlane.f32.xlu0 %v6845
    %v6847 = vpop.xlane.xlu0 %6846
    %v6848 = vsel %vm940, %v6829, 0.0
    %6849 = vadd.xlane.f32.xlu0 %v6848
    %v6850 = vpop.xlane.xlu0 %6849
    %v6851 = vsel %vm940, %v6831, 0.0
    %6852 = vadd.xlane.f32.xlu0 %v6851
    %v6853 = vpop.xlane.xlu0 %6852
    %v6854 = vsel %vm940, %v6833, 0.0
    %6855 = vadd.xlane.f32.xlu0 %v6854
    %v6856 = vpop.xlane.xlu0 %6855
    %v6857 = vsel %vm940, %v6835, 0.0
    %6858 = vadd.xlane.f32.xlu0 %v6857
    %v6859 = vpop.xlane.xlu0 %6858
    %v6860 = vrcp.pop %v6838
    %v6861 = vrcp.pop %v6841
    %v6862 = vrcp.pop %v6844
    %v6863 = vrcp.pop %v6847
    %v6864 = vrcp.pop %v6850
    %v6865 = vrcp.pop %v6853
    %v6866 = vrcp.pop %v6856
    %v6867 = vrcp.pop %v6859
    %v6868 = vmul.f32 %v6821, %v6860
    %v6869 = vmul.f32 %v6823, %v6861
    %v6870 = vmul.f32 %v6825, %v6862
    %v6871 = vmul.f32 %v6827, %v6863
    %v6872 = vmul.f32 %v6829, %v6864
    %v6873 = vmul.f32 %v6831, %v6865
    %v6874 = vmul.f32 %v6833, %v6866
    %v6875 = vmul.f32 %v6835, %v6867
    %v6876 = vpack.c.bf16 %v6869, %v6868
    %v6877 = vpack.c.bf16 %v6871, %v6870
    %v6878 = vpack.c.bf16 %v6873, %v6872
    %v6879 = vpack.c.bf16 %v6875, %v6874
    %6880 = vrot.lane.b32.xlu0 %v6288, 32
    %v6881 = vpop.permute.xlu0 %6880
    %v6884 = vsel %vm940, %v6876, 0
    %6886 = vmatprep.subr.bf16.mxu0 0
    %6887 = vmatpush1.bf16.msra.mxu0 %v6881
    %6888 = vmatprep.subr.bf16.mxu0 0
    %6889 = vmatpush1.bf16.msra.mxu0 0
    %6890 = vmatprep.subr.bf16.mxu0 0
    %6891 = vmatpush1.bf16.msra.mxu0 0
    %6892 = vmatprep.subr.bf16.mxu0 0
    %6893 = vmatpush1.bf16.msra.mxu0 0
    %6894 = vmatprep.subr.bf16.mxu0 0
    %6895 = vmatpush1.bf16.msra.mxu0 0
    %6896 = vmatprep.subr.bf16.mxu0 0
    %6897 = vmatpush1.bf16.msra.mxu0 0
    %6898 = vmatprep.subr.bf16.mxu0 0
    %6899 = vmatpush1.bf16.msra.mxu0 0
    %6900 = vmatprep.subr.bf16.mxu0 0
    %6901 = vmatpush1.bf16.msra.mxu0 0
    %6902 = vmatprep.subr.bf16.mxu0 0
    %6903 = vmatpush1.bf16.msra.mxu0 0
    %6904 = vmatprep.subr.bf16.mxu0 0
    %6905 = vmatpush1.bf16.msra.mxu0 0
    %6906 = vmatprep.subr.bf16.mxu0 0
    %6907 = vmatpush1.bf16.msra.mxu0 0
    %6908 = vmatprep.subr.bf16.mxu0 0
    %6909 = vmatpush1.bf16.msra.mxu0 0
    %6910 = vmatprep.subr.bf16.mxu0 0
    %6911 = vmatpush1.bf16.msra.mxu0 0
    %6912 = vmatprep.subr.bf16.mxu0 0
    %6913 = vmatpush1.bf16.msra.mxu0 0
    %6914 = vmatprep.subr.bf16.mxu0 0
    %6915 = vmatpush1.bf16.msra.mxu0 0
    %6916 = vmatprep.subr.bf16.mxu0 0
    %6917 = vmatpush1.bf16.msra.mxu0 0
    %6918 = vmatprep.mubr.bf16.mxu0 0
    %6919 = vmatmul.mubr.bf16.gmra.mrb[0].mxu0 %v6884
    %v6920 = vpop.f32.mrb[0].mxu0
    %v6921 = vadd.f32 0.0, %v6920
    %v6922 = vpop.f32.mrb[0].mxu0
    %v6923 = vpop.f32.mrb[0].mxu0
    %v6924 = vadd.f32 0.0, %v6923
    %v6925 = vpop.f32.mrb[0].mxu0
    %6926 = vdwg.mxu0
    %6927 = vrot.lane.b32.xlu0 %v6289, 32
    %v6928 = vpop.permute.xlu0 %6927
    %v6931 = vsel %vm940, %v6877, 0
    %6933 = vmatprep.subr.bf16.mxu0 0
    %6934 = vmatpush1.bf16.msra.mxu0 %v6928
    %6935 = vmatprep.subr.bf16.mxu0 0
    %6936 = vmatpush1.bf16.msra.mxu0 0
    %6937 = vmatprep.subr.bf16.mxu0 0
    %6938 = vmatpush1.bf16.msra.mxu0 0
    %6939 = vmatprep.subr.bf16.mxu0 0
    %6940 = vmatpush1.bf16.msra.mxu0 0
    %6941 = vmatprep.subr.bf16.mxu0 0
    %6942 = vmatpush1.bf16.msra.mxu0 0
    %6943 = vmatprep.subr.bf16.mxu0 0
    %6944 = vmatpush1.bf16.msra.mxu0 0
    %6945 = vmatprep.subr.bf16.mxu0 0
    %6946 = vmatpush1.bf16.msra.mxu0 0
    %6947 = vmatprep.subr.bf16.mxu0 0
    %6948 = vmatpush1.bf16.msra.mxu0 0
    %6949 = vmatprep.subr.bf16.mxu0 0
    %6950 = vmatpush1.bf16.msra.mxu0 0
    %6951 = vmatprep.subr.bf16.mxu0 0
    %6952 = vmatpush1.bf16.msra.mxu0 0
    %6953 = vmatprep.subr.bf16.mxu0 0
    %6954 = vmatpush1.bf16.msra.mxu0 0
    %6955 = vmatprep.subr.bf16.mxu0 0
    %6956 = vmatpush1.bf16.msra.mxu0 0
    %6957 = vmatprep.subr.bf16.mxu0 0
    %6958 = vmatpush1.bf16.msra.mxu0 0
    %6959 = vmatprep.subr.bf16.mxu0 0
    %6960 = vmatpush1.bf16.msra.mxu0 0
    %6961 = vmatprep.subr.bf16.mxu0 0
    %6962 = vmatpush1.bf16.msra.mxu0 0
    %6963 = vmatprep.subr.bf16.mxu0 0
    %6964 = vmatpush1.bf16.msra.mxu0 0
    %6965 = vmatprep.mubr.bf16.mxu0 0
    %6966 = vmatmul.mubr.bf16.gmra.mrb[0].mxu0 %v6931
    %v6967 = vpop.f32.mrb[0].mxu0
    %v6968 = vadd.f32 0.0, %v6967
    %v6969 = vpop.f32.mrb[0].mxu0
    %v6970 = vpop.f32.mrb[0].mxu0
    %v6971 = vadd.f32 0.0, %v6970
    %v6972 = vpop.f32.mrb[0].mxu0
    %6973 = vdwg.mxu0
    %6974 = vrot.lane.b32.xlu0 %v6290, 32
    %v6975 = vpop.permute.xlu0 %6974
    %v6978 = vsel %vm940, %v6878, 0
    %6980 = vmatprep.subr.bf16.mxu0 0
    %6981 = vmatpush1.bf16.msra.mxu0 %v6975
    %6982 = vmatprep.subr.bf16.mxu0 0
    %6983 = vmatpush1.bf16.msra.mxu0 0
    %6984 = vmatprep.subr.bf16.mxu0 0
    %6985 = vmatpush1.bf16.msra.mxu0 0
    %6986 = vmatprep.subr.bf16.mxu0 0
    %6987 = vmatpush1.bf16.msra.mxu0 0
    %6988 = vmatprep.subr.bf16.mxu0 0
    %6989 = vmatpush1.bf16.msra.mxu0 0
    %6990 = vmatprep.subr.bf16.mxu0 0
    %6991 = vmatpush1.bf16.msra.mxu0 0
    %6992 = vmatprep.subr.bf16.mxu0 0
    %6993 = vmatpush1.bf16.msra.mxu0 0
    %6994 = vmatprep.subr.bf16.mxu0 0
    %6995 = vmatpush1.bf16.msra.mxu0 0
    %6996 = vmatprep.subr.bf16.mxu0 0
    %6997 = vmatpush1.bf16.msra.mxu0 0
    %6998 = vmatprep.subr.bf16.mxu0 0
    %6999 = vmatpush1.bf16.msra.mxu0 0
    %7000 = vmatprep.subr.bf16.mxu0 0
    %7001 = vmatpush1.bf16.msra.mxu0 0
    %7002 = vmatprep.subr.bf16.mxu0 0
    %7003 = vmatpush1.bf16.msra.mxu0 0
    %7004 = vmatprep.subr.bf16.mxu0 0
    %7005 = vmatpush1.bf16.msra.mxu0 0
    %7006 = vmatprep.subr.bf16.mxu0 0
    %7007 = vmatpush1.bf16.msra.mxu0 0
    %7008 = vmatprep.subr.bf16.mxu0 0
    %7009 = vmatpush1.bf16.msra.mxu0 0
    %7010 = vmatprep.subr.bf16.mxu0 0
    %7011 = vmatpush1.bf16.msra.mxu0 0
    %7012 = vmatprep.mubr.bf16.mxu0 0
    %7013 = vmatmul.mubr.bf16.gmra.mrb[0].mxu0 %v6978
    %v7014 = vpop.f32.mrb[0].mxu0
    %v7015 = vadd.f32 0.0, %v7014
    %v7016 = vpop.f32.mrb[0].mxu0
    %v7017 = vpop.f32.mrb[0].mxu0
    %v7018 = vadd.f32 0.0, %v7017
    %v7019 = vpop.f32.mrb[0].mxu0
    %7020 = vdwg.mxu0
    %7021 = vrot.lane.b32.xlu0 %v6291, 32
    %v7022 = vpop.permute.xlu0 %7021
    %v7025 = vsel %vm940, %v6879, 0
    %7027 = vmatprep.subr.bf16.mxu0 0
    %7028 = vmatpush1.bf16.msra.mxu0 %v7022
    %7029 = vmatprep.subr.bf16.mxu0 0
    %7030 = vmatpush1.bf16.msra.mxu0 0
    %7031 = vmatprep.subr.bf16.mxu0 0
    %7032 = vmatpush1.bf16.msra.mxu0 0
    %7033 = vmatprep.subr.bf16.mxu0 0
    %7034 = vmatpush1.bf16.msra.mxu0 0
    %7035 = vmatprep.subr.bf16.mxu0 0
    %7036 = vmatpush1.bf16.msra.mxu0 0
    %7037 = vmatprep.subr.bf16.mxu0 0
    %7038 = vmatpush1.bf16.msra.mxu0 0
    %7039 = vmatprep.subr.bf16.mxu0 0
    %7040 = vmatpush1.bf16.msra.mxu0 0
    %7041 = vmatprep.subr.bf16.mxu0 0
    %7042 = vmatpush1.bf16.msra.mxu0 0
    %7043 = vmatprep.subr.bf16.mxu0 0
    %7044 = vmatpush1.bf16.msra.mxu0 0
    %7045 = vmatprep.subr.bf16.mxu0 0
    %7046 = vmatpush1.bf16.msra.mxu0 0
    %7047 = vmatprep.subr.bf16.mxu0 0
    %7048 = vmatpush1.bf16.msra.mxu0 0
    %7049 = vmatprep.subr.bf16.mxu0 0
    %7050 = vmatpush1.bf16.msra.mxu0 0
    %7051 = vmatprep.subr.bf16.mxu0 0
    %7052 = vmatpush1.bf16.msra.mxu0 0
    %7053 = vmatprep.subr.bf16.mxu0 0
    %7054 = vmatpush1.bf16.msra.mxu0 0
    %7055 = vmatprep.subr.bf16.mxu0 0
    %7056 = vmatpush1.bf16.msra.mxu0 0
    %7057 = vmatprep.subr.bf16.mxu0 0
    %7058 = vmatpush1.bf16.msra.mxu0 0
    %7059 = vmatprep.mubr.bf16.mxu0 0
    %7060 = vmatmul.mubr.bf16.gmra.mrb[0].mxu0 %v7025
    %v7061 = vpop.f32.mrb[0].mxu0
    %v7062 = vadd.f32 0.0, %v7061
    %v7063 = vpop.f32.mrb[0].mxu0
    %v7064 = vpop.f32.mrb[0].mxu0
    %v7065 = vadd.f32 0.0, %v7064
    %v7066 = vpop.f32.mrb[0].mxu0
    %7067 = vdwg.mxu0
    %7068 = vrot.lane.b32.xlu0 %v6288, 64
    %v7069 = vpop.permute.xlu0 %7068
    %v7072 = vsel %vm940, %v6580, 0
    %7074 = vmatprep.subr.bf16.mxu0 0
    %7075 = vmatpush1.bf16.msra.mxu0 %v7069
    %7076 = vmatprep.subr.bf16.mxu0 0
    %7077 = vmatpush1.bf16.msra.mxu0 0
    %7078 = vmatprep.subr.bf16.mxu0 0
    %7079 = vmatpush1.bf16.msra.mxu0 0
    %7080 = vmatprep.subr.bf16.mxu0 0
    %7081 = vmatpush1.bf16.msra.mxu0 0
    %7082 = vmatprep.subr.bf16.mxu0 0
    %7083 = vmatpush1.bf16.msra.mxu0 0
    %7084 = vmatprep.subr.bf16.mxu0 0
    %7085 = vmatpush1.bf16.msra.mxu0 0
    %7086 = vmatprep.subr.bf16.mxu0 0
    %7087 = vmatpush1.bf16.msra.mxu0 0
    %7088 = vmatprep.subr.bf16.mxu0 0
    %7089 = vmatpush1.bf16.msra.mxu0 0
    %7090 = vmatprep.subr.bf16.mxu0 0
    %7091 = vmatpush1.bf16.msra.mxu0 0
    %7092 = vmatprep.subr.bf16.mxu0 0
    %7093 = vmatpush1.bf16.msra.mxu0 0
    %7094 = vmatprep.subr.bf16.mxu0 0
    %7095 = vmatpush1.bf16.msra.mxu0 0
    %7096 = vmatprep.subr.bf16.mxu0 0
    %7097 = vmatpush1.bf16.msra.mxu0 0
    %7098 = vmatprep.subr.bf16.mxu0 0
    %7099 = vmatpush1.bf16.msra.mxu0 0
    %7100 = vmatprep.subr.bf16.mxu0 0
    %7101 = vmatpush1.bf16.msra.mxu0 0
    %7102 = vmatprep.subr.bf16.mxu0 0
    %7103 = vmatpush1.bf16.msra.mxu0 0
    %7104 = vmatprep.subr.bf16.mxu0 0
    %7105 = vmatpush1.bf16.msra.mxu0 0
    %7106 = vmatprep.mubr.bf16.mxu0 0
    %7107 = vmatmul.mubr.bf16.gmra.mrb[0].mxu0 %v7072
    %v7108 = vpop.f32.mrb[0].mxu0
    %v7109 = vadd.f32 %v6921, %v7108
    %v7110 = vpop.f32.mrb[0].mxu0
    %v7111 = vpop.f32.mrb[0].mxu0
    %v7112 = vadd.f32 %v6924, %v7111
    %v7113 = vpop.f32.mrb[0].mxu0
    %7114 = vdwg.mxu0
    %7115 = vrot.lane.b32.xlu0 %v6289, 64
    %v7116 = vpop.permute.xlu0 %7115
    %v7119 = vsel %vm940, %v6581, 0
    %7121 = vmatprep.subr.bf16.mxu0 0
    %7122 = vmatpush1.bf16.msra.mxu0 %v7116
    %7123 = vmatprep.subr.bf16.mxu0 0
    %7124 = vmatpush1.bf16.msra.mxu0 0
    %7125 = vmatprep.subr.bf16.mxu0 0
    %7126 = vmatpush1.bf16.msra.mxu0 0
    %7127 = vmatprep.subr.bf16.mxu0 0
    %7128 = vmatpush1.bf16.msra.mxu0 0
    %7129 = vmatprep.subr.bf16.mxu0 0
    %7130 = vmatpush1.bf16.msra.mxu0 0
    %7131 = vmatprep.subr.bf16.mxu0 0
    %7132 = vmatpush1.bf16.msra.mxu0 0
    %7133 = vmatprep.subr.bf16.mxu0 0
    %7134 = vmatpush1.bf16.msra.mxu0 0
    %7135 = vmatprep.subr.bf16.mxu0 0
    %7136 = vmatpush1.bf16.msra.mxu0 0
    %7137 = vmatprep.subr.bf16.mxu0 0
    %7138 = vmatpush1.bf16.msra.mxu0 0
    %7139 = vmatprep.subr.bf16.mxu0 0
    %7140 = vmatpush1.bf16.msra.mxu0 0
    %7141 = vmatprep.subr.bf16.mxu0 0
    %7142 = vmatpush1.bf16.msra.mxu0 0
    %7143 = vmatprep.subr.bf16.mxu0 0
    %7144 = vmatpush1.bf16.msra.mxu0 0
    %7145 = vmatprep.subr.bf16.mxu0 0
    %7146 = vmatpush1.bf16.msra.mxu0 0
    %7147 = vmatprep.subr.bf16.mxu0 0
    %7148 = vmatpush1.bf16.msra.mxu0 0
    %7149 = vmatprep.subr.bf16.mxu0 0
    %7150 = vmatpush1.bf16.msra.mxu0 0
    %7151 = vmatprep.subr.bf16.mxu0 0
    %7152 = vmatpush1.bf16.msra.mxu0 0
    %7153 = vmatprep.mubr.bf16.mxu0 0
    %7154 = vmatmul.mubr.bf16.gmra.mrb[0].mxu0 %v7119
    %v7155 = vpop.f32.mrb[0].mxu0
    %v7156 = vadd.f32 %v6968, %v7155
    %v7157 = vpop.f32.mrb[0].mxu0
    %v7158 = vpop.f32.mrb[0].mxu0
    %v7159 = vadd.f32 %v6971, %v7158
    %v7160 = vpop.f32.mrb[0].mxu0
    %7161 = vdwg.mxu0
    %7162 = vrot.lane.b32.xlu0 %v6290, 64
    %v7163 = vpop.permute.xlu0 %7162
    %v7166 = vsel %vm940, %v6582, 0
    %7168 = vmatprep.subr.bf16.mxu0 0
    %7169 = vmatpush1.bf16.msra.mxu0 %v7163
    %7170 = vmatprep.subr.bf16.mxu0 0
    %7171 = vmatpush1.bf16.msra.mxu0 0
    %7172 = vmatprep.subr.bf16.mxu0 0
    %7173 = vmatpush1.bf16.msra.mxu0 0
    %7174 = vmatprep.subr.bf16.mxu0 0
    %7175 = vmatpush1.bf16.msra.mxu0 0
    %7176 = vmatprep.subr.bf16.mxu0 0
    %7177 = vmatpush1.bf16.msra.mxu0 0
    %7178 = vmatprep.subr.bf16.mxu0 0
    %7179 = vmatpush1.bf16.msra.mxu0 0
    %7180 = vmatprep.subr.bf16.mxu0 0
    %7181 = vmatpush1.bf16.msra.mxu0 0
    %7182 = vmatprep.subr.bf16.mxu0 0
    %7183 = vmatpush1.bf16.msra.mxu0 0
    %7184 = vmatprep.subr.bf16.mxu0 0
    %7185 = vmatpush1.bf16.msra.mxu0 0
    %7186 = vmatprep.subr.bf16.mxu0 0
    %7187 = vmatpush1.bf16.msra.mxu0 0
    %7188 = vmatprep.subr.bf16.mxu0 0
    %7189 = vmatpush1.bf16.msra.mxu0 0
    %7190 = vmatprep.subr.bf16.mxu0 0
    %7191 = vmatpush1.bf16.msra.mxu0 0
    %7192 = vmatprep.subr.bf16.mxu0 0
    %7193 = vmatpush1.bf16.msra.mxu0 0
    %7194 = vmatprep.subr.bf16.mxu0 0
    %7195 = vmatpush1.bf16.msra.mxu0 0
    %7196 = vmatprep.subr.bf16.mxu0 0
    %7197 = vmatpush1.bf16.msra.mxu0 0
    %7198 = vmatprep.subr.bf16.mxu0 0
    %7199 = vmatpush1.bf16.msra.mxu0 0
    %7200 = vmatprep.mubr.bf16.mxu0 0
    %7201 = vmatmul.mubr.bf16.gmra.mrb[0].mxu0 %v7166
    %v7202 = vpop.f32.mrb[0].mxu0
    %v7203 = vadd.f32 %v7015, %v7202
    %v7204 = vpop.f32.mrb[0].mxu0
    %v7205 = vpop.f32.mrb[0].mxu0
    %v7206 = vadd.f32 %v7018, %v7205
    %v7207 = vpop.f32.mrb[0].mxu0
    %7208 = vdwg.mxu0
    %7209 = vrot.lane.b32.xlu0 %v6291, 64
    %v7210 = vpop.permute.xlu0 %7209
    %v7213 = vsel %vm940, %v6583, 0
    %7215 = vmatprep.subr.bf16.mxu0 0
    %7216 = vmatpush1.bf16.msra.mxu0 %v7210
    %7217 = vmatprep.subr.bf16.mxu0 0
    %7218 = vmatpush1.bf16.msra.mxu0 0
    %7219 = vmatprep.subr.bf16.mxu0 0
    %7220 = vmatpush1.bf16.msra.mxu0 0
    %7221 = vmatprep.subr.bf16.mxu0 0
    %7222 = vmatpush1.bf16.msra.mxu0 0
    %7223 = vmatprep.subr.bf16.mxu0 0
    %7224 = vmatpush1.bf16.msra.mxu0 0
    %7225 = vmatprep.subr.bf16.mxu0 0
    %7226 = vmatpush1.bf16.msra.mxu0 0
    %7227 = vmatprep.subr.bf16.mxu0 0
    %7228 = vmatpush1.bf16.msra.mxu0 0
    %7229 = vmatprep.subr.bf16.mxu0 0
    %7230 = vmatpush1.bf16.msra.mxu0 0
    %7231 = vmatprep.subr.bf16.mxu0 0
    %7232 = vmatpush1.bf16.msra.mxu0 0
    %7233 = vmatprep.subr.bf16.mxu0 0
    %7234 = vmatpush1.bf16.msra.mxu0 0
    %7235 = vmatprep.subr.bf16.mxu0 0
    %7236 = vmatpush1.bf16.msra.mxu0 0
    %7237 = vmatprep.subr.bf16.mxu0 0
    %7238 = vmatpush1.bf16.msra.mxu0 0
    %7239 = vmatprep.subr.bf16.mxu0 0
    %7240 = vmatpush1.bf16.msra.mxu0 0
    %7241 = vmatprep.subr.bf16.mxu0 0
    %7242 = vmatpush1.bf16.msra.mxu0 0
    %7243 = vmatprep.subr.bf16.mxu0 0
    %7244 = vmatpush1.bf16.msra.mxu0 0
    %7245 = vmatprep.subr.bf16.mxu0 0
    %7246 = vmatpush1.bf16.msra.mxu0 0
    %7247 = vmatprep.mubr.bf16.mxu0 0
    %7248 = vmatmul.mubr.bf16.gmra.mrb[0].mxu0 %v7213
    %v7249 = vpop.f32.mrb[0].mxu0
    %v7250 = vadd.f32 %v7062, %v7249
    %v7251 = vpop.f32.mrb[0].mxu0
    %v7252 = vpop.f32.mrb[0].mxu0
    %v7253 = vadd.f32 %v7065, %v7252
    %v7254 = vpop.f32.mrb[0].mxu0
    %7255 = vdwg.mxu0
    %v7256 = vld [vmem:[%s10 + $0x3] sm:$0x1]
    %v7257 = vlaneseq
    %v7258 = vshrl.u32 %v7257, 7
    %v7259 = vsub.s32 0, %v7258
    %v7260 = vrot.slane %v7256, %v7259
    %v7261 = vadd.f32 %v6052, %v7260
    %v7262 = vadd.f32 %v6053, %v7260
    %v7263 = vadd.f32 %v6054, %v7260
    %v7264 = vadd.f32 %v6055, %v7260
    %v7265 = vadd.f32 %v6056, %v7260
    %v7266 = vadd.f32 %v6057, %v7260
    %v7267 = vadd.f32 %v6058, %v7260
    %v7268 = vadd.f32 %v6059, %v7260
    %v7269 = vadd.f32 %v7261, %v7109
    %v7270 = vadd.f32 %v7262, %v7112
    %v7271 = vadd.f32 %v7263, %v7156
    %v7272 = vadd.f32 %v7264, %v7159
    %v7273 = vadd.f32 %v7265, %v7203
    %v7274 = vadd.f32 %v7266, %v7206
    %v7275 = vadd.f32 %v7267, %v7250
    %v7276 = vadd.f32 %v7268, %v7253
    %v7277 = vld [vmem:[%s11 + $0x3] sm:$0x1]
    %v7278 = vld [vmem:[%s12 + $0x3] sm:$0x1]
    %v7279 = vsel %vm260, %v7269, 0.0
    %7280 = vadd.xlane.f32.xlu0 %v7279
    %v7281 = vpop.xlane.xlu0 %7280
    %v7282 = vsel %vm260, %v7270, 0.0
    %7283 = vadd.xlane.f32.xlu0 %v7282
    %v7284 = vpop.xlane.xlu0 %7283
    %v7285 = vsel %vm260, %v7271, 0.0
    %7286 = vadd.xlane.f32.xlu0 %v7285
    %v7287 = vpop.xlane.xlu0 %7286
    %v7288 = vsel %vm260, %v7272, 0.0
    %7289 = vadd.xlane.f32.xlu0 %v7288
    %v7290 = vpop.xlane.xlu0 %7289
    %v7291 = vsel %vm260, %v7273, 0.0
    %7292 = vadd.xlane.f32.xlu0 %v7291
    %v7293 = vpop.xlane.xlu0 %7292
    %v7294 = vsel %vm260, %v7274, 0.0
    %7295 = vadd.xlane.f32.xlu0 %v7294
    %v7296 = vpop.xlane.xlu0 %7295
    %v7297 = vsel %vm260, %v7275, 0.0
    %7298 = vadd.xlane.f32.xlu0 %v7297
    %v7299 = vpop.xlane.xlu0 %7298
    %v7300 = vsel %vm260, %v7276, 0.0
    %7301 = vadd.xlane.f32.xlu0 %v7300
    %v7302 = vpop.xlane.xlu0 %7301
    %v7303 = vmul.f32 %v7281, %v285
    %v7304 = vmul.f32 %v7284, %v285
    %v7305 = vmul.f32 %v7287, %v285
    %v7306 = vmul.f32 %v7290, %v285
    %v7307 = vmul.f32 %v7293, %v285
    %v7308 = vmul.f32 %v7296, %v285
    %v7309 = vmul.f32 %v7299, %v285
    %v7310 = vmul.f32 %v7302, %v285
    %v7311 = vsub.f32 %v7269, %v7303
    %v7312 = vsub.f32 %v7270, %v7304
    %v7313 = vsub.f32 %v7271, %v7305
    %v7314 = vsub.f32 %v7272, %v7306
    %v7315 = vsub.f32 %v7273, %v7307
    %v7316 = vsub.f32 %v7274, %v7308
    %v7317 = vsub.f32 %v7275, %v7309
    %v7318 = vsub.f32 %v7276, %v7310
    %v7319 = vmul.f32 %v7311, %v7311
    %v7320 = vmul.f32 %v7312, %v7312
    %v7321 = vmul.f32 %v7313, %v7313
    %v7322 = vmul.f32 %v7314, %v7314
    %v7323 = vmul.f32 %v7315, %v7315
    %v7324 = vmul.f32 %v7316, %v7316
    %v7325 = vmul.f32 %v7317, %v7317
    %v7326 = vmul.f32 %v7318, %v7318
    %v7327 = vsel %vm260, %v7319, 0.0
    %7328 = vadd.xlane.f32.xlu0 %v7327
    %v7329 = vpop.xlane.xlu0 %7328
    %v7330 = vsel %vm260, %v7320, 0.0
    %7331 = vadd.xlane.f32.xlu0 %v7330
    %v7332 = vpop.xlane.xlu0 %7331
    %v7333 = vsel %vm260, %v7321, 0.0
    %7334 = vadd.xlane.f32.xlu0 %v7333
    %v7335 = vpop.xlane.xlu0 %7334
    %v7336 = vsel %vm260, %v7322, 0.0
    %7337 = vadd.xlane.f32.xlu0 %v7336
    %v7338 = vpop.xlane.xlu0 %7337
    %v7339 = vsel %vm260, %v7323, 0.0
    %7340 = vadd.xlane.f32.xlu0 %v7339
    %v7341 = vpop.xlane.xlu0 %7340
    %v7342 = vsel %vm260, %v7324, 0.0
    %7343 = vadd.xlane.f32.xlu0 %v7342
    %v7344 = vpop.xlane.xlu0 %7343
    %v7345 = vsel %vm260, %v7325, 0.0
    %7346 = vadd.xlane.f32.xlu0 %v7345
    %v7347 = vpop.xlane.xlu0 %7346
    %v7348 = vsel %vm260, %v7326, 0.0
    %7349 = vadd.xlane.f32.xlu0 %v7348
    %v7350 = vpop.xlane.xlu0 %7349
    %v7351 = vmul.f32 %v7329, %v285
    %v7352 = vmul.f32 %v7332, %v285
    %v7353 = vmul.f32 %v7335, %v285
    %v7354 = vmul.f32 %v7338, %v285
    %v7355 = vmul.f32 %v7341, %v285
    %v7356 = vmul.f32 %v7344, %v285
    %v7357 = vmul.f32 %v7347, %v285
    %v7358 = vmul.f32 %v7350, %v285
    %v7359 = vadd.f32 %v7351, 1e-05
    %v7360 = vadd.f32 %v7352, 1e-05
    %v7361 = vadd.f32 %v7353, 1e-05
    %v7362 = vadd.f32 %v7354, 1e-05
    %v7363 = vadd.f32 %v7355, 1e-05
    %v7364 = vadd.f32 %v7356, 1e-05
    %v7365 = vadd.f32 %v7357, 1e-05
    %v7366 = vadd.f32 %v7358, 1e-05
    %v7367 = vrsqrt.pop %v7359
    %v7368 = vrsqrt.pop %v7360
    %v7369 = vrsqrt.pop %v7361
    %v7370 = vrsqrt.pop %v7362
    %v7371 = vrsqrt.pop %v7363
    %v7372 = vrsqrt.pop %v7364
    %v7373 = vrsqrt.pop %v7365
    %v7374 = vrsqrt.pop %v7366
    %v7375 = vmul.f32 %v7311, %v7367
    %v7376 = vmul.f32 %v7312, %v7368
    %v7377 = vmul.f32 %v7313, %v7369
    %v7378 = vmul.f32 %v7314, %v7370
    %v7379 = vmul.f32 %v7315, %v7371
    %v7380 = vmul.f32 %v7316, %v7372
    %v7381 = vmul.f32 %v7317, %v7373
    %v7382 = vmul.f32 %v7318, %v7374
    %v7383 = vlaneseq
    %v7384 = vshrl.u32 %v7383, 7
    %v7385 = vsub.s32 0, %v7384
    %v7386 = vrot.slane %v7277, %v7385
    %v7387 = vmul.f32 %v7375, %v7386
    %v7388 = vmul.f32 %v7376, %v7386
    %v7389 = vmul.f32 %v7377, %v7386
    %v7390 = vmul.f32 %v7378, %v7386
    %v7391 = vmul.f32 %v7379, %v7386
    %v7392 = vmul.f32 %v7380, %v7386
    %v7393 = vmul.f32 %v7381, %v7386
    %v7394 = vmul.f32 %v7382, %v7386
    %v7395 = vlaneseq
    %v7396 = vshrl.u32 %v7395, 7
    %v7397 = vsub.s32 0, %v7396
    %v7398 = vrot.slane %v7278, %v7397
    %v7399 = vadd.f32 %v7387, %v7398
    %v7400 = vadd.f32 %v7388, %v7398
    %v7401 = vadd.f32 %v7389, %v7398
    %v7402 = vadd.f32 %v7390, %v7398
    %v7403 = vadd.f32 %v7391, %v7398
    %v7404 = vadd.f32 %v7392, %v7398
    %v7405 = vadd.f32 %v7393, %v7398
    %v7406 = vadd.f32 %v7394, %v7398
    %s7407 = scalar_lea.vmem %s13, 48
    %v7408 = vld [vmem:[%s7407] sm:$0xf]
    %v7409 = vld [vmem:[%s7407 + $0x4] sm:$0xf]
    %v7410 = vld [vmem:[%s7407 + $0x8] sm:$0xf]
    %v7411 = vld [vmem:[%s7407 + $0xc] sm:$0xf]
    %v7412 = vld [vmem:[%s14 + $0x3] sm:$0x1]
    %v7413 = vpack.c.bf16 %v7400, %v7399
    %v7414 = vpack.c.bf16 %v7402, %v7401
    %v7415 = vpack.c.bf16 %v7404, %v7403
    %v7416 = vpack.c.bf16 %v7406, %v7405
    %v7417 = vlaneseq
    %v7418 = vshrl.u32 %v7417, 7
    %v7419 = vsub.s32 0, %v7418
    %v7420 = vrot.slane %v7412, %v7419
    %v7425 = vunpack.c.l.b16 %v7408
    %v7426 = vunpack.c.l.b16 %v7409
    %v7427 = vunpack.c.l.b16 %v7410
    %v7428 = vunpack.c.l.b16 %v7411
    %v7429 = vpack.c.b16 %v7426, %v7425
    %v7430 = vpack.c.b16 %v7428, %v7427
    %v7434 = vsel %vm260, %v7413, 0
    %v7437 = vsel %vm260, %v7414, 0
    %v7440 = vsel %vm260, %v7415, 0
    %v7443 = vsel %vm260, %v7416, 0
    %7445 = vmatprep.subr.bf16.mxu0 0
    %7446 = vmatpush1.bf16.msra.mxu0 %v7429
    %7447 = vmatprep.subr.bf16.mxu0 0
    %7448 = vmatpush1.bf16.msra.mxu0 %v7430
    %7449 = vmatprep.subr.bf16.mxu0 0
    %7450 = vmatpush1.bf16.msra.mxu0 0
    %7451 = vmatprep.subr.bf16.mxu0 0
    %7452 = vmatpush1.bf16.msra.mxu0 0
    %7453 = vmatprep.subr.bf16.mxu0 0
    %7454 = vmatpush1.bf16.msra.mxu0 0
    %7455 = vmatprep.subr.bf16.mxu0 0
    %7456 = vmatpush1.bf16.msra.mxu0 0
    %7457 = vmatprep.subr.bf16.mxu0 0
    %7458 = vmatpush1.bf16.msra.mxu0 0
    %7459 = vmatprep.subr.bf16.mxu0 0
    %7460 = vmatpush1.bf16.msra.mxu0 0
    %7461 = vmatprep.subr.bf16.mxu0 0
    %7462 = vmatpush1.bf16.msra.mxu0 0
    %7463 = vmatprep.subr.bf16.mxu0 0
    %7464 = vmatpush1.bf16.msra.mxu0 0
    %7465 = vmatprep.subr.bf16.mxu0 0
    %7466 = vmatpush1.bf16.msra.mxu0 0
    %7467 = vmatprep.subr.bf16.mxu0 0
    %7468 = vmatpush1.bf16.msra.mxu0 0
    %7469 = vmatprep.subr.bf16.mxu0 0
    %7470 = vmatpush1.bf16.msra.mxu0 0
    %7471 = vmatprep.subr.bf16.mxu0 0
    %7472 = vmatpush1.bf16.msra.mxu0 0
    %7473 = vmatprep.subr.bf16.mxu0 0
    %7474 = vmatpush1.bf16.msra.mxu0 0
    %7475 = vmatprep.subr.bf16.mxu0 0
    %7476 = vmatpush1.bf16.msra.mxu0 0
    %7477 = vmatprep.mubr.bf16.mxu0 0
    %7478 = vmatmul.mubr.bf16.gmra.mrb[0].mxu0 %v7434
    %v7479 = vpop.f32.mrb[0].mxu0
    %v7480 = vadd.f32 %v7420, %v7479
    %v7481 = vpop.f32.mrb[0].mxu0
    %v7482 = vpop.f32.mrb[0].mxu0
    %v7483 = vadd.f32 %v7420, %v7482
    %v7484 = vpop.f32.mrb[0].mxu0
    %7485 = vmatprep.mubr.bf16.mxu0 0
    %7486 = vmatmul.mubr.bf16.gmra.mrb[0].mxu0 %v7437
    %v7487 = vpop.f32.mrb[0].mxu0
    %v7488 = vadd.f32 %v7420, %v7487
    %v7489 = vpop.f32.mrb[0].mxu0
    %v7490 = vpop.f32.mrb[0].mxu0
    %v7491 = vadd.f32 %v7420, %v7490
    %v7492 = vpop.f32.mrb[0].mxu0
    %7493 = vmatprep.mubr.bf16.mxu0 0
    %7494 = vmatmul.mubr.bf16.gmra.mrb[0].mxu0 %v7440
    %v7495 = vpop.f32.mrb[0].mxu0
    %v7496 = vadd.f32 %v7420, %v7495
    %v7497 = vpop.f32.mrb[0].mxu0
    %v7498 = vpop.f32.mrb[0].mxu0
    %v7499 = vadd.f32 %v7420, %v7498
    %v7500 = vpop.f32.mrb[0].mxu0
    %7501 = vmatprep.mubr.bf16.mxu0 0
    %7502 = vmatmul.mubr.bf16.gmra.mrb[0].mxu0 %v7443
    %v7503 = vpop.f32.mrb[0].mxu0
    %v7504 = vadd.f32 %v7420, %v7503
    %v7505 = vpop.f32.mrb[0].mxu0
    %v7506 = vpop.f32.mrb[0].mxu0
    %v7507 = vadd.f32 %v7420, %v7506
    %v7508 = vpop.f32.mrb[0].mxu0
    %7509 = vdwg.mxu0
    %v7510 = vmul.f32 %v7480, 0.70710677
    %v7511 = vmul.f32 %v7483, 0.70710677
    %v7512 = vmul.f32 %v7488, 0.70710677
    %v7513 = vmul.f32 %v7491, 0.70710677
    %v7514 = vmul.f32 %v7496, 0.70710677
    %v7515 = vmul.f32 %v7499, 0.70710677
    %v7516 = vmul.f32 %v7504, 0.70710677
    %v7517 = vmul.f32 %v7507, 0.70710677
    %vm7518 = vcmp.lt.f32.partialorder %v7510, 0.0
    %vm7519 = vcmp.lt.f32.partialorder %v7511, 0.0
    %vm7520 = vcmp.lt.f32.partialorder %v7512, 0.0
    %vm7521 = vcmp.lt.f32.partialorder %v7513, 0.0
    %vm7522 = vcmp.lt.f32.partialorder %v7514, 0.0
    %vm7523 = vcmp.lt.f32.partialorder %v7515, 0.0
    %vm7524 = vcmp.lt.f32.partialorder %v7516, 0.0
    %vm7525 = vcmp.lt.f32.partialorder %v7517, 0.0
    %v7526 = vsel %vm7518, -1.0, 1.0
    %v7527 = vsel %vm7519, -1.0, 1.0
    %v7528 = vsel %vm7520, -1.0, 1.0
    %v7529 = vsel %vm7521, -1.0, 1.0
    %v7530 = vsel %vm7522, -1.0, 1.0
    %v7531 = vsel %vm7523, -1.0, 1.0
    %v7532 = vsel %vm7524, -1.0, 1.0
    %v7533 = vsel %vm7525, -1.0, 1.0
    %v7534 = vand.u32 2147483647, %v7510
    %v7535 = vand.u32 2147483647, %v7511
    %v7536 = vand.u32 2147483647, %v7512
    %v7537 = vand.u32 2147483647, %v7513
    %v7538 = vand.u32 2147483647, %v7514
    %v7539 = vand.u32 2147483647, %v7515
    %v7540 = vand.u32 2147483647, %v7516
    %v7541 = vand.u32 2147483647, %v7517
    %v7542 = vmul.f32 %v7534, 0.3275911
    %v7543 = vmul.f32 %v7535, 0.3275911
    %v7544 = vmul.f32 %v7536, 0.3275911
    %v7545 = vmul.f32 %v7537, 0.3275911
    %v7546 = vmul.f32 %v7538, 0.3275911
    %v7547 = vmul.f32 %v7539, 0.3275911
    %v7548 = vmul.f32 %v7540, 0.3275911
    %v7549 = vmul.f32 %v7541, 0.3275911
    %v7550 = vadd.f32 %v7542, 1.0
    %v7551 = vadd.f32 %v7543, 1.0
    %v7552 = vadd.f32 %v7544, 1.0
    %v7553 = vadd.f32 %v7545, 1.0
    %v7554 = vadd.f32 %v7546, 1.0
    %v7555 = vadd.f32 %v7547, 1.0
    %v7556 = vadd.f32 %v7548, 1.0
    %v7557 = vadd.f32 %v7549, 1.0
    %v7558 = vrcp.pop %v7550
    %v7559 = vrcp.pop %v7551
    %v7560 = vrcp.pop %v7552
    %v7561 = vrcp.pop %v7553
    %v7562 = vrcp.pop %v7554
    %v7563 = vrcp.pop %v7555
    %v7564 = vrcp.pop %v7556
    %v7565 = vrcp.pop %v7557
    %v7566 = vmul.f32 %v7558, 1.0614054
    %v7567 = vmul.f32 %v7559, 1.0614054
    %v7568 = vmul.f32 %v7560, 1.0614054
    %v7569 = vmul.f32 %v7561, 1.0614054
    %v7570 = vmul.f32 %v7562, 1.0614054
    %v7571 = vmul.f32 %v7563, 1.0614054
    %v7572 = vmul.f32 %v7564, 1.0614054
    %v7573 = vmul.f32 %v7565, 1.0614054
    %v7574 = vadd.f32 %v7566, -1.4531521
    %v7575 = vadd.f32 %v7567, -1.4531521
    %v7576 = vadd.f32 %v7568, -1.4531521
    %v7577 = vadd.f32 %v7569, -1.4531521
    %v7578 = vadd.f32 %v7570, -1.4531521
    %v7579 = vadd.f32 %v7571, -1.4531521
    %v7580 = vadd.f32 %v7572, -1.4531521
    %v7581 = vadd.f32 %v7573, -1.4531521
    %v7582 = vmul.f32 %v7574, %v7558
    %v7583 = vmul.f32 %v7575, %v7559
    %v7584 = vmul.f32 %v7576, %v7560
    %v7585 = vmul.f32 %v7577, %v7561
    %v7586 = vmul.f32 %v7578, %v7562
    %v7587 = vmul.f32 %v7579, %v7563
    %v7588 = vmul.f32 %v7580, %v7564
    %v7589 = vmul.f32 %v7581, %v7565
    %v7590 = vadd.f32 %v7582, 1.4214138
    %v7591 = vadd.f32 %v7583, 1.4214138
    %v7592 = vadd.f32 %v7584, 1.4214138
    %v7593 = vadd.f32 %v7585, 1.4214138
    %v7594 = vadd.f32 %v7586, 1.4214138
    %v7595 = vadd.f32 %v7587, 1.4214138
    %v7596 = vadd.f32 %v7588, 1.4214138
    %v7597 = vadd.f32 %v7589, 1.4214138
    %v7598 = vmul.f32 %v7590, %v7558
    %v7599 = vmul.f32 %v7591, %v7559
    %v7600 = vmul.f32 %v7592, %v7560
    %v7601 = vmul.f32 %v7593, %v7561
    %v7602 = vmul.f32 %v7594, %v7562
    %v7603 = vmul.f32 %v7595, %v7563
    %v7604 = vmul.f32 %v7596, %v7564
    %v7605 = vmul.f32 %v7597, %v7565
    %v7606 = vadd.f32 %v7598, -0.28449672
    %v7607 = vadd.f32 %v7599, -0.28449672
    %v7608 = vadd.f32 %v7600, -0.28449672
    %v7609 = vadd.f32 %v7601, -0.28449672
    %v7610 = vadd.f32 %v7602, -0.28449672
    %v7611 = vadd.f32 %v7603, -0.28449672
    %v7612 = vadd.f32 %v7604, -0.28449672
    %v7613 = vadd.f32 %v7605, -0.28449672
    %v7614 = vmul.f32 %v7606, %v7558
    %v7615 = vmul.f32 %v7607, %v7559
    %v7616 = vmul.f32 %v7608, %v7560
    %v7617 = vmul.f32 %v7609, %v7561
    %v7618 = vmul.f32 %v7610, %v7562
    %v7619 = vmul.f32 %v7611, %v7563
    %v7620 = vmul.f32 %v7612, %v7564
    %v7621 = vmul.f32 %v7613, %v7565
    %v7622 = vadd.f32 %v7614, 0.2548296
    %v7623 = vadd.f32 %v7615, 0.2548296
    %v7624 = vadd.f32 %v7616, 0.2548296
    %v7625 = vadd.f32 %v7617, 0.2548296
    %v7626 = vadd.f32 %v7618, 0.2548296
    %v7627 = vadd.f32 %v7619, 0.2548296
    %v7628 = vadd.f32 %v7620, 0.2548296
    %v7629 = vadd.f32 %v7621, 0.2548296
    %v7630 = vmul.f32 %v7622, %v7558
    %v7631 = vmul.f32 %v7623, %v7559
    %v7632 = vmul.f32 %v7624, %v7560
    %v7633 = vmul.f32 %v7625, %v7561
    %v7634 = vmul.f32 %v7626, %v7562
    %v7635 = vmul.f32 %v7627, %v7563
    %v7636 = vmul.f32 %v7628, %v7564
    %v7637 = vmul.f32 %v7629, %v7565
    %v7638 = vsub.f32 0.0, %v7534
    %v7639 = vsub.f32 0.0, %v7535
    %v7640 = vsub.f32 0.0, %v7536
    %v7641 = vsub.f32 0.0, %v7537
    %v7642 = vsub.f32 0.0, %v7538
    %v7643 = vsub.f32 0.0, %v7539
    %v7644 = vsub.f32 0.0, %v7540
    %v7645 = vsub.f32 0.0, %v7541
    %v7646 = vmul.f32 %v7638, %v7534
    %v7647 = vmul.f32 %v7639, %v7535
    %v7648 = vmul.f32 %v7640, %v7536
    %v7649 = vmul.f32 %v7641, %v7537
    %v7650 = vmul.f32 %v7642, %v7538
    %v7651 = vmul.f32 %v7643, %v7539
    %v7652 = vmul.f32 %v7644, %v7540
    %v7653 = vmul.f32 %v7645, %v7541
    %v7654 = vmul.f32 %v7646, 1.442695
    %v7655 = vpow.pop %v7654
    %v7656 = vmul.f32 %v7647, 1.442695
    %v7657 = vpow.pop %v7656
    %v7658 = vmul.f32 %v7648, 1.442695
    %v7659 = vpow.pop %v7658
    %v7660 = vmul.f32 %v7649, 1.442695
    %v7661 = vpow.pop %v7660
    %v7662 = vmul.f32 %v7650, 1.442695
    %v7663 = vpow.pop %v7662
    %v7664 = vmul.f32 %v7651, 1.442695
    %v7665 = vpow.pop %v7664
    %v7666 = vmul.f32 %v7652, 1.442695
    %v7667 = vpow.pop %v7666
    %v7668 = vmul.f32 %v7653, 1.442695
    %v7669 = vpow.pop %v7668
    %v7670 = vmul.f32 %v7630, %v7655
    %v7671 = vmul.f32 %v7631, %v7657
    %v7672 = vmul.f32 %v7632, %v7659
    %v7673 = vmul.f32 %v7633, %v7661
    %v7674 = vmul.f32 %v7634, %v7663
    %v7675 = vmul.f32 %v7635, %v7665
    %v7676 = vmul.f32 %v7636, %v7667
    %v7677 = vmul.f32 %v7637, %v7669
    %v7678 = vsub.f32 1.0, %v7670
    %v7679 = vsub.f32 1.0, %v7671
    %v7680 = vsub.f32 1.0, %v7672
    %v7681 = vsub.f32 1.0, %v7673
    %v7682 = vsub.f32 1.0, %v7674
    %v7683 = vsub.f32 1.0, %v7675
    %v7684 = vsub.f32 1.0, %v7676
    %v7685 = vsub.f32 1.0, %v7677
    %v7686 = vmul.f32 %v7526, %v7678
    %v7687 = vmul.f32 %v7527, %v7679
    %v7688 = vmul.f32 %v7528, %v7680
    %v7689 = vmul.f32 %v7529, %v7681
    %v7690 = vmul.f32 %v7530, %v7682
    %v7691 = vmul.f32 %v7531, %v7683
    %v7692 = vmul.f32 %v7532, %v7684
    %v7693 = vmul.f32 %v7533, %v7685
    %v7694 = vmul.f32 %v7480, 0.5
    %v7695 = vmul.f32 %v7483, 0.5
    %v7696 = vmul.f32 %v7488, 0.5
    %v7697 = vmul.f32 %v7491, 0.5
    %v7698 = vmul.f32 %v7496, 0.5
    %v7699 = vmul.f32 %v7499, 0.5
    %v7700 = vmul.f32 %v7504, 0.5
    %v7701 = vmul.f32 %v7507, 0.5
    %v7702 = vadd.f32 %v7686, 1.0
    %v7703 = vadd.f32 %v7687, 1.0
    %v7704 = vadd.f32 %v7688, 1.0
    %v7705 = vadd.f32 %v7689, 1.0
    %v7706 = vadd.f32 %v7690, 1.0
    %v7707 = vadd.f32 %v7691, 1.0
    %v7708 = vadd.f32 %v7692, 1.0
    %v7709 = vadd.f32 %v7693, 1.0
    %v7710 = vmul.f32 %v7694, %v7702
    %v7711 = vmul.f32 %v7695, %v7703
    %v7712 = vmul.f32 %v7696, %v7704
    %v7713 = vmul.f32 %v7697, %v7705
    %v7714 = vmul.f32 %v7698, %v7706
    %v7715 = vmul.f32 %v7699, %v7707
    %v7716 = vmul.f32 %v7700, %v7708
    %v7717 = vmul.f32 %v7701, %v7709
    %s7718 = scalar_lea.vmem %s15, 96
    %v7719 = vld [vmem:[%s7718] sm:$0xf]
    %v7720 = vld [vmem:[%s7718 + $0x4] sm:$0xf]
    %v7721 = vld [vmem:[%s7718 + $0x8] sm:$0xf]
    %v7722 = vld [vmem:[%s7718 + $0xc] sm:$0xf]
    %v7723 = vld [vmem:[%s7718 + $0x10] sm:$0xf]
    %v7724 = vld [vmem:[%s7718 + $0x14] sm:$0xf]
    %v7725 = vld [vmem:[%s7718 + $0x18] sm:$0xf]
    %v7726 = vld [vmem:[%s7718 + $0x1c] sm:$0xf]
    %v7727 = vld [vmem:[%s16 + $0x3] sm:$0x1]
    %v7728 = vpack.c.bf16 %v7711, %v7710
    %v7729 = vpack.c.bf16 %v7713, %v7712
    %v7730 = vpack.c.bf16 %v7715, %v7714
    %v7731 = vpack.c.bf16 %v7717, %v7716
    %v7732 = vlaneseq
    %v7733 = vshrl.u32 %v7732, 7
    %v7734 = vsub.s32 0, %v7733
    %v7735 = vrot.slane %v7727, %v7734
    %v7744 = vunpack.c.l.b16 %v7719
    %v7745 = vunpack.c.l.b16 %v7720
    %v7746 = vunpack.c.l.b16 %v7721
    %v7747 = vunpack.c.l.b16 %v7722
    %v7748 = vunpack.c.l.b16 %v7723
    %v7749 = vunpack.c.l.b16 %v7724
    %v7750 = vunpack.c.l.b16 %v7725
    %v7751 = vunpack.c.l.b16 %v7726
    %v7752 = vpack.c.b16 %v7745, %v7744
    %v7753 = vpack.c.b16 %v7747, %v7746
    %v7754 = vpack.c.b16 %v7749, %v7748
    %v7755 = vpack.c.b16 %v7751, %v7750
    %v7761 = vsel %vm2404, %v7728, 0
    %v7764 = vsel %vm2404, %v7729, 0
    %v7767 = vsel %vm2404, %v7730, 0
    %v7770 = vsel %vm2404, %v7731, 0
    %7772 = vmatprep.subr.bf16.mxu0 0
    %7773 = vmatpush1.bf16.msra.mxu0 %v7752
    %7774 = vmatprep.subr.bf16.mxu0 0
    %7775 = vmatpush1.bf16.msra.mxu0 %v7753
    %7776 = vmatprep.subr.bf16.mxu0 0
    %7777 = vmatpush1.bf16.msra.mxu0 %v7754
    %7778 = vmatprep.subr.bf16.mxu0 0
    %7779 = vmatpush1.bf16.msra.mxu0 %v7755
    %7780 = vmatprep.subr.bf16.mxu0 0
    %7781 = vmatpush1.bf16.msra.mxu0 0
    %7782 = vmatprep.subr.bf16.mxu0 0
    %7783 = vmatpush1.bf16.msra.mxu0 0
    %7784 = vmatprep.subr.bf16.mxu0 0
    %7785 = vmatpush1.bf16.msra.mxu0 0
    %7786 = vmatprep.subr.bf16.mxu0 0
    %7787 = vmatpush1.bf16.msra.mxu0 0
    %7788 = vmatprep.subr.bf16.mxu0 0
    %7789 = vmatpush1.bf16.msra.mxu0 0
    %7790 = vmatprep.subr.bf16.mxu0 0
    %7791 = vmatpush1.bf16.msra.mxu0 0
    %7792 = vmatprep.subr.bf16.mxu0 0
    %7793 = vmatpush1.bf16.msra.mxu0 0
    %7794 = vmatprep.subr.bf16.mxu0 0
    %7795 = vmatpush1.bf16.msra.mxu0 0
    %7796 = vmatprep.subr.bf16.mxu0 0
    %7797 = vmatpush1.bf16.msra.mxu0 0
    %7798 = vmatprep.subr.bf16.mxu0 0
    %7799 = vmatpush1.bf16.msra.mxu0 0
    %7800 = vmatprep.subr.bf16.mxu0 0
    %7801 = vmatpush1.bf16.msra.mxu0 0
    %7802 = vmatprep.subr.bf16.mxu0 0
    %7803 = vmatpush1.bf16.msra.mxu0 0
    %7804 = vmatprep.mubr.bf16.mxu0 0
    %7805 = vmatmul.mubr.bf16.gmra.mrb[0].mxu0 %v7761
    %v7806 = vpop.f32.mrb[0].mxu0
    %v7807 = vadd.f32 %v7735, %v7806
    %v7808 = vpop.f32.mrb[0].mxu0
    %v7809 = vpop.f32.mrb[0].mxu0
    %v7810 = vadd.f32 %v7735, %v7809
    %v7811 = vpop.f32.mrb[0].mxu0
    %7812 = vmatprep.mubr.bf16.mxu0 0
    %7813 = vmatmul.mubr.bf16.gmra.mrb[0].mxu0 %v7764
    %v7814 = vpop.f32.mrb[0].mxu0
    %v7815 = vadd.f32 %v7735, %v7814
    %v7816 = vpop.f32.mrb[0].mxu0
    %v7817 = vpop.f32.mrb[0].mxu0
    %v7818 = vadd.f32 %v7735, %v7817
    %v7819 = vpop.f32.mrb[0].mxu0
    %7820 = vmatprep.mubr.bf16.mxu0 0
    %7821 = vmatmul.mubr.bf16.gmra.mrb[0].mxu0 %v7767
    %v7822 = vpop.f32.mrb[0].mxu0
    %v7823 = vadd.f32 %v7735, %v7822
    %v7824 = vpop.f32.mrb[0].mxu0
    %v7825 = vpop.f32.mrb[0].mxu0
    %v7826 = vadd.f32 %v7735, %v7825
    %v7827 = vpop.f32.mrb[0].mxu0
    %7828 = vmatprep.mubr.bf16.mxu0 0
    %7829 = vmatmul.mubr.bf16.gmra.mrb[0].mxu0 %v7770
    %v7830 = vpop.f32.mrb[0].mxu0
    %v7831 = vadd.f32 %v7735, %v7830
    %v7832 = vpop.f32.mrb[0].mxu0
    %v7833 = vpop.f32.mrb[0].mxu0
    %v7834 = vadd.f32 %v7735, %v7833
    %v7835 = vpop.f32.mrb[0].mxu0
    %7836 = vdwg.mxu0
    %v7837 = vadd.f32 %v7807, %v7269
    %v7838 = vadd.f32 %v7810, %v7270
    %v7839 = vadd.f32 %v7815, %v7271
    %v7840 = vadd.f32 %v7818, %v7272
    %v7841 = vadd.f32 %v7823, %v7273
    %v7842 = vadd.f32 %v7826, %v7274
    %v7843 = vadd.f32 %v7831, %v7275
    %v7844 = vadd.f32 %v7834, %v7276
    %v7845 = vld [vmem:[%s17] sm:$0x1]
    %v7846 = vld [vmem:[%s18] sm:$0x1]
    %v7847 = vsel %vm260, %v7837, 0.0
    %7848 = vadd.xlane.f32.xlu0 %v7847
    %v7849 = vpop.xlane.xlu0 %7848
    %v7850 = vsel %vm260, %v7838, 0.0
    %7851 = vadd.xlane.f32.xlu0 %v7850
    %v7852 = vpop.xlane.xlu0 %7851
    %v7853 = vsel %vm260, %v7839, 0.0
    %7854 = vadd.xlane.f32.xlu0 %v7853
    %v7855 = vpop.xlane.xlu0 %7854
    %v7856 = vsel %vm260, %v7840, 0.0
    %7857 = vadd.xlane.f32.xlu0 %v7856
    %v7858 = vpop.xlane.xlu0 %7857
    %v7859 = vsel %vm260, %v7841, 0.0
    %7860 = vadd.xlane.f32.xlu0 %v7859
    %v7861 = vpop.xlane.xlu0 %7860
    %v7862 = vsel %vm260, %v7842, 0.0
    %7863 = vadd.xlane.f32.xlu0 %v7862
    %v7864 = vpop.xlane.xlu0 %7863
    %v7865 = vsel %vm260, %v7843, 0.0
    %7866 = vadd.xlane.f32.xlu0 %v7865
    %v7867 = vpop.xlane.xlu0 %7866
    %v7868 = vsel %vm260, %v7844, 0.0
    %7869 = vadd.xlane.f32.xlu0 %v7868
    %v7870 = vpop.xlane.xlu0 %7869
    %v7871 = vmul.f32 %v7849, %v285
    %v7872 = vmul.f32 %v7852, %v285
    %v7873 = vmul.f32 %v7855, %v285
    %v7874 = vmul.f32 %v7858, %v285
    %v7875 = vmul.f32 %v7861, %v285
    %v7876 = vmul.f32 %v7864, %v285
    %v7877 = vmul.f32 %v7867, %v285
    %v7878 = vmul.f32 %v7870, %v285
    %v7879 = vsub.f32 %v7837, %v7871
    %v7880 = vsub.f32 %v7838, %v7872
    %v7881 = vsub.f32 %v7839, %v7873
    %v7882 = vsub.f32 %v7840, %v7874
    %v7883 = vsub.f32 %v7841, %v7875
    %v7884 = vsub.f32 %v7842, %v7876
    %v7885 = vsub.f32 %v7843, %v7877
    %v7886 = vsub.f32 %v7844, %v7878
    %v7887 = vmul.f32 %v7879, %v7879
    %v7888 = vmul.f32 %v7880, %v7880
    %v7889 = vmul.f32 %v7881, %v7881
    %v7890 = vmul.f32 %v7882, %v7882
    %v7891 = vmul.f32 %v7883, %v7883
    %v7892 = vmul.f32 %v7884, %v7884
    %v7893 = vmul.f32 %v7885, %v7885
    %v7894 = vmul.f32 %v7886, %v7886
    %v7895 = vsel %vm260, %v7887, 0.0
    %7896 = vadd.xlane.f32.xlu0 %v7895
    %v7897 = vpop.xlane.xlu0 %7896
    %v7898 = vsel %vm260, %v7888, 0.0
    %7899 = vadd.xlane.f32.xlu0 %v7898
    %v7900 = vpop.xlane.xlu0 %7899
    %v7901 = vsel %vm260, %v7889, 0.0
    %7902 = vadd.xlane.f32.xlu0 %v7901
    %v7903 = vpop.xlane.xlu0 %7902
    %v7904 = vsel %vm260, %v7890, 0.0
    %7905 = vadd.xlane.f32.xlu0 %v7904
    %v7906 = vpop.xlane.xlu0 %7905
    %v7907 = vsel %vm260, %v7891, 0.0
    %7908 = vadd.xlane.f32.xlu0 %v7907
    %v7909 = vpop.xlane.xlu0 %7908
    %v7910 = vsel %vm260, %v7892, 0.0
    %7911 = vadd.xlane.f32.xlu0 %v7910
    %v7912 = vpop.xlane.xlu0 %7911
    %v7913 = vsel %vm260, %v7893, 0.0
    %7914 = vadd.xlane.f32.xlu0 %v7913
    %v7915 = vpop.xlane.xlu0 %7914
    %v7916 = vsel %vm260, %v7894, 0.0
    %7917 = vadd.xlane.f32.xlu0 %v7916
    %v7918 = vpop.xlane.xlu0 %7917
    %v7919 = vmul.f32 %v7897, %v285
    %v7920 = vmul.f32 %v7900, %v285
    %v7921 = vmul.f32 %v7903, %v285
    %v7922 = vmul.f32 %v7906, %v285
    %v7923 = vmul.f32 %v7909, %v285
    %v7924 = vmul.f32 %v7912, %v285
    %v7925 = vmul.f32 %v7915, %v285
    %v7926 = vmul.f32 %v7918, %v285
    %v7927 = vadd.f32 %v7919, 1e-05
    %v7928 = vadd.f32 %v7920, 1e-05
    %v7929 = vadd.f32 %v7921, 1e-05
    %v7930 = vadd.f32 %v7922, 1e-05
    %v7931 = vadd.f32 %v7923, 1e-05
    %v7932 = vadd.f32 %v7924, 1e-05
    %v7933 = vadd.f32 %v7925, 1e-05
    %v7934 = vadd.f32 %v7926, 1e-05
    %v7935 = vrsqrt.pop %v7927
    %v7936 = vrsqrt.pop %v7928
    %v7937 = vrsqrt.pop %v7929
    %v7938 = vrsqrt.pop %v7930
    %v7939 = vrsqrt.pop %v7931
    %v7940 = vrsqrt.pop %v7932
    %v7941 = vrsqrt.pop %v7933
    %v7942 = vrsqrt.pop %v7934
    %v7943 = vmul.f32 %v7879, %v7935
    %v7944 = vmul.f32 %v7880, %v7936
    %v7945 = vmul.f32 %v7881, %v7937
    %v7946 = vmul.f32 %v7882, %v7938
    %v7947 = vmul.f32 %v7883, %v7939
    %v7948 = vmul.f32 %v7884, %v7940
    %v7949 = vmul.f32 %v7885, %v7941
    %v7950 = vmul.f32 %v7886, %v7942
    %v7952 = vlaneseq
    %v7953 = vshrl.u32 %v7952, 7
    %v7954 = vsub.s32 0, %v7953
    %v7955 = vrot.slane %v7845, %v7954
    %v7957 = vmul.f32 %v7943, %v7955
    %v7958 = vmul.f32 %v7944, %v7955
    %v7959 = vmul.f32 %v7945, %v7955
    %v7960 = vmul.f32 %v7946, %v7955
    %v7961 = vmul.f32 %v7947, %v7955
    %v7962 = vmul.f32 %v7948, %v7955
    %v7963 = vmul.f32 %v7949, %v7955
    %v7964 = vmul.f32 %v7950, %v7955
    %v7966 = vlaneseq
    %v7967 = vshrl.u32 %v7966, 7
    %v7968 = vsub.s32 0, %v7967
    %v7969 = vrot.slane %v7846, %v7968
    %v7971 = vadd.f32 %v7957, %v7969
    %v7972 = vadd.f32 %v7958, %v7969
    %v7973 = vadd.f32 %v7959, %v7969
    %v7974 = vadd.f32 %v7960, %v7969
    %v7975 = vadd.f32 %v7961, %v7969
    %v7976 = vadd.f32 %v7962, %v7969
    %v7977 = vadd.f32 %v7963, %v7969
    %v7978 = vadd.f32 %v7964, %v7969
    %v7979 = vld [vmem:[%s19] sm:$0xf]
    %v7980 = vld [vmem:[%s19 + $0x4] sm:$0xf]
    %v7981 = vld [vmem:[%s19 + $0x8] sm:$0xf]
    %v7982 = vld [vmem:[%s19 + $0xc] sm:$0xf]
    %v7983 = vld [vmem:[%s20] sm:$0x1]
    %v7984 = vpack.c.bf16 %v7972, %v7971
    %v7985 = vpack.c.bf16 %v7974, %v7973
    %v7986 = vpack.c.bf16 %v7976, %v7975
    %v7987 = vpack.c.bf16 %v7978, %v7977
    %v7989 = vlaneseq
    %v7990 = vshrl.u32 %v7989, 7
    %v7991 = vsub.s32 0, %v7990
    %v7992 = vrot.slane %v7983, %v7991
    %v7998 = vunpack.c.l.b16 %v7979
    %v7999 = vunpack.c.l.b16 %v7980
    %v8000 = vunpack.c.l.b16 %v7981
    %v8001 = vunpack.c.l.b16 %v7982
    %v8002 = vpack.c.b16 %v7999, %v7998
    %v8003 = vpack.c.b16 %v8001, %v8000
    %v8007 = vsel %vm260, %v7984, 0
    %v8010 = vsel %vm260, %v7985, 0
    %v8013 = vsel %vm260, %v7986, 0
    %v8016 = vsel %vm260, %v7987, 0
    %8018 = vmatprep.subr.bf16.mxu0 0
    %8019 = vmatpush1.bf16.msra.mxu0 %v8002
    %8020 = vmatprep.subr.bf16.mxu0 0
    %8021 = vmatpush1.bf16.msra.mxu0 %v8003
    %8022 = vmatprep.subr.bf16.mxu0 0
    %8023 = vmatpush1.bf16.msra.mxu0 0
    %8024 = vmatprep.subr.bf16.mxu0 0
    %8025 = vmatpush1.bf16.msra.mxu0 0
    %8026 = vmatprep.subr.bf16.mxu0 0
    %8027 = vmatpush1.bf16.msra.mxu0 0
    %8028 = vmatprep.subr.bf16.mxu0 0
    %8029 = vmatpush1.bf16.msra.mxu0 0
    %8030 = vmatprep.subr.bf16.mxu0 0
    %8031 = vmatpush1.bf16.msra.mxu0 0
    %8032 = vmatprep.subr.bf16.mxu0 0
    %8033 = vmatpush1.bf16.msra.mxu0 0
    %8034 = vmatprep.subr.bf16.mxu0 0
    %8035 = vmatpush1.bf16.msra.mxu0 0
    %8036 = vmatprep.subr.bf16.mxu0 0
    %8037 = vmatpush1.bf16.msra.mxu0 0
    %8038 = vmatprep.subr.bf16.mxu0 0
    %8039 = vmatpush1.bf16.msra.mxu0 0
    %8040 = vmatprep.subr.bf16.mxu0 0
    %8041 = vmatpush1.bf16.msra.mxu0 0
    %8042 = vmatprep.subr.bf16.mxu0 0
    %8043 = vmatpush1.bf16.msra.mxu0 0
    %8044 = vmatprep.subr.bf16.mxu0 0
    %8045 = vmatpush1.bf16.msra.mxu0 0
    %8046 = vmatprep.subr.bf16.mxu0 0
    %8047 = vmatpush1.bf16.msra.mxu0 0
    %8048 = vmatprep.subr.bf16.mxu0 0
    %8049 = vmatpush1.bf16.msra.mxu0 0
    %8050 = vmatprep.mubr.bf16.mxu0 0
    %8051 = vmatmul.mubr.bf16.gmra.mrb[0].mxu0 %v8007
    %v8052 = vpop.f32.mrb[0].mxu0
    %v8053 = vadd.f32 %v7992, %v8052
    %v8054 = vpop.f32.mrb[0].mxu0
    %v8055 = vpop.f32.mrb[0].mxu0
    %v8056 = vadd.f32 %v7992, %v8055
    %v8057 = vpop.f32.mrb[0].mxu0
    %8058 = vmatprep.mubr.bf16.mxu0 0
    %8059 = vmatmul.mubr.bf16.gmra.mrb[0].mxu0 %v8010
    %v8060 = vpop.f32.mrb[0].mxu0
    %v8061 = vadd.f32 %v7992, %v8060
    %v8062 = vpop.f32.mrb[0].mxu0
    %v8063 = vpop.f32.mrb[0].mxu0
    %v8064 = vadd.f32 %v7992, %v8063
    %v8065 = vpop.f32.mrb[0].mxu0
    %8066 = vmatprep.mubr.bf16.mxu0 0
    %8067 = vmatmul.mubr.bf16.gmra.mrb[0].mxu0 %v8013
    %v8068 = vpop.f32.mrb[0].mxu0
    %v8069 = vadd.f32 %v7992, %v8068
    %v8070 = vpop.f32.mrb[0].mxu0
    %v8071 = vpop.f32.mrb[0].mxu0
    %v8072 = vadd.f32 %v7992, %v8071
    %v8073 = vpop.f32.mrb[0].mxu0
    %8074 = vmatprep.mubr.bf16.mxu0 0
    %8075 = vmatmul.mubr.bf16.gmra.mrb[0].mxu0 %v8016
    %v8076 = vpop.f32.mrb[0].mxu0
    %v8077 = vadd.f32 %v7992, %v8076
    %v8078 = vpop.f32.mrb[0].mxu0
    %v8079 = vpop.f32.mrb[0].mxu0
    %v8080 = vadd.f32 %v7992, %v8079
    %v8081 = vpop.f32.mrb[0].mxu0
    %8082 = vdwg.mxu0
    %v8083 = vmul.f32 %v8053, 0.70710677
    %v8084 = vmul.f32 %v8056, 0.70710677
    %v8085 = vmul.f32 %v8061, 0.70710677
    %v8086 = vmul.f32 %v8064, 0.70710677
    %v8087 = vmul.f32 %v8069, 0.70710677
    %v8088 = vmul.f32 %v8072, 0.70710677
    %v8089 = vmul.f32 %v8077, 0.70710677
    %v8090 = vmul.f32 %v8080, 0.70710677
    %vm8091 = vcmp.lt.f32.partialorder %v8083, 0.0
    %vm8092 = vcmp.lt.f32.partialorder %v8084, 0.0
    %vm8093 = vcmp.lt.f32.partialorder %v8085, 0.0
    %vm8094 = vcmp.lt.f32.partialorder %v8086, 0.0
    %vm8095 = vcmp.lt.f32.partialorder %v8087, 0.0
    %vm8096 = vcmp.lt.f32.partialorder %v8088, 0.0
    %vm8097 = vcmp.lt.f32.partialorder %v8089, 0.0
    %vm8098 = vcmp.lt.f32.partialorder %v8090, 0.0
    %v8099 = vsel %vm8091, -1.0, 1.0
    %v8100 = vsel %vm8092, -1.0, 1.0
    %v8101 = vsel %vm8093, -1.0, 1.0
    %v8102 = vsel %vm8094, -1.0, 1.0
    %v8103 = vsel %vm8095, -1.0, 1.0
    %v8104 = vsel %vm8096, -1.0, 1.0
    %v8105 = vsel %vm8097, -1.0, 1.0
    %v8106 = vsel %vm8098, -1.0, 1.0
    %v8107 = vand.u32 2147483647, %v8083
    %v8108 = vand.u32 2147483647, %v8084
    %v8109 = vand.u32 2147483647, %v8085
    %v8110 = vand.u32 2147483647, %v8086
    %v8111 = vand.u32 2147483647, %v8087
    %v8112 = vand.u32 2147483647, %v8088
    %v8113 = vand.u32 2147483647, %v8089
    %v8114 = vand.u32 2147483647, %v8090
    %v8115 = vmul.f32 %v8107, 0.3275911
    %v8116 = vmul.f32 %v8108, 0.3275911
    %v8117 = vmul.f32 %v8109, 0.3275911
    %v8118 = vmul.f32 %v8110, 0.3275911
    %v8119 = vmul.f32 %v8111, 0.3275911
    %v8120 = vmul.f32 %v8112, 0.3275911
    %v8121 = vmul.f32 %v8113, 0.3275911
    %v8122 = vmul.f32 %v8114, 0.3275911
    %v8123 = vadd.f32 %v8115, 1.0
    %v8124 = vadd.f32 %v8116, 1.0
    %v8125 = vadd.f32 %v8117, 1.0
    %v8126 = vadd.f32 %v8118, 1.0
    %v8127 = vadd.f32 %v8119, 1.0
    %v8128 = vadd.f32 %v8120, 1.0
    %v8129 = vadd.f32 %v8121, 1.0
    %v8130 = vadd.f32 %v8122, 1.0
    %v8131 = vrcp.pop %v8123
    %v8132 = vrcp.pop %v8124
    %v8133 = vrcp.pop %v8125
    %v8134 = vrcp.pop %v8126
    %v8135 = vrcp.pop %v8127
    %v8136 = vrcp.pop %v8128
    %v8137 = vrcp.pop %v8129
    %v8138 = vrcp.pop %v8130
    %v8139 = vmul.f32 %v8131, 1.0614054
    %v8140 = vmul.f32 %v8132, 1.0614054
    %v8141 = vmul.f32 %v8133, 1.0614054
    %v8142 = vmul.f32 %v8134, 1.0614054
    %v8143 = vmul.f32 %v8135, 1.0614054
    %v8144 = vmul.f32 %v8136, 1.0614054
    %v8145 = vmul.f32 %v8137, 1.0614054
    %v8146 = vmul.f32 %v8138, 1.0614054
    %v8147 = vadd.f32 %v8139, -1.4531521
    %v8148 = vadd.f32 %v8140, -1.4531521
    %v8149 = vadd.f32 %v8141, -1.4531521
    %v8150 = vadd.f32 %v8142, -1.4531521
    %v8151 = vadd.f32 %v8143, -1.4531521
    %v8152 = vadd.f32 %v8144, -1.4531521
    %v8153 = vadd.f32 %v8145, -1.4531521
    %v8154 = vadd.f32 %v8146, -1.4531521
    %v8155 = vmul.f32 %v8147, %v8131
    %v8156 = vmul.f32 %v8148, %v8132
    %v8157 = vmul.f32 %v8149, %v8133
    %v8158 = vmul.f32 %v8150, %v8134
    %v8159 = vmul.f32 %v8151, %v8135
    %v8160 = vmul.f32 %v8152, %v8136
    %v8161 = vmul.f32 %v8153, %v8137
    %v8162 = vmul.f32 %v8154, %v8138
    %v8163 = vadd.f32 %v8155, 1.4214138
    %v8164 = vadd.f32 %v8156, 1.4214138
    %v8165 = vadd.f32 %v8157, 1.4214138
    %v8166 = vadd.f32 %v8158, 1.4214138
    %v8167 = vadd.f32 %v8159, 1.4214138
    %v8168 = vadd.f32 %v8160, 1.4214138
    %v8169 = vadd.f32 %v8161, 1.4214138
    %v8170 = vadd.f32 %v8162, 1.4214138
    %v8171 = vmul.f32 %v8163, %v8131
    %v8172 = vmul.f32 %v8164, %v8132
    %v8173 = vmul.f32 %v8165, %v8133
    %v8174 = vmul.f32 %v8166, %v8134
    %v8175 = vmul.f32 %v8167, %v8135
    %v8176 = vmul.f32 %v8168, %v8136
    %v8177 = vmul.f32 %v8169, %v8137
    %v8178 = vmul.f32 %v8170, %v8138
    %v8179 = vadd.f32 %v8171, -0.28449672
    %v8180 = vadd.f32 %v8172, -0.28449672
    %v8181 = vadd.f32 %v8173, -0.28449672
    %v8182 = vadd.f32 %v8174, -0.28449672
    %v8183 = vadd.f32 %v8175, -0.28449672
    %v8184 = vadd.f32 %v8176, -0.28449672
    %v8185 = vadd.f32 %v8177, -0.28449672
    %v8186 = vadd.f32 %v8178, -0.28449672
    %v8187 = vmul.f32 %v8179, %v8131
    %v8188 = vmul.f32 %v8180, %v8132
    %v8189 = vmul.f32 %v8181, %v8133
    %v8190 = vmul.f32 %v8182, %v8134
    %v8191 = vmul.f32 %v8183, %v8135
    %v8192 = vmul.f32 %v8184, %v8136
    %v8193 = vmul.f32 %v8185, %v8137
    %v8194 = vmul.f32 %v8186, %v8138
    %v8195 = vadd.f32 %v8187, 0.2548296
    %v8196 = vadd.f32 %v8188, 0.2548296
    %v8197 = vadd.f32 %v8189, 0.2548296
    %v8198 = vadd.f32 %v8190, 0.2548296
    %v8199 = vadd.f32 %v8191, 0.2548296
    %v8200 = vadd.f32 %v8192, 0.2548296
    %v8201 = vadd.f32 %v8193, 0.2548296
    %v8202 = vadd.f32 %v8194, 0.2548296
    %v8203 = vmul.f32 %v8195, %v8131
    %v8204 = vmul.f32 %v8196, %v8132
    %v8205 = vmul.f32 %v8197, %v8133
    %v8206 = vmul.f32 %v8198, %v8134
    %v8207 = vmul.f32 %v8199, %v8135
    %v8208 = vmul.f32 %v8200, %v8136
    %v8209 = vmul.f32 %v8201, %v8137
    %v8210 = vmul.f32 %v8202, %v8138
    %v8211 = vsub.f32 0.0, %v8107
    %v8212 = vsub.f32 0.0, %v8108
    %v8213 = vsub.f32 0.0, %v8109
    %v8214 = vsub.f32 0.0, %v8110
    %v8215 = vsub.f32 0.0, %v8111
    %v8216 = vsub.f32 0.0, %v8112
    %v8217 = vsub.f32 0.0, %v8113
    %v8218 = vsub.f32 0.0, %v8114
    %v8219 = vmul.f32 %v8211, %v8107
    %v8220 = vmul.f32 %v8212, %v8108
    %v8221 = vmul.f32 %v8213, %v8109
    %v8222 = vmul.f32 %v8214, %v8110
    %v8223 = vmul.f32 %v8215, %v8111
    %v8224 = vmul.f32 %v8216, %v8112
    %v8225 = vmul.f32 %v8217, %v8113
    %v8226 = vmul.f32 %v8218, %v8114
    %v8227 = vmul.f32 %v8219, 1.442695
    %v8228 = vpow.pop %v8227
    %v8229 = vmul.f32 %v8220, 1.442695
    %v8230 = vpow.pop %v8229
    %v8231 = vmul.f32 %v8221, 1.442695
    %v8232 = vpow.pop %v8231
    %v8233 = vmul.f32 %v8222, 1.442695
    %v8234 = vpow.pop %v8233
    %v8235 = vmul.f32 %v8223, 1.442695
    %v8236 = vpow.pop %v8235
    %v8237 = vmul.f32 %v8224, 1.442695
    %v8238 = vpow.pop %v8237
    %v8239 = vmul.f32 %v8225, 1.442695
    %v8240 = vpow.pop %v8239
    %v8241 = vmul.f32 %v8226, 1.442695
    %v8242 = vpow.pop %v8241
    %v8243 = vmul.f32 %v8203, %v8228
    %v8244 = vmul.f32 %v8204, %v8230
    %v8245 = vmul.f32 %v8205, %v8232
    %v8246 = vmul.f32 %v8206, %v8234
    %v8247 = vmul.f32 %v8207, %v8236
    %v8248 = vmul.f32 %v8208, %v8238
    %v8249 = vmul.f32 %v8209, %v8240
    %v8250 = vmul.f32 %v8210, %v8242
    %v8251 = vsub.f32 1.0, %v8243
    %v8252 = vsub.f32 1.0, %v8244
    %v8253 = vsub.f32 1.0, %v8245
    %v8254 = vsub.f32 1.0, %v8246
    %v8255 = vsub.f32 1.0, %v8247
    %v8256 = vsub.f32 1.0, %v8248
    %v8257 = vsub.f32 1.0, %v8249
    %v8258 = vsub.f32 1.0, %v8250
    %v8259 = vmul.f32 %v8099, %v8251
    %v8260 = vmul.f32 %v8100, %v8252
    %v8261 = vmul.f32 %v8101, %v8253
    %v8262 = vmul.f32 %v8102, %v8254
    %v8263 = vmul.f32 %v8103, %v8255
    %v8264 = vmul.f32 %v8104, %v8256
    %v8265 = vmul.f32 %v8105, %v8257
    %v8266 = vmul.f32 %v8106, %v8258
    %v8267 = vmul.f32 %v8053, 0.5
    %v8268 = vmul.f32 %v8056, 0.5
    %v8269 = vmul.f32 %v8061, 0.5
    %v8270 = vmul.f32 %v8064, 0.5
    %v8271 = vmul.f32 %v8069, 0.5
    %v8272 = vmul.f32 %v8072, 0.5
    %v8273 = vmul.f32 %v8077, 0.5
    %v8274 = vmul.f32 %v8080, 0.5
    %v8275 = vadd.f32 %v8259, 1.0
    %v8276 = vadd.f32 %v8260, 1.0
    %v8277 = vadd.f32 %v8261, 1.0
    %v8278 = vadd.f32 %v8262, 1.0
    %v8279 = vadd.f32 %v8263, 1.0
    %v8280 = vadd.f32 %v8264, 1.0
    %v8281 = vadd.f32 %v8265, 1.0
    %v8282 = vadd.f32 %v8266, 1.0
    %v8283 = vmul.f32 %v8267, %v8275
    %v8284 = vmul.f32 %v8268, %v8276
    %v8285 = vmul.f32 %v8269, %v8277
    %v8286 = vmul.f32 %v8270, %v8278
    %v8287 = vmul.f32 %v8271, %v8279
    %v8288 = vmul.f32 %v8272, %v8280
    %v8289 = vmul.f32 %v8273, %v8281
    %v8290 = vmul.f32 %v8274, %v8282
    %v8291 = vld [vmem:[%s21] sm:$0x1]
    %v8293 = vlaneseq
    %v8294 = vshrl.u32 %v8293, 7
    %v8295 = vsub.s32 0, %v8294
    %v8296 = vrot.slane %v8291, %v8295
    %v8298 = vmul.f32 %v8283, %v8296
    %v8299 = vmul.f32 %v8284, %v8296
    %v8300 = vmul.f32 %v8285, %v8296
    %v8301 = vmul.f32 %v8286, %v8296
    %v8302 = vmul.f32 %v8287, %v8296
    %v8303 = vmul.f32 %v8288, %v8296
    %v8304 = vmul.f32 %v8289, %v8296
    %v8305 = vmul.f32 %v8290, %v8296
    %v8306 = vsel %vm260, %v8298, 0.0
    %8307 = vadd.xlane.f32.xlu0 %v8306
    %v8308 = vpop.xlane.xlu0 %8307
    %v8309 = vsel %vm260, %v8299, 0.0
    %8310 = vadd.xlane.f32.xlu0 %v8309
    %v8311 = vpop.xlane.xlu0 %8310
    %v8312 = vsel %vm260, %v8300, 0.0
    %8313 = vadd.xlane.f32.xlu0 %v8312
    %v8314 = vpop.xlane.xlu0 %8313
    %v8315 = vsel %vm260, %v8301, 0.0
    %8316 = vadd.xlane.f32.xlu0 %v8315
    %v8317 = vpop.xlane.xlu0 %8316
    %v8318 = vsel %vm260, %v8302, 0.0
    %8319 = vadd.xlane.f32.xlu0 %v8318
    %v8320 = vpop.xlane.xlu0 %8319
    %v8321 = vsel %vm260, %v8303, 0.0
    %8322 = vadd.xlane.f32.xlu0 %v8321
    %v8323 = vpop.xlane.xlu0 %8322
    %v8324 = vsel %vm260, %v8304, 0.0
    %8325 = vadd.xlane.f32.xlu0 %v8324
    %v8326 = vpop.xlane.xlu0 %8325
    %v8327 = vsel %vm260, %v8305, 0.0
    %8328 = vadd.xlane.f32.xlu0 %v8327
    %v8329 = vpop.xlane.xlu0 %8328
    %v8330 = vld [vmem:[#allocation2] sm:$0x1]
    %v8332 = vlaneseq
    %v8333 = vshrl.u32 %v8332, 7
    %v8334 = vsub.s32 0, %v8333
    %v8335 = vrot.slane %v8330, %v8334
    %8336 = vset.pattern.permute.xlu0 0
    %8337 = vperm.xlu0 %8336, %v8335
    %v8338 = vpop.permute.xlu0 %8337
    %v8340 = vadd.f32 %v8308, %v8338
    %v8341 = vadd.f32 %v8311, %v8338
    %v8342 = vadd.f32 %v8314, %v8338
    %v8343 = vadd.f32 %v8317, %v8338
    %v8344 = vadd.f32 %v8320, %v8338
    %v8345 = vadd.f32 %v8323, %v8338
    %v8346 = vadd.f32 %v8326, %v8338
    %v8347 = vadd.f32 %v8329, %v8338
    %v8356 = vlaneseq
    %v8357 = vand.u32 %v8356, 127
    %v8358 = vlaneseq
    %v8359 = vshrl.u32 %v8358, 7
    %v8360 = vsub.s32 %v8357, %v8359
    %v8361 = vrot.slane %v8340, %v8360
    %v8362 = vadd.s32 %v8357, 4294967288
    %v8363 = vlaneseq
    %v8364 = vshrl.u32 %v8363, 7
    %v8365 = vsub.s32 %v8362, %v8364
    %v8366 = vrot.slane %v8341, %v8365
    %vm8367 = vcmask 130112
    %v8368 = vsel %vm8367, %v8366, %v8361
    %v8369 = vlaneseq
    %v8370 = vshrl.u32 %v8369, 7
    %v8371 = vsub.s32 %v8357, %v8370
    %v8372 = vrot.slane %v8342, %v8371
    %v8373 = vlaneseq
    %v8374 = vshrl.u32 %v8373, 7
    %v8375 = vsub.s32 %v8362, %v8374
    %v8376 = vrot.slane %v8343, %v8375
    %v8377 = vsel %vm8367, %v8376, %v8372
    %v8378 = vlaneseq
    %v8379 = vshrl.u32 %v8378, 7
    %v8380 = vsub.s32 %v8357, %v8379
    %v8381 = vrot.slane %v8344, %v8380
    %v8382 = vlaneseq
    %v8383 = vshrl.u32 %v8382, 7
    %v8384 = vsub.s32 %v8362, %v8383
    %v8385 = vrot.slane %v8345, %v8384
    %v8386 = vsel %vm8367, %v8385, %v8381
    %v8387 = vlaneseq
    %v8388 = vshrl.u32 %v8387, 7
    %v8389 = vsub.s32 %v8357, %v8388
    %v8390 = vrot.slane %v8346, %v8389
    %v8391 = vlaneseq
    %v8392 = vshrl.u32 %v8391, 7
    %v8393 = vsub.s32 %v8362, %v8392
    %v8394 = vrot.slane %v8347, %v8393
    %v8395 = vsel %vm8367, %v8394, %v8390
    %vm8396 = vcmask 1041409
    %v8397 = vsel %vm8396, %v8377, %v8368
    %vm8398 = vcmask 1042434
    %v8399 = vsel %vm8398, %v8386, %v8397
    %vm8400 = vcmask 1043459
    %v8401 = vsel %vm8400, %v8395, %v8399
    %vm8403 = vcmask 125952
    %8404 = vst.msk [vmem:[#allocation3] sm:$0xf] %vm8403, %v8401
    // Predicated region
    $region94: #{tpu_custom_call.1} parent=1 // pred_check
      _
    $region95: #{tpu_custom_call.1} parent=1 // pred_check_branch
      %8406 = sbr.rel (0) target = $region97
    $region96: #{tpu_custom_call.1} parent=1 // pred_region
      %s8408 = ssub.s32 64, 64
      %8409 = vsyncadd [#allocation4], %s8408
      %s8411 = sshll.u32 [#allocation3], 4
      %s8412 = int_to_ptr.vmem [resolvable:$true] %s8411
      %8414 = dma.vmem_to_hbm [thread:$0]  %s8412, 64, %s23, [#allocation4]
    $region97: #{tpu_custom_call.1} parent=1 // pred_fallthru
      _
    // Predicated region
    $region98: #{tpu_custom_call.1} parent=1 // pred_check
      _
    $region99: #{tpu_custom_call.1} parent=1 // pred_check_branch
      %8416 = sbr.rel (0) target = $region101
    $region100: #{tpu_custom_call.1} parent=1 // pred_region
      %8417 = dma.done [#allocation4], 64
    $region101: #{tpu_custom_call.1} parent=1 // pred_fallthru
      _
    %8418 = vsyncpa [#allocation4], 1

</llo_original>
